<compile_context>
chip_gen: v7x
topology: tpu7x:2x2x1
jax: 0.10.0
libtpu: 0.0.40
codegen_flags: <defaults>
</compile_context>

<pallas_src>
import math
import functools

import jax
import jax.numpy as jnp
from jax.experimental import pallas as pl
from jax.experimental.pallas import tpu as pltpu


# ----------------------------- kernel ---------------------------------------

def _layer_norm(x, gamma, beta, eps=1e-5):
    # matches torch.nn.LayerNorm (biased variance, eps inside rsqrt)
    mean = jnp.mean(x, axis=-1, keepdims=True)
    var = jnp.mean((x - mean) ** 2, axis=-1, keepdims=True)
    return (x - mean) * jax.lax.rsqrt(var + eps) * gamma + beta


def decoder_layer_kernel(*refs, n_head, key_dim, norm_factor, has_attn_mask,
                         has_kpm, return_attention, compute_dtype):
    it = iter(refs)
    q_ref = next(it)                                   # (1, TQ, D)
    k_ref = next(it)                                   # (1, Nk, D)
    am_ref = next(it) if has_attn_mask else None       # (1, TQ, Nk) any dtype
    kpm_ref = next(it) if has_kpm else None            # (1, 1, Nk) any dtype
    vec_ref = next(it)                                 # (8, D) f32 packed LN/b2
    b1_ref = next(it)                                  # (1, hidden) f32
    wqkv_ref = next(it)                                # (3, D, H*kd)
    wo_ref = next(it)                                  # (H*kd, D)
    w1_ref = next(it)                                  # (D, hidden)
    w2_ref = next(it)                                  # (hidden, D)
    out_ref = next(it)                                 # (1, TQ, D) f32
    attn_ref = next(it) if return_attention else None  # (H, 1, TQ, Nk)
    k_scr = next(it)                                   # (Nk, H*kd) compute dtype
    v_scr = next(it)                                   # (Nk, H*kd) compute dtype

    f32 = jnp.float32
    cdt = compute_dtype

    # ---- K-side work once per batch (q-tile axis is the trailing "arbitrary"
    #      axis, so these scratch buffers stay valid for all q tiles of batch b).
    @pl.when(pl.program_id(1) == 0)
    def _():
        kn = _layer_norm(k_ref[0].astype(f32), vec_ref[2], vec_ref[3]).astype(cdt)
        k_scr[...] = jnp.dot(kn, wqkv_ref[1],
                             preferred_element_type=f32).astype(k_scr.dtype)
        v_scr[...] = jnp.dot(kn, wqkv_ref[2],
                             preferred_element_type=f32).astype(v_scr.dtype)

    q = q_ref[0]                          # (TQ, D)
    tq, d = q.shape

    # LN1; fold 1/sqrt(kd) into the normalized query (linear in wq).
    qn = (_layer_norm(q.astype(f32), vec_ref[0], vec_ref[1]) * norm_factor).astype(cdt)
    Q = jnp.dot(qn, wqkv_ref[0], preferred_element_type=f32).astype(cdt)   # (TQ, H*kd)

    # Additive mask bias, computed once and shared by every head.
    bias = None
    if has_attn_mask or has_kpm:
        combined = None
        if has_attn_mask:
            combined = am_ref[0].astype(f32)                       # (TQ, Nk)
        if has_kpm:
            kpm = kpm_ref[0].astype(f32)                           # (1, Nk)
            combined = kpm if combined is None else combined + kpm
        # PyTorch: masked_fill(combined == 0, -1e8); exp underflows to 0 either way.
        bias = jnp.where(combined == 0.0, f32(-1e8), f32(0.0))

    K = k_scr[...]
    V = v_scr[...]

    mha = jnp.zeros((tq, d), f32)
    for h in range(n_head):                       # n_head is small & static
        lo = h * key_dim
        Qh = Q[:, lo:lo + key_dim]
        Kh = K[:, lo:lo + key_dim]
        Vh = V[:, lo:lo + key_dim]
        # contract on the last dim of both operands (no explicit Kh.T transpose)
        U = jax.lax.dot_general(Qh, Kh, (((1,), (1,)), ((), ())),
                                preferred_element_type=f32)        # (TQ, Nk)
        if bias is not None:
            U = U + bias
        U = U - jnp.max(U, axis=-1, keepdims=True)
        e = jnp.exp(U)
        denom = jnp.sum(e, axis=-1, keepdims=True)
        # exact division when the attention tensor is handed back to the caller,
        # approx (EUP) reciprocal on the fast path.
        attn = e * pl.reciprocal(denom, approx=not return_attention)
        if return_attention:
            attn_ref[h, 0] = attn.astype(attn_ref.dtype)
        pv = jnp.dot(attn.astype(cdt), Vh, preferred_element_type=f32)      # (TQ, kd)
        # accumulate the output projection per head (wo slice is sublane-aligned)
        mha = mha + jnp.dot(pv.astype(cdt), wo_ref[lo:lo + key_dim, :],
                            preferred_element_type=f32)

    h1 = mha + q.astype(f32)                                       # residual 1

    # LN3 + MLP (Linear -> LeakyReLU(0.01) -> Linear) + residual 2
    h1n = _layer_norm(h1, vec_ref[4], vec_ref[5]).astype(cdt)
    z = jnp.dot(h1n, w1_ref[...], preferred_element_type=f32) + b1_ref[0]
    z = jnp.where(z >= 0.0, z, 0.01 * z)
    z = jnp.dot(z.astype(cdt), w2_ref[...], preferred_element_type=f32) + vec_ref[6]
    out_ref[0] = (z + h1).astype(out_ref.dtype)


# ----------------------------- wrapper ---------------------------------------

def _estimate_vmem_bytes(tq, nk, d, hkd, hidden, n_head, cdt_bytes,
                         mask_bytes, kpm_bytes, attn_bytes):
    """Rough per-grid-step VMEM footprint (double-buffered streams + scratch)."""
    by = 0
    by += 2 * tq * d * cdt_bytes                       # q tile
    by += 2 * nk * d * cdt_bytes                       # k
    by += 2 * tq * nk * mask_bytes                     # attn_mask stream (0 if absent)
    by += 2 * nk * kpm_bytes                           # key_padding_mask stream
    by += 2 * (8 * d + hidden) * 4                     # packed LN/bias vectors + b1
    by += 2 * (3 * d * hkd + hkd * d + d * hidden + hidden * d) * cdt_bytes  # weights
    by += 2 * tq * d * 4                               # output tile
    by += 2 * n_head * tq * nk * attn_bytes            # attention writeback
    by += 2 * nk * hkd * cdt_bytes                     # K/V scratch
    by += 4 * tq * nk * 4 + 6 * tq * max(d, hkd, hidden) * 4   # live intermediates
    return by


def decoder_layer(q, k, params, key_padding_mask=None, attn_mask=None,
                  return_attention=True, attn_dtype=jnp.bfloat16,
                  compute_dtype=jnp.float32):
    """q: (B, Nq, D), k: (B, Nk, D).  Returns (h2 f32, attention | None)."""
    B, Nq, D = q.shape
    Nk = k.shape[1]
    n_head, _, key_dim = params["wq"].shape
    hidden = params["w1"].shape[1]
    hkd = n_head * key_dim
    norm_factor = 1.0 / math.sqrt(key_dim)

    has_attn_mask = attn_mask is not None
    has_kpm = key_padding_mask is not None
    if has_kpm:
        key_padding_mask = key_padding_mask.reshape(B, 1, Nk)  # keep original dtype

    cdt = jnp.dtype(compute_dtype)
    q_c = q.astype(cdt)
    k_c = k.astype(cdt)

    # head-fused / packed weight layouts (computed once, outside the kernel)
    wq_f = jnp.transpose(params["wq"], (1, 0, 2)).reshape(D, hkd)
    wk_f = jnp.transpose(params["wk"], (1, 0, 2)).reshape(D, hkd)
    wv_f = jnp.transpose(params["wv"], (1, 0, 2)).reshape(D, hkd)
    wqkv = jnp.stack([wq_f, wk_f, wv_f]).astype(cdt)            # (3, D, H*kd)
    wo_f = params["wo"].reshape(hkd, D).astype(cdt)             # concat-heads layout
    w1_c = params["w1"].astype(cdt)
    w2_c = params["w2"].astype(cdt)

    # small 1-D parameters packed into a single (8, D) f32 slab (row 7 = padding);
    # LN statistics / biases always stay f32 regardless of compute dtype.
    vecs = jnp.stack([params["ln1_g"], params["ln1_b"],
                      params["ln2_g"], params["ln2_b"],
                      params["ln3_g"], params["ln3_b"],
                      params["b2"], jnp.zeros((D,), jnp.float32)]).astype(jnp.float32)
    b1 = params["b1"].reshape(1, hidden).astype(jnp.float32)

    # --- query-row tile: largest candidate that divides Nq and fits the budget ---
    mask_bytes = attn_mask.dtype.itemsize if has_attn_mask else 0
    kpm_bytes = key_padding_mask.dtype.itemsize if has_kpm else 0
    attn_bytes = jnp.dtype(attn_dtype).itemsize if return_attention else 0
    budget = 40 * 1024 * 1024                 # conservative: fits v7x's 64 MiB VMEM
    est = lambda tq: _estimate_vmem_bytes(tq, Nk, D, hkd, hidden, n_head,
                                          cdt.itemsize, mask_bytes, kpm_bytes,
                                          attn_bytes)
    TQ = Nq                                   # fallback: whole query axis per step
    for cand in (1024, 512, 256, 128):
        if Nq % cand == 0 and est(cand) <= budget:
            TQ = cand
            break
    n_qt = Nq // TQ
    grid = (B, n_qt)

    def const_spec(shape):
        nd = len(shape)
        return pl.BlockSpec(shape, lambda b, i, _nd=nd: (0,) * _nd)

    in_specs = [
        pl.BlockSpec((1, TQ, D), lambda b, i: (b, i, 0)),       # q row tile
        pl.BlockSpec((1, Nk, D), lambda b, i: (b, 0, 0)),       # full k per batch
    ]
    inputs = [q_c, k_c]
    if has_attn_mask:
        in_specs.append(pl.BlockSpec((1, TQ, Nk), lambda b, i: (b, i, 0)))
        inputs.append(attn_mask)
    if has_kpm:
        in_specs.append(pl.BlockSpec((1, 1, Nk), lambda b, i: (b, 0, 0)))
        inputs.append(key_padding_mask)
    in_specs += [const_spec((8, D)), const_spec((1, hidden)),
                 const_spec((3, D, hkd)), const_spec((hkd, D)),
                 const_spec((D, hidden)), const_spec((hidden, D))]
    inputs += [vecs, b1, wqkv, wo_f, w1_c, w2_c]

    out_shape = [jax.ShapeDtypeStruct((B, Nq, D), jnp.float32)]
    out_specs = [pl.BlockSpec((1, TQ, D), lambda b, i: (b, i, 0))]
    if return_attention:
        out_shape.append(jax.ShapeDtypeStruct((n_head, B, Nq, Nk), attn_dtype))
        out_specs.append(pl.BlockSpec((n_head, 1, TQ, Nk),
                                      lambda b, i: (0, b, i, 0)))

    # K / V projections cached across the q-tile ("arbitrary") axis
    scratch_shapes = [pltpu.VMEM((Nk, hkd), cdt), pltpu.VMEM((Nk, hkd), cdt)]

    vmem_limit = int(min(48 * 1024 * 1024, max(32 * 1024 * 1024, 2 * est(TQ))))

    kernel = functools.partial(
        decoder_layer_kernel,
        n_head=n_head, key_dim=key_dim, norm_factor=norm_factor,
        has_attn_mask=has_attn_mask, has_kpm=has_kpm,
        return_attention=return_attention, compute_dtype=cdt)

    res = pl.pallas_call(
        kernel,
        out_shape=tuple(out_shape),
        grid=grid,
        in_specs=in_specs,
        out_specs=tuple(out_specs),
        scratch_shapes=scratch_shapes,
        compiler_params=pltpu.CompilerParams(
            dimension_semantics=("parallel", "arbitrary"),
            vmem_limit_bytes=vmem_limit),
    )(*inputs)

    if return_attention:
        h2, attention = res
        return h2, attention
    return res[0], None


# ----------------------------- reference (pure JAX) ---------------------------

def decoder_layer_ref(q, k, params, mask=None):
    norm_factor = 1.0 / math.sqrt(params["wq"].shape[2])

    def ln(x, g, b):
        m = jnp.mean(x, -1, keepdims=True)
        v = jnp.mean((x - m) ** 2, -1, keepdims=True)
        return (x - m) * jax.lax.rsqrt(v + 1e-5) * g + b

    qn = ln(q, params["ln1_g"], params["ln1_b"])
    kn = ln(k, params["ln2_g"], params["ln2_b"])

    Q = jnp.einsum("bqd,hde->hbqe", qn, params["wq"])
    K = jnp.einsum("bkd,hde->hbke", kn, params["wk"])
    V = jnp.einsum("bkd,hde->hbke", kn, params["wv"])
    U = norm_factor * jnp.einsum("hbqe,hbke->hbqk", Q, K)
    if mask is not None:
        U = jnp.where(mask[None] == 0.0, -1e8, U)
    attn = jax.nn.softmax(U, axis=-1)
    heads = jnp.einsum("hbqk,hbke->hbqe", attn, V)
    mha = jnp.einsum("hbqe,hed->bqd", heads, params["wo"])

    h1 = mha + q
    h1n = ln(h1, params["ln3_g"], params["ln3_b"])
    z = h1n @ params["w1"] + params["b1"]
    z = jnp.where(z >= 0, z, 0.01 * z)
    z = z @ params["w2"] + params["b2"]
    return z + h1, attn


# ----------------------------- params ----------------------------------------

def make_params(key, embedding_dim, n_head, hidden=512):
    kd = embedding_dim // n_head
    ks = jax.random.split(key, 14)
    u = lambda kk, shape, bound: jax.random.uniform(
        kk, shape, jnp.float32, -bound, bound)
    stdv = 1.0 / math.sqrt(kd)
    stdv_o = 1.0 / math.sqrt(embedding_dim)
    # NOTE: torch initializes LayerNorm to weight=1 / bias=0; small random
    # perturbations are used here so the test exercises the packed-vector paths.
    lng = lambda kk: 1.0 + 0.1 * jax.random.normal(kk, (embedding_dim,), jnp.float32)
    lnb = lambda kk: 0.1 * jax.random.normal(kk, (embedding_dim,), jnp.float32)
    return {
        # MHA projection weights (per-head), like the PyTorch uniform init
        "wq": u(ks[0], (n_head, embedding_dim, kd), stdv),
        "wk": u(ks[1], (n_head, embedding_dim, kd), stdv),
        "wv": u(ks[2], (n_head, embedding_dim, kd), stdv),
        "wo": u(ks[3], (n_head, kd, embedding_dim), stdv_o),
        "ln1_g": lng(ks[8]), "ln1_b": lnb(ks[9]),
        "ln2_g": lng(ks[10]), "ln2_b": lnb(ks[11]),
        "ln3_g": lng(ks[12]), "ln3_b": lnb(ks[13]),
        # MLP: Linear(D, 512) -> LeakyReLU -> Linear(512, D); stored as (in, out)
        "w1": u(ks[4], (embedding_dim, hidden), 1.0 / math.sqrt(embedding_dim)),
        "b1": u(ks[5], (hidden,), 1.0 / math.sqrt(embedding_dim)),
        "w2": u(ks[6], (hidden, embedding_dim), 1.0 / math.sqrt(hidden)),
        "b2": u(ks[7], (embedding_dim,), 1.0 / math.sqrt(hidden)),
    }


# ----------------------------- main -------------------------------------------

if __name__ == "__main__":
    # lane-dense demo shapes (D and Nk multiples of 128)
    B, Nq, Nk, D, n_head = 2, 128, 128, 128, 4

    root = jax.random.PRNGKey(0)
    kq, kk, km, kpad, kp = jax.random.split(root, 5)

    q = jax.random.normal(kq, (B, Nq, D), jnp.float32)
    k = jax.random.normal(kk, (B, Nk, D), jnp.float32)
    # edge mask streamed as int8 (0 => masked out with -1e8 before softmax)
    attn_mask = (jax.random.uniform(km, (B, Nq, Nk)) > 0.2).astype(jnp.int8)
    key_padding_mask = (jax.random.uniform(kpad, (B, Nk)) > 0.1).astype(jnp.float32)

    params = make_params(kp, D, n_head)

    # ---- path 1: edge mask (int8 stream), attention returned (bf16 writeback) ----
    h2, attention = decoder_layer(q, k, params, attn_mask=attn_mask)
    jax.block_until_ready((h2, attention))
    h2_exp, attn_exp = decoder_layer_ref(q, k, params, attn_mask.astype(jnp.float32))
    assert jnp.allclose(h2, h2_exp, rtol=1e-2, atol=1e-2), "h2 mismatch (attn_mask)"
    assert jnp.allclose(attention.astype(jnp.float32), attn_exp,
                        rtol=1e-2, atol=1e-2), "attention mismatch (attn_mask)"

    # ---- path 2: key-padding mask only, f32 attention writeback ----
    h2b, attn_b = decoder_layer(q, k, params, key_padding_mask=key_padding_mask,
                                attn_dtype=jnp.float32)
    jax.block_until_ready((h2b, attn_b))
    mask_b = jnp.broadcast_to(key_padding_mask[:, None, :], (B, Nq, Nk))
    h2b_exp, attnb_exp = decoder_layer_ref(q, k, params, mask_b)
    assert jnp.allclose(h2b, h2b_exp, rtol=1e-2, atol=1e-2), "h2 mismatch (kpm)"
    assert jnp.allclose(attn_b, attnb_exp, rtol=1e-2, atol=1e-2), \
        "attention mismatch (kpm)"

    # ---- path 3: no mask, attention dropped (fast path, approx reciprocal) ----
    h2c, _ = decoder_layer(q, k, params, return_attention=False)
    jax.block_until_ready(h2c)
    h2c_exp, _ = decoder_layer_ref(q, k, params, None)
    assert jnp.allclose(h2c, h2c_exp, rtol=1e-2, atol=1e-2), "h2 mismatch (no mask)"

    # ---- path 4: bf16 data movement / MXU path (f32 statistics & accumulators) ----
    h2d, _ = decoder_layer(q, k, params, attn_mask=attn_mask,
                           return_attention=False, compute_dtype=jnp.bfloat16)
    jax.block_until_ready(h2d)
    assert jnp.allclose(h2d, h2_exp, rtol=1e-1, atol=2.5e-1), "h2 mismatch (bf16)"

    print("KERNEL_OK")
</pallas_src>

<mosaic_0001>
module attributes {stable_mosaic.version = 11 : i64} {
  func.func @decoder_layer_kernel(%arg0: i32, %arg1: i32, %arg2: memref<1x128x128xf32, #tpu.memory_space<vmem>>, %arg3: memref<1x128x128xf32, #tpu.memory_space<vmem>>, %arg4: memref<1x128x128xi8, #tpu.memory_space<vmem>>, %arg5: memref<8x128xf32, #tpu.memory_space<vmem>>, %arg6: memref<1x512xf32, #tpu.memory_space<vmem>>, %arg7: memref<3x128x128xf32, #tpu.memory_space<vmem>>, %arg8: memref<128x128xf32, #tpu.memory_space<vmem>>, %arg9: memref<128x512xf32, #tpu.memory_space<vmem>>, %arg10: memref<512x128xf32, #tpu.memory_space<vmem>>, %arg11: memref<1x128x128xf32, #tpu.memory_space<vmem>>, %arg12: memref<4x1x128x128xbf16, #tpu.memory_space<vmem>>, %arg13: memref<128x128xf32, #tpu.memory_space<vmem>>, %arg14: memref<128x128xf32, #tpu.memory_space<vmem>>) attributes {dimension_semantics = [#tpu.dimension_semantics<parallel>, #tpu.dimension_semantics<arbitrary>], iteration_bounds = array<i64: 2, 1>, scalar_prefetch = 0 : i64, scratch_operands = 2 : i64, tpu.core_type = #tpu.core_type<tc>, window_params = [{transform_indices = @transform_0, window_bounds = array<i64: 1, 128, 128>}, {transform_indices = @transform_1, window_bounds = array<i64: 1, 128, 128>}, {transform_indices = @transform_2, window_bounds = array<i64: 1, 128, 128>}, {pipeline_mode = #tpu.pipeline_mode<synchronous>, transform_indices = @transform_3, window_bounds = array<i64: 8, 128>}, {pipeline_mode = #tpu.pipeline_mode<synchronous>, transform_indices = @transform_4, window_bounds = array<i64: 1, 512>}, {pipeline_mode = #tpu.pipeline_mode<synchronous>, transform_indices = @transform_5, window_bounds = array<i64: 3, 128, 128>}, {pipeline_mode = #tpu.pipeline_mode<synchronous>, transform_indices = @transform_6, window_bounds = array<i64: 128, 128>}, {pipeline_mode = #tpu.pipeline_mode<synchronous>, transform_indices = @transform_7, window_bounds = array<i64: 128, 512>}, {pipeline_mode = #tpu.pipeline_mode<synchronous>, transform_indices = @transform_8, window_bounds = array<i64: 512, 128>}, {transform_indices = @transform_9, window_bounds = array<i64: 1, 128, 128>}, {transform_indices = @transform_10, window_bounds = array<i64: 4, 1, 128, 128>}]} {
    %c0_i32 = arith.constant 0 : i32
    %0 = arith.cmpi eq, %arg1, %c0_i32 : i32
    %1 = arith.extui %0 : i1 to i32
    %c0_i32_0 = arith.constant 0 : i32
    %2 = arith.cmpi ne, %1, %c0_i32_0 : i32
    scf.if %2 {
      %c0_86 = arith.constant 0 : index
      %c0_87 = arith.constant 0 : index
      %c0_88 = arith.constant 0 : index
      %193 = vector.load %arg3[%c0_86, %c0_87, %c0_88] : memref<1x128x128xf32, #tpu.memory_space<vmem>>, vector<1x128x128xf32>
      %194 = vector.shape_cast %193 : vector<1x128x128xf32> to vector<128x128xf32>
      %c2_89 = arith.constant 2 : index
      %c0_90 = arith.constant 0 : index
      %195 = vector.load %arg5[%c2_89, %c0_90] : memref<8x128xf32, #tpu.memory_space<vmem>>, vector<1x128xf32>
      %196 = vector.shape_cast %195 : vector<1x128xf32> to vector<128xf32>
      %c3_91 = arith.constant 3 : index
      %c0_92 = arith.constant 0 : index
      %197 = vector.load %arg5[%c3_91, %c0_92] : memref<8x128xf32, #tpu.memory_space<vmem>>, vector<1x128xf32>
      %198 = vector.shape_cast %197 : vector<1x128xf32> to vector<128xf32>
      %cst_93 = arith.constant dense<0.000000e+00> : vector<128xf32>
      %199 = vector.multi_reduction <add>, %194, %cst_93 [1] : vector<128x128xf32> to vector<128xf32>
      %200 = vector.shape_cast %199 : vector<128xf32> to vector<128x1xf32>
      %cst_94 = arith.constant 1.280000e+02 : f32
      %201 = vector.broadcast %cst_94 : f32 to vector<128x1xf32>
      %202 = arith.divf %200, %201 : vector<128x1xf32>
      %203 = vector.broadcast %202 : vector<128x1xf32> to vector<128x128xf32>
      %204 = arith.subf %194, %203 : vector<128x128xf32>
      %205 = arith.mulf %204, %204 : vector<128x128xf32>
      %cst_95 = arith.constant dense<0.000000e+00> : vector<128xf32>
      %206 = vector.multi_reduction <add>, %205, %cst_95 [1] : vector<128x128xf32> to vector<128xf32>
      %207 = vector.shape_cast %206 : vector<128xf32> to vector<128x1xf32>
      %cst_96 = arith.constant 1.280000e+02 : f32
      %208 = vector.broadcast %cst_96 : f32 to vector<128x1xf32>
      %209 = arith.divf %207, %208 : vector<128x1xf32>
      %210 = vector.broadcast %202 : vector<128x1xf32> to vector<128x128xf32>
      %211 = arith.subf %194, %210 : vector<128x128xf32>
      %cst_97 = arith.constant 9.99999974E-6 : f32
      %212 = vector.broadcast %cst_97 : f32 to vector<128x1xf32>
      %213 = arith.addf %209, %212 : vector<128x1xf32>
      %214 = math.rsqrt %213 : vector<128x1xf32>
      %215 = vector.broadcast %214 : vector<128x1xf32> to vector<128x128xf32>
      %216 = arith.mulf %211, %215 : vector<128x128xf32>
      %217 = vector.shape_cast %196 : vector<128xf32> to vector<1x128xf32>
      %218 = vector.broadcast %217 : vector<1x128xf32> to vector<128x128xf32>
      %219 = arith.mulf %216, %218 : vector<128x128xf32>
      %220 = vector.shape_cast %198 : vector<128xf32> to vector<1x128xf32>
      %221 = vector.broadcast %220 : vector<1x128xf32> to vector<128x128xf32>
      %222 = arith.addf %219, %221 : vector<128x128xf32>
      %c1_98 = arith.constant 1 : index
      %c0_99 = arith.constant 0 : index
      %c0_100 = arith.constant 0 : index
      %223 = vector.load %arg7[%c1_98, %c0_99, %c0_100] : memref<3x128x128xf32, #tpu.memory_space<vmem>>, vector<1x128x128xf32>
      %224 = vector.shape_cast %223 : vector<1x128x128xf32> to vector<128x128xf32>
      %cst_101 = arith.constant dense<0.000000e+00> : vector<128x128xf32>
      %225 = tpu.matmul %222, %224, %cst_101 {dimension_numbers = #tpu.dot_dimension_numbers<[1], [0], [0], [1], [0, 0, 1, 1], [], []>} : vector<128x128xf32>, vector<128x128xf32>, vector<128x128xf32> -> vector<128x128xf32>
      %c0_102 = arith.constant 0 : index
      %c0_103 = arith.constant 0 : index
      %226 = vector.load %arg13[%c0_102, %c0_103] : memref<128x128xf32, #tpu.memory_space<vmem>>, vector<128x128xf32>
      tpu.vector_store %arg13[%c0_102, %c0_103], %225 {strides = array<i32>} : memref<128x128xf32, #tpu.memory_space<vmem>>, vector<128x128xf32>,
      %c2_104 = arith.constant 2 : index
      %c0_105 = arith.constant 0 : index
      %c0_106 = arith.constant 0 : index
      %227 = vector.load %arg7[%c2_104, %c0_105, %c0_106] : memref<3x128x128xf32, #tpu.memory_space<vmem>>, vector<1x128x128xf32>
      %228 = vector.shape_cast %227 : vector<1x128x128xf32> to vector<128x128xf32>
      %cst_107 = arith.constant dense<0.000000e+00> : vector<128x128xf32>
      %229 = tpu.matmul %222, %228, %cst_107 {dimension_numbers = #tpu.dot_dimension_numbers<[1], [0], [0], [1], [0, 0, 1, 1], [], []>} : vector<128x128xf32>, vector<128x128xf32>, vector<128x128xf32> -> vector<128x128xf32>
      %c0_108 = arith.constant 0 : index
      %c0_109 = arith.constant 0 : index
      %230 = vector.load %arg14[%c0_108, %c0_109] : memref<128x128xf32, #tpu.memory_space<vmem>>, vector<128x128xf32>
      tpu.vector_store %arg14[%c0_108, %c0_109], %229 {strides = array<i32>} : memref<128x128xf32, #tpu.memory_space<vmem>>, vector<128x128xf32>,
    } else {
    }
    %c0 = arith.constant 0 : index
    %c0_1 = arith.constant 0 : index
    %c0_2 = arith.constant 0 : index
    %3 = vector.load %arg2[%c0, %c0_1, %c0_2] : memref<1x128x128xf32, #tpu.memory_space<vmem>>, vector<1x128x128xf32>
    %4 = vector.shape_cast %3 : vector<1x128x128xf32> to vector<128x128xf32>
    %c0_3 = arith.constant 0 : index
    %c0_4 = arith.constant 0 : index
    %5 = vector.load %arg5[%c0_3, %c0_4] : memref<8x128xf32, #tpu.memory_space<vmem>>, vector<1x128xf32>
    %6 = vector.shape_cast %5 : vector<1x128xf32> to vector<128xf32>
    %c1 = arith.constant 1 : index
    %c0_5 = arith.constant 0 : index
    %7 = vector.load %arg5[%c1, %c0_5] : memref<8x128xf32, #tpu.memory_space<vmem>>, vector<1x128xf32>
    %8 = vector.shape_cast %7 : vector<1x128xf32> to vector<128xf32>
    %cst = arith.constant dense<0.000000e+00> : vector<128xf32>
    %9 = vector.multi_reduction <add>, %4, %cst [1] : vector<128x128xf32> to vector<128xf32>
    %10 = vector.shape_cast %9 : vector<128xf32> to vector<128x1xf32>
    %cst_6 = arith.constant 1.280000e+02 : f32
    %11 = vector.broadcast %cst_6 : f32 to vector<128x1xf32>
    %12 = arith.divf %10, %11 : vector<128x1xf32>
    %13 = vector.broadcast %12 : vector<128x1xf32> to vector<128x128xf32>
    %14 = arith.subf %4, %13 : vector<128x128xf32>
    %15 = arith.mulf %14, %14 : vector<128x128xf32>
    %cst_7 = arith.constant dense<0.000000e+00> : vector<128xf32>
    %16 = vector.multi_reduction <add>, %15, %cst_7 [1] : vector<128x128xf32> to vector<128xf32>
    %17 = vector.shape_cast %16 : vector<128xf32> to vector<128x1xf32>
    %cst_8 = arith.constant 1.280000e+02 : f32
    %18 = vector.broadcast %cst_8 : f32 to vector<128x1xf32>
    %19 = arith.divf %17, %18 : vector<128x1xf32>
    %20 = vector.broadcast %12 : vector<128x1xf32> to vector<128x128xf32>
    %21 = arith.subf %4, %20 : vector<128x128xf32>
    %cst_9 = arith.constant 9.99999974E-6 : f32
    %22 = vector.broadcast %cst_9 : f32 to vector<128x1xf32>
    %23 = arith.addf %19, %22 : vector<128x1xf32>
    %24 = math.rsqrt %23 : vector<128x1xf32>
    %25 = vector.broadcast %24 : vector<128x1xf32> to vector<128x128xf32>
    %26 = arith.mulf %21, %25 : vector<128x128xf32>
    %27 = vector.shape_cast %6 : vector<128xf32> to vector<1x128xf32>
    %28 = vector.broadcast %27 : vector<1x128xf32> to vector<128x128xf32>
    %29 = arith.mulf %26, %28 : vector<128x128xf32>
    %30 = vector.shape_cast %8 : vector<128xf32> to vector<1x128xf32>
    %31 = vector.broadcast %30 : vector<1x128xf32> to vector<128x128xf32>
    %32 = arith.addf %29, %31 : vector<128x128xf32>
    %cst_10 = arith.constant 0.176776692 : f32
    %33 = vector.broadcast %cst_10 : f32 to vector<128x128xf32>
    %34 = arith.mulf %32, %33 : vector<128x128xf32>
    %c0_11 = arith.constant 0 : index
    %c0_12 = arith.constant 0 : index
    %c0_13 = arith.constant 0 : index
    %35 = vector.load %arg7[%c0_11, %c0_12, %c0_13] : memref<3x128x128xf32, #tpu.memory_space<vmem>>, vector<1x128x128xf32>
    %36 = vector.shape_cast %35 : vector<1x128x128xf32> to vector<128x128xf32>
    %cst_14 = arith.constant dense<0.000000e+00> : vector<128x128xf32>
    %37 = tpu.matmul %34, %36, %cst_14 {dimension_numbers = #tpu.dot_dimension_numbers<[1], [0], [0], [1], [0, 0, 1, 1], [], []>} : vector<128x128xf32>, vector<128x128xf32>, vector<128x128xf32> -> vector<128x128xf32>
    %c0_15 = arith.constant 0 : index
    %c0_16 = arith.constant 0 : index
    %c0_17 = arith.constant 0 : index
    %38 = vector.load %arg4[%c0_15, %c0_16, %c0_17] : memref<1x128x128xi8, #tpu.memory_space<vmem>>, vector<1x128x128xi8>
    %39 = vector.shape_cast %38 : vector<1x128x128xi8> to vector<128x128xi8>
    %40 = arith.sitofp %39 : vector<128x128xi8> to vector<128x128xf32>
    %cst_18 = arith.constant 0.000000e+00 : f32
    %41 = vector.broadcast %cst_18 : f32 to vector<128x128xf32>
    %42 = arith.cmpf oeq, %40, %41 : vector<128x128xf32>
    %cst_19 = arith.constant -1.000000e+08 : f32
    %cst_20 = arith.constant 0.000000e+00 : f32
    %43 = vector.broadcast %cst_19 : f32 to vector<128x128xf32>
    %44 = vector.broadcast %cst_20 : f32 to vector<128x128xf32>
    %45 = arith.select %42, %43, %44 : vector<128x128xi1>, vector<128x128xf32>
    %c0_21 = arith.constant 0 : index
    %c0_22 = arith.constant 0 : index
    %46 = vector.load %arg13[%c0_21, %c0_22] : memref<128x128xf32, #tpu.memory_space<vmem>>, vector<128x128xf32>
    %c0_23 = arith.constant 0 : index
    %c0_24 = arith.constant 0 : index
    %47 = vector.load %arg14[%c0_23, %c0_24] : memref<128x128xf32, #tpu.memory_space<vmem>>, vector<128x128xf32>
    %cst_25 = arith.constant 0.000000e+00 : f32
    %48 = vector.broadcast %cst_25 : f32 to vector<128x128xf32>
    %49 = vector.extract_strided_slice %37 {offsets = [0, 0], sizes = [128, 32], strides = [1, 1]} : vector<128x128xf32> to vector<128x32xf32>
    %50 = vector.extract_strided_slice %46 {offsets = [0, 0], sizes = [128, 32], strides = [1, 1]} : vector<128x128xf32> to vector<128x32xf32>
    %51 = vector.extract_strided_slice %47 {offsets = [0, 0], sizes = [128, 32], strides = [1, 1]} : vector<128x128xf32> to vector<128x32xf32>
    %cst_26 = arith.constant dense<0.000000e+00> : vector<128x128xf32>
    %52 = tpu.matmul %49, %50, %cst_26 {dimension_numbers = #tpu.dot_dimension_numbers<[1], [1], [0], [0], [0, 0, 1, 0], [], []>} : vector<128x32xf32>, vector<128x32xf32>, vector<128x128xf32> -> vector<128x128xf32>
    %53 = arith.addf %52, %45 : vector<128x128xf32>
    %cst_27 = arith.constant dense<0xFF800000> : vector<128xf32>
    %54 = vector.multi_reduction <maximumf>, %53, %cst_27 [1] : vector<128x128xf32> to vector<128xf32>
    %55 = vector.shape_cast %54 : vector<128xf32> to vector<128x1xf32>
    %56 = vector.broadcast %55 : vector<128x1xf32> to vector<128x128xf32>
    %57 = arith.subf %53, %56 : vector<128x128xf32>
    %58 = math.exp %57 : vector<128x128xf32>
    %cst_28 = arith.constant dense<0.000000e+00> : vector<128xf32>
    %59 = vector.multi_reduction <add>, %58, %cst_28 [1] : vector<128x128xf32> to vector<128xf32>
    %60 = vector.shape_cast %59 : vector<128xf32> to vector<128x1xf32>
    %61 = tpu.reciprocal %60 : vector<128x1xf32> -> vector<128x1xf32>
    %62 = vector.broadcast %61 : vector<128x1xf32> to vector<128x128xf32>
    %63 = arith.mulf %58, %62 : vector<128x128xf32>
    %64 = arith.truncf %63 : vector<128x128xf32> to vector<128x128xbf16>
    %c0_29 = arith.constant 0 : index
    %c0_30 = arith.constant 0 : index
    %c0_31 = arith.constant 0 : index
    %c0_32 = arith.constant 0 : index
    %65 = vector.load %arg12[%c0_29, %c0_30, %c0_31, %c0_32] : memref<4x1x128x128xbf16, #tpu.memory_space<vmem>>, vector<1x1x128x128xbf16>
    %66 = vector.shape_cast %65 : vector<1x1x128x128xbf16> to vector<128x128xbf16>
    %67 = vector.shape_cast %64 : vector<128x128xbf16> to vector<1x1x128x128xbf16>
    tpu.vector_store %arg12[%c0_29, %c0_30, %c0_31, %c0_32], %67 {strides = array<i32>} : memref<4x1x128x128xbf16, #tpu.memory_space<vmem>>, vector<1x1x128x128xbf16>,
    %cst_33 = arith.constant dense<0.000000e+00> : vector<128x32xf32>
    %68 = tpu.matmul %63, %51, %cst_33 {dimension_numbers = #tpu.dot_dimension_numbers<[1], [0], [0], [1], [0, 0, 1, 1], [], []>} : vector<128x128xf32>, vector<128x32xf32>, vector<128x32xf32> -> vector<128x32xf32>
    %c0_34 = arith.constant 0 : index
    %c0_35 = arith.constant 0 : index
    %69 = vector.load %arg8[%c0_34, %c0_35] : memref<128x128xf32, #tpu.memory_space<vmem>>, vector<32x128xf32>
    %cst_36 = arith.constant dense<0.000000e+00> : vector<128x128xf32>
    %70 = tpu.matmul %68, %69, %cst_36 {dimension_numbers = #tpu.dot_dimension_numbers<[1], [0], [0], [1], [0, 0, 1, 1], [], []>} : vector<128x32xf32>, vector<32x128xf32>, vector<128x128xf32> -> vector<128x128xf32>
    %71 = arith.addf %48, %70 : vector<128x128xf32>
    %72 = vector.extract_strided_slice %37 {offsets = [0, 32], sizes = [128, 32], strides = [1, 1]} : vector<128x128xf32> to vector<128x32xf32>
    %73 = vector.extract_strided_slice %46 {offsets = [0, 32], sizes = [128, 32], strides = [1, 1]} : vector<128x128xf32> to vector<128x32xf32>
    %74 = vector.extract_strided_slice %47 {offsets = [0, 32], sizes = [128, 32], strides = [1, 1]} : vector<128x128xf32> to vector<128x32xf32>
    %cst_37 = arith.constant dense<0.000000e+00> : vector<128x128xf32>
    %75 = tpu.matmul %72, %73, %cst_37 {dimension_numbers = #tpu.dot_dimension_numbers<[1], [1], [0], [0], [0, 0, 1, 0], [], []>} : vector<128x32xf32>, vector<128x32xf32>, vector<128x128xf32> -> vector<128x128xf32>
    %76 = arith.addf %75, %45 : vector<128x128xf32>
    %cst_38 = arith.constant dense<0xFF800000> : vector<128xf32>
    %77 = vector.multi_reduction <maximumf>, %76, %cst_38 [1] : vector<128x128xf32> to vector<128xf32>
    %78 = vector.shape_cast %77 : vector<128xf32> to vector<128x1xf32>
    %79 = vector.broadcast %78 : vector<128x1xf32> to vector<128x128xf32>
    %80 = arith.subf %76, %79 : vector<128x128xf32>
    %81 = math.exp %80 : vector<128x128xf32>
    %cst_39 = arith.constant dense<0.000000e+00> : vector<128xf32>
    %82 = vector.multi_reduction <add>, %81, %cst_39 [1] : vector<128x128xf32> to vector<128xf32>
    %83 = vector.shape_cast %82 : vector<128xf32> to vector<128x1xf32>
    %84 = tpu.reciprocal %83 : vector<128x1xf32> -> vector<128x1xf32>
    %85 = vector.broadcast %84 : vector<128x1xf32> to vector<128x128xf32>
    %86 = arith.mulf %81, %85 : vector<128x128xf32>
    %87 = arith.truncf %86 : vector<128x128xf32> to vector<128x128xbf16>
    %c1_40 = arith.constant 1 : index
    %c0_41 = arith.constant 0 : index
    %c0_42 = arith.constant 0 : index
    %c0_43 = arith.constant 0 : index
    %88 = vector.load %arg12[%c1_40, %c0_41, %c0_42, %c0_43] : memref<4x1x128x128xbf16, #tpu.memory_space<vmem>>, vector<1x1x128x128xbf16>
    %89 = vector.shape_cast %88 : vector<1x1x128x128xbf16> to vector<128x128xbf16>
    %90 = vector.shape_cast %87 : vector<128x128xbf16> to vector<1x1x128x128xbf16>
    tpu.vector_store %arg12[%c1_40, %c0_41, %c0_42, %c0_43], %90 {strides = array<i32>} : memref<4x1x128x128xbf16, #tpu.memory_space<vmem>>, vector<1x1x128x128xbf16>,
    %cst_44 = arith.constant dense<0.000000e+00> : vector<128x32xf32>
    %91 = tpu.matmul %86, %74, %cst_44 {dimension_numbers = #tpu.dot_dimension_numbers<[1], [0], [0], [1], [0, 0, 1, 1], [], []>} : vector<128x128xf32>, vector<128x32xf32>, vector<128x32xf32> -> vector<128x32xf32>
    %c32 = arith.constant 32 : index
    %c0_45 = arith.constant 0 : index
    %92 = vector.load %arg8[%c32, %c0_45] : memref<128x128xf32, #tpu.memory_space<vmem>>, vector<32x128xf32>
    %cst_46 = arith.constant dense<0.000000e+00> : vector<128x128xf32>
    %93 = tpu.matmul %91, %92, %cst_46 {dimension_numbers = #tpu.dot_dimension_numbers<[1], [0], [0], [1], [0, 0, 1, 1], [], []>} : vector<128x32xf32>, vector<32x128xf32>, vector<128x128xf32> -> vector<128x128xf32>
    %94 = arith.addf %71, %93 : vector<128x128xf32>
    %95 = vector.extract_strided_slice %37 {offsets = [0, 64], sizes = [128, 32], strides = [1, 1]} : vector<128x128xf32> to vector<128x32xf32>
    %96 = vector.extract_strided_slice %46 {offsets = [0, 64], sizes = [128, 32], strides = [1, 1]} : vector<128x128xf32> to vector<128x32xf32>
    %97 = vector.extract_strided_slice %47 {offsets = [0, 64], sizes = [128, 32], strides = [1, 1]} : vector<128x128xf32> to vector<128x32xf32>
    %cst_47 = arith.constant dense<0.000000e+00> : vector<128x128xf32>
    %98 = tpu.matmul %95, %96, %cst_47 {dimension_numbers = #tpu.dot_dimension_numbers<[1], [1], [0], [0], [0, 0, 1, 0], [], []>} : vector<128x32xf32>, vector<128x32xf32>, vector<128x128xf32> -> vector<128x128xf32>
    %99 = arith.addf %98, %45 : vector<128x128xf32>
    %cst_48 = arith.constant dense<0xFF800000> : vector<128xf32>
    %100 = vector.multi_reduction <maximumf>, %99, %cst_48 [1] : vector<128x128xf32> to vector<128xf32>
    %101 = vector.shape_cast %100 : vector<128xf32> to vector<128x1xf32>
    %102 = vector.broadcast %101 : vector<128x1xf32> to vector<128x128xf32>
    %103 = arith.subf %99, %102 : vector<128x128xf32>
    %104 = math.exp %103 : vector<128x128xf32>
    %cst_49 = arith.constant dense<0.000000e+00> : vector<128xf32>
    %105 = vector.multi_reduction <add>, %104, %cst_49 [1] : vector<128x128xf32> to vector<128xf32>
    %106 = vector.shape_cast %105 : vector<128xf32> to vector<128x1xf32>
    %107 = tpu.reciprocal %106 : vector<128x1xf32> -> vector<128x1xf32>
    %108 = vector.broadcast %107 : vector<128x1xf32> to vector<128x128xf32>
    %109 = arith.mulf %104, %108 : vector<128x128xf32>
    %110 = arith.truncf %109 : vector<128x128xf32> to vector<128x128xbf16>
    %c2 = arith.constant 2 : index
    %c0_50 = arith.constant 0 : index
    %c0_51 = arith.constant 0 : index
    %c0_52 = arith.constant 0 : index
    %111 = vector.load %arg12[%c2, %c0_50, %c0_51, %c0_52] : memref<4x1x128x128xbf16, #tpu.memory_space<vmem>>, vector<1x1x128x128xbf16>
    %112 = vector.shape_cast %111 : vector<1x1x128x128xbf16> to vector<128x128xbf16>
    %113 = vector.shape_cast %110 : vector<128x128xbf16> to vector<1x1x128x128xbf16>
    tpu.vector_store %arg12[%c2, %c0_50, %c0_51, %c0_52], %113 {strides = array<i32>} : memref<4x1x128x128xbf16, #tpu.memory_space<vmem>>, vector<1x1x128x128xbf16>,
    %cst_53 = arith.constant dense<0.000000e+00> : vector<128x32xf32>
    %114 = tpu.matmul %109, %97, %cst_53 {dimension_numbers = #tpu.dot_dimension_numbers<[1], [0], [0], [1], [0, 0, 1, 1], [], []>} : vector<128x128xf32>, vector<128x32xf32>, vector<128x32xf32> -> vector<128x32xf32>
    %c64 = arith.constant 64 : index
    %c0_54 = arith.constant 0 : index
    %115 = vector.load %arg8[%c64, %c0_54] : memref<128x128xf32, #tpu.memory_space<vmem>>, vector<32x128xf32>
    %cst_55 = arith.constant dense<0.000000e+00> : vector<128x128xf32>
    %116 = tpu.matmul %114, %115, %cst_55 {dimension_numbers = #tpu.dot_dimension_numbers<[1], [0], [0], [1], [0, 0, 1, 1], [], []>} : vector<128x32xf32>, vector<32x128xf32>, vector<128x128xf32> -> vector<128x128xf32>
    %117 = arith.addf %94, %116 : vector<128x128xf32>
    %118 = vector.extract_strided_slice %37 {offsets = [0, 96], sizes = [128, 32], strides = [1, 1]} : vector<128x128xf32> to vector<128x32xf32>
    %119 = vector.extract_strided_slice %46 {offsets = [0, 96], sizes = [128, 32], strides = [1, 1]} : vector<128x128xf32> to vector<128x32xf32>
    %120 = vector.extract_strided_slice %47 {offsets = [0, 96], sizes = [128, 32], strides = [1, 1]} : vector<128x128xf32> to vector<128x32xf32>
    %cst_56 = arith.constant dense<0.000000e+00> : vector<128x128xf32>
    %121 = tpu.matmul %118, %119, %cst_56 {dimension_numbers = #tpu.dot_dimension_numbers<[1], [1], [0], [0], [0, 0, 1, 0], [], []>} : vector<128x32xf32>, vector<128x32xf32>, vector<128x128xf32> -> vector<128x128xf32>
    %122 = arith.addf %121, %45 : vector<128x128xf32>
    %cst_57 = arith.constant dense<0xFF800000> : vector<128xf32>
    %123 = vector.multi_reduction <maximumf>, %122, %cst_57 [1] : vector<128x128xf32> to vector<128xf32>
    %124 = vector.shape_cast %123 : vector<128xf32> to vector<128x1xf32>
    %125 = vector.broadcast %124 : vector<128x1xf32> to vector<128x128xf32>
    %126 = arith.subf %122, %125 : vector<128x128xf32>
    %127 = math.exp %126 : vector<128x128xf32>
    %cst_58 = arith.constant dense<0.000000e+00> : vector<128xf32>
    %128 = vector.multi_reduction <add>, %127, %cst_58 [1] : vector<128x128xf32> to vector<128xf32>
    %129 = vector.shape_cast %128 : vector<128xf32> to vector<128x1xf32>
    %130 = tpu.reciprocal %129 : vector<128x1xf32> -> vector<128x1xf32>
    %131 = vector.broadcast %130 : vector<128x1xf32> to vector<128x128xf32>
    %132 = arith.mulf %127, %131 : vector<128x128xf32>
    %133 = arith.truncf %132 : vector<128x128xf32> to vector<128x128xbf16>
    %c3 = arith.constant 3 : index
    %c0_59 = arith.constant 0 : index
    %c0_60 = arith.constant 0 : index
    %c0_61 = arith.constant 0 : index
    %134 = vector.load %arg12[%c3, %c0_59, %c0_60, %c0_61] : memref<4x1x128x128xbf16, #tpu.memory_space<vmem>>, vector<1x1x128x128xbf16>
    %135 = vector.shape_cast %134 : vector<1x1x128x128xbf16> to vector<128x128xbf16>
    %136 = vector.shape_cast %133 : vector<128x128xbf16> to vector<1x1x128x128xbf16>
    tpu.vector_store %arg12[%c3, %c0_59, %c0_60, %c0_61], %136 {strides = array<i32>} : memref<4x1x128x128xbf16, #tpu.memory_space<vmem>>, vector<1x1x128x128xbf16>,
    %cst_62 = arith.constant dense<0.000000e+00> : vector<128x32xf32>
    %137 = tpu.matmul %132, %120, %cst_62 {dimension_numbers = #tpu.dot_dimension_numbers<[1], [0], [0], [1], [0, 0, 1, 1], [], []>} : vector<128x128xf32>, vector<128x32xf32>, vector<128x32xf32> -> vector<128x32xf32>
    %c96 = arith.constant 96 : index
    %c0_63 = arith.constant 0 : index
    %138 = vector.load %arg8[%c96, %c0_63] : memref<128x128xf32, #tpu.memory_space<vmem>>, vector<32x128xf32>
    %cst_64 = arith.constant dense<0.000000e+00> : vector<128x128xf32>
    %139 = tpu.matmul %137, %138, %cst_64 {dimension_numbers = #tpu.dot_dimension_numbers<[1], [0], [0], [1], [0, 0, 1, 1], [], []>} : vector<128x32xf32>, vector<32x128xf32>, vector<128x128xf32> -> vector<128x128xf32>
    %140 = arith.addf %117, %139 : vector<128x128xf32>
    %141 = arith.addf %140, %4 : vector<128x128xf32>
    %c4 = arith.constant 4 : index
    %c0_65 = arith.constant 0 : index
    %142 = vector.load %arg5[%c4, %c0_65] : memref<8x128xf32, #tpu.memory_space<vmem>>, vector<1x128xf32>
    %143 = vector.shape_cast %142 : vector<1x128xf32> to vector<128xf32>
    %c5 = arith.constant 5 : index
    %c0_66 = arith.constant 0 : index
    %144 = vector.load %arg5[%c5, %c0_66] : memref<8x128xf32, #tpu.memory_space<vmem>>, vector<1x128xf32>
    %145 = vector.shape_cast %144 : vector<1x128xf32> to vector<128xf32>
    %cst_67 = arith.constant dense<0.000000e+00> : vector<128xf32>
    %146 = vector.multi_reduction <add>, %141, %cst_67 [1] : vector<128x128xf32> to vector<128xf32>
    %147 = vector.shape_cast %146 : vector<128xf32> to vector<128x1xf32>
    %cst_68 = arith.constant 1.280000e+02 : f32
    %148 = vector.broadcast %cst_68 : f32 to vector<128x1xf32>
    %149 = arith.divf %147, %148 : vector<128x1xf32>
    %150 = vector.broadcast %149 : vector<128x1xf32> to vector<128x128xf32>
    %151 = arith.subf %141, %150 : vector<128x128xf32>
    %152 = arith.mulf %151, %151 : vector<128x128xf32>
    %cst_69 = arith.constant dense<0.000000e+00> : vector<128xf32>
    %153 = vector.multi_reduction <add>, %152, %cst_69 [1] : vector<128x128xf32> to vector<128xf32>
    %154 = vector.shape_cast %153 : vector<128xf32> to vector<128x1xf32>
    %cst_70 = arith.constant 1.280000e+02 : f32
    %155 = vector.broadcast %cst_70 : f32 to vector<128x1xf32>
    %156 = arith.divf %154, %155 : vector<128x1xf32>
    %157 = vector.broadcast %149 : vector<128x1xf32> to vector<128x128xf32>
    %158 = arith.subf %141, %157 : vector<128x128xf32>
    %cst_71 = arith.constant 9.99999974E-6 : f32
    %159 = vector.broadcast %cst_71 : f32 to vector<128x1xf32>
    %160 = arith.addf %156, %159 : vector<128x1xf32>
    %161 = math.rsqrt %160 : vector<128x1xf32>
    %162 = vector.broadcast %161 : vector<128x1xf32> to vector<128x128xf32>
    %163 = arith.mulf %158, %162 : vector<128x128xf32>
    %164 = vector.shape_cast %143 : vector<128xf32> to vector<1x128xf32>
    %165 = vector.broadcast %164 : vector<1x128xf32> to vector<128x128xf32>
    %166 = arith.mulf %163, %165 : vector<128x128xf32>
    %167 = vector.shape_cast %145 : vector<128xf32> to vector<1x128xf32>
    %168 = vector.broadcast %167 : vector<1x128xf32> to vector<128x128xf32>
    %169 = arith.addf %166, %168 : vector<128x128xf32>
    %c0_72 = arith.constant 0 : index
    %c0_73 = arith.constant 0 : index
    %170 = vector.load %arg9[%c0_72, %c0_73] : memref<128x512xf32, #tpu.memory_space<vmem>>, vector<128x512xf32>
    %cst_74 = arith.constant dense<0.000000e+00> : vector<128x512xf32>
    %171 = tpu.matmul %169, %170, %cst_74 {dimension_numbers = #tpu.dot_dimension_numbers<[1], [0], [0], [1], [0, 0, 1, 1], [], []>} : vector<128x128xf32>, vector<128x512xf32>, vector<128x512xf32> -> vector<128x512xf32>
    %c0_75 = arith.constant 0 : index
    %c0_76 = arith.constant 0 : index
    %172 = vector.load %arg6[%c0_75, %c0_76] : memref<1x512xf32, #tpu.memory_space<vmem>>, vector<1x512xf32>
    %173 = vector.shape_cast %172 : vector<1x512xf32> to vector<512xf32>
    %174 = vector.shape_cast %173 : vector<512xf32> to vector<1x512xf32>
    %175 = vector.broadcast %174 : vector<1x512xf32> to vector<128x512xf32>
    %176 = arith.addf %171, %175 : vector<128x512xf32>
    %cst_77 = arith.constant 0.000000e+00 : f32
    %177 = vector.broadcast %cst_77 : f32 to vector<128x512xf32>
    %178 = arith.cmpf oge, %176, %177 : vector<128x512xf32>
    %cst_78 = arith.constant 0.00999999977 : f32
    %179 = vector.broadcast %cst_78 : f32 to vector<128x512xf32>
    %180 = arith.mulf %179, %176 : vector<128x512xf32>
    %181 = arith.select %178, %176, %180 : vector<128x512xi1>, vector<128x512xf32>
    %c0_79 = arith.constant 0 : index
    %c0_80 = arith.constant 0 : index
    %182 = vector.load %arg10[%c0_79, %c0_80] : memref<512x128xf32, #tpu.memory_space<vmem>>, vector<512x128xf32>
    %cst_81 = arith.constant dense<0.000000e+00> : vector<128x128xf32>
    %183 = tpu.matmul %181, %182, %cst_81 {dimension_numbers = #tpu.dot_dimension_numbers<[1], [0], [0], [1], [0, 0, 1, 1], [], []>} : vector<128x512xf32>, vector<512x128xf32>, vector<128x128xf32> -> vector<128x128xf32>
    %c6 = arith.constant 6 : index
    %c0_82 = arith.constant 0 : index
    %184 = vector.load %arg5[%c6, %c0_82] : memref<8x128xf32, #tpu.memory_space<vmem>>, vector<1x128xf32>
    %185 = vector.shape_cast %184 : vector<1x128xf32> to vector<128xf32>
    %186 = vector.shape_cast %185 : vector<128xf32> to vector<1x128xf32>
    %187 = vector.broadcast %186 : vector<1x128xf32> to vector<128x128xf32>
    %188 = arith.addf %183, %187 : vector<128x128xf32>
    %189 = arith.addf %188, %141 : vector<128x128xf32>
    %c0_83 = arith.constant 0 : index
    %c0_84 = arith.constant 0 : index
    %c0_85 = arith.constant 0 : index
    %190 = vector.load %arg11[%c0_83, %c0_84, %c0_85] : memref<1x128x128xf32, #tpu.memory_space<vmem>>, vector<1x128x128xf32>
    %191 = vector.shape_cast %190 : vector<1x128x128xf32> to vector<128x128xf32>
    %192 = vector.shape_cast %189 : vector<128x128xf32> to vector<1x128x128xf32>
    tpu.vector_store %arg11[%c0_83, %c0_84, %c0_85], %192 {strides = array<i32>} : memref<1x128x128xf32, #tpu.memory_space<vmem>>, vector<1x128x128xf32>,
    return
  }
  func.func @transform_0(%arg0: i32, %arg1: i32) -> (i32, i32, i32) {
    %c0_i32 = arith.constant 0 : i32
    %c0_i32_0 = arith.constant 0 : i32
    return %arg0, %arg1, %c0_i32 : i32, i32, i32
  }
  func.func @transform_1(%arg0: i32, %arg1: i32) -> (i32, i32, i32) {
    %c0_i32 = arith.constant 0 : i32
    %c0_i32_0 = arith.constant 0 : i32
    %c0_i32_1 = arith.constant 0 : i32
    return %arg0, %c0_i32, %c0_i32_0 : i32, i32, i32
  }
  func.func @transform_2(%arg0: i32, %arg1: i32) -> (i32, i32, i32) {
    %c0_i32 = arith.constant 0 : i32
    %c0_i32_0 = arith.constant 0 : i32
    return %arg0, %arg1, %c0_i32 : i32, i32, i32
  }
  func.func @transform_3(%arg0: i32, %arg1: i32) -> (i32, i32) {
    %c0_i32 = arith.constant 0 : i32
    %c0_i32_0 = arith.constant 0 : i32
    %c0_i32_1 = arith.constant 0 : i32
    return %c0_i32, %c0_i32_0 : i32, i32
  }
  func.func @transform_4(%arg0: i32, %arg1: i32) -> (i32, i32) {
    %c0_i32 = arith.constant 0 : i32
    %c0_i32_0 = arith.constant 0 : i32
    %c0_i32_1 = arith.constant 0 : i32
    return %c0_i32, %c0_i32_0 : i32, i32
  }
  func.func @transform_5(%arg0: i32, %arg1: i32) -> (i32, i32, i32) {
    %c0_i32 = arith.constant 0 : i32
    %c0_i32_0 = arith.constant 0 : i32
    %c0_i32_1 = arith.constant 0 : i32
    %c0_i32_2 = arith.constant 0 : i32
    return %c0_i32, %c0_i32_0, %c0_i32_1 : i32, i32, i32
  }
  func.func @transform_6(%arg0: i32, %arg1: i32) -> (i32, i32) {
    %c0_i32 = arith.constant 0 : i32
    %c0_i32_0 = arith.constant 0 : i32
    %c0_i32_1 = arith.constant 0 : i32
    return %c0_i32, %c0_i32_0 : i32, i32
  }
  func.func @transform_7(%arg0: i32, %arg1: i32) -> (i32, i32) {
    %c0_i32 = arith.constant 0 : i32
    %c0_i32_0 = arith.constant 0 : i32
    %c0_i32_1 = arith.constant 0 : i32
    return %c0_i32, %c0_i32_0 : i32, i32
  }
  func.func @transform_8(%arg0: i32, %arg1: i32) -> (i32, i32) {
    %c0_i32 = arith.constant 0 : i32
    %c0_i32_0 = arith.constant 0 : i32
    %c0_i32_1 = arith.constant 0 : i32
    return %c0_i32, %c0_i32_0 : i32, i32
  }
  func.func @transform_9(%arg0: i32, %arg1: i32) -> (i32, i32, i32) {
    %c0_i32 = arith.constant 0 : i32
    %c0_i32_0 = arith.constant 0 : i32
    return %arg0, %arg1, %c0_i32 : i32, i32, i32
  }
  func.func @transform_10(%arg0: i32, %arg1: i32) -> (i32, i32, i32, i32) {
    %c0_i32 = arith.constant 0 : i32
    %c0_i32_0 = arith.constant 0 : i32
    %c0_i32_1 = arith.constant 0 : i32
    return %c0_i32, %arg0, %arg1, %c0_i32_0 : i32, i32, i32, i32
  }
}

</mosaic_0001>

<llo_original>
// kernel: tpu_custom_call.1
$region0: #{tpu_custom_call.1}
  #allocation0 [shape = 'u32[]', space=smem, size = 0x4, offset = 0x4, fixed_abs, tag = 'smem constant byte address 0x4 - core index']
  #allocation1 [shape = 'u32[144,128]{1,0:T(1,128)}', space=vmem, size = 0x12000, scoped, tag = 'internal scratch']
  #allocation2 [shape = 'f32[128,128]{1,0:T(8,128)}', space=vmem, size = 0x10000, scoped, tag = 'scratch operand']
  #allocation3 [shape = 'f32[128,128]{1,0:T(8,128)}', space=vmem, size = 0x10000, scoped, tag = 'scratch operand']
  #allocation19 [shape = 's32[]', space=sflag, size = 0x4, offset = 0, fixed_abs, tag = 'sflag constant byte address 0x0 - dummy sync flag']
  %s0 = inlined_call_operand.hbm [shape: f32[2,128,128], index: 0, kind: input, shape index: {}]
  %s1 = inlined_call_operand.hbm [shape: f32[2,128,128], index: 1, kind: input, shape index: {}]
  %s2 = inlined_call_operand.hbm [shape: s8[2,128,128], index: 2, kind: input, shape index: {}]
  %s3 = inlined_call_operand.vmem [shape: f32[8,128], index: 3, kind: input, shape index: {}]
  %s4 = inlined_call_operand.vmem [shape: f32[1,512], index: 4, kind: input, shape index: {}]
  %s5 = inlined_call_operand.hbm [shape: f32[3,128,128], index: 5, kind: input, shape index: {}]
  %s6 = inlined_call_operand.hbm [shape: f32[128,128], index: 6, kind: input, shape index: {}]
  %s7 = inlined_call_operand.hbm [shape: f32[128,512], index: 7, kind: input, shape index: {}]
  %s8 = inlined_call_operand.hbm [shape: f32[512,128], index: 8, kind: input, shape index: {}]
  %s9 = inlined_call_operand.hbm [shape: f32[2,128,128], index: 9, kind: output, shape index: {0}]
  %s10 = inlined_call_operand.hbm [shape: bf16[4,2,128,128], index: 10, kind: output, shape index: {1}]
  %11 = xla_tuple %s9, %s10
  %s12 = sld [smem:[#allocation0]]
  $region109: #{tpu_custom_call.1} parent=0
    _
  %s14 = ssub.s32 1, %s12
  %s15 = scalar_select 0, %s14, %s12
  $region1: #{tpu_custom_call.1} parent=0
    #allocation4 [shape = 'u8[131072]{0}', space=vmem, size = 0x20000, scoped, tag = 'input window, operand 0']
    #allocation5 [shape = 's32[2]{0}', space=sflag, size = 0x8, scoped, tag = 'scoped memory for tpu_custom_call.1']
    #allocation6 [shape = 's32[2]{0}', space=sflag, size = 0x8, scoped, tag = 'scoped memory for tpu_custom_call.1']
    #allocation7 [shape = 'u8[131072]{0}', space=vmem, size = 0x20000, scoped, tag = 'input window, operand 1']
    #allocation8 [shape = 's32[2]{0}', space=sflag, size = 0x8, scoped, tag = 'scoped memory for tpu_custom_call.1']
    #allocation9 [shape = 'u8[32768]{0}', space=vmem, size = 0x8000, scoped, tag = 'input window, operand 2']
    #allocation10 [shape = 'u8[196608]{0}', space=vmem, size = 0x30000, scoped, tag = 'input window, operand 5, single buffered']
    #allocation11 [shape = 's32[1]{0}', space=sflag, size = 0x4, scoped, tag = 'scoped memory for tpu_custom_call.1']
    #allocation12 [shape = 'u8[65536]{0}', space=vmem, size = 0x10000, scoped, tag = 'input window, operand 6, single buffered']
    #allocation13 [shape = 'u8[262144]{0}', space=vmem, size = 0x40000, scoped, tag = 'input window, operand 7, single buffered']
    #allocation14 [shape = 's32[1]{0}', space=sflag, size = 0x4, scoped, tag = 'scoped memory for tpu_custom_call.1']
    #allocation15 [shape = 'u8[262144]{0}', space=vmem, size = 0x40000, scoped, tag = 'input window, operand 8, single buffered']
    #allocation16 [shape = 'u8[131072]{0}', space=vmem, size = 0x20000, scoped, tag = 'output window, operand 0']
    #allocation17 [shape = 'u8[262144]{0}', space=vmem, size = 0x40000, scoped, tag = 'output window, operand 1']
    #allocation18 [shape = 's32[2]{0}', space=sflag, size = 0x8, scoped, tag = 'scoped memory for tpu_custom_call.1']
    %16 = vsyncpa [#allocation5], 0
    %s17 = scalar_lea.sflag [#allocation5], 1
    %18 = vsyncpa %s17, 0
    %19 = vsyncpa [#allocation8], 0
    %s20 = scalar_lea.sflag [#allocation8], 1
    %21 = vsyncpa %s20, 0
    %22 = vsyncpa [#allocation11], 0
    %23 = vsyncpa [#allocation14], 0
    %24 = vsyncpa [#allocation6], 0
    %s25 = scalar_lea.sflag [#allocation6], 1
    %26 = vsyncpa %s25, 0
    %27 = vsyncpa [#allocation18], 0
    %s28 = scalar_lea.sflag [#allocation18], 1
    %29 = vsyncpa %s28, 0
    loop: start=0, step=1, limit=4
    $region2: #{tpu_custom_call.1} parent=1 // loop_pre_header
      _
    $region3: #{tpu_custom_call.1} parent=1 // loop_header
      %s31 = sphi 0, %s35
      %p32 = scmp.ge.s32.totalorder %s31, 4
      %s38 = sphi 0, %s50
      %s39 = sphi 0, %s46
      %s40 = sphi 0, %s38
      %s41 = sphi 0, %s39
      %s42 = sphi 0, %s40
      %s43 = sphi 0, %s41
      %s55 = sphi 0, %s57
      %s58 = sphi 0, %s55
      %s59 = sphi 0, %s58
      %s75 = sphi 0, %s59
      %s81 = sphi 0, %s83
      %s84 = sphi 0, %s81
      %s85 = sphi 0, %s84
      %s101 = sphi 0, %s85
      %s109 = sphi 0, %s111
      %s112 = sphi 0, %s109
      %s113 = sphi 0, %s112
      %s129 = sphi 0, %s113
      %s133 = sphi 0, %s133
      %s135 = sphi 0, %s133
      %s136 = sphi 0, %s135
      %s150 = sphi 0, %s136
      %s154 = sphi 0, %s154
      %s156 = sphi 0, %s154
      %s157 = sphi 0, %s156
      %s171 = sphi 0, %s157
      %s175 = sphi 0, %s175
      %s177 = sphi 0, %s175
      %s178 = sphi 0, %s177
      %s192 = sphi 0, %s178
      %s196 = sphi 0, %s196
      %s198 = sphi 0, %s196
      %s199 = sphi 0, %s198
      %s213 = sphi 0, %s199
      %s217 = sphi 0, %s217
      %s219 = sphi 0, %s217
      %s220 = sphi 0, %s219
      %s234 = sphi 0, %s220
      %s238 = sphi 0, %s238
      %s240 = sphi 0, %s238
      %s241 = sphi 0, %s240
      %s255 = sphi 0, %s241
      %s263 = sphi 0, %s265
      %s266 = sphi 0, %s263
      %s267 = sphi 0, %s266
      %s283 = sphi 0, %s267
      %s291 = sphi 0, %s293
      %s294 = sphi 0, %s291
      %s295 = sphi 0, %s294
      %s311 = sphi 0, %s295
    $region4: #{tpu_custom_call.1} parent=1 // loop_header_branch
      %34 = sbr.rel (%p32) target = $region8
    $region5: #{tpu_custom_call.1} parent=1 // loop_body
      %s36 = ssub.s32 %s31, 1
      %s37 = ssub.s32 %s31, 2
      %s44 = sadd.s32 1, %s39
      %p45 = scmp.ge.s32.totalorder %s44, 1
      %s46 = scalar_select %p45, 0, %s44
      %s47 = sadd.s32 1, %s38
      %s48 = scalar_select %p45, %s47, %s38
      %p49 = scmp.ge.s32.totalorder %s48, 2
      %s50 = scalar_select %p49, 0, %s48
      %s51 = ssub.s32 %s38, %s50
      %s52 = ssub.s32 %s39, %s46
      %s53 = sor.u32 %s51, %s52
      %p54 = scmp.eq.s32.totalorder %s53, 0
      %s56 = sadd.s32 %s55, 1
      %s57 = scalar_select %p54, %s55, %s56
      %p60 = pneg %p54
      %p61 = scmp.eq.s32.totalorder %s31, 1
      %p62 = por %p60, %p61
      %p63 = scmp.ne.s32.totalorder %s55, %s58
      %p64 = scmp.eq.s32.totalorder %s31, 0
      %p65 = por %p63, %p64
      %p66 = scmp.ne.s32.totalorder %s55, %s58
      %p67 = scmp.eq.s32.totalorder %s36, 1
      %p68 = por %p66, %p67
      %p69 = scmp.ne.s32.totalorder %s58, %s59
      %p70 = scmp.eq.s32.totalorder %s36, 0
      %p71 = por %p69, %p70
      %p72 = scmp.ne.s32.totalorder %s58, %s59
      %p73 = scmp.eq.s32.totalorder %s37, 1
      %p74 = por %p72, %p73
      %p76 = scmp.ne.s32.totalorder %s59, %s75
      %p77 = scmp.eq.s32.totalorder %s37, 0
      %p78 = por %p76, %p77
      %s79 = ssub.s32 %s38, %s50
      %p80 = scmp.eq.s32.totalorder %s79, 0
      %s82 = sadd.s32 %s81, 1
      %s83 = scalar_select %p80, %s81, %s82
      %p86 = pneg %p80
      %p87 = scmp.eq.s32.totalorder %s31, 1
      %p88 = por %p86, %p87
      %p89 = scmp.ne.s32.totalorder %s81, %s84
      %p90 = scmp.eq.s32.totalorder %s31, 0
      %p91 = por %p89, %p90
      %p92 = scmp.ne.s32.totalorder %s81, %s84
      %p93 = scmp.eq.s32.totalorder %s36, 1
      %p94 = por %p92, %p93
      %p95 = scmp.ne.s32.totalorder %s84, %s85
      %p96 = scmp.eq.s32.totalorder %s36, 0
      %p97 = por %p95, %p96
      %p98 = scmp.ne.s32.totalorder %s84, %s85
      %p99 = scmp.eq.s32.totalorder %s37, 1
      %p100 = por %p98, %p99
      %p102 = scmp.ne.s32.totalorder %s85, %s101
      %p103 = scmp.eq.s32.totalorder %s37, 0
      %p104 = por %p102, %p103
      %s105 = ssub.s32 %s38, %s50
      %s106 = ssub.s32 %s39, %s46
      %s107 = sor.u32 %s105, %s106
      %p108 = scmp.eq.s32.totalorder %s107, 0
      %s110 = sadd.s32 %s109, 1
      %s111 = scalar_select %p108, %s109, %s110
      %p114 = pneg %p108
      %p115 = scmp.eq.s32.totalorder %s31, 1
      %p116 = por %p114, %p115
      %p117 = scmp.ne.s32.totalorder %s109, %s112
      %p118 = scmp.eq.s32.totalorder %s31, 0
      %p119 = por %p117, %p118
      %p120 = scmp.ne.s32.totalorder %s109, %s112
      %p121 = scmp.eq.s32.totalorder %s36, 1
      %p122 = por %p120, %p121
      %p123 = scmp.ne.s32.totalorder %s112, %s113
      %p124 = scmp.eq.s32.totalorder %s36, 0
      %p125 = por %p123, %p124
      %p126 = scmp.ne.s32.totalorder %s112, %s113
      %p127 = scmp.eq.s32.totalorder %s37, 1
      %p128 = por %p126, %p127
      %p130 = scmp.ne.s32.totalorder %s113, %s129
      %p131 = scmp.eq.s32.totalorder %s37, 0
      %p132 = por %p130, %p131
      %s134 = sadd.s32 %s133, 1
      %p137 = scmp.eq.s32.totalorder %s31, 1
      %p138 = scmp.ne.s32.totalorder %s133, %s135
      %p139 = scmp.eq.s32.totalorder %s31, 0
      %p140 = por %p138, %p139
      %p141 = scmp.ne.s32.totalorder %s133, %s135
      %p142 = scmp.eq.s32.totalorder %s36, 1
      %p143 = por %p141, %p142
      %p144 = scmp.ne.s32.totalorder %s135, %s136
      %p145 = scmp.eq.s32.totalorder %s36, 0
      %p146 = por %p144, %p145
      %p147 = scmp.ne.s32.totalorder %s135, %s136
      %p148 = scmp.eq.s32.totalorder %s37, 1
      %p149 = por %p147, %p148
      %p151 = scmp.ne.s32.totalorder %s136, %s150
      %p152 = scmp.eq.s32.totalorder %s37, 0
      %p153 = por %p151, %p152
      %s155 = sadd.s32 %s154, 1
      %p158 = scmp.eq.s32.totalorder %s31, 1
      %p159 = scmp.ne.s32.totalorder %s154, %s156
      %p160 = scmp.eq.s32.totalorder %s31, 0
      %p161 = por %p159, %p160
      %p162 = scmp.ne.s32.totalorder %s154, %s156
      %p163 = scmp.eq.s32.totalorder %s36, 1
      %p164 = por %p162, %p163
      %p165 = scmp.ne.s32.totalorder %s156, %s157
      %p166 = scmp.eq.s32.totalorder %s36, 0
      %p167 = por %p165, %p166
      %p168 = scmp.ne.s32.totalorder %s156, %s157
      %p169 = scmp.eq.s32.totalorder %s37, 1
      %p170 = por %p168, %p169
      %p172 = scmp.ne.s32.totalorder %s157, %s171
      %p173 = scmp.eq.s32.totalorder %s37, 0
      %p174 = por %p172, %p173
      %s176 = sadd.s32 %s175, 1
      %p179 = scmp.eq.s32.totalorder %s31, 1
      %p180 = scmp.ne.s32.totalorder %s175, %s177
      %p181 = scmp.eq.s32.totalorder %s31, 0
      %p182 = por %p180, %p181
      %p183 = scmp.ne.s32.totalorder %s175, %s177
      %p184 = scmp.eq.s32.totalorder %s36, 1
      %p185 = por %p183, %p184
      %p186 = scmp.ne.s32.totalorder %s177, %s178
      %p187 = scmp.eq.s32.totalorder %s36, 0
      %p188 = por %p186, %p187
      %p189 = scmp.ne.s32.totalorder %s177, %s178
      %p190 = scmp.eq.s32.totalorder %s37, 1
      %p191 = por %p189, %p190
      %p193 = scmp.ne.s32.totalorder %s178, %s192
      %p194 = scmp.eq.s32.totalorder %s37, 0
      %p195 = por %p193, %p194
      %s197 = sadd.s32 %s196, 1
      %p200 = scmp.eq.s32.totalorder %s31, 1
      %p201 = scmp.ne.s32.totalorder %s196, %s198
      %p202 = scmp.eq.s32.totalorder %s31, 0
      %p203 = por %p201, %p202
      %p204 = scmp.ne.s32.totalorder %s196, %s198
      %p205 = scmp.eq.s32.totalorder %s36, 1
      %p206 = por %p204, %p205
      %p207 = scmp.ne.s32.totalorder %s198, %s199
      %p208 = scmp.eq.s32.totalorder %s36, 0
      %p209 = por %p207, %p208
      %p210 = scmp.ne.s32.totalorder %s198, %s199
      %p211 = scmp.eq.s32.totalorder %s37, 1
      %p212 = por %p210, %p211
      %p214 = scmp.ne.s32.totalorder %s199, %s213
      %p215 = scmp.eq.s32.totalorder %s37, 0
      %p216 = por %p214, %p215
      %s218 = sadd.s32 %s217, 1
      %p221 = scmp.eq.s32.totalorder %s31, 1
      %p222 = scmp.ne.s32.totalorder %s217, %s219
      %p223 = scmp.eq.s32.totalorder %s31, 0
      %p224 = por %p222, %p223
      %p225 = scmp.ne.s32.totalorder %s217, %s219
      %p226 = scmp.eq.s32.totalorder %s36, 1
      %p227 = por %p225, %p226
      %p228 = scmp.ne.s32.totalorder %s219, %s220
      %p229 = scmp.eq.s32.totalorder %s36, 0
      %p230 = por %p228, %p229
      %p231 = scmp.ne.s32.totalorder %s219, %s220
      %p232 = scmp.eq.s32.totalorder %s37, 1
      %p233 = por %p231, %p232
      %p235 = scmp.ne.s32.totalorder %s220, %s234
      %p236 = scmp.eq.s32.totalorder %s37, 0
      %p237 = por %p235, %p236
      %s239 = sadd.s32 %s238, 1
      %p242 = scmp.eq.s32.totalorder %s31, 1
      %p243 = scmp.ne.s32.totalorder %s238, %s240
      %p244 = scmp.eq.s32.totalorder %s31, 0
      %p245 = por %p243, %p244
      %p246 = scmp.ne.s32.totalorder %s238, %s240
      %p247 = scmp.eq.s32.totalorder %s36, 1
      %p248 = por %p246, %p247
      %p249 = scmp.ne.s32.totalorder %s240, %s241
      %p250 = scmp.eq.s32.totalorder %s36, 0
      %p251 = por %p249, %p250
      %p252 = scmp.ne.s32.totalorder %s240, %s241
      %p253 = scmp.eq.s32.totalorder %s37, 1
      %p254 = por %p252, %p253
      %p256 = scmp.ne.s32.totalorder %s241, %s255
      %p257 = scmp.eq.s32.totalorder %s37, 0
      %p258 = por %p256, %p257
      %s259 = ssub.s32 %s38, %s50
      %s260 = ssub.s32 %s39, %s46
      %s261 = sor.u32 %s259, %s260
      %p262 = scmp.eq.s32.totalorder %s261, 0
      %s264 = sadd.s32 %s263, 1
      %s265 = scalar_select %p262, %s263, %s264
      %p268 = pneg %p262
      %p269 = scmp.eq.s32.totalorder %s31, 1
      %p270 = por %p268, %p269
      %p271 = scmp.ne.s32.totalorder %s263, %s266
      %p272 = scmp.eq.s32.totalorder %s31, 0
      %p273 = por %p271, %p272
      %p274 = scmp.ne.s32.totalorder %s263, %s266
      %p275 = scmp.eq.s32.totalorder %s36, 1
      %p276 = por %p274, %p275
      %p277 = scmp.ne.s32.totalorder %s266, %s267
      %p278 = scmp.eq.s32.totalorder %s36, 0
      %p279 = por %p277, %p278
      %p280 = scmp.ne.s32.totalorder %s266, %s267
      %p281 = scmp.eq.s32.totalorder %s37, 1
      %p282 = por %p280, %p281
      %p284 = scmp.ne.s32.totalorder %s267, %s283
      %p285 = scmp.eq.s32.totalorder %s37, 0
      %p286 = por %p284, %p285
      %s287 = ssub.s32 %s38, %s50
      %s288 = ssub.s32 %s39, %s46
      %s289 = sor.u32 %s287, %s288
      %p290 = scmp.eq.s32.totalorder %s289, 0
      %s292 = sadd.s32 %s291, 1
      %s293 = scalar_select %p290, %s291, %s292
      %p296 = pneg %p290
      %p297 = scmp.eq.s32.totalorder %s31, 1
      %p298 = por %p296, %p297
      %p299 = scmp.ne.s32.totalorder %s291, %s294
      %p300 = scmp.eq.s32.totalorder %s31, 0
      %p301 = por %p299, %p300
      %p302 = scmp.ne.s32.totalorder %s291, %s294
      %p303 = scmp.eq.s32.totalorder %s36, 1
      %p304 = por %p302, %p303
      %p305 = scmp.ne.s32.totalorder %s294, %s295
      %p306 = scmp.eq.s32.totalorder %s36, 0
      %p307 = por %p305, %p306
      %p308 = scmp.ne.s32.totalorder %s294, %s295
      %p309 = scmp.eq.s32.totalorder %s37, 1
      %p310 = por %p308, %p309
      %p312 = scmp.ne.s32.totalorder %s295, %s311
      %p313 = scmp.eq.s32.totalorder %s37, 0
      %p314 = por %p312, %p313
      %p315 = scmp.le.s32.totalorder 1, %s31
      %p316 = scmp.lt.s32.totalorder %s31, 3
      %p317 = pnand %p315, %p316
      %p318 = pneg %p317
      // Predicated region
      $region9: #{tpu_custom_call.1} parent=5 // pred_check
        _
      $region10: #{tpu_custom_call.1} parent=5 // pred_check_branch
        %320 = sbr.rel (%p317) target = $region12
      $region11: #{tpu_custom_call.1} parent=5 // pred_region
        %s321 = ssub.s32 %s31, 1
        // Predicated region
        $region13: #{tpu_custom_call.1} parent=11 // pred_check
          %p322 = pneg %p146
        $region14: #{tpu_custom_call.1} parent=11 // pred_check_branch
          %324 = sbr.rel (%p322) target = $region16
        $region15: #{tpu_custom_call.1} parent=11 // pred_region
          _
        $region16: #{tpu_custom_call.1} parent=11 // pred_fallthru
          _
        // Predicated region
        $region17: #{tpu_custom_call.1} parent=11 // pred_check
          %p325 = pneg %p167
        $region18: #{tpu_custom_call.1} parent=11 // pred_check_branch
          %327 = sbr.rel (%p325) target = $region20
        $region19: #{tpu_custom_call.1} parent=11 // pred_region
          _
        $region20: #{tpu_custom_call.1} parent=11 // pred_fallthru
          _
        // Predicated region
        $region21: #{tpu_custom_call.1} parent=11 // pred_check
          %p328 = pneg %p188
        $region22: #{tpu_custom_call.1} parent=11 // pred_check_branch
          %330 = sbr.rel (%p328) target = $region24
        $region23: #{tpu_custom_call.1} parent=11 // pred_region
          %s332 = ssub.s32 6144, 6144
          %333 = vsyncadd [#allocation11], %s332
          %s334 = sshll.u32 [#allocation10], 4
          %s335 = int_to_ptr.vmem [resolvable:$true] %s334
          %340 = dma.hbm_to_vmem [thread:$0]  %s5, 6144, %s335, [#allocation11], 128, 128, 8
        $region24: #{tpu_custom_call.1} parent=11 // pred_fallthru
          _
        // Predicated region
        $region25: #{tpu_custom_call.1} parent=11 // pred_check
          %p341 = pneg %p209
        $region26: #{tpu_custom_call.1} parent=11 // pred_check_branch
          %343 = sbr.rel (%p341) target = $region28
        $region27: #{tpu_custom_call.1} parent=11 // pred_region
          %s345 = ssub.s32 2048, 2048
          %346 = vsyncadd [#allocation11], %s345
          %s347 = sshll.u32 [#allocation12], 4
          %s348 = int_to_ptr.vmem [resolvable:$true] %s347
          %353 = dma.hbm_to_vmem [thread:$0]  %s6, 2048, %s348, [#allocation11], 128, 128, 8
        $region28: #{tpu_custom_call.1} parent=11 // pred_fallthru
          _
        // Predicated region
        $region29: #{tpu_custom_call.1} parent=11 // pred_check
          %p354 = pneg %p230
        $region30: #{tpu_custom_call.1} parent=11 // pred_check_branch
          %356 = sbr.rel (%p354) target = $region32
        $region31: #{tpu_custom_call.1} parent=11 // pred_region
          %s358 = ssub.s32 8192, 8192
          %359 = vsyncadd [#allocation14], %s358
          %s360 = sshll.u32 [#allocation13], 4
          %s361 = int_to_ptr.vmem [resolvable:$true] %s360
          %366 = dma.hbm_to_vmem [thread:$0]  %s7, 8192, %s361, [#allocation14], 512, 512, 32
        $region32: #{tpu_custom_call.1} parent=11 // pred_fallthru
          _
        // Predicated region
        $region33: #{tpu_custom_call.1} parent=11 // pred_check
          %p367 = pneg %p251
        $region34: #{tpu_custom_call.1} parent=11 // pred_check_branch
          %369 = sbr.rel (%p367) target = $region36
        $region35: #{tpu_custom_call.1} parent=11 // pred_region
          %s371 = ssub.s32 8192, 8192
          %372 = vsyncadd [#allocation14], %s371
          %s373 = sshll.u32 [#allocation15], 4
          %s374 = int_to_ptr.vmem [resolvable:$true] %s373
          %379 = dma.hbm_to_vmem [thread:$0]  %s8, 8192, %s374, [#allocation14], 128, 128, 8
        $region36: #{tpu_custom_call.1} parent=11 // pred_fallthru
          _
      $region12: #{tpu_custom_call.1} parent=5 // pred_fallthru
        _
      %p380 = scmp.lt.s32.totalorder %s31, 2
      // Predicated region
      $region37: #{tpu_custom_call.1} parent=5 // pred_check
        %p381 = pneg %p380
      $region38: #{tpu_custom_call.1} parent=5 // pred_check_branch
        %383 = sbr.rel (%p381) target = $region40
      $region39: #{tpu_custom_call.1} parent=5 // pred_region
        // Predicated region
        $region41: #{tpu_custom_call.1} parent=39 // pred_check
          %p384 = pneg %p65
        $region42: #{tpu_custom_call.1} parent=39 // pred_check_branch
          %386 = sbr.rel (%p384) target = $region44
        $region43: #{tpu_custom_call.1} parent=39 // pred_region
          %s387 = sand.u32 %s55, 1
          %s388 = scalar_lea.sflag [#allocation5], %s387
          %s389 = sand.u32 %s55, 1
          %s390 = smul.addr %s389, 128
          %s391 = scalar_lea.vmem [#allocation4], %s390
          %s392 = smul.u32 16, %s39
          %s394 = ssub.s32 2048, 2048
          %395 = vsyncadd %s388, %s394
          %s396 = smul.addr %s38, 16
          %s397 = sadd.s32 %s392, %s396
          %s398 = smul.addr %s397, 128
          %s399 = scalar_lea.hbm %s0, %s398
          %s400 = sshll.u32 %s391, 4
          %s401 = int_to_ptr.vmem [resolvable:$true] %s400
          %406 = dma.hbm_to_vmem [thread:$0]  %s399, 2048, %s401, %s388, 128, 128, 8
        $region44: #{tpu_custom_call.1} parent=39 // pred_fallthru
          _
        // Predicated region
        $region45: #{tpu_custom_call.1} parent=39 // pred_check
          %p407 = pneg %p91
        $region46: #{tpu_custom_call.1} parent=39 // pred_check_branch
          %409 = sbr.rel (%p407) target = $region48
        $region47: #{tpu_custom_call.1} parent=39 // pred_region
          %s410 = sand.u32 %s31, 1
          %s411 = scalar_lea.sflag [#allocation8], %s410
          %s412 = sand.u32 %s81, 1
          %s413 = smul.addr %s412, 128
          %s414 = scalar_lea.vmem [#allocation7], %s413
          %s416 = ssub.s32 2048, 2048
          %417 = vsyncadd %s411, %s416
          %s418 = smul.addr %s38, 16
          %s419 = smul.addr %s418, 128
          %s420 = scalar_lea.hbm %s1, %s419
          %s421 = sshll.u32 %s414, 4
          %s422 = int_to_ptr.vmem [resolvable:$true] %s421
          %427 = dma.hbm_to_vmem [thread:$0]  %s420, 2048, %s422, %s411, 128, 128, 8
        $region48: #{tpu_custom_call.1} parent=39 // pred_fallthru
          _
        // Predicated region
        $region49: #{tpu_custom_call.1} parent=39 // pred_check
          %p428 = pneg %p119
        $region50: #{tpu_custom_call.1} parent=39 // pred_check_branch
          %430 = sbr.rel (%p428) target = $region52
        $region51: #{tpu_custom_call.1} parent=39 // pred_region
          %s431 = sand.u32 %s31, 1
          %s432 = scalar_lea.sflag [#allocation8], %s431
          %s433 = sand.u32 %s109, 1
          %s434 = smul.addr %s433, 32
          %s435 = scalar_lea.vmem [#allocation9], %s434
          %s436 = smul.u32 4, %s39
          %s438 = ssub.s32 512, 512
          %439 = vsyncadd %s432, %s438
          %s440 = smul.addr %s38, 4
          %s441 = sadd.s32 %s436, %s440
          %s442 = smul.addr %s441, 128
          %s443 = scalar_lea.hbm %s2, %s442
          %s444 = sshll.u32 %s435, 4
          %s445 = int_to_ptr.vmem [resolvable:$true] %s444
          %450 = dma.hbm_to_vmem [thread:$0]  %s443, 512, %s445, %s432, 128, 128, 8
        $region52: #{tpu_custom_call.1} parent=39 // pred_fallthru
          _
      $region40: #{tpu_custom_call.1} parent=5 // pred_fallthru
        _
      %p451 = scmp.le.s32.totalorder 1, %s31
      %p452 = scmp.lt.s32.totalorder %s31, 3
      %p453 = pnand %p451, %p452
      %p454 = pneg %p453
      // Predicated region
      $region53: #{tpu_custom_call.1} parent=5 // pred_check
        _
      $region54: #{tpu_custom_call.1} parent=5 // pred_check_branch
        %456 = sbr.rel (%p453) target = $region56
      $region55: #{tpu_custom_call.1} parent=5 // pred_region
        %s457 = ssub.s32 %s31, 1
        %s458 = sand.u32 %s58, 1
        %s459 = scalar_lea.sflag [#allocation5], %s458
        %s460 = sand.u32 %s58, 1
        %s461 = smul.addr %s460, 128
        %s462 = scalar_lea.vmem [#allocation4], %s461
        // Predicated region
        $region57: #{tpu_custom_call.1} parent=55 // pred_check
          %p463 = pneg %p71
        $region58: #{tpu_custom_call.1} parent=55 // pred_check_branch
          %465 = sbr.rel (%p463) target = $region60
        $region59: #{tpu_custom_call.1} parent=55 // pred_region
          %466 = dma.done %s459, 2048
        $region60: #{tpu_custom_call.1} parent=55 // pred_fallthru
          _
        %s467 = sand.u32 %s36, 1
        %s468 = scalar_lea.sflag [#allocation8], %s467
        %s469 = sand.u32 %s84, 1
        %s470 = smul.addr %s469, 128
        %s471 = scalar_lea.vmem [#allocation7], %s470
        // Predicated region
        $region61: #{tpu_custom_call.1} parent=55 // pred_check
          %p472 = pneg %p97
        $region62: #{tpu_custom_call.1} parent=55 // pred_check_branch
          %474 = sbr.rel (%p472) target = $region64
        $region63: #{tpu_custom_call.1} parent=55 // pred_region
          %475 = dma.done %s468, 2048
        $region64: #{tpu_custom_call.1} parent=55 // pred_fallthru
          _
        %s476 = sand.u32 %s36, 1
        %s477 = scalar_lea.sflag [#allocation8], %s476
        %s478 = sand.u32 %s112, 1
        %s479 = smul.addr %s478, 32
        %s480 = scalar_lea.vmem [#allocation9], %s479
        // Predicated region
        $region65: #{tpu_custom_call.1} parent=55 // pred_check
          %p481 = pneg %p125
        $region66: #{tpu_custom_call.1} parent=55 // pred_check_branch
          %483 = sbr.rel (%p481) target = $region68
        $region67: #{tpu_custom_call.1} parent=55 // pred_region
          %484 = dma.done %s477, 512
        $region68: #{tpu_custom_call.1} parent=55 // pred_fallthru
          _
        // Predicated region
        $region69: #{tpu_custom_call.1} parent=55 // pred_check
          %p485 = pneg %p188
        $region70: #{tpu_custom_call.1} parent=55 // pred_check_branch
          %487 = sbr.rel (%p485) target = $region72
        $region71: #{tpu_custom_call.1} parent=55 // pred_region
          %488 = dma.done [#allocation11], 6144
        $region72: #{tpu_custom_call.1} parent=55 // pred_fallthru
          _
        // Predicated region
        $region73: #{tpu_custom_call.1} parent=55 // pred_check
          %p489 = pneg %p209
        $region74: #{tpu_custom_call.1} parent=55 // pred_check_branch
          %491 = sbr.rel (%p489) target = $region76
        $region75: #{tpu_custom_call.1} parent=55 // pred_region
          %492 = dma.done [#allocation11], 2048
        $region76: #{tpu_custom_call.1} parent=55 // pred_fallthru
          _
        // Predicated region
        $region77: #{tpu_custom_call.1} parent=55 // pred_check
          %p493 = pneg %p230
        $region78: #{tpu_custom_call.1} parent=55 // pred_check_branch
          %495 = sbr.rel (%p493) target = $region80
        $region79: #{tpu_custom_call.1} parent=55 // pred_region
          %496 = dma.done [#allocation14], 8192
        $region80: #{tpu_custom_call.1} parent=55 // pred_fallthru
          _
        // Predicated region
        $region81: #{tpu_custom_call.1} parent=55 // pred_check
          %p497 = pneg %p251
        $region82: #{tpu_custom_call.1} parent=55 // pred_check_branch
          %499 = sbr.rel (%p497) target = $region84
        $region83: #{tpu_custom_call.1} parent=55 // pred_region
          %500 = dma.done [#allocation14], 8192
        $region84: #{tpu_custom_call.1} parent=55 // pred_fallthru
          _
        %s501 = sand.u32 %s58, 1
        %s502 = scalar_lea.sflag [#allocation5], %s501
        %s503 = sand.u32 %s58, 1
        %s504 = smul.addr %s503, 128
        %s505 = scalar_lea.vmem [#allocation4], %s504
        %p506 = pneg %p71
        %p507 = pneg %p68
        %s508 = sand.u32 %s36, 1
        %s509 = scalar_lea.sflag [#allocation8], %s508
        %s510 = sand.u32 %s84, 1
        %s511 = smul.addr %s510, 128
        %s512 = scalar_lea.vmem [#allocation7], %s511
        %p513 = pneg %p97
        %p514 = pneg %p94
        %s515 = sand.u32 %s36, 1
        %s516 = scalar_lea.sflag [#allocation8], %s515
        %s517 = sand.u32 %s112, 1
        %s518 = smul.addr %s517, 32
        %s519 = scalar_lea.vmem [#allocation9], %s518
        %p520 = pneg %p125
        %p521 = pneg %p122
        %p522 = pneg %p146
        %p523 = pneg %p143
        %p524 = pneg %p167
        %p525 = pneg %p164
        %p526 = pneg %p188
        %p527 = pneg %p185
        %p528 = pneg %p209
        %p529 = pneg %p206
        %p530 = pneg %p230
        %p531 = pneg %p227
        %p532 = pneg %p251
        %p533 = pneg %p248
        %p534 = pneg %p279
        %p535 = pneg %p276
        %s536 = sand.u32 %s266, 1
        %s537 = scalar_lea.sflag [#allocation6], %s536
        %s538 = sand.u32 %s266, 1
        %s539 = smul.addr %s538, 128
        %s540 = scalar_lea.vmem [#allocation16], %s539
        %p541 = pneg %p307
        %p542 = pneg %p304
        %s543 = sand.u32 %s294, 1
        %s544 = scalar_lea.sflag [#allocation18], %s543
        %s545 = sand.u32 %s294, 1
        %s546 = smul.addr %s545, 256
        %s547 = scalar_lea.vmem [#allocation17], %s546
        %s548 = smul.u32 16, %s41
        %s549 = smul.u32 4, %s41
        %s550 = smul.u32 16, %s41
        %s551 = smul.u32 16, %s41
        %p552 = scmp.eq.s32.totalorder %s41, 0
        // Predicated region
        $region85: #{tpu_custom_call.1} parent=55 // pred_check
          %p553 = pneg %p552
        $region86: #{tpu_custom_call.1} parent=55 // pred_check_branch
          %555 = sbr.rel (%p553) target = $region88
        $region87: #{tpu_custom_call.1} parent=55 // pred_region
          %v556 = vld [vmem:[%s471] sm:$0xff]
          %v557 = vld [vmem:[%s471 + $0x8] sm:$0xff]
          %v558 = vld [vmem:[%s471 + $0x10] sm:$0xff]
          %v559 = vld [vmem:[%s471 + $0x18] sm:$0xff]
          %v560 = vld [vmem:[%s471 + $0x20] sm:$0xff]
          %v561 = vld [vmem:[%s471 + $0x28] sm:$0xff]
          %v562 = vld [vmem:[%s471 + $0x30] sm:$0xff]
          %v563 = vld [vmem:[%s471 + $0x38] sm:$0xff]
          %v564 = vld [vmem:[%s471 + $0x40] sm:$0xff]
          %v565 = vld [vmem:[%s471 + $0x48] sm:$0xff]
          %v566 = vld [vmem:[%s471 + $0x50] sm:$0xff]
          %v567 = vld [vmem:[%s471 + $0x58] sm:$0xff]
          %v568 = vld [vmem:[%s471 + $0x60] sm:$0xff]
          %v569 = vld [vmem:[%s471 + $0x68] sm:$0xff]
          %v570 = vld [vmem:[%s471 + $0x70] sm:$0xff]
          %v571 = vld [vmem:[%s471 + $0x78] sm:$0xff]
          %v572 = vld [vmem:[%s3 + $0x2] sm:$0x1]
          %v573 = vld [vmem:[%s3 + $0x3] sm:$0x1]
          %574 = vadd.xlane.f32.xlu0 %v556
          %v575 = vpop.xlane.xlu0 %574
          %576 = vadd.xlane.f32.xlu0 %v557
          %v577 = vpop.xlane.xlu0 %576
          %578 = vadd.xlane.f32.xlu0 %v558
          %v579 = vpop.xlane.xlu0 %578
          %580 = vadd.xlane.f32.xlu0 %v559
          %v581 = vpop.xlane.xlu0 %580
          %582 = vadd.xlane.f32.xlu0 %v560
          %v583 = vpop.xlane.xlu0 %582
          %584 = vadd.xlane.f32.xlu0 %v561
          %v585 = vpop.xlane.xlu0 %584
          %586 = vadd.xlane.f32.xlu0 %v562
          %v587 = vpop.xlane.xlu0 %586
          %588 = vadd.xlane.f32.xlu0 %v563
          %v589 = vpop.xlane.xlu0 %588
          %590 = vadd.xlane.f32.xlu0 %v564
          %v591 = vpop.xlane.xlu0 %590
          %592 = vadd.xlane.f32.xlu0 %v565
          %v593 = vpop.xlane.xlu0 %592
          %594 = vadd.xlane.f32.xlu0 %v566
          %v595 = vpop.xlane.xlu0 %594
          %596 = vadd.xlane.f32.xlu0 %v567
          %v597 = vpop.xlane.xlu0 %596
          %598 = vadd.xlane.f32.xlu0 %v568
          %v599 = vpop.xlane.xlu0 %598
          %600 = vadd.xlane.f32.xlu0 %v569
          %v601 = vpop.xlane.xlu0 %600
          %602 = vadd.xlane.f32.xlu0 %v570
          %v603 = vpop.xlane.xlu0 %602
          %604 = vadd.xlane.f32.xlu0 %v571
          %v605 = vpop.xlane.xlu0 %604
          %v606 = vrcp.pop 128.0
          %v607 = vmul.f32 %v575, %v606
          %v608 = vmul.f32 %v577, %v606
          %v609 = vmul.f32 %v579, %v606
          %v610 = vmul.f32 %v581, %v606
          %v611 = vmul.f32 %v583, %v606
          %v612 = vmul.f32 %v585, %v606
          %v613 = vmul.f32 %v587, %v606
          %v614 = vmul.f32 %v589, %v606
          %v615 = vmul.f32 %v591, %v606
          %v616 = vmul.f32 %v593, %v606
          %v617 = vmul.f32 %v595, %v606
          %v618 = vmul.f32 %v597, %v606
          %v619 = vmul.f32 %v599, %v606
          %v620 = vmul.f32 %v601, %v606
          %v621 = vmul.f32 %v603, %v606
          %v622 = vmul.f32 %v605, %v606
          %v623 = vsub.f32 %v556, %v607
          %v624 = vsub.f32 %v557, %v608
          %v625 = vsub.f32 %v558, %v609
          %v626 = vsub.f32 %v559, %v610
          %v627 = vsub.f32 %v560, %v611
          %v628 = vsub.f32 %v561, %v612
          %v629 = vsub.f32 %v562, %v613
          %v630 = vsub.f32 %v563, %v614
          %v631 = vsub.f32 %v564, %v615
          %v632 = vsub.f32 %v565, %v616
          %v633 = vsub.f32 %v566, %v617
          %v634 = vsub.f32 %v567, %v618
          %v635 = vsub.f32 %v568, %v619
          %v636 = vsub.f32 %v569, %v620
          %v637 = vsub.f32 %v570, %v621
          %v638 = vsub.f32 %v571, %v622
          %v639 = vmul.f32 %v623, %v623
          %v640 = vmul.f32 %v624, %v624
          %v641 = vmul.f32 %v625, %v625
          %v642 = vmul.f32 %v626, %v626
          %v643 = vmul.f32 %v627, %v627
          %v644 = vmul.f32 %v628, %v628
          %v645 = vmul.f32 %v629, %v629
          %v646 = vmul.f32 %v630, %v630
          %v647 = vmul.f32 %v631, %v631
          %v648 = vmul.f32 %v632, %v632
          %v649 = vmul.f32 %v633, %v633
          %v650 = vmul.f32 %v634, %v634
          %v651 = vmul.f32 %v635, %v635
          %v652 = vmul.f32 %v636, %v636
          %v653 = vmul.f32 %v637, %v637
          %v654 = vmul.f32 %v638, %v638
          %655 = vadd.xlane.f32.xlu0 %v639
          %v656 = vpop.xlane.xlu0 %655
          %657 = vadd.xlane.f32.xlu0 %v640
          %v658 = vpop.xlane.xlu0 %657
          %659 = vadd.xlane.f32.xlu0 %v641
          %v660 = vpop.xlane.xlu0 %659
          %661 = vadd.xlane.f32.xlu0 %v642
          %v662 = vpop.xlane.xlu0 %661
          %663 = vadd.xlane.f32.xlu0 %v643
          %v664 = vpop.xlane.xlu0 %663
          %665 = vadd.xlane.f32.xlu0 %v644
          %v666 = vpop.xlane.xlu0 %665
          %667 = vadd.xlane.f32.xlu0 %v645
          %v668 = vpop.xlane.xlu0 %667
          %669 = vadd.xlane.f32.xlu0 %v646
          %v670 = vpop.xlane.xlu0 %669
          %671 = vadd.xlane.f32.xlu0 %v647
          %v672 = vpop.xlane.xlu0 %671
          %673 = vadd.xlane.f32.xlu0 %v648
          %v674 = vpop.xlane.xlu0 %673
          %675 = vadd.xlane.f32.xlu0 %v649
          %v676 = vpop.xlane.xlu0 %675
          %677 = vadd.xlane.f32.xlu0 %v650
          %v678 = vpop.xlane.xlu0 %677
          %679 = vadd.xlane.f32.xlu0 %v651
          %v680 = vpop.xlane.xlu0 %679
          %681 = vadd.xlane.f32.xlu0 %v652
          %v682 = vpop.xlane.xlu0 %681
          %683 = vadd.xlane.f32.xlu0 %v653
          %v684 = vpop.xlane.xlu0 %683
          %685 = vadd.xlane.f32.xlu0 %v654
          %v686 = vpop.xlane.xlu0 %685
          %v687 = vmul.f32 %v656, %v606
          %v688 = vmul.f32 %v658, %v606
          %v689 = vmul.f32 %v660, %v606
          %v690 = vmul.f32 %v662, %v606
          %v691 = vmul.f32 %v664, %v606
          %v692 = vmul.f32 %v666, %v606
          %v693 = vmul.f32 %v668, %v606
          %v694 = vmul.f32 %v670, %v606
          %v695 = vmul.f32 %v672, %v606
          %v696 = vmul.f32 %v674, %v606
          %v697 = vmul.f32 %v676, %v606
          %v698 = vmul.f32 %v678, %v606
          %v699 = vmul.f32 %v680, %v606
          %v700 = vmul.f32 %v682, %v606
          %v701 = vmul.f32 %v684, %v606
          %v702 = vmul.f32 %v686, %v606
          %v703 = vadd.f32 %v687, 1e-05
          %v704 = vadd.f32 %v688, 1e-05
          %v705 = vadd.f32 %v689, 1e-05
          %v706 = vadd.f32 %v690, 1e-05
          %v707 = vadd.f32 %v691, 1e-05
          %v708 = vadd.f32 %v692, 1e-05
          %v709 = vadd.f32 %v693, 1e-05
          %v710 = vadd.f32 %v694, 1e-05
          %v711 = vadd.f32 %v695, 1e-05
          %v712 = vadd.f32 %v696, 1e-05
          %v713 = vadd.f32 %v697, 1e-05
          %v714 = vadd.f32 %v698, 1e-05
          %v715 = vadd.f32 %v699, 1e-05
          %v716 = vadd.f32 %v700, 1e-05
          %v717 = vadd.f32 %v701, 1e-05
          %v718 = vadd.f32 %v702, 1e-05
          %v719 = vrsqrt.pop %v703
          %v720 = vrsqrt.pop %v704
          %v721 = vrsqrt.pop %v705
          %v722 = vrsqrt.pop %v706
          %v723 = vrsqrt.pop %v707
          %v724 = vrsqrt.pop %v708
          %v725 = vrsqrt.pop %v709
          %v726 = vrsqrt.pop %v710
          %v727 = vrsqrt.pop %v711
          %v728 = vrsqrt.pop %v712
          %v729 = vrsqrt.pop %v713
          %v730 = vrsqrt.pop %v714
          %v731 = vrsqrt.pop %v715
          %v732 = vrsqrt.pop %v716
          %v733 = vrsqrt.pop %v717
          %v734 = vrsqrt.pop %v718
          %v735 = vmul.f32 %v623, %v719
          %v736 = vmul.f32 %v624, %v720
          %v737 = vmul.f32 %v625, %v721
          %v738 = vmul.f32 %v626, %v722
          %v739 = vmul.f32 %v627, %v723
          %v740 = vmul.f32 %v628, %v724
          %v741 = vmul.f32 %v629, %v725
          %v742 = vmul.f32 %v630, %v726
          %v743 = vmul.f32 %v631, %v727
          %v744 = vmul.f32 %v632, %v728
          %v745 = vmul.f32 %v633, %v729
          %v746 = vmul.f32 %v634, %v730
          %v747 = vmul.f32 %v635, %v731
          %v748 = vmul.f32 %v636, %v732
          %v749 = vmul.f32 %v637, %v733
          %v750 = vmul.f32 %v638, %v734
          %v751 = vlaneseq
          %v752 = vshrl.u32 %v751, 7
          %v753 = vsub.s32 0, %v752
          %v754 = vrot.slane %v572, %v753
          %v755 = vmul.f32 %v735, %v754
          %v756 = vmul.f32 %v736, %v754
          %v757 = vmul.f32 %v737, %v754
          %v758 = vmul.f32 %v738, %v754
          %v759 = vmul.f32 %v739, %v754
          %v760 = vmul.f32 %v740, %v754
          %v761 = vmul.f32 %v741, %v754
          %v762 = vmul.f32 %v742, %v754
          %v763 = vmul.f32 %v743, %v754
          %v764 = vmul.f32 %v744, %v754
          %v765 = vmul.f32 %v745, %v754
          %v766 = vmul.f32 %v746, %v754
          %v767 = vmul.f32 %v747, %v754
          %v768 = vmul.f32 %v748, %v754
          %v769 = vmul.f32 %v749, %v754
          %v770 = vmul.f32 %v750, %v754
          %v771 = vlaneseq
          %v772 = vshrl.u32 %v771, 7
          %v773 = vsub.s32 0, %v772
          %v774 = vrot.slane %v573, %v773
          %v775 = vadd.f32 %v755, %v774
          %v776 = vadd.f32 %v756, %v774
          %v777 = vadd.f32 %v757, %v774
          %v778 = vadd.f32 %v758, %v774
          %v779 = vadd.f32 %v759, %v774
          %v780 = vadd.f32 %v760, %v774
          %v781 = vadd.f32 %v761, %v774
          %v782 = vadd.f32 %v762, %v774
          %v783 = vadd.f32 %v763, %v774
          %v784 = vadd.f32 %v764, %v774
          %v785 = vadd.f32 %v765, %v774
          %v786 = vadd.f32 %v766, %v774
          %v787 = vadd.f32 %v767, %v774
          %v788 = vadd.f32 %v768, %v774
          %v789 = vadd.f32 %v769, %v774
          %v790 = vadd.f32 %v770, %v774
          %s791 = scalar_lea.vmem [#allocation10], 128
          %v792 = vld [vmem:[%s791] sm:$0xff]
          %v793 = vld [vmem:[%s791 + $0x8] sm:$0xff]
          %v794 = vld [vmem:[%s791 + $0x10] sm:$0xff]
          %v795 = vld [vmem:[%s791 + $0x18] sm:$0xff]
          %v796 = vld [vmem:[%s791 + $0x20] sm:$0xff]
          %v797 = vld [vmem:[%s791 + $0x28] sm:$0xff]
          %v798 = vld [vmem:[%s791 + $0x30] sm:$0xff]
          %v799 = vld [vmem:[%s791 + $0x38] sm:$0xff]
          %v800 = vld [vmem:[%s791 + $0x40] sm:$0xff]
          %v801 = vld [vmem:[%s791 + $0x48] sm:$0xff]
          %v802 = vld [vmem:[%s791 + $0x50] sm:$0xff]
          %v803 = vld [vmem:[%s791 + $0x58] sm:$0xff]
          %v804 = vld [vmem:[%s791 + $0x60] sm:$0xff]
          %v805 = vld [vmem:[%s791 + $0x68] sm:$0xff]
          %v806 = vld [vmem:[%s791 + $0x70] sm:$0xff]
          %v807 = vld [vmem:[%s791 + $0x78] sm:$0xff]
          %808 = vmatprep.subr.mxu0 0.0
          %809 = vmatpush1.msra.mxu0 %v792
          %810 = vmatprep.subr.mxu0 0.0
          %811 = vmatpush1.msra.mxu0 %v793
          %812 = vmatprep.subr.mxu0 0.0
          %813 = vmatpush1.msra.mxu0 %v794
          %814 = vmatprep.subr.mxu0 0.0
          %815 = vmatpush1.msra.mxu0 %v795
          %816 = vmatprep.subr.mxu0 0.0
          %817 = vmatpush1.msra.mxu0 %v796
          %818 = vmatprep.subr.mxu0 0.0
          %819 = vmatpush1.msra.mxu0 %v797
          %820 = vmatprep.subr.mxu0 0.0
          %821 = vmatpush1.msra.mxu0 %v798
          %822 = vmatprep.subr.mxu0 0.0
          %823 = vmatpush1.msra.mxu0 %v799
          %824 = vmatprep.subr.mxu0 0.0
          %825 = vmatpush1.msra.mxu0 %v800
          %826 = vmatprep.subr.mxu0 0.0
          %827 = vmatpush1.msra.mxu0 %v801
          %828 = vmatprep.subr.mxu0 0.0
          %829 = vmatpush1.msra.mxu0 %v802
          %830 = vmatprep.subr.mxu0 0.0
          %831 = vmatpush1.msra.mxu0 %v803
          %832 = vmatprep.subr.mxu0 0.0
          %833 = vmatpush1.msra.mxu0 %v804
          %834 = vmatprep.subr.mxu0 0.0
          %835 = vmatpush1.msra.mxu0 %v805
          %836 = vmatprep.subr.mxu0 0.0
          %837 = vmatpush1.msra.mxu0 %v806
          %838 = vmatprep.subr.mxu0 0.0
          %839 = vmatpush1.msra.mxu0 %v807
          %840 = vmatprep.subr.mxu0 0.0
          %841 = vmatpush1.msra.mxu0 0.0
          %842 = vmatprep.subr.mxu0 0.0
          %843 = vmatpush1.msra.mxu0 0.0
          %844 = vmatprep.subr.mxu0 0.0
          %845 = vmatpush1.msra.mxu0 0.0
          %846 = vmatprep.subr.mxu0 0.0
          %847 = vmatpush1.msra.mxu0 0.0
          %848 = vmatprep.subr.mxu0 0.0
          %849 = vmatpush1.msra.mxu0 0.0
          %850 = vmatprep.subr.mxu0 0.0
          %851 = vmatpush1.msra.mxu0 0.0
          %852 = vmatprep.subr.mxu0 0.0
          %853 = vmatpush1.msra.mxu0 0.0
          %854 = vmatprep.subr.mxu0 0.0
          %855 = vmatpush1.msra.mxu0 0.0
          %856 = vmatprep.subr.mxu0 0.0
          %857 = vmatpush1.msra.mxu0 0.0
          %858 = vmatprep.subr.mxu0 0.0
          %859 = vmatpush1.msra.mxu0 0.0
          %860 = vmatprep.subr.mxu0 0.0
          %861 = vmatpush1.msra.mxu0 0.0
          %862 = vmatprep.subr.mxu0 0.0
          %863 = vmatpush1.msra.mxu0 0.0
          %864 = vmatprep.subr.mxu0 0.0
          %865 = vmatpush1.msra.mxu0 0.0
          %866 = vmatprep.subr.mxu0 0.0
          %867 = vmatpush1.msra.mxu0 0.0
          %868 = vmatprep.subr.mxu0 0.0
          %869 = vmatpush1.msra.mxu0 0.0
          %870 = vmatprep.subr.mxu0 0.0
          %871 = vmatpush1.msra.mxu0 0.0
          %872 = vmatprep.mubr.f32.mxu0 0.0
          %873 = vmatmul.mubr.f32.gmra.mrb[0].mxu0 %v775
          %v874 = vpop.f32.mrb[0].mxu0
          %v875 = vadd.f32 0.0, %v874
          %v876 = vpop.f32.mrb[0].mxu0
          %877 = vmatprep.mubr.f32.mxu0 0.0
          %878 = vmatmul.mubr.f32.gmra.mrb[0].mxu0 %v776
          %v879 = vpop.f32.mrb[0].mxu0
          %v880 = vadd.f32 0.0, %v879
          %v881 = vpop.f32.mrb[0].mxu0
          %882 = vmatprep.mubr.f32.mxu0 0.0
          %883 = vmatmul.mubr.f32.gmra.mrb[0].mxu0 %v777
          %v884 = vpop.f32.mrb[0].mxu0
          %v885 = vadd.f32 0.0, %v884
          %v886 = vpop.f32.mrb[0].mxu0
          %887 = vmatprep.mubr.f32.mxu0 0.0
          %888 = vmatmul.mubr.f32.gmra.mrb[0].mxu0 %v778
          %v889 = vpop.f32.mrb[0].mxu0
          %v890 = vadd.f32 0.0, %v889
          %v891 = vpop.f32.mrb[0].mxu0
          %892 = vmatprep.mubr.f32.mxu0 0.0
          %893 = vmatmul.mubr.f32.gmra.mrb[0].mxu0 %v779
          %v894 = vpop.f32.mrb[0].mxu0
          %v895 = vadd.f32 0.0, %v894
          %v896 = vpop.f32.mrb[0].mxu0
          %897 = vmatprep.mubr.f32.mxu0 0.0
          %898 = vmatmul.mubr.f32.gmra.mrb[0].mxu0 %v780
          %v899 = vpop.f32.mrb[0].mxu0
          %v900 = vadd.f32 0.0, %v899
          %v901 = vpop.f32.mrb[0].mxu0
          %902 = vmatprep.mubr.f32.mxu0 0.0
          %903 = vmatmul.mubr.f32.gmra.mrb[0].mxu0 %v781
          %v904 = vpop.f32.mrb[0].mxu0
          %v905 = vadd.f32 0.0, %v904
          %v906 = vpop.f32.mrb[0].mxu0
          %907 = vmatprep.mubr.f32.mxu0 0.0
          %908 = vmatmul.mubr.f32.gmra.mrb[0].mxu0 %v782
          %v909 = vpop.f32.mrb[0].mxu0
          %v910 = vadd.f32 0.0, %v909
          %v911 = vpop.f32.mrb[0].mxu0
          %912 = vmatprep.mubr.f32.mxu0 0.0
          %913 = vmatmul.mubr.f32.gmra.mrb[0].mxu0 %v783
          %v914 = vpop.f32.mrb[0].mxu0
          %v915 = vadd.f32 0.0, %v914
          %v916 = vpop.f32.mrb[0].mxu0
          %917 = vmatprep.mubr.f32.mxu0 0.0
          %918 = vmatmul.mubr.f32.gmra.mrb[0].mxu0 %v784
          %v919 = vpop.f32.mrb[0].mxu0
          %v920 = vadd.f32 0.0, %v919
          %v921 = vpop.f32.mrb[0].mxu0
          %922 = vmatprep.mubr.f32.mxu0 0.0
          %923 = vmatmul.mubr.f32.gmra.mrb[0].mxu0 %v785
          %v924 = vpop.f32.mrb[0].mxu0
          %v925 = vadd.f32 0.0, %v924
          %v926 = vpop.f32.mrb[0].mxu0
          %927 = vmatprep.mubr.f32.mxu0 0.0
          %928 = vmatmul.mubr.f32.gmra.mrb[0].mxu0 %v786
          %v929 = vpop.f32.mrb[0].mxu0
          %v930 = vadd.f32 0.0, %v929
          %v931 = vpop.f32.mrb[0].mxu0
          %932 = vmatprep.mubr.f32.mxu0 0.0
          %933 = vmatmul.mubr.f32.gmra.mrb[0].mxu0 %v787
          %v934 = vpop.f32.mrb[0].mxu0
          %v935 = vadd.f32 0.0, %v934
          %v936 = vpop.f32.mrb[0].mxu0
          %937 = vmatprep.mubr.f32.mxu0 0.0
          %938 = vmatmul.mubr.f32.gmra.mrb[0].mxu0 %v788
          %v939 = vpop.f32.mrb[0].mxu0
          %v940 = vadd.f32 0.0, %v939
          %v941 = vpop.f32.mrb[0].mxu0
          %942 = vmatprep.mubr.f32.mxu0 0.0
          %943 = vmatmul.mubr.f32.gmra.mrb[0].mxu0 %v789
          %v944 = vpop.f32.mrb[0].mxu0
          %v945 = vadd.f32 0.0, %v944
          %v946 = vpop.f32.mrb[0].mxu0
          %947 = vmatprep.mubr.f32.mxu0 0.0
          %948 = vmatmul.mubr.f32.gmra.mrb[0].mxu0 %v790
          %v949 = vpop.f32.mrb[0].mxu0
          %v950 = vadd.f32 0.0, %v949
          %v951 = vpop.f32.mrb[0].mxu0
          %952 = vdwg.mxu0
          %953 = vst [vmem:[#allocation2] sm:$0xff] %v875
          %954 = vst [vmem:[#allocation2 + $0x8] sm:$0xff] %v880
          %955 = vst [vmem:[#allocation2 + $0x10] sm:$0xff] %v885
          %956 = vst [vmem:[#allocation2 + $0x18] sm:$0xff] %v890
          %957 = vst [vmem:[#allocation2 + $0x20] sm:$0xff] %v895
          %958 = vst [vmem:[#allocation2 + $0x28] sm:$0xff] %v900
          %959 = vst [vmem:[#allocation2 + $0x30] sm:$0xff] %v905
          %960 = vst [vmem:[#allocation2 + $0x38] sm:$0xff] %v910
          %961 = vst [vmem:[#allocation2 + $0x40] sm:$0xff] %v915
          %962 = vst [vmem:[#allocation2 + $0x48] sm:$0xff] %v920
          %963 = vst [vmem:[#allocation2 + $0x50] sm:$0xff] %v925
          %964 = vst [vmem:[#allocation2 + $0x58] sm:$0xff] %v930
          %965 = vst [vmem:[#allocation2 + $0x60] sm:$0xff] %v935
          %966 = vst [vmem:[#allocation2 + $0x68] sm:$0xff] %v940
          %967 = vst [vmem:[#allocation2 + $0x70] sm:$0xff] %v945
          %968 = vst [vmem:[#allocation2 + $0x78] sm:$0xff] %v950
          %s969 = scalar_lea.vmem [#allocation10], 256
          %v970 = vld [vmem:[%s969] sm:$0xff]
          %v971 = vld [vmem:[%s969 + $0x8] sm:$0xff]
          %v972 = vld [vmem:[%s969 + $0x10] sm:$0xff]
          %v973 = vld [vmem:[%s969 + $0x18] sm:$0xff]
          %v974 = vld [vmem:[%s969 + $0x20] sm:$0xff]
          %v975 = vld [vmem:[%s969 + $0x28] sm:$0xff]
          %v976 = vld [vmem:[%s969 + $0x30] sm:$0xff]
          %v977 = vld [vmem:[%s969 + $0x38] sm:$0xff]
          %v978 = vld [vmem:[%s969 + $0x40] sm:$0xff]
          %v979 = vld [vmem:[%s969 + $0x48] sm:$0xff]
          %v980 = vld [vmem:[%s969 + $0x50] sm:$0xff]
          %v981 = vld [vmem:[%s969 + $0x58] sm:$0xff]
          %v982 = vld [vmem:[%s969 + $0x60] sm:$0xff]
          %v983 = vld [vmem:[%s969 + $0x68] sm:$0xff]
          %v984 = vld [vmem:[%s969 + $0x70] sm:$0xff]
          %v985 = vld [vmem:[%s969 + $0x78] sm:$0xff]
          %986 = vmatprep.subr.mxu0 0.0
          %987 = vmatpush1.msra.mxu0 %v970
          %988 = vmatprep.subr.mxu0 0.0
          %989 = vmatpush1.msra.mxu0 %v971
          %990 = vmatprep.subr.mxu0 0.0
          %991 = vmatpush1.msra.mxu0 %v972
          %992 = vmatprep.subr.mxu0 0.0
          %993 = vmatpush1.msra.mxu0 %v973
          %994 = vmatprep.subr.mxu0 0.0
          %995 = vmatpush1.msra.mxu0 %v974
          %996 = vmatprep.subr.mxu0 0.0
          %997 = vmatpush1.msra.mxu0 %v975
          %998 = vmatprep.subr.mxu0 0.0
          %999 = vmatpush1.msra.mxu0 %v976
          %1000 = vmatprep.subr.mxu0 0.0
          %1001 = vmatpush1.msra.mxu0 %v977
          %1002 = vmatprep.subr.mxu0 0.0
          %1003 = vmatpush1.msra.mxu0 %v978
          %1004 = vmatprep.subr.mxu0 0.0
          %1005 = vmatpush1.msra.mxu0 %v979
          %1006 = vmatprep.subr.mxu0 0.0
          %1007 = vmatpush1.msra.mxu0 %v980
          %1008 = vmatprep.subr.mxu0 0.0
          %1009 = vmatpush1.msra.mxu0 %v981
          %1010 = vmatprep.subr.mxu0 0.0
          %1011 = vmatpush1.msra.mxu0 %v982
          %1012 = vmatprep.subr.mxu0 0.0
          %1013 = vmatpush1.msra.mxu0 %v983
          %1014 = vmatprep.subr.mxu0 0.0
          %1015 = vmatpush1.msra.mxu0 %v984
          %1016 = vmatprep.subr.mxu0 0.0
          %1017 = vmatpush1.msra.mxu0 %v985
          %1018 = vmatprep.subr.mxu0 0.0
          %1019 = vmatpush1.msra.mxu0 0.0
          %1020 = vmatprep.subr.mxu0 0.0
          %1021 = vmatpush1.msra.mxu0 0.0
          %1022 = vmatprep.subr.mxu0 0.0
          %1023 = vmatpush1.msra.mxu0 0.0
          %1024 = vmatprep.subr.mxu0 0.0
          %1025 = vmatpush1.msra.mxu0 0.0
          %1026 = vmatprep.subr.mxu0 0.0
          %1027 = vmatpush1.msra.mxu0 0.0
          %1028 = vmatprep.subr.mxu0 0.0
          %1029 = vmatpush1.msra.mxu0 0.0
          %1030 = vmatprep.subr.mxu0 0.0
          %1031 = vmatpush1.msra.mxu0 0.0
          %1032 = vmatprep.subr.mxu0 0.0
          %1033 = vmatpush1.msra.mxu0 0.0
          %1034 = vmatprep.subr.mxu0 0.0
          %1035 = vmatpush1.msra.mxu0 0.0
          %1036 = vmatprep.subr.mxu0 0.0
          %1037 = vmatpush1.msra.mxu0 0.0
          %1038 = vmatprep.subr.mxu0 0.0
          %1039 = vmatpush1.msra.mxu0 0.0
          %1040 = vmatprep.subr.mxu0 0.0
          %1041 = vmatpush1.msra.mxu0 0.0
          %1042 = vmatprep.subr.mxu0 0.0
          %1043 = vmatpush1.msra.mxu0 0.0
          %1044 = vmatprep.subr.mxu0 0.0
          %1045 = vmatpush1.msra.mxu0 0.0
          %1046 = vmatprep.subr.mxu0 0.0
          %1047 = vmatpush1.msra.mxu0 0.0
          %1048 = vmatprep.subr.mxu0 0.0
          %1049 = vmatpush1.msra.mxu0 0.0
          %1050 = vmatprep.mubr.f32.mxu0 0.0
          %1051 = vmatmul.mubr.f32.gmra.mrb[0].mxu0 %v775
          %v1052 = vpop.f32.mrb[0].mxu0
          %v1053 = vadd.f32 0.0, %v1052
          %v1054 = vpop.f32.mrb[0].mxu0
          %1055 = vmatprep.mubr.f32.mxu0 0.0
          %1056 = vmatmul.mubr.f32.gmra.mrb[0].mxu0 %v776
          %v1057 = vpop.f32.mrb[0].mxu0
          %v1058 = vadd.f32 0.0, %v1057
          %v1059 = vpop.f32.mrb[0].mxu0
          %1060 = vmatprep.mubr.f32.mxu0 0.0
          %1061 = vmatmul.mubr.f32.gmra.mrb[0].mxu0 %v777
          %v1062 = vpop.f32.mrb[0].mxu0
          %v1063 = vadd.f32 0.0, %v1062
          %v1064 = vpop.f32.mrb[0].mxu0
          %1065 = vmatprep.mubr.f32.mxu0 0.0
          %1066 = vmatmul.mubr.f32.gmra.mrb[0].mxu0 %v778
          %v1067 = vpop.f32.mrb[0].mxu0
          %v1068 = vadd.f32 0.0, %v1067
          %v1069 = vpop.f32.mrb[0].mxu0
          %1070 = vmatprep.mubr.f32.mxu0 0.0
          %1071 = vmatmul.mubr.f32.gmra.mrb[0].mxu0 %v779
          %v1072 = vpop.f32.mrb[0].mxu0
          %v1073 = vadd.f32 0.0, %v1072
          %v1074 = vpop.f32.mrb[0].mxu0
          %1075 = vmatprep.mubr.f32.mxu0 0.0
          %1076 = vmatmul.mubr.f32.gmra.mrb[0].mxu0 %v780
          %v1077 = vpop.f32.mrb[0].mxu0
          %v1078 = vadd.f32 0.0, %v1077
          %v1079 = vpop.f32.mrb[0].mxu0
          %1080 = vmatprep.mubr.f32.mxu0 0.0
          %1081 = vmatmul.mubr.f32.gmra.mrb[0].mxu0 %v781
          %v1082 = vpop.f32.mrb[0].mxu0
          %v1083 = vadd.f32 0.0, %v1082
          %v1084 = vpop.f32.mrb[0].mxu0
          %1085 = vmatprep.mubr.f32.mxu0 0.0
          %1086 = vmatmul.mubr.f32.gmra.mrb[0].mxu0 %v782
          %v1087 = vpop.f32.mrb[0].mxu0
          %v1088 = vadd.f32 0.0, %v1087
          %v1089 = vpop.f32.mrb[0].mxu0
          %1090 = vmatprep.mubr.f32.mxu0 0.0
          %1091 = vmatmul.mubr.f32.gmra.mrb[0].mxu0 %v783
          %v1092 = vpop.f32.mrb[0].mxu0
          %v1093 = vadd.f32 0.0, %v1092
          %v1094 = vpop.f32.mrb[0].mxu0
          %1095 = vmatprep.mubr.f32.mxu0 0.0
          %1096 = vmatmul.mubr.f32.gmra.mrb[0].mxu0 %v784
          %v1097 = vpop.f32.mrb[0].mxu0
          %v1098 = vadd.f32 0.0, %v1097
          %v1099 = vpop.f32.mrb[0].mxu0
          %1100 = vmatprep.mubr.f32.mxu0 0.0
          %1101 = vmatmul.mubr.f32.gmra.mrb[0].mxu0 %v785
          %v1102 = vpop.f32.mrb[0].mxu0
          %v1103 = vadd.f32 0.0, %v1102
          %v1104 = vpop.f32.mrb[0].mxu0
          %1105 = vmatprep.mubr.f32.mxu0 0.0
          %1106 = vmatmul.mubr.f32.gmra.mrb[0].mxu0 %v786
          %v1107 = vpop.f32.mrb[0].mxu0
          %v1108 = vadd.f32 0.0, %v1107
          %v1109 = vpop.f32.mrb[0].mxu0
          %1110 = vmatprep.mubr.f32.mxu0 0.0
          %1111 = vmatmul.mubr.f32.gmra.mrb[0].mxu0 %v787
          %v1112 = vpop.f32.mrb[0].mxu0
          %v1113 = vadd.f32 0.0, %v1112
          %v1114 = vpop.f32.mrb[0].mxu0
          %1115 = vmatprep.mubr.f32.mxu0 0.0
          %1116 = vmatmul.mubr.f32.gmra.mrb[0].mxu0 %v788
          %v1117 = vpop.f32.mrb[0].mxu0
          %v1118 = vadd.f32 0.0, %v1117
          %v1119 = vpop.f32.mrb[0].mxu0
          %1120 = vmatprep.mubr.f32.mxu0 0.0
          %1121 = vmatmul.mubr.f32.gmra.mrb[0].mxu0 %v789
          %v1122 = vpop.f32.mrb[0].mxu0
          %v1123 = vadd.f32 0.0, %v1122
          %v1124 = vpop.f32.mrb[0].mxu0
          %1125 = vmatprep.mubr.f32.mxu0 0.0
          %1126 = vmatmul.mubr.f32.gmra.mrb[0].mxu0 %v790
          %v1127 = vpop.f32.mrb[0].mxu0
          %v1128 = vadd.f32 0.0, %v1127
          %v1129 = vpop.f32.mrb[0].mxu0
          %1130 = vdwg.mxu0
          %1131 = vst [vmem:[#allocation3] sm:$0xff] %v1053
          %1132 = vst [vmem:[#allocation3 + $0x8] sm:$0xff] %v1058
          %1133 = vst [vmem:[#allocation3 + $0x10] sm:$0xff] %v1063
          %1134 = vst [vmem:[#allocation3 + $0x18] sm:$0xff] %v1068
          %1135 = vst [vmem:[#allocation3 + $0x20] sm:$0xff] %v1073
          %1136 = vst [vmem:[#allocation3 + $0x28] sm:$0xff] %v1078
          %1137 = vst [vmem:[#allocation3 + $0x30] sm:$0xff] %v1083
          %1138 = vst [vmem:[#allocation3 + $0x38] sm:$0xff] %v1088
          %1139 = vst [vmem:[#allocation3 + $0x40] sm:$0xff] %v1093
          %1140 = vst [vmem:[#allocation3 + $0x48] sm:$0xff] %v1098
          %1141 = vst [vmem:[#allocation3 + $0x50] sm:$0xff] %v1103
          %1142 = vst [vmem:[#allocation3 + $0x58] sm:$0xff] %v1108
          %1143 = vst [vmem:[#allocation3 + $0x60] sm:$0xff] %v1113
          %1144 = vst [vmem:[#allocation3 + $0x68] sm:$0xff] %v1118
          %1145 = vst [vmem:[#allocation3 + $0x70] sm:$0xff] %v1123
          %1146 = vst [vmem:[#allocation3 + $0x78] sm:$0xff] %v1128
        $region88: #{tpu_custom_call.1} parent=55 // pred_fallthru
          _
        %v1147 = vld [vmem:[%s462] sm:$0xff]
        %v1148 = vld [vmem:[%s462 + $0x8] sm:$0xff]
        %v1149 = vld [vmem:[%s462 + $0x10] sm:$0xff]
        %v1150 = vld [vmem:[%s462 + $0x18] sm:$0xff]
        %v1151 = vld [vmem:[%s462 + $0x20] sm:$0xff]
        %v1152 = vld [vmem:[%s462 + $0x28] sm:$0xff]
        %v1153 = vld [vmem:[%s462 + $0x30] sm:$0xff]
        %v1154 = vld [vmem:[%s462 + $0x38] sm:$0xff]
        %v1155 = vld [vmem:[%s462 + $0x40] sm:$0xff]
        %v1156 = vld [vmem:[%s462 + $0x48] sm:$0xff]
        %v1157 = vld [vmem:[%s462 + $0x50] sm:$0xff]
        %v1158 = vld [vmem:[%s462 + $0x58] sm:$0xff]
        %v1159 = vld [vmem:[%s462 + $0x60] sm:$0xff]
        %v1160 = vld [vmem:[%s462 + $0x68] sm:$0xff]
        %v1161 = vld [vmem:[%s462 + $0x70] sm:$0xff]
        %v1162 = vld [vmem:[%s462 + $0x78] sm:$0xff]
        %v1163 = vld [vmem:[%s3] sm:$0x1]
        %v1164 = vld [vmem:[%s3 + $0x1] sm:$0x1]
        %1165 = vadd.xlane.f32.xlu0 %v1147
        %v1166 = vpop.xlane.xlu0 %1165
        %1167 = vadd.xlane.f32.xlu0 %v1148
        %v1168 = vpop.xlane.xlu0 %1167
        %1169 = vadd.xlane.f32.xlu0 %v1149
        %v1170 = vpop.xlane.xlu0 %1169
        %1171 = vadd.xlane.f32.xlu0 %v1150
        %v1172 = vpop.xlane.xlu0 %1171
        %1173 = vadd.xlane.f32.xlu0 %v1151
        %v1174 = vpop.xlane.xlu0 %1173
        %1175 = vadd.xlane.f32.xlu0 %v1152
        %v1176 = vpop.xlane.xlu0 %1175
        %1177 = vadd.xlane.f32.xlu0 %v1153
        %v1178 = vpop.xlane.xlu0 %1177
        %1179 = vadd.xlane.f32.xlu0 %v1154
        %v1180 = vpop.xlane.xlu0 %1179
        %1181 = vadd.xlane.f32.xlu0 %v1155
        %v1182 = vpop.xlane.xlu0 %1181
        %1183 = vadd.xlane.f32.xlu0 %v1156
        %v1184 = vpop.xlane.xlu0 %1183
        %1185 = vadd.xlane.f32.xlu0 %v1157
        %v1186 = vpop.xlane.xlu0 %1185
        %1187 = vadd.xlane.f32.xlu0 %v1158
        %v1188 = vpop.xlane.xlu0 %1187
        %1189 = vadd.xlane.f32.xlu0 %v1159
        %v1190 = vpop.xlane.xlu0 %1189
        %1191 = vadd.xlane.f32.xlu0 %v1160
        %v1192 = vpop.xlane.xlu0 %1191
        %1193 = vadd.xlane.f32.xlu0 %v1161
        %v1194 = vpop.xlane.xlu0 %1193
        %1195 = vadd.xlane.f32.xlu0 %v1162
        %v1196 = vpop.xlane.xlu0 %1195
        %v1197 = vrcp.pop 128.0
        %v1198 = vmul.f32 %v1166, %v1197
        %v1199 = vmul.f32 %v1168, %v1197
        %v1200 = vmul.f32 %v1170, %v1197
        %v1201 = vmul.f32 %v1172, %v1197
        %v1202 = vmul.f32 %v1174, %v1197
        %v1203 = vmul.f32 %v1176, %v1197
        %v1204 = vmul.f32 %v1178, %v1197
        %v1205 = vmul.f32 %v1180, %v1197
        %v1206 = vmul.f32 %v1182, %v1197
        %v1207 = vmul.f32 %v1184, %v1197
        %v1208 = vmul.f32 %v1186, %v1197
        %v1209 = vmul.f32 %v1188, %v1197
        %v1210 = vmul.f32 %v1190, %v1197
        %v1211 = vmul.f32 %v1192, %v1197
        %v1212 = vmul.f32 %v1194, %v1197
        %v1213 = vmul.f32 %v1196, %v1197
        %v1214 = vsub.f32 %v1147, %v1198
        %v1215 = vsub.f32 %v1148, %v1199
        %v1216 = vsub.f32 %v1149, %v1200
        %v1217 = vsub.f32 %v1150, %v1201
        %v1218 = vsub.f32 %v1151, %v1202
        %v1219 = vsub.f32 %v1152, %v1203
        %v1220 = vsub.f32 %v1153, %v1204
        %v1221 = vsub.f32 %v1154, %v1205
        %v1222 = vsub.f32 %v1155, %v1206
        %v1223 = vsub.f32 %v1156, %v1207
        %v1224 = vsub.f32 %v1157, %v1208
        %v1225 = vsub.f32 %v1158, %v1209
        %v1226 = vsub.f32 %v1159, %v1210
        %v1227 = vsub.f32 %v1160, %v1211
        %v1228 = vsub.f32 %v1161, %v1212
        %v1229 = vsub.f32 %v1162, %v1213
        %v1230 = vmul.f32 %v1214, %v1214
        %v1231 = vmul.f32 %v1215, %v1215
        %v1232 = vmul.f32 %v1216, %v1216
        %v1233 = vmul.f32 %v1217, %v1217
        %v1234 = vmul.f32 %v1218, %v1218
        %v1235 = vmul.f32 %v1219, %v1219
        %v1236 = vmul.f32 %v1220, %v1220
        %v1237 = vmul.f32 %v1221, %v1221
        %v1238 = vmul.f32 %v1222, %v1222
        %v1239 = vmul.f32 %v1223, %v1223
        %v1240 = vmul.f32 %v1224, %v1224
        %v1241 = vmul.f32 %v1225, %v1225
        %v1242 = vmul.f32 %v1226, %v1226
        %v1243 = vmul.f32 %v1227, %v1227
        %v1244 = vmul.f32 %v1228, %v1228
        %v1245 = vmul.f32 %v1229, %v1229
        %1246 = vadd.xlane.f32.xlu0 %v1230
        %v1247 = vpop.xlane.xlu0 %1246
        %1248 = vadd.xlane.f32.xlu0 %v1231
        %v1249 = vpop.xlane.xlu0 %1248
        %1250 = vadd.xlane.f32.xlu0 %v1232
        %v1251 = vpop.xlane.xlu0 %1250
        %1252 = vadd.xlane.f32.xlu0 %v1233
        %v1253 = vpop.xlane.xlu0 %1252
        %1254 = vadd.xlane.f32.xlu0 %v1234
        %v1255 = vpop.xlane.xlu0 %1254
        %1256 = vadd.xlane.f32.xlu0 %v1235
        %v1257 = vpop.xlane.xlu0 %1256
        %1258 = vadd.xlane.f32.xlu0 %v1236
        %v1259 = vpop.xlane.xlu0 %1258
        %1260 = vadd.xlane.f32.xlu0 %v1237
        %v1261 = vpop.xlane.xlu0 %1260
        %1262 = vadd.xlane.f32.xlu0 %v1238
        %v1263 = vpop.xlane.xlu0 %1262
        %1264 = vadd.xlane.f32.xlu0 %v1239
        %v1265 = vpop.xlane.xlu0 %1264
        %1266 = vadd.xlane.f32.xlu0 %v1240
        %v1267 = vpop.xlane.xlu0 %1266
        %1268 = vadd.xlane.f32.xlu0 %v1241
        %v1269 = vpop.xlane.xlu0 %1268
        %1270 = vadd.xlane.f32.xlu0 %v1242
        %v1271 = vpop.xlane.xlu0 %1270
        %1272 = vadd.xlane.f32.xlu0 %v1243
        %v1273 = vpop.xlane.xlu0 %1272
        %1274 = vadd.xlane.f32.xlu0 %v1244
        %v1275 = vpop.xlane.xlu0 %1274
        %1276 = vadd.xlane.f32.xlu0 %v1245
        %v1277 = vpop.xlane.xlu0 %1276
        %v1278 = vmul.f32 %v1247, %v1197
        %v1279 = vmul.f32 %v1249, %v1197
        %v1280 = vmul.f32 %v1251, %v1197
        %v1281 = vmul.f32 %v1253, %v1197
        %v1282 = vmul.f32 %v1255, %v1197
        %v1283 = vmul.f32 %v1257, %v1197
        %v1284 = vmul.f32 %v1259, %v1197
        %v1285 = vmul.f32 %v1261, %v1197
        %v1286 = vmul.f32 %v1263, %v1197
        %v1287 = vmul.f32 %v1265, %v1197
        %v1288 = vmul.f32 %v1267, %v1197
        %v1289 = vmul.f32 %v1269, %v1197
        %v1290 = vmul.f32 %v1271, %v1197
        %v1291 = vmul.f32 %v1273, %v1197
        %v1292 = vmul.f32 %v1275, %v1197
        %v1293 = vmul.f32 %v1277, %v1197
        %v1294 = vadd.f32 %v1278, 1e-05
        %v1295 = vadd.f32 %v1279, 1e-05
        %v1296 = vadd.f32 %v1280, 1e-05
        %v1297 = vadd.f32 %v1281, 1e-05
        %v1298 = vadd.f32 %v1282, 1e-05
        %v1299 = vadd.f32 %v1283, 1e-05
        %v1300 = vadd.f32 %v1284, 1e-05
        %v1301 = vadd.f32 %v1285, 1e-05
        %v1302 = vadd.f32 %v1286, 1e-05
        %v1303 = vadd.f32 %v1287, 1e-05
        %v1304 = vadd.f32 %v1288, 1e-05
        %v1305 = vadd.f32 %v1289, 1e-05
        %v1306 = vadd.f32 %v1290, 1e-05
        %v1307 = vadd.f32 %v1291, 1e-05
        %v1308 = vadd.f32 %v1292, 1e-05
        %v1309 = vadd.f32 %v1293, 1e-05
        %v1310 = vrsqrt.pop %v1294
        %v1311 = vrsqrt.pop %v1295
        %v1312 = vrsqrt.pop %v1296
        %v1313 = vrsqrt.pop %v1297
        %v1314 = vrsqrt.pop %v1298
        %v1315 = vrsqrt.pop %v1299
        %v1316 = vrsqrt.pop %v1300
        %v1317 = vrsqrt.pop %v1301
        %v1318 = vrsqrt.pop %v1302
        %v1319 = vrsqrt.pop %v1303
        %v1320 = vrsqrt.pop %v1304
        %v1321 = vrsqrt.pop %v1305
        %v1322 = vrsqrt.pop %v1306
        %v1323 = vrsqrt.pop %v1307
        %v1324 = vrsqrt.pop %v1308
        %v1325 = vrsqrt.pop %v1309
        %v1326 = vmul.f32 %v1214, %v1310
        %v1327 = vmul.f32 %v1215, %v1311
        %v1328 = vmul.f32 %v1216, %v1312
        %v1329 = vmul.f32 %v1217, %v1313
        %v1330 = vmul.f32 %v1218, %v1314
        %v1331 = vmul.f32 %v1219, %v1315
        %v1332 = vmul.f32 %v1220, %v1316
        %v1333 = vmul.f32 %v1221, %v1317
        %v1334 = vmul.f32 %v1222, %v1318
        %v1335 = vmul.f32 %v1223, %v1319
        %v1336 = vmul.f32 %v1224, %v1320
        %v1337 = vmul.f32 %v1225, %v1321
        %v1338 = vmul.f32 %v1226, %v1322
        %v1339 = vmul.f32 %v1227, %v1323
        %v1340 = vmul.f32 %v1228, %v1324
        %v1341 = vmul.f32 %v1229, %v1325
        %v1342 = vlaneseq
        %v1343 = vshrl.u32 %v1342, 7
        %v1344 = vsub.s32 0, %v1343
        %v1345 = vrot.slane %v1163, %v1344
        %v1346 = vmul.f32 %v1326, %v1345
        %v1347 = vmul.f32 %v1327, %v1345
        %v1348 = vmul.f32 %v1328, %v1345
        %v1349 = vmul.f32 %v1329, %v1345
        %v1350 = vmul.f32 %v1330, %v1345
        %v1351 = vmul.f32 %v1331, %v1345
        %v1352 = vmul.f32 %v1332, %v1345
        %v1353 = vmul.f32 %v1333, %v1345
        %v1354 = vmul.f32 %v1334, %v1345
        %v1355 = vmul.f32 %v1335, %v1345
        %v1356 = vmul.f32 %v1336, %v1345
        %v1357 = vmul.f32 %v1337, %v1345
        %v1358 = vmul.f32 %v1338, %v1345
        %v1359 = vmul.f32 %v1339, %v1345
        %v1360 = vmul.f32 %v1340, %v1345
        %v1361 = vmul.f32 %v1341, %v1345
        %v1362 = vlaneseq
        %v1363 = vshrl.u32 %v1362, 7
        %v1364 = vsub.s32 0, %v1363
        %v1365 = vrot.slane %v1164, %v1364
        %v1366 = vadd.f32 %v1346, %v1365
        %v1367 = vadd.f32 %v1347, %v1365
        %v1368 = vadd.f32 %v1348, %v1365
        %v1369 = vadd.f32 %v1349, %v1365
        %v1370 = vadd.f32 %v1350, %v1365
        %v1371 = vadd.f32 %v1351, %v1365
        %v1372 = vadd.f32 %v1352, %v1365
        %v1373 = vadd.f32 %v1353, %v1365
        %v1374 = vadd.f32 %v1354, %v1365
        %v1375 = vadd.f32 %v1355, %v1365
        %v1376 = vadd.f32 %v1356, %v1365
        %v1377 = vadd.f32 %v1357, %v1365
        %v1378 = vadd.f32 %v1358, %v1365
        %v1379 = vadd.f32 %v1359, %v1365
        %v1380 = vadd.f32 %v1360, %v1365
        %v1381 = vadd.f32 %v1361, %v1365
        %v1382 = vmul.f32 %v1366, 0.17677669
        %v1383 = vmul.f32 %v1367, 0.17677669
        %v1384 = vmul.f32 %v1368, 0.17677669
        %v1385 = vmul.f32 %v1369, 0.17677669
        %v1386 = vmul.f32 %v1370, 0.17677669
        %v1387 = vmul.f32 %v1371, 0.17677669
        %v1388 = vmul.f32 %v1372, 0.17677669
        %v1389 = vmul.f32 %v1373, 0.17677669
        %v1390 = vmul.f32 %v1374, 0.17677669
        %v1391 = vmul.f32 %v1375, 0.17677669
        %v1392 = vmul.f32 %v1376, 0.17677669
        %v1393 = vmul.f32 %v1377, 0.17677669
        %v1394 = vmul.f32 %v1378, 0.17677669
        %v1395 = vmul.f32 %v1379, 0.17677669
        %v1396 = vmul.f32 %v1380, 0.17677669
        %v1397 = vmul.f32 %v1381, 0.17677669
        %v1398 = vld [vmem:[#allocation10] sm:$0xff]
        %v1399 = vld [vmem:[#allocation10 + $0x8] sm:$0xff]
        %v1400 = vld [vmem:[#allocation10 + $0x10] sm:$0xff]
        %v1401 = vld [vmem:[#allocation10 + $0x18] sm:$0xff]
        %v1402 = vld [vmem:[#allocation10 + $0x20] sm:$0xff]
        %v1403 = vld [vmem:[#allocation10 + $0x28] sm:$0xff]
        %v1404 = vld [vmem:[#allocation10 + $0x30] sm:$0xff]
        %v1405 = vld [vmem:[#allocation10 + $0x38] sm:$0xff]
        %v1406 = vld [vmem:[#allocation10 + $0x40] sm:$0xff]
        %v1407 = vld [vmem:[#allocation10 + $0x48] sm:$0xff]
        %v1408 = vld [vmem:[#allocation10 + $0x50] sm:$0xff]
        %v1409 = vld [vmem:[#allocation10 + $0x58] sm:$0xff]
        %v1410 = vld [vmem:[#allocation10 + $0x60] sm:$0xff]
        %v1411 = vld [vmem:[#allocation10 + $0x68] sm:$0xff]
        %v1412 = vld [vmem:[#allocation10 + $0x70] sm:$0xff]
        %v1413 = vld [vmem:[#allocation10 + $0x78] sm:$0xff]
        %1414 = vmatprep.subr.mxu0 0.0
        %1415 = vmatpush1.msra.mxu0 %v1398
        %1416 = vmatprep.subr.mxu0 0.0
        %1417 = vmatpush1.msra.mxu0 %v1399
        %1418 = vmatprep.subr.mxu0 0.0
        %1419 = vmatpush1.msra.mxu0 %v1400
        %1420 = vmatprep.subr.mxu0 0.0
        %1421 = vmatpush1.msra.mxu0 %v1401
        %1422 = vmatprep.subr.mxu0 0.0
        %1423 = vmatpush1.msra.mxu0 %v1402
        %1424 = vmatprep.subr.mxu0 0.0
        %1425 = vmatpush1.msra.mxu0 %v1403
        %1426 = vmatprep.subr.mxu0 0.0
        %1427 = vmatpush1.msra.mxu0 %v1404
        %1428 = vmatprep.subr.mxu0 0.0
        %1429 = vmatpush1.msra.mxu0 %v1405
        %1430 = vmatprep.subr.mxu0 0.0
        %1431 = vmatpush1.msra.mxu0 %v1406
        %1432 = vmatprep.subr.mxu0 0.0
        %1433 = vmatpush1.msra.mxu0 %v1407
        %1434 = vmatprep.subr.mxu0 0.0
        %1435 = vmatpush1.msra.mxu0 %v1408
        %1436 = vmatprep.subr.mxu0 0.0
        %1437 = vmatpush1.msra.mxu0 %v1409
        %1438 = vmatprep.subr.mxu0 0.0
        %1439 = vmatpush1.msra.mxu0 %v1410
        %1440 = vmatprep.subr.mxu0 0.0
        %1441 = vmatpush1.msra.mxu0 %v1411
        %1442 = vmatprep.subr.mxu0 0.0
        %1443 = vmatpush1.msra.mxu0 %v1412
        %1444 = vmatprep.subr.mxu0 0.0
        %1445 = vmatpush1.msra.mxu0 %v1413
        %1446 = vmatprep.subr.mxu0 0.0
        %1447 = vmatpush1.msra.mxu0 0.0
        %1448 = vmatprep.subr.mxu0 0.0
        %1449 = vmatpush1.msra.mxu0 0.0
        %1450 = vmatprep.subr.mxu0 0.0
        %1451 = vmatpush1.msra.mxu0 0.0
        %1452 = vmatprep.subr.mxu0 0.0
        %1453 = vmatpush1.msra.mxu0 0.0
        %1454 = vmatprep.subr.mxu0 0.0
        %1455 = vmatpush1.msra.mxu0 0.0
        %1456 = vmatprep.subr.mxu0 0.0
        %1457 = vmatpush1.msra.mxu0 0.0
        %1458 = vmatprep.subr.mxu0 0.0
        %1459 = vmatpush1.msra.mxu0 0.0
        %1460 = vmatprep.subr.mxu0 0.0
        %1461 = vmatpush1.msra.mxu0 0.0
        %1462 = vmatprep.subr.mxu0 0.0
        %1463 = vmatpush1.msra.mxu0 0.0
        %1464 = vmatprep.subr.mxu0 0.0
        %1465 = vmatpush1.msra.mxu0 0.0
        %1466 = vmatprep.subr.mxu0 0.0
        %1467 = vmatpush1.msra.mxu0 0.0
        %1468 = vmatprep.subr.mxu0 0.0
        %1469 = vmatpush1.msra.mxu0 0.0
        %1470 = vmatprep.subr.mxu0 0.0
        %1471 = vmatpush1.msra.mxu0 0.0
        %1472 = vmatprep.subr.mxu0 0.0
        %1473 = vmatpush1.msra.mxu0 0.0
        %1474 = vmatprep.subr.mxu0 0.0
        %1475 = vmatpush1.msra.mxu0 0.0
        %1476 = vmatprep.subr.mxu0 0.0
        %1477 = vmatpush1.msra.mxu0 0.0
        %1478 = vmatprep.mubr.f32.mxu0 0.0
        %1479 = vmatmul.mubr.f32.gmra.mrb[0].mxu0 %v1382
        %v1480 = vpop.f32.mrb[0].mxu0
        %v1481 = vadd.f32 0.0, %v1480
        %v1482 = vpop.f32.mrb[0].mxu0
        %1483 = vmatprep.mubr.f32.mxu0 0.0
        %1484 = vmatmul.mubr.f32.gmra.mrb[0].mxu0 %v1383
        %v1485 = vpop.f32.mrb[0].mxu0
        %v1486 = vadd.f32 0.0, %v1485
        %v1487 = vpop.f32.mrb[0].mxu0
        %1488 = vmatprep.mubr.f32.mxu0 0.0
        %1489 = vmatmul.mubr.f32.gmra.mrb[0].mxu0 %v1384
        %v1490 = vpop.f32.mrb[0].mxu0
        %v1491 = vadd.f32 0.0, %v1490
        %v1492 = vpop.f32.mrb[0].mxu0
        %1493 = vmatprep.mubr.f32.mxu0 0.0
        %1494 = vmatmul.mubr.f32.gmra.mrb[0].mxu0 %v1385
        %v1495 = vpop.f32.mrb[0].mxu0
        %v1496 = vadd.f32 0.0, %v1495
        %v1497 = vpop.f32.mrb[0].mxu0
        %1498 = vmatprep.mubr.f32.mxu0 0.0
        %1499 = vmatmul.mubr.f32.gmra.mrb[0].mxu0 %v1386
        %v1500 = vpop.f32.mrb[0].mxu0
        %v1501 = vadd.f32 0.0, %v1500
        %v1502 = vpop.f32.mrb[0].mxu0
        %1503 = vmatprep.mubr.f32.mxu0 0.0
        %1504 = vmatmul.mubr.f32.gmra.mrb[0].mxu0 %v1387
        %v1505 = vpop.f32.mrb[0].mxu0
        %v1506 = vadd.f32 0.0, %v1505
        %v1507 = vpop.f32.mrb[0].mxu0
        %1508 = vmatprep.mubr.f32.mxu0 0.0
        %1509 = vmatmul.mubr.f32.gmra.mrb[0].mxu0 %v1388
        %v1510 = vpop.f32.mrb[0].mxu0
        %v1511 = vadd.f32 0.0, %v1510
        %v1512 = vpop.f32.mrb[0].mxu0
        %1513 = vmatprep.mubr.f32.mxu0 0.0
        %1514 = vmatmul.mubr.f32.gmra.mrb[0].mxu0 %v1389
        %v1515 = vpop.f32.mrb[0].mxu0
        %v1516 = vadd.f32 0.0, %v1515
        %v1517 = vpop.f32.mrb[0].mxu0
        %1518 = vmatprep.mubr.f32.mxu0 0.0
        %1519 = vmatmul.mubr.f32.gmra.mrb[0].mxu0 %v1390
        %v1520 = vpop.f32.mrb[0].mxu0
        %v1521 = vadd.f32 0.0, %v1520
        %v1522 = vpop.f32.mrb[0].mxu0
        %1523 = vmatprep.mubr.f32.mxu0 0.0
        %1524 = vmatmul.mubr.f32.gmra.mrb[0].mxu0 %v1391
        %v1525 = vpop.f32.mrb[0].mxu0
        %v1526 = vadd.f32 0.0, %v1525
        %v1527 = vpop.f32.mrb[0].mxu0
        %1528 = vmatprep.mubr.f32.mxu0 0.0
        %1529 = vmatmul.mubr.f32.gmra.mrb[0].mxu0 %v1392
        %v1530 = vpop.f32.mrb[0].mxu0
        %v1531 = vadd.f32 0.0, %v1530
        %v1532 = vpop.f32.mrb[0].mxu0
        %1533 = vmatprep.mubr.f32.mxu0 0.0
        %1534 = vmatmul.mubr.f32.gmra.mrb[0].mxu0 %v1393
        %v1535 = vpop.f32.mrb[0].mxu0
        %v1536 = vadd.f32 0.0, %v1535
        %v1537 = vpop.f32.mrb[0].mxu0
        %1538 = vmatprep.mubr.f32.mxu0 0.0
        %1539 = vmatmul.mubr.f32.gmra.mrb[0].mxu0 %v1394
        %v1540 = vpop.f32.mrb[0].mxu0
        %v1541 = vadd.f32 0.0, %v1540
        %v1542 = vpop.f32.mrb[0].mxu0
        %1543 = vmatprep.mubr.f32.mxu0 0.0
        %1544 = vmatmul.mubr.f32.gmra.mrb[0].mxu0 %v1395
        %v1545 = vpop.f32.mrb[0].mxu0
        %v1546 = vadd.f32 0.0, %v1545
        %v1547 = vpop.f32.mrb[0].mxu0
        %1548 = vmatprep.mubr.f32.mxu0 0.0
        %1549 = vmatmul.mubr.f32.gmra.mrb[0].mxu0 %v1396
        %v1550 = vpop.f32.mrb[0].mxu0
        %v1551 = vadd.f32 0.0, %v1550
        %v1552 = vpop.f32.mrb[0].mxu0
        %1553 = vmatprep.mubr.f32.mxu0 0.0
        %1554 = vmatmul.mubr.f32.gmra.mrb[0].mxu0 %v1397
        %v1555 = vpop.f32.mrb[0].mxu0
        %v1556 = vadd.f32 0.0, %v1555
        %v1557 = vpop.f32.mrb[0].mxu0
        %1558 = vdwg.mxu0
        %v1559 = vld [vmem:[%s480] sm:$0xff]
        %v1560 = vld [vmem:[%s480 + $0x8] sm:$0xff]
        %v1561 = vld [vmem:[%s480 + $0x10] sm:$0xff]
        %v1562 = vld [vmem:[%s480 + $0x18] sm:$0xff]
        %v1563 = vunpack.c.0.s8 %v1559
        %v1564 = vunpack.c.1.s8 %v1559
        %v1565 = vunpack.c.2.s8 %v1559
        %v1566 = vunpack.c.3.s8 %v1559
        %v1567 = vunpack.c.0.s8 %v1560
        %v1568 = vunpack.c.1.s8 %v1560
        %v1569 = vunpack.c.2.s8 %v1560
        %v1570 = vunpack.c.3.s8 %v1560
        %v1571 = vunpack.c.0.s8 %v1561
        %v1572 = vunpack.c.1.s8 %v1561
        %v1573 = vunpack.c.2.s8 %v1561
        %v1574 = vunpack.c.3.s8 %v1561
        %v1575 = vunpack.c.0.s8 %v1562
        %v1576 = vunpack.c.1.s8 %v1562
        %v1577 = vunpack.c.2.s8 %v1562
        %v1578 = vunpack.c.3.s8 %v1562
        %v1579 = vcvt.s32.f32 %v1563
        %v1580 = vcvt.s32.f32 %v1564
        %v1581 = vcvt.s32.f32 %v1565
        %v1582 = vcvt.s32.f32 %v1566
        %v1583 = vcvt.s32.f32 %v1567
        %v1584 = vcvt.s32.f32 %v1568
        %v1585 = vcvt.s32.f32 %v1569
        %v1586 = vcvt.s32.f32 %v1570
        %v1587 = vcvt.s32.f32 %v1571
        %v1588 = vcvt.s32.f32 %v1572
        %v1589 = vcvt.s32.f32 %v1573
        %v1590 = vcvt.s32.f32 %v1574
        %v1591 = vcvt.s32.f32 %v1575
        %v1592 = vcvt.s32.f32 %v1576
        %v1593 = vcvt.s32.f32 %v1577
        %v1594 = vcvt.s32.f32 %v1578
        %vm1595 = vcmp.eq.f32.partialorder %v1579, 0.0
        %vm1596 = vcmp.eq.f32.partialorder %v1580, 0.0
        %vm1597 = vcmp.eq.f32.partialorder %v1581, 0.0
        %vm1598 = vcmp.eq.f32.partialorder %v1582, 0.0
        %vm1599 = vcmp.eq.f32.partialorder %v1583, 0.0
        %vm1600 = vcmp.eq.f32.partialorder %v1584, 0.0
        %vm1601 = vcmp.eq.f32.partialorder %v1585, 0.0
        %vm1602 = vcmp.eq.f32.partialorder %v1586, 0.0
        %vm1603 = vcmp.eq.f32.partialorder %v1587, 0.0
        %vm1604 = vcmp.eq.f32.partialorder %v1588, 0.0
        %vm1605 = vcmp.eq.f32.partialorder %v1589, 0.0
        %vm1606 = vcmp.eq.f32.partialorder %v1590, 0.0
        %vm1607 = vcmp.eq.f32.partialorder %v1591, 0.0
        %vm1608 = vcmp.eq.f32.partialorder %v1592, 0.0
        %vm1609 = vcmp.eq.f32.partialorder %v1593, 0.0
        %vm1610 = vcmp.eq.f32.partialorder %v1594, 0.0
        %v1611 = vsel %vm1595, -1e+08, 0.0
        %v1612 = vsel %vm1596, -1e+08, 0.0
        %v1613 = vsel %vm1597, -1e+08, 0.0
        %v1614 = vsel %vm1598, -1e+08, 0.0
        %v1615 = vsel %vm1599, -1e+08, 0.0
        %v1616 = vsel %vm1600, -1e+08, 0.0
        %v1617 = vsel %vm1601, -1e+08, 0.0
        %v1618 = vsel %vm1602, -1e+08, 0.0
        %v1619 = vsel %vm1603, -1e+08, 0.0
        %v1620 = vsel %vm1604, -1e+08, 0.0
        %v1621 = vsel %vm1605, -1e+08, 0.0
        %v1622 = vsel %vm1606, -1e+08, 0.0
        %v1623 = vsel %vm1607, -1e+08, 0.0
        %v1624 = vsel %vm1608, -1e+08, 0.0
        %v1625 = vsel %vm1609, -1e+08, 0.0
        %v1626 = vsel %vm1610, -1e+08, 0.0
        %v1627 = vld [vmem:[#allocation2] sm:$0xff]
        %v1628 = vld [vmem:[#allocation2 + $0x8] sm:$0xff]
        %v1629 = vld [vmem:[#allocation2 + $0x10] sm:$0xff]
        %v1630 = vld [vmem:[#allocation2 + $0x18] sm:$0xff]
        %v1631 = vld [vmem:[#allocation2 + $0x20] sm:$0xff]
        %v1632 = vld [vmem:[#allocation2 + $0x28] sm:$0xff]
        %v1633 = vld [vmem:[#allocation2 + $0x30] sm:$0xff]
        %v1634 = vld [vmem:[#allocation2 + $0x38] sm:$0xff]
        %v1635 = vld [vmem:[#allocation2 + $0x40] sm:$0xff]
        %v1636 = vld [vmem:[#allocation2 + $0x48] sm:$0xff]
        %v1637 = vld [vmem:[#allocation2 + $0x50] sm:$0xff]
        %v1638 = vld [vmem:[#allocation2 + $0x58] sm:$0xff]
        %v1639 = vld [vmem:[#allocation2 + $0x60] sm:$0xff]
        %v1640 = vld [vmem:[#allocation2 + $0x68] sm:$0xff]
        %v1641 = vld [vmem:[#allocation2 + $0x70] sm:$0xff]
        %v1642 = vld [vmem:[#allocation2 + $0x78] sm:$0xff]
        %v1643 = vld [vmem:[#allocation3] sm:$0xff]
        %v1644 = vld [vmem:[#allocation3 + $0x8] sm:$0xff]
        %v1645 = vld [vmem:[#allocation3 + $0x10] sm:$0xff]
        %v1646 = vld [vmem:[#allocation3 + $0x18] sm:$0xff]
        %v1647 = vld [vmem:[#allocation3 + $0x20] sm:$0xff]
        %v1648 = vld [vmem:[#allocation3 + $0x28] sm:$0xff]
        %v1649 = vld [vmem:[#allocation3 + $0x30] sm:$0xff]
        %v1650 = vld [vmem:[#allocation3 + $0x38] sm:$0xff]
        %v1651 = vld [vmem:[#allocation3 + $0x40] sm:$0xff]
        %v1652 = vld [vmem:[#allocation3 + $0x48] sm:$0xff]
        %v1653 = vld [vmem:[#allocation3 + $0x50] sm:$0xff]
        %v1654 = vld [vmem:[#allocation3 + $0x58] sm:$0xff]
        %v1655 = vld [vmem:[#allocation3 + $0x60] sm:$0xff]
        %v1656 = vld [vmem:[#allocation3 + $0x68] sm:$0xff]
        %v1657 = vld [vmem:[#allocation3 + $0x70] sm:$0xff]
        %v1658 = vld [vmem:[#allocation3 + $0x78] sm:$0xff]
        %vm1659 = vcmask 261120
        %v1661 = vsel %vm1659, %v1481, 0
        %v1664 = vsel %vm1659, %v1486, 0
        %v1667 = vsel %vm1659, %v1491, 0
        %v1670 = vsel %vm1659, %v1496, 0
        %v1673 = vsel %vm1659, %v1501, 0
        %v1676 = vsel %vm1659, %v1506, 0
        %v1679 = vsel %vm1659, %v1511, 0
        %v1682 = vsel %vm1659, %v1516, 0
        %v1685 = vsel %vm1659, %v1521, 0
        %v1688 = vsel %vm1659, %v1526, 0
        %v1691 = vsel %vm1659, %v1531, 0
        %v1694 = vsel %vm1659, %v1536, 0
        %v1697 = vsel %vm1659, %v1541, 0
        %v1700 = vsel %vm1659, %v1546, 0
        %v1703 = vsel %vm1659, %v1551, 0
        %v1706 = vsel %vm1659, %v1556, 0
        %v1709 = vsel %vm1659, %v1627, 0
        %v1712 = vsel %vm1659, %v1628, 0
        %v1715 = vsel %vm1659, %v1629, 0
        %v1718 = vsel %vm1659, %v1630, 0
        %v1721 = vsel %vm1659, %v1631, 0
        %v1724 = vsel %vm1659, %v1632, 0
        %v1727 = vsel %vm1659, %v1633, 0
        %v1730 = vsel %vm1659, %v1634, 0
        %v1733 = vsel %vm1659, %v1635, 0
        %v1736 = vsel %vm1659, %v1636, 0
        %v1739 = vsel %vm1659, %v1637, 0
        %v1742 = vsel %vm1659, %v1638, 0
        %v1745 = vsel %vm1659, %v1639, 0
        %v1748 = vsel %vm1659, %v1640, 0
        %v1751 = vsel %vm1659, %v1641, 0
        %v1754 = vsel %vm1659, %v1642, 0
        %1756 = vmatprep.subr.mxu0 0.0
        %1757 = vmatpush1.xpose.msra.mxu0 %v1709
        %1758 = vmatprep.subr.mxu0 0.0
        %1759 = vmatpush1.xpose.msra.mxu0 %v1712
        %1760 = vmatprep.subr.mxu0 0.0
        %1761 = vmatpush1.xpose.msra.mxu0 %v1715
        %1762 = vmatprep.subr.mxu0 0.0
        %1763 = vmatpush1.xpose.msra.mxu0 %v1718
        %1764 = vmatprep.subr.mxu0 0.0
        %1765 = vmatpush1.xpose.msra.mxu0 %v1721
        %1766 = vmatprep.subr.mxu0 0.0
        %1767 = vmatpush1.xpose.msra.mxu0 %v1724
        %1768 = vmatprep.subr.mxu0 0.0
        %1769 = vmatpush1.xpose.msra.mxu0 %v1727
        %1770 = vmatprep.subr.mxu0 0.0
        %1771 = vmatpush1.xpose.msra.mxu0 %v1730
        %1772 = vmatprep.subr.mxu0 0.0
        %1773 = vmatpush1.xpose.msra.mxu0 %v1733
        %1774 = vmatprep.subr.mxu0 0.0
        %1775 = vmatpush1.xpose.msra.mxu0 %v1736
        %1776 = vmatprep.subr.mxu0 0.0
        %1777 = vmatpush1.xpose.msra.mxu0 %v1739
        %1778 = vmatprep.subr.mxu0 0.0
        %1779 = vmatpush1.xpose.msra.mxu0 %v1742
        %1780 = vmatprep.subr.mxu0 0.0
        %1781 = vmatpush1.xpose.msra.mxu0 %v1745
        %1782 = vmatprep.subr.mxu0 0.0
        %1783 = vmatpush1.xpose.msra.mxu0 %v1748
        %1784 = vmatprep.subr.mxu0 0.0
        %1785 = vmatpush1.xpose.msra.mxu0 %v1751
        %1786 = vmatprep.subr.mxu0 0.0
        %1787 = vmatpush1.xpose.msra.mxu0 %v1754
        %1788 = vmatprep.subr.mxu0 0.0
        %1789 = vmatpush1.xpose.msra.mxu0 0.0
        %1790 = vmatprep.subr.mxu0 0.0
        %1791 = vmatpush1.xpose.msra.mxu0 0.0
        %1792 = vmatprep.subr.mxu0 0.0
        %1793 = vmatpush1.xpose.msra.mxu0 0.0
        %1794 = vmatprep.subr.mxu0 0.0
        %1795 = vmatpush1.xpose.msra.mxu0 0.0
        %1796 = vmatprep.subr.mxu0 0.0
        %1797 = vmatpush1.xpose.msra.mxu0 0.0
        %1798 = vmatprep.subr.mxu0 0.0
        %1799 = vmatpush1.xpose.msra.mxu0 0.0
        %1800 = vmatprep.subr.mxu0 0.0
        %1801 = vmatpush1.xpose.msra.mxu0 0.0
        %1802 = vmatprep.subr.mxu0 0.0
        %1803 = vmatpush1.xpose.msra.mxu0 0.0
        %1804 = vmatprep.subr.mxu0 0.0
        %1805 = vmatpush1.xpose.msra.mxu0 0.0
        %1806 = vmatprep.subr.mxu0 0.0
        %1807 = vmatpush1.xpose.msra.mxu0 0.0
        %1808 = vmatprep.subr.mxu0 0.0
        %1809 = vmatpush1.xpose.msra.mxu0 0.0
        %1810 = vmatprep.subr.mxu0 0.0
        %1811 = vmatpush1.xpose.msra.mxu0 0.0
        %1812 = vmatprep.subr.mxu0 0.0
        %1813 = vmatpush1.xpose.msra.mxu0 0.0
        %1814 = vmatprep.subr.mxu0 0.0
        %1815 = vmatpush1.xpose.msra.mxu0 0.0
        %1816 = vmatprep.subr.mxu0 0.0
        %1817 = vmatpush1.xpose.msra.mxu0 0.0
        %1818 = vmatprep.subr.mxu0 0.0
        %1819 = vmatpush1.xpose.msra.mxu0 0.0
        %1820 = vmatprep.mubr.f32.mxu0 0.0
        %1821 = vmatmul.mubr.f32.gmra.mrb[0].mxu0 %v1661
        %v1822 = vpop.f32.mrb[0].mxu0
        %v1823 = vadd.f32 %v1611, %v1822
        %v1824 = vpop.f32.mrb[0].mxu0
        %1825 = vmatprep.mubr.f32.mxu0 0.0
        %1826 = vmatmul.mubr.f32.gmra.mrb[0].mxu0 %v1664
        %v1827 = vpop.f32.mrb[0].mxu0
        %v1828 = vadd.f32 %v1612, %v1827
        %v1829 = vpop.f32.mrb[0].mxu0
        %1830 = vmatprep.mubr.f32.mxu0 0.0
        %1831 = vmatmul.mubr.f32.gmra.mrb[0].mxu0 %v1667
        %v1832 = vpop.f32.mrb[0].mxu0
        %v1833 = vadd.f32 %v1613, %v1832
        %v1834 = vpop.f32.mrb[0].mxu0
        %1835 = vmatprep.mubr.f32.mxu0 0.0
        %1836 = vmatmul.mubr.f32.gmra.mrb[0].mxu0 %v1670
        %v1837 = vpop.f32.mrb[0].mxu0
        %v1838 = vadd.f32 %v1614, %v1837
        %v1839 = vpop.f32.mrb[0].mxu0
        %1840 = vmatprep.mubr.f32.mxu0 0.0
        %1841 = vmatmul.mubr.f32.gmra.mrb[0].mxu0 %v1673
        %v1842 = vpop.f32.mrb[0].mxu0
        %v1843 = vadd.f32 %v1615, %v1842
        %v1844 = vpop.f32.mrb[0].mxu0
        %1845 = vmatprep.mubr.f32.mxu0 0.0
        %1846 = vmatmul.mubr.f32.gmra.mrb[0].mxu0 %v1676
        %v1847 = vpop.f32.mrb[0].mxu0
        %v1848 = vadd.f32 %v1616, %v1847
        %v1849 = vpop.f32.mrb[0].mxu0
        %1850 = vmatprep.mubr.f32.mxu0 0.0
        %1851 = vmatmul.mubr.f32.gmra.mrb[0].mxu0 %v1679
        %v1852 = vpop.f32.mrb[0].mxu0
        %v1853 = vadd.f32 %v1617, %v1852
        %v1854 = vpop.f32.mrb[0].mxu0
        %1855 = vmatprep.mubr.f32.mxu0 0.0
        %1856 = vmatmul.mubr.f32.gmra.mrb[0].mxu0 %v1682
        %v1857 = vpop.f32.mrb[0].mxu0
        %v1858 = vadd.f32 %v1618, %v1857
        %v1859 = vpop.f32.mrb[0].mxu0
        %1860 = vmatprep.mubr.f32.mxu0 0.0
        %1861 = vmatmul.mubr.f32.gmra.mrb[0].mxu0 %v1685
        %v1862 = vpop.f32.mrb[0].mxu0
        %v1863 = vadd.f32 %v1619, %v1862
        %v1864 = vpop.f32.mrb[0].mxu0
        %1865 = vmatprep.mubr.f32.mxu0 0.0
        %1866 = vmatmul.mubr.f32.gmra.mrb[0].mxu0 %v1688
        %v1867 = vpop.f32.mrb[0].mxu0
        %v1868 = vadd.f32 %v1620, %v1867
        %v1869 = vpop.f32.mrb[0].mxu0
        %1870 = vmatprep.mubr.f32.mxu0 0.0
        %1871 = vmatmul.mubr.f32.gmra.mrb[0].mxu0 %v1691
        %v1872 = vpop.f32.mrb[0].mxu0
        %v1873 = vadd.f32 %v1621, %v1872
        %v1874 = vpop.f32.mrb[0].mxu0
        %1875 = vmatprep.mubr.f32.mxu0 0.0
        %1876 = vmatmul.mubr.f32.gmra.mrb[0].mxu0 %v1694
        %v1877 = vpop.f32.mrb[0].mxu0
        %v1878 = vadd.f32 %v1622, %v1877
        %v1879 = vpop.f32.mrb[0].mxu0
        %1880 = vmatprep.mubr.f32.mxu0 0.0
        %1881 = vmatmul.mubr.f32.gmra.mrb[0].mxu0 %v1697
        %v1882 = vpop.f32.mrb[0].mxu0
        %v1883 = vadd.f32 %v1623, %v1882
        %v1884 = vpop.f32.mrb[0].mxu0
        %1885 = vmatprep.mubr.f32.mxu0 0.0
        %1886 = vmatmul.mubr.f32.gmra.mrb[0].mxu0 %v1700
        %v1887 = vpop.f32.mrb[0].mxu0
        %v1888 = vadd.f32 %v1624, %v1887
        %v1889 = vpop.f32.mrb[0].mxu0
        %1890 = vmatprep.mubr.f32.mxu0 0.0
        %1891 = vmatmul.mubr.f32.gmra.mrb[0].mxu0 %v1703
        %v1892 = vpop.f32.mrb[0].mxu0
        %v1893 = vadd.f32 %v1625, %v1892
        %v1894 = vpop.f32.mrb[0].mxu0
        %1895 = vmatprep.mubr.f32.mxu0 0.0
        %1896 = vmatmul.mubr.f32.gmra.mrb[0].mxu0 %v1706
        %v1897 = vpop.f32.mrb[0].mxu0
        %v1898 = vadd.f32 %v1626, %v1897
        %v1899 = vpop.f32.mrb[0].mxu0
        %1900 = vdwg.mxu0
        %1901 = vmax.xlane.f32.xlu0 %v1823
        %v1902 = vpop.xlane.xlu0 %1901
        %1903 = vmax.xlane.f32.xlu0 %v1828
        %v1904 = vpop.xlane.xlu0 %1903
        %1905 = vmax.xlane.f32.xlu0 %v1833
        %v1906 = vpop.xlane.xlu0 %1905
        %1907 = vmax.xlane.f32.xlu0 %v1838
        %v1908 = vpop.xlane.xlu0 %1907
        %1909 = vmax.xlane.f32.xlu0 %v1843
        %v1910 = vpop.xlane.xlu0 %1909
        %1911 = vmax.xlane.f32.xlu0 %v1848
        %v1912 = vpop.xlane.xlu0 %1911
        %1913 = vmax.xlane.f32.xlu0 %v1853
        %v1914 = vpop.xlane.xlu0 %1913
        %1915 = vmax.xlane.f32.xlu0 %v1858
        %v1916 = vpop.xlane.xlu0 %1915
        %1917 = vmax.xlane.f32.xlu0 %v1863
        %v1918 = vpop.xlane.xlu0 %1917
        %1919 = vmax.xlane.f32.xlu0 %v1868
        %v1920 = vpop.xlane.xlu0 %1919
        %1921 = vmax.xlane.f32.xlu0 %v1873
        %v1922 = vpop.xlane.xlu0 %1921
        %1923 = vmax.xlane.f32.xlu0 %v1878
        %v1924 = vpop.xlane.xlu0 %1923
        %1925 = vmax.xlane.f32.xlu0 %v1883
        %v1926 = vpop.xlane.xlu0 %1925
        %1927 = vmax.xlane.f32.xlu0 %v1888
        %v1928 = vpop.xlane.xlu0 %1927
        %1929 = vmax.xlane.f32.xlu0 %v1893
        %v1930 = vpop.xlane.xlu0 %1929
        %1931 = vmax.xlane.f32.xlu0 %v1898
        %v1932 = vpop.xlane.xlu0 %1931
        %v1933 = vsub.f32 %v1823, %v1902
        %v1934 = vsub.f32 %v1828, %v1904
        %v1935 = vsub.f32 %v1833, %v1906
        %v1936 = vsub.f32 %v1838, %v1908
        %v1937 = vsub.f32 %v1843, %v1910
        %v1938 = vsub.f32 %v1848, %v1912
        %v1939 = vsub.f32 %v1853, %v1914
        %v1940 = vsub.f32 %v1858, %v1916
        %v1941 = vsub.f32 %v1863, %v1918
        %v1942 = vsub.f32 %v1868, %v1920
        %v1943 = vsub.f32 %v1873, %v1922
        %v1944 = vsub.f32 %v1878, %v1924
        %v1945 = vsub.f32 %v1883, %v1926
        %v1946 = vsub.f32 %v1888, %v1928
        %v1947 = vsub.f32 %v1893, %v1930
        %v1948 = vsub.f32 %v1898, %v1932
        %v1949 = vmul.f32 %v1933, 1.442695
        %v1950 = vpow.pop %v1949
        %v1951 = vmul.f32 %v1934, 1.442695
        %v1952 = vpow.pop %v1951
        %v1953 = vmul.f32 %v1935, 1.442695
        %v1954 = vpow.pop %v1953
        %v1955 = vmul.f32 %v1936, 1.442695
        %v1956 = vpow.pop %v1955
        %v1957 = vmul.f32 %v1937, 1.442695
        %v1958 = vpow.pop %v1957
        %v1959 = vmul.f32 %v1938, 1.442695
        %v1960 = vpow.pop %v1959
        %v1961 = vmul.f32 %v1939, 1.442695
        %v1962 = vpow.pop %v1961
        %v1963 = vmul.f32 %v1940, 1.442695
        %v1964 = vpow.pop %v1963
        %v1965 = vmul.f32 %v1941, 1.442695
        %v1966 = vpow.pop %v1965
        %v1967 = vmul.f32 %v1942, 1.442695
        %v1968 = vpow.pop %v1967
        %v1969 = vmul.f32 %v1943, 1.442695
        %v1970 = vpow.pop %v1969
        %v1971 = vmul.f32 %v1944, 1.442695
        %v1972 = vpow.pop %v1971
        %v1973 = vmul.f32 %v1945, 1.442695
        %v1974 = vpow.pop %v1973
        %v1975 = vmul.f32 %v1946, 1.442695
        %v1976 = vpow.pop %v1975
        %v1977 = vmul.f32 %v1947, 1.442695
        %v1978 = vpow.pop %v1977
        %v1979 = vmul.f32 %v1948, 1.442695
        %v1980 = vpow.pop %v1979
        %1981 = vadd.xlane.f32.xlu0 %v1950
        %v1982 = vpop.xlane.xlu0 %1981
        %1983 = vadd.xlane.f32.xlu0 %v1952
        %v1984 = vpop.xlane.xlu0 %1983
        %1985 = vadd.xlane.f32.xlu0 %v1954
        %v1986 = vpop.xlane.xlu0 %1985
        %1987 = vadd.xlane.f32.xlu0 %v1956
        %v1988 = vpop.xlane.xlu0 %1987
        %1989 = vadd.xlane.f32.xlu0 %v1958
        %v1990 = vpop.xlane.xlu0 %1989
        %1991 = vadd.xlane.f32.xlu0 %v1960
        %v1992 = vpop.xlane.xlu0 %1991
        %1993 = vadd.xlane.f32.xlu0 %v1962
        %v1994 = vpop.xlane.xlu0 %1993
        %1995 = vadd.xlane.f32.xlu0 %v1964
        %v1996 = vpop.xlane.xlu0 %1995
        %1997 = vadd.xlane.f32.xlu0 %v1966
        %v1998 = vpop.xlane.xlu0 %1997
        %1999 = vadd.xlane.f32.xlu0 %v1968
        %v2000 = vpop.xlane.xlu0 %1999
        %2001 = vadd.xlane.f32.xlu0 %v1970
        %v2002 = vpop.xlane.xlu0 %2001
        %2003 = vadd.xlane.f32.xlu0 %v1972
        %v2004 = vpop.xlane.xlu0 %2003
        %2005 = vadd.xlane.f32.xlu0 %v1974
        %v2006 = vpop.xlane.xlu0 %2005
        %2007 = vadd.xlane.f32.xlu0 %v1976
        %v2008 = vpop.xlane.xlu0 %2007
        %2009 = vadd.xlane.f32.xlu0 %v1978
        %v2010 = vpop.xlane.xlu0 %2009
        %2011 = vadd.xlane.f32.xlu0 %v1980
        %v2012 = vpop.xlane.xlu0 %2011
        %v2013 = vrcp.pop %v1982
        %v2014 = vrcp.pop %v1984
        %v2015 = vrcp.pop %v1986
        %v2016 = vrcp.pop %v1988
        %v2017 = vrcp.pop %v1990
        %v2018 = vrcp.pop %v1992
        %v2019 = vrcp.pop %v1994
        %v2020 = vrcp.pop %v1996
        %v2021 = vrcp.pop %v1998
        %v2022 = vrcp.pop %v2000
        %v2023 = vrcp.pop %v2002
        %v2024 = vrcp.pop %v2004
        %v2025 = vrcp.pop %v2006
        %v2026 = vrcp.pop %v2008
        %v2027 = vrcp.pop %v2010
        %v2028 = vrcp.pop %v2012
        %v2029 = vmul.f32 %v1950, %v2013
        %v2030 = vmul.f32 %v1952, %v2014
        %v2031 = vmul.f32 %v1954, %v2015
        %v2032 = vmul.f32 %v1956, %v2016
        %v2033 = vmul.f32 %v1958, %v2017
        %v2034 = vmul.f32 %v1960, %v2018
        %v2035 = vmul.f32 %v1962, %v2019
        %v2036 = vmul.f32 %v1964, %v2020
        %v2037 = vmul.f32 %v1966, %v2021
        %v2038 = vmul.f32 %v1968, %v2022
        %v2039 = vmul.f32 %v1970, %v2023
        %v2040 = vmul.f32 %v1972, %v2024
        %v2041 = vmul.f32 %v1974, %v2025
        %v2042 = vmul.f32 %v1976, %v2026
        %v2043 = vmul.f32 %v1978, %v2027
        %v2044 = vmul.f32 %v1980, %v2028
        %v2045 = vpack.c.bf16 %v2030, %v2029
        %v2046 = vpack.c.bf16 %v2032, %v2031
        %v2047 = vpack.c.bf16 %v2034, %v2033
        %v2048 = vpack.c.bf16 %v2036, %v2035
        %v2049 = vpack.c.bf16 %v2038, %v2037
        %v2050 = vpack.c.bf16 %v2040, %v2039
        %v2051 = vpack.c.bf16 %v2042, %v2041
        %v2052 = vpack.c.bf16 %v2044, %v2043
        %v2061 = vunpack.c.l.b16 %v2045
        %v2062 = vunpack.c.h.b16 %v2045
        %v2063 = vunpack.c.l.b16 %v2046
        %v2064 = vunpack.c.h.b16 %v2046
        %v2065 = vunpack.c.l.b16 %v2047
        %v2066 = vunpack.c.h.b16 %v2047
        %v2067 = vunpack.c.l.b16 %v2048
        %v2068 = vunpack.c.h.b16 %v2048
        %v2069 = vunpack.c.l.b16 %v2049
        %v2070 = vunpack.c.h.b16 %v2049
        %v2071 = vunpack.c.l.b16 %v2050
        %v2072 = vunpack.c.h.b16 %v2050
        %v2073 = vunpack.c.l.b16 %v2051
        %v2074 = vunpack.c.h.b16 %v2051
        %v2075 = vunpack.c.l.b16 %v2052
        %v2076 = vunpack.c.h.b16 %v2052
        %v2077 = vpack.c.b16 %v2061, %v2061
        %v2078 = vpack.c.b16 %v2062, %v2062
        %v2079 = vpack.c.b16 %v2063, %v2063
        %v2080 = vpack.c.b16 %v2064, %v2064
        %v2081 = vpack.c.b16 %v2065, %v2065
        %v2082 = vpack.c.b16 %v2066, %v2066
        %v2083 = vpack.c.b16 %v2067, %v2067
        %v2084 = vpack.c.b16 %v2068, %v2068
        %v2085 = vpack.c.b16 %v2069, %v2069
        %v2086 = vpack.c.b16 %v2070, %v2070
        %v2087 = vpack.c.b16 %v2071, %v2071
        %v2088 = vpack.c.b16 %v2072, %v2072
        %v2089 = vpack.c.b16 %v2073, %v2073
        %v2090 = vpack.c.b16 %v2074, %v2074
        %v2091 = vpack.c.b16 %v2075, %v2075
        %v2092 = vpack.c.b16 %v2076, %v2076
        %2109 = vst [vmem:[%s547] sm:$0xf] %v2077
        %2110 = vst [vmem:[%s547 + $0x4] sm:$0xf] %v2078
        %2111 = vst [vmem:[%s547 + $0x8] sm:$0xf] %v2079
        %2112 = vst [vmem:[%s547 + $0xc] sm:$0xf] %v2080
        %2113 = vst [vmem:[%s547 + $0x10] sm:$0xf] %v2081
        %2114 = vst [vmem:[%s547 + $0x14] sm:$0xf] %v2082
        %2115 = vst [vmem:[%s547 + $0x18] sm:$0xf] %v2083
        %2116 = vst [vmem:[%s547 + $0x1c] sm:$0xf] %v2084
        %2117 = vst [vmem:[%s547 + $0x20] sm:$0xf] %v2085
        %2118 = vst [vmem:[%s547 + $0x24] sm:$0xf] %v2086
        %2119 = vst [vmem:[%s547 + $0x28] sm:$0xf] %v2087
        %2120 = vst [vmem:[%s547 + $0x2c] sm:$0xf] %v2088
        %2121 = vst [vmem:[%s547 + $0x30] sm:$0xf] %v2089
        %2122 = vst [vmem:[%s547 + $0x34] sm:$0xf] %v2090
        %2123 = vst [vmem:[%s547 + $0x38] sm:$0xf] %v2091
        %2124 = vst [vmem:[%s547 + $0x3c] sm:$0xf] %v2092
        %2125 = vmatprep.subr.mxu0 0.0
        %2126 = vmatpush1.msra.mxu0 %v1643
        %2127 = vmatprep.subr.mxu0 0.0
        %2128 = vmatpush1.msra.mxu0 %v1644
        %2129 = vmatprep.subr.mxu0 0.0
        %2130 = vmatpush1.msra.mxu0 %v1645
        %2131 = vmatprep.subr.mxu0 0.0
        %2132 = vmatpush1.msra.mxu0 %v1646
        %2133 = vmatprep.subr.mxu0 0.0
        %2134 = vmatpush1.msra.mxu0 %v1647
        %2135 = vmatprep.subr.mxu0 0.0
        %2136 = vmatpush1.msra.mxu0 %v1648
        %2137 = vmatprep.subr.mxu0 0.0
        %2138 = vmatpush1.msra.mxu0 %v1649
        %2139 = vmatprep.subr.mxu0 0.0
        %2140 = vmatpush1.msra.mxu0 %v1650
        %2141 = vmatprep.subr.mxu0 0.0
        %2142 = vmatpush1.msra.mxu0 %v1651
        %2143 = vmatprep.subr.mxu0 0.0
        %2144 = vmatpush1.msra.mxu0 %v1652
        %2145 = vmatprep.subr.mxu0 0.0
        %2146 = vmatpush1.msra.mxu0 %v1653
        %2147 = vmatprep.subr.mxu0 0.0
        %2148 = vmatpush1.msra.mxu0 %v1654
        %2149 = vmatprep.subr.mxu0 0.0
        %2150 = vmatpush1.msra.mxu0 %v1655
        %2151 = vmatprep.subr.mxu0 0.0
        %2152 = vmatpush1.msra.mxu0 %v1656
        %2153 = vmatprep.subr.mxu0 0.0
        %2154 = vmatpush1.msra.mxu0 %v1657
        %2155 = vmatprep.subr.mxu0 0.0
        %2156 = vmatpush1.msra.mxu0 %v1658
        %2157 = vmatprep.subr.mxu0 0.0
        %2158 = vmatpush1.msra.mxu0 0.0
        %2159 = vmatprep.subr.mxu0 0.0
        %2160 = vmatpush1.msra.mxu0 0.0
        %2161 = vmatprep.subr.mxu0 0.0
        %2162 = vmatpush1.msra.mxu0 0.0
        %2163 = vmatprep.subr.mxu0 0.0
        %2164 = vmatpush1.msra.mxu0 0.0
        %2165 = vmatprep.subr.mxu0 0.0
        %2166 = vmatpush1.msra.mxu0 0.0
        %2167 = vmatprep.subr.mxu0 0.0
        %2168 = vmatpush1.msra.mxu0 0.0
        %2169 = vmatprep.subr.mxu0 0.0
        %2170 = vmatpush1.msra.mxu0 0.0
        %2171 = vmatprep.subr.mxu0 0.0
        %2172 = vmatpush1.msra.mxu0 0.0
        %2173 = vmatprep.subr.mxu0 0.0
        %2174 = vmatpush1.msra.mxu0 0.0
        %2175 = vmatprep.subr.mxu0 0.0
        %2176 = vmatpush1.msra.mxu0 0.0
        %2177 = vmatprep.subr.mxu0 0.0
        %2178 = vmatpush1.msra.mxu0 0.0
        %2179 = vmatprep.subr.mxu0 0.0
        %2180 = vmatpush1.msra.mxu0 0.0
        %2181 = vmatprep.subr.mxu0 0.0
        %2182 = vmatpush1.msra.mxu0 0.0
        %2183 = vmatprep.subr.mxu0 0.0
        %2184 = vmatpush1.msra.mxu0 0.0
        %2185 = vmatprep.subr.mxu0 0.0
        %2186 = vmatpush1.msra.mxu0 0.0
        %2187 = vmatprep.subr.mxu0 0.0
        %2188 = vmatpush1.msra.mxu0 0.0
        %2189 = vmatprep.mubr.f32.mxu0 0.0
        %2190 = vmatmul.mubr.f32.gmra.mrb[0].mxu0 %v2029
        %v2191 = vpop.f32.mrb[0].mxu0
        %v2192 = vadd.f32 0.0, %v2191
        %v2193 = vpop.f32.mrb[0].mxu0
        %2194 = vmatprep.mubr.f32.mxu0 0.0
        %2195 = vmatmul.mubr.f32.gmra.mrb[0].mxu0 %v2030
        %v2196 = vpop.f32.mrb[0].mxu0
        %v2197 = vadd.f32 0.0, %v2196
        %v2198 = vpop.f32.mrb[0].mxu0
        %2199 = vmatprep.mubr.f32.mxu0 0.0
        %2200 = vmatmul.mubr.f32.gmra.mrb[0].mxu0 %v2031
        %v2201 = vpop.f32.mrb[0].mxu0
        %v2202 = vadd.f32 0.0, %v2201
        %v2203 = vpop.f32.mrb[0].mxu0
        %2204 = vmatprep.mubr.f32.mxu0 0.0
        %2205 = vmatmul.mubr.f32.gmra.mrb[0].mxu0 %v2032
        %v2206 = vpop.f32.mrb[0].mxu0
        %v2207 = vadd.f32 0.0, %v2206
        %v2208 = vpop.f32.mrb[0].mxu0
        %2209 = vmatprep.mubr.f32.mxu0 0.0
        %2210 = vmatmul.mubr.f32.gmra.mrb[0].mxu0 %v2033
        %v2211 = vpop.f32.mrb[0].mxu0
        %v2212 = vadd.f32 0.0, %v2211
        %v2213 = vpop.f32.mrb[0].mxu0
        %2214 = vmatprep.mubr.f32.mxu0 0.0
        %2215 = vmatmul.mubr.f32.gmra.mrb[0].mxu0 %v2034
        %v2216 = vpop.f32.mrb[0].mxu0
        %v2217 = vadd.f32 0.0, %v2216
        %v2218 = vpop.f32.mrb[0].mxu0
        %2219 = vmatprep.mubr.f32.mxu0 0.0
        %2220 = vmatmul.mubr.f32.gmra.mrb[0].mxu0 %v2035
        %v2221 = vpop.f32.mrb[0].mxu0
        %v2222 = vadd.f32 0.0, %v2221
        %v2223 = vpop.f32.mrb[0].mxu0
        %2224 = vmatprep.mubr.f32.mxu0 0.0
        %2225 = vmatmul.mubr.f32.gmra.mrb[0].mxu0 %v2036
        %v2226 = vpop.f32.mrb[0].mxu0
        %v2227 = vadd.f32 0.0, %v2226
        %v2228 = vpop.f32.mrb[0].mxu0
        %2229 = vmatprep.mubr.f32.mxu0 0.0
        %2230 = vmatmul.mubr.f32.gmra.mrb[0].mxu0 %v2037
        %v2231 = vpop.f32.mrb[0].mxu0
        %v2232 = vadd.f32 0.0, %v2231
        %v2233 = vpop.f32.mrb[0].mxu0
        %2234 = vmatprep.mubr.f32.mxu0 0.0
        %2235 = vmatmul.mubr.f32.gmra.mrb[0].mxu0 %v2038
        %v2236 = vpop.f32.mrb[0].mxu0
        %v2237 = vadd.f32 0.0, %v2236
        %v2238 = vpop.f32.mrb[0].mxu0
        %2239 = vmatprep.mubr.f32.mxu0 0.0
        %2240 = vmatmul.mubr.f32.gmra.mrb[0].mxu0 %v2039
        %v2241 = vpop.f32.mrb[0].mxu0
        %v2242 = vadd.f32 0.0, %v2241
        %v2243 = vpop.f32.mrb[0].mxu0
        %2244 = vmatprep.mubr.f32.mxu0 0.0
        %2245 = vmatmul.mubr.f32.gmra.mrb[0].mxu0 %v2040
        %v2246 = vpop.f32.mrb[0].mxu0
        %v2247 = vadd.f32 0.0, %v2246
        %v2248 = vpop.f32.mrb[0].mxu0
        %2249 = vmatprep.mubr.f32.mxu0 0.0
        %2250 = vmatmul.mubr.f32.gmra.mrb[0].mxu0 %v2041
        %v2251 = vpop.f32.mrb[0].mxu0
        %v2252 = vadd.f32 0.0, %v2251
        %v2253 = vpop.f32.mrb[0].mxu0
        %2254 = vmatprep.mubr.f32.mxu0 0.0
        %2255 = vmatmul.mubr.f32.gmra.mrb[0].mxu0 %v2042
        %v2256 = vpop.f32.mrb[0].mxu0
        %v2257 = vadd.f32 0.0, %v2256
        %v2258 = vpop.f32.mrb[0].mxu0
        %2259 = vmatprep.mubr.f32.mxu0 0.0
        %2260 = vmatmul.mubr.f32.gmra.mrb[0].mxu0 %v2043
        %v2261 = vpop.f32.mrb[0].mxu0
        %v2262 = vadd.f32 0.0, %v2261
        %v2263 = vpop.f32.mrb[0].mxu0
        %2264 = vmatprep.mubr.f32.mxu0 0.0
        %2265 = vmatmul.mubr.f32.gmra.mrb[0].mxu0 %v2044
        %v2266 = vpop.f32.mrb[0].mxu0
        %v2267 = vadd.f32 0.0, %v2266
        %v2268 = vpop.f32.mrb[0].mxu0
        %2269 = vdwg.mxu0
        %v2270 = vld [vmem:[#allocation12] sm:$0xff]
        %v2271 = vld [vmem:[#allocation12 + $0x8] sm:$0xff]
        %v2272 = vld [vmem:[#allocation12 + $0x10] sm:$0xff]
        %v2273 = vld [vmem:[#allocation12 + $0x18] sm:$0xff]
        %2274 = vrot.lane.b32.xlu0 %v1481, 96
        %v2275 = vpop.permute.xlu0 %2274
        %2276 = vrot.lane.b32.xlu0 %v1486, 96
        %v2277 = vpop.permute.xlu0 %2276
        %2278 = vrot.lane.b32.xlu0 %v1491, 96
        %v2279 = vpop.permute.xlu0 %2278
        %2280 = vrot.lane.b32.xlu0 %v1496, 96
        %v2281 = vpop.permute.xlu0 %2280
        %2282 = vrot.lane.b32.xlu0 %v1501, 96
        %v2283 = vpop.permute.xlu0 %2282
        %2284 = vrot.lane.b32.xlu0 %v1506, 96
        %v2285 = vpop.permute.xlu0 %2284
        %2286 = vrot.lane.b32.xlu0 %v1511, 96
        %v2287 = vpop.permute.xlu0 %2286
        %2288 = vrot.lane.b32.xlu0 %v1516, 96
        %v2289 = vpop.permute.xlu0 %2288
        %2290 = vrot.lane.b32.xlu0 %v1521, 96
        %v2291 = vpop.permute.xlu0 %2290
        %2292 = vrot.lane.b32.xlu0 %v1526, 96
        %v2293 = vpop.permute.xlu0 %2292
        %2294 = vrot.lane.b32.xlu0 %v1531, 96
        %v2295 = vpop.permute.xlu0 %2294
        %2296 = vrot.lane.b32.xlu0 %v1536, 96
        %v2297 = vpop.permute.xlu0 %2296
        %2298 = vrot.lane.b32.xlu0 %v1541, 96
        %v2299 = vpop.permute.xlu0 %2298
        %2300 = vrot.lane.b32.xlu0 %v1546, 96
        %v2301 = vpop.permute.xlu0 %2300
        %2302 = vrot.lane.b32.xlu0 %v1551, 96
        %v2303 = vpop.permute.xlu0 %2302
        %2304 = vrot.lane.b32.xlu0 %v1556, 96
        %v2305 = vpop.permute.xlu0 %2304
        %2306 = vrot.lane.b32.xlu0 %v1627, 96
        %v2307 = vpop.permute.xlu0 %2306
        %2308 = vrot.lane.b32.xlu0 %v1628, 96
        %v2309 = vpop.permute.xlu0 %2308
        %2310 = vrot.lane.b32.xlu0 %v1629, 96
        %v2311 = vpop.permute.xlu0 %2310
        %2312 = vrot.lane.b32.xlu0 %v1630, 96
        %v2313 = vpop.permute.xlu0 %2312
        %2314 = vrot.lane.b32.xlu0 %v1631, 96
        %v2315 = vpop.permute.xlu0 %2314
        %2316 = vrot.lane.b32.xlu0 %v1632, 96
        %v2317 = vpop.permute.xlu0 %2316
        %2318 = vrot.lane.b32.xlu0 %v1633, 96
        %v2319 = vpop.permute.xlu0 %2318
        %2320 = vrot.lane.b32.xlu0 %v1634, 96
        %v2321 = vpop.permute.xlu0 %2320
        %2322 = vrot.lane.b32.xlu0 %v1635, 96
        %v2323 = vpop.permute.xlu0 %2322
        %2324 = vrot.lane.b32.xlu0 %v1636, 96
        %v2325 = vpop.permute.xlu0 %2324
        %2326 = vrot.lane.b32.xlu0 %v1637, 96
        %v2327 = vpop.permute.xlu0 %2326
        %2328 = vrot.lane.b32.xlu0 %v1638, 96
        %v2329 = vpop.permute.xlu0 %2328
        %2330 = vrot.lane.b32.xlu0 %v1639, 96
        %v2331 = vpop.permute.xlu0 %2330
        %2332 = vrot.lane.b32.xlu0 %v1640, 96
        %v2333 = vpop.permute.xlu0 %2332
        %2334 = vrot.lane.b32.xlu0 %v1641, 96
        %v2335 = vpop.permute.xlu0 %2334
        %2336 = vrot.lane.b32.xlu0 %v1642, 96
        %v2337 = vpop.permute.xlu0 %2336
        %v2338 = vsel %vm1659, %v2275, 0
        %v2340 = vsel %vm1659, %v2277, 0
        %v2342 = vsel %vm1659, %v2279, 0
        %v2344 = vsel %vm1659, %v2281, 0
        %v2346 = vsel %vm1659, %v2283, 0
        %v2348 = vsel %vm1659, %v2285, 0
        %v2350 = vsel %vm1659, %v2287, 0
        %v2352 = vsel %vm1659, %v2289, 0
        %v2354 = vsel %vm1659, %v2291, 0
        %v2356 = vsel %vm1659, %v2293, 0
        %v2358 = vsel %vm1659, %v2295, 0
        %v2360 = vsel %vm1659, %v2297, 0
        %v2362 = vsel %vm1659, %v2299, 0
        %v2364 = vsel %vm1659, %v2301, 0
        %v2366 = vsel %vm1659, %v2303, 0
        %v2368 = vsel %vm1659, %v2305, 0
        %v2370 = vsel %vm1659, %v2307, 0
        %v2372 = vsel %vm1659, %v2309, 0
        %v2374 = vsel %vm1659, %v2311, 0
        %v2376 = vsel %vm1659, %v2313, 0
        %v2378 = vsel %vm1659, %v2315, 0
        %v2380 = vsel %vm1659, %v2317, 0
        %v2382 = vsel %vm1659, %v2319, 0
        %v2384 = vsel %vm1659, %v2321, 0
        %v2386 = vsel %vm1659, %v2323, 0
        %v2388 = vsel %vm1659, %v2325, 0
        %v2390 = vsel %vm1659, %v2327, 0
        %v2392 = vsel %vm1659, %v2329, 0
        %v2394 = vsel %vm1659, %v2331, 0
        %v2396 = vsel %vm1659, %v2333, 0
        %v2398 = vsel %vm1659, %v2335, 0
        %v2400 = vsel %vm1659, %v2337, 0
        %2402 = vmatprep.subr.mxu0 0.0
        %2403 = vmatpush1.xpose.msra.mxu0 %v2370
        %2404 = vmatprep.subr.mxu0 0.0
        %2405 = vmatpush1.xpose.msra.mxu0 %v2372
        %2406 = vmatprep.subr.mxu0 0.0
        %2407 = vmatpush1.xpose.msra.mxu0 %v2374
        %2408 = vmatprep.subr.mxu0 0.0
        %2409 = vmatpush1.xpose.msra.mxu0 %v2376
        %2410 = vmatprep.subr.mxu0 0.0
        %2411 = vmatpush1.xpose.msra.mxu0 %v2378
        %2412 = vmatprep.subr.mxu0 0.0
        %2413 = vmatpush1.xpose.msra.mxu0 %v2380
        %2414 = vmatprep.subr.mxu0 0.0
        %2415 = vmatpush1.xpose.msra.mxu0 %v2382
        %2416 = vmatprep.subr.mxu0 0.0
        %2417 = vmatpush1.xpose.msra.mxu0 %v2384
        %2418 = vmatprep.subr.mxu0 0.0
        %2419 = vmatpush1.xpose.msra.mxu0 %v2386
        %2420 = vmatprep.subr.mxu0 0.0
        %2421 = vmatpush1.xpose.msra.mxu0 %v2388
        %2422 = vmatprep.subr.mxu0 0.0
        %2423 = vmatpush1.xpose.msra.mxu0 %v2390
        %2424 = vmatprep.subr.mxu0 0.0
        %2425 = vmatpush1.xpose.msra.mxu0 %v2392
        %2426 = vmatprep.subr.mxu0 0.0
        %2427 = vmatpush1.xpose.msra.mxu0 %v2394
        %2428 = vmatprep.subr.mxu0 0.0
        %2429 = vmatpush1.xpose.msra.mxu0 %v2396
        %2430 = vmatprep.subr.mxu0 0.0
        %2431 = vmatpush1.xpose.msra.mxu0 %v2398
        %2432 = vmatprep.subr.mxu0 0.0
        %2433 = vmatpush1.xpose.msra.mxu0 %v2400
        %2434 = vmatprep.subr.mxu0 0.0
        %2435 = vmatpush1.xpose.msra.mxu0 0.0
        %2436 = vmatprep.subr.mxu0 0.0
        %2437 = vmatpush1.xpose.msra.mxu0 0.0
        %2438 = vmatprep.subr.mxu0 0.0
        %2439 = vmatpush1.xpose.msra.mxu0 0.0
        %2440 = vmatprep.subr.mxu0 0.0
        %2441 = vmatpush1.xpose.msra.mxu0 0.0
        %2442 = vmatprep.subr.mxu0 0.0
        %2443 = vmatpush1.xpose.msra.mxu0 0.0
        %2444 = vmatprep.subr.mxu0 0.0
        %2445 = vmatpush1.xpose.msra.mxu0 0.0
        %2446 = vmatprep.subr.mxu0 0.0
        %2447 = vmatpush1.xpose.msra.mxu0 0.0
        %2448 = vmatprep.subr.mxu0 0.0
        %2449 = vmatpush1.xpose.msra.mxu0 0.0
        %2450 = vmatprep.subr.mxu0 0.0
        %2451 = vmatpush1.xpose.msra.mxu0 0.0
        %2452 = vmatprep.subr.mxu0 0.0
        %2453 = vmatpush1.xpose.msra.mxu0 0.0
        %2454 = vmatprep.subr.mxu0 0.0
        %2455 = vmatpush1.xpose.msra.mxu0 0.0
        %2456 = vmatprep.subr.mxu0 0.0
        %2457 = vmatpush1.xpose.msra.mxu0 0.0
        %2458 = vmatprep.subr.mxu0 0.0
        %2459 = vmatpush1.xpose.msra.mxu0 0.0
        %2460 = vmatprep.subr.mxu0 0.0
        %2461 = vmatpush1.xpose.msra.mxu0 0.0
        %2462 = vmatprep.subr.mxu0 0.0
        %2463 = vmatpush1.xpose.msra.mxu0 0.0
        %2464 = vmatprep.subr.mxu0 0.0
        %2465 = vmatpush1.xpose.msra.mxu0 0.0
        %2466 = vmatprep.mubr.f32.mxu0 0.0
        %2467 = vmatmul.mubr.f32.gmra.mrb[0].mxu0 %v2338
        %v2468 = vpop.f32.mrb[0].mxu0
        %v2469 = vadd.f32 %v1611, %v2468
        %v2470 = vpop.f32.mrb[0].mxu0
        %2471 = vmatprep.mubr.f32.mxu0 0.0
        %2472 = vmatmul.mubr.f32.gmra.mrb[0].mxu0 %v2340
        %v2473 = vpop.f32.mrb[0].mxu0
        %v2474 = vadd.f32 %v1612, %v2473
        %v2475 = vpop.f32.mrb[0].mxu0
        %2476 = vmatprep.mubr.f32.mxu0 0.0
        %2477 = vmatmul.mubr.f32.gmra.mrb[0].mxu0 %v2342
        %v2478 = vpop.f32.mrb[0].mxu0
        %v2479 = vadd.f32 %v1613, %v2478
        %v2480 = vpop.f32.mrb[0].mxu0
        %2481 = vmatprep.mubr.f32.mxu0 0.0
        %2482 = vmatmul.mubr.f32.gmra.mrb[0].mxu0 %v2344
        %v2483 = vpop.f32.mrb[0].mxu0
        %v2484 = vadd.f32 %v1614, %v2483
        %v2485 = vpop.f32.mrb[0].mxu0
        %2486 = vmatprep.mubr.f32.mxu0 0.0
        %2487 = vmatmul.mubr.f32.gmra.mrb[0].mxu0 %v2346
        %v2488 = vpop.f32.mrb[0].mxu0
        %v2489 = vadd.f32 %v1615, %v2488
        %v2490 = vpop.f32.mrb[0].mxu0
        %2491 = vmatprep.mubr.f32.mxu0 0.0
        %2492 = vmatmul.mubr.f32.gmra.mrb[0].mxu0 %v2348
        %v2493 = vpop.f32.mrb[0].mxu0
        %v2494 = vadd.f32 %v1616, %v2493
        %v2495 = vpop.f32.mrb[0].mxu0
        %2496 = vmatprep.mubr.f32.mxu0 0.0
        %2497 = vmatmul.mubr.f32.gmra.mrb[0].mxu0 %v2350
        %v2498 = vpop.f32.mrb[0].mxu0
        %v2499 = vadd.f32 %v1617, %v2498
        %v2500 = vpop.f32.mrb[0].mxu0
        %2501 = vmatprep.mubr.f32.mxu0 0.0
        %2502 = vmatmul.mubr.f32.gmra.mrb[0].mxu0 %v2352
        %v2503 = vpop.f32.mrb[0].mxu0
        %v2504 = vadd.f32 %v1618, %v2503
        %v2505 = vpop.f32.mrb[0].mxu0
        %2506 = vmatprep.mubr.f32.mxu0 0.0
        %2507 = vmatmul.mubr.f32.gmra.mrb[0].mxu0 %v2354
        %v2508 = vpop.f32.mrb[0].mxu0
        %v2509 = vadd.f32 %v1619, %v2508
        %v2510 = vpop.f32.mrb[0].mxu0
        %2511 = vmatprep.mubr.f32.mxu0 0.0
        %2512 = vmatmul.mubr.f32.gmra.mrb[0].mxu0 %v2356
        %v2513 = vpop.f32.mrb[0].mxu0
        %v2514 = vadd.f32 %v1620, %v2513
        %v2515 = vpop.f32.mrb[0].mxu0
        %2516 = vmatprep.mubr.f32.mxu0 0.0
        %2517 = vmatmul.mubr.f32.gmra.mrb[0].mxu0 %v2358
        %v2518 = vpop.f32.mrb[0].mxu0
        %v2519 = vadd.f32 %v1621, %v2518
        %v2520 = vpop.f32.mrb[0].mxu0
        %2521 = vmatprep.mubr.f32.mxu0 0.0
        %2522 = vmatmul.mubr.f32.gmra.mrb[0].mxu0 %v2360
        %v2523 = vpop.f32.mrb[0].mxu0
        %v2524 = vadd.f32 %v1622, %v2523
        %v2525 = vpop.f32.mrb[0].mxu0
        %2526 = vmatprep.mubr.f32.mxu0 0.0
        %2527 = vmatmul.mubr.f32.gmra.mrb[0].mxu0 %v2362
        %v2528 = vpop.f32.mrb[0].mxu0
        %v2529 = vadd.f32 %v1623, %v2528
        %v2530 = vpop.f32.mrb[0].mxu0
        %2531 = vmatprep.mubr.f32.mxu0 0.0
        %2532 = vmatmul.mubr.f32.gmra.mrb[0].mxu0 %v2364
        %v2533 = vpop.f32.mrb[0].mxu0
        %v2534 = vadd.f32 %v1624, %v2533
        %v2535 = vpop.f32.mrb[0].mxu0
        %2536 = vmatprep.mubr.f32.mxu0 0.0
        %2537 = vmatmul.mubr.f32.gmra.mrb[0].mxu0 %v2366
        %v2538 = vpop.f32.mrb[0].mxu0
        %v2539 = vadd.f32 %v1625, %v2538
        %v2540 = vpop.f32.mrb[0].mxu0
        %2541 = vmatprep.mubr.f32.mxu0 0.0
        %2542 = vmatmul.mubr.f32.gmra.mrb[0].mxu0 %v2368
        %v2543 = vpop.f32.mrb[0].mxu0
        %v2544 = vadd.f32 %v1626, %v2543
        %v2545 = vpop.f32.mrb[0].mxu0
        %2546 = vdwg.mxu0
        %2547 = vmax.xlane.f32.xlu0 %v2469
        %v2548 = vpop.xlane.xlu0 %2547
        %2549 = vmax.xlane.f32.xlu0 %v2474
        %v2550 = vpop.xlane.xlu0 %2549
        %2551 = vmax.xlane.f32.xlu0 %v2479
        %v2552 = vpop.xlane.xlu0 %2551
        %2553 = vmax.xlane.f32.xlu0 %v2484
        %v2554 = vpop.xlane.xlu0 %2553
        %2555 = vmax.xlane.f32.xlu0 %v2489
        %v2556 = vpop.xlane.xlu0 %2555
        %2557 = vmax.xlane.f32.xlu0 %v2494
        %v2558 = vpop.xlane.xlu0 %2557
        %2559 = vmax.xlane.f32.xlu0 %v2499
        %v2560 = vpop.xlane.xlu0 %2559
        %2561 = vmax.xlane.f32.xlu0 %v2504
        %v2562 = vpop.xlane.xlu0 %2561
        %2563 = vmax.xlane.f32.xlu0 %v2509
        %v2564 = vpop.xlane.xlu0 %2563
        %2565 = vmax.xlane.f32.xlu0 %v2514
        %v2566 = vpop.xlane.xlu0 %2565
        %2567 = vmax.xlane.f32.xlu0 %v2519
        %v2568 = vpop.xlane.xlu0 %2567
        %2569 = vmax.xlane.f32.xlu0 %v2524
        %v2570 = vpop.xlane.xlu0 %2569
        %2571 = vmax.xlane.f32.xlu0 %v2529
        %v2572 = vpop.xlane.xlu0 %2571
        %2573 = vmax.xlane.f32.xlu0 %v2534
        %v2574 = vpop.xlane.xlu0 %2573
        %2575 = vmax.xlane.f32.xlu0 %v2539
        %v2576 = vpop.xlane.xlu0 %2575
        %2577 = vmax.xlane.f32.xlu0 %v2544
        %v2578 = vpop.xlane.xlu0 %2577
        %v2579 = vsub.f32 %v2469, %v2548
        %v2580 = vsub.f32 %v2474, %v2550
        %v2581 = vsub.f32 %v2479, %v2552
        %v2582 = vsub.f32 %v2484, %v2554
        %v2583 = vsub.f32 %v2489, %v2556
        %v2584 = vsub.f32 %v2494, %v2558
        %v2585 = vsub.f32 %v2499, %v2560
        %v2586 = vsub.f32 %v2504, %v2562
        %v2587 = vsub.f32 %v2509, %v2564
        %v2588 = vsub.f32 %v2514, %v2566
        %v2589 = vsub.f32 %v2519, %v2568
        %v2590 = vsub.f32 %v2524, %v2570
        %v2591 = vsub.f32 %v2529, %v2572
        %v2592 = vsub.f32 %v2534, %v2574
        %v2593 = vsub.f32 %v2539, %v2576
        %v2594 = vsub.f32 %v2544, %v2578
        %v2595 = vmul.f32 %v2579, 1.442695
        %v2596 = vpow.pop %v2595
        %v2597 = vmul.f32 %v2580, 1.442695
        %v2598 = vpow.pop %v2597
        %v2599 = vmul.f32 %v2581, 1.442695
        %v2600 = vpow.pop %v2599
        %v2601 = vmul.f32 %v2582, 1.442695
        %v2602 = vpow.pop %v2601
        %v2603 = vmul.f32 %v2583, 1.442695
        %v2604 = vpow.pop %v2603
        %v2605 = vmul.f32 %v2584, 1.442695
        %v2606 = vpow.pop %v2605
        %v2607 = vmul.f32 %v2585, 1.442695
        %v2608 = vpow.pop %v2607
        %v2609 = vmul.f32 %v2586, 1.442695
        %v2610 = vpow.pop %v2609
        %v2611 = vmul.f32 %v2587, 1.442695
        %v2612 = vpow.pop %v2611
        %v2613 = vmul.f32 %v2588, 1.442695
        %v2614 = vpow.pop %v2613
        %v2615 = vmul.f32 %v2589, 1.442695
        %v2616 = vpow.pop %v2615
        %v2617 = vmul.f32 %v2590, 1.442695
        %v2618 = vpow.pop %v2617
        %v2619 = vmul.f32 %v2591, 1.442695
        %v2620 = vpow.pop %v2619
        %v2621 = vmul.f32 %v2592, 1.442695
        %v2622 = vpow.pop %v2621
        %v2623 = vmul.f32 %v2593, 1.442695
        %v2624 = vpow.pop %v2623
        %v2625 = vmul.f32 %v2594, 1.442695
        %v2626 = vpow.pop %v2625
        %2627 = vadd.xlane.f32.xlu0 %v2596
        %v2628 = vpop.xlane.xlu0 %2627
        %2629 = vadd.xlane.f32.xlu0 %v2598
        %v2630 = vpop.xlane.xlu0 %2629
        %2631 = vadd.xlane.f32.xlu0 %v2600
        %v2632 = vpop.xlane.xlu0 %2631
        %2633 = vadd.xlane.f32.xlu0 %v2602
        %v2634 = vpop.xlane.xlu0 %2633
        %2635 = vadd.xlane.f32.xlu0 %v2604
        %v2636 = vpop.xlane.xlu0 %2635
        %2637 = vadd.xlane.f32.xlu0 %v2606
        %v2638 = vpop.xlane.xlu0 %2637
        %2639 = vadd.xlane.f32.xlu0 %v2608
        %v2640 = vpop.xlane.xlu0 %2639
        %2641 = vadd.xlane.f32.xlu0 %v2610
        %v2642 = vpop.xlane.xlu0 %2641
        %2643 = vadd.xlane.f32.xlu0 %v2612
        %v2644 = vpop.xlane.xlu0 %2643
        %2645 = vadd.xlane.f32.xlu0 %v2614
        %v2646 = vpop.xlane.xlu0 %2645
        %2647 = vadd.xlane.f32.xlu0 %v2616
        %v2648 = vpop.xlane.xlu0 %2647
        %2649 = vadd.xlane.f32.xlu0 %v2618
        %v2650 = vpop.xlane.xlu0 %2649
        %2651 = vadd.xlane.f32.xlu0 %v2620
        %v2652 = vpop.xlane.xlu0 %2651
        %2653 = vadd.xlane.f32.xlu0 %v2622
        %v2654 = vpop.xlane.xlu0 %2653
        %2655 = vadd.xlane.f32.xlu0 %v2624
        %v2656 = vpop.xlane.xlu0 %2655
        %2657 = vadd.xlane.f32.xlu0 %v2626
        %v2658 = vpop.xlane.xlu0 %2657
        %v2659 = vrcp.pop %v2628
        %v2660 = vrcp.pop %v2630
        %v2661 = vrcp.pop %v2632
        %v2662 = vrcp.pop %v2634
        %v2663 = vrcp.pop %v2636
        %v2664 = vrcp.pop %v2638
        %v2665 = vrcp.pop %v2640
        %v2666 = vrcp.pop %v2642
        %v2667 = vrcp.pop %v2644
        %v2668 = vrcp.pop %v2646
        %v2669 = vrcp.pop %v2648
        %v2670 = vrcp.pop %v2650
        %v2671 = vrcp.pop %v2652
        %v2672 = vrcp.pop %v2654
        %v2673 = vrcp.pop %v2656
        %v2674 = vrcp.pop %v2658
        %v2675 = vmul.f32 %v2596, %v2659
        %v2676 = vmul.f32 %v2598, %v2660
        %v2677 = vmul.f32 %v2600, %v2661
        %v2678 = vmul.f32 %v2602, %v2662
        %v2679 = vmul.f32 %v2604, %v2663
        %v2680 = vmul.f32 %v2606, %v2664
        %v2681 = vmul.f32 %v2608, %v2665
        %v2682 = vmul.f32 %v2610, %v2666
        %v2683 = vmul.f32 %v2612, %v2667
        %v2684 = vmul.f32 %v2614, %v2668
        %v2685 = vmul.f32 %v2616, %v2669
        %v2686 = vmul.f32 %v2618, %v2670
        %v2687 = vmul.f32 %v2620, %v2671
        %v2688 = vmul.f32 %v2622, %v2672
        %v2689 = vmul.f32 %v2624, %v2673
        %v2690 = vmul.f32 %v2626, %v2674
        %v2691 = vpack.c.bf16 %v2676, %v2675
        %v2692 = vpack.c.bf16 %v2678, %v2677
        %v2693 = vpack.c.bf16 %v2680, %v2679
        %v2694 = vpack.c.bf16 %v2682, %v2681
        %v2695 = vpack.c.bf16 %v2684, %v2683
        %v2696 = vpack.c.bf16 %v2686, %v2685
        %v2697 = vpack.c.bf16 %v2688, %v2687
        %v2698 = vpack.c.bf16 %v2690, %v2689
        %v2707 = vunpack.c.l.b16 %v2691
        %v2708 = vunpack.c.h.b16 %v2691
        %v2709 = vunpack.c.l.b16 %v2692
        %v2710 = vunpack.c.h.b16 %v2692
        %v2711 = vunpack.c.l.b16 %v2693
        %v2712 = vunpack.c.h.b16 %v2693
        %v2713 = vunpack.c.l.b16 %v2694
        %v2714 = vunpack.c.h.b16 %v2694
        %v2715 = vunpack.c.l.b16 %v2695
        %v2716 = vunpack.c.h.b16 %v2695
        %v2717 = vunpack.c.l.b16 %v2696
        %v2718 = vunpack.c.h.b16 %v2696
        %v2719 = vunpack.c.l.b16 %v2697
        %v2720 = vunpack.c.h.b16 %v2697
        %v2721 = vunpack.c.l.b16 %v2698
        %v2722 = vunpack.c.h.b16 %v2698
        %v2723 = vpack.c.b16 %v2707, %v2707
        %v2724 = vpack.c.b16 %v2708, %v2708
        %v2725 = vpack.c.b16 %v2709, %v2709
        %v2726 = vpack.c.b16 %v2710, %v2710
        %v2727 = vpack.c.b16 %v2711, %v2711
        %v2728 = vpack.c.b16 %v2712, %v2712
        %v2729 = vpack.c.b16 %v2713, %v2713
        %v2730 = vpack.c.b16 %v2714, %v2714
        %v2731 = vpack.c.b16 %v2715, %v2715
        %v2732 = vpack.c.b16 %v2716, %v2716
        %v2733 = vpack.c.b16 %v2717, %v2717
        %v2734 = vpack.c.b16 %v2718, %v2718
        %v2735 = vpack.c.b16 %v2719, %v2719
        %v2736 = vpack.c.b16 %v2720, %v2720
        %v2737 = vpack.c.b16 %v2721, %v2721
        %v2738 = vpack.c.b16 %v2722, %v2722
        %s2755 = scalar_lea.vmem %s547, 64 [#allocation17]
        %2756 = vst [vmem:[%s2755] sm:$0xf] %v2723
        %2757 = vst [vmem:[%s2755 + $0x4] sm:$0xf] %v2724
        %2758 = vst [vmem:[%s2755 + $0x8] sm:$0xf] %v2725
        %2759 = vst [vmem:[%s2755 + $0xc] sm:$0xf] %v2726
        %2760 = vst [vmem:[%s2755 + $0x10] sm:$0xf] %v2727
        %2761 = vst [vmem:[%s2755 + $0x14] sm:$0xf] %v2728
        %2762 = vst [vmem:[%s2755 + $0x18] sm:$0xf] %v2729
        %2763 = vst [vmem:[%s2755 + $0x1c] sm:$0xf] %v2730
        %2764 = vst [vmem:[%s2755 + $0x20] sm:$0xf] %v2731
        %2765 = vst [vmem:[%s2755 + $0x24] sm:$0xf] %v2732
        %2766 = vst [vmem:[%s2755 + $0x28] sm:$0xf] %v2733
        %2767 = vst [vmem:[%s2755 + $0x2c] sm:$0xf] %v2734
        %2768 = vst [vmem:[%s2755 + $0x30] sm:$0xf] %v2735
        %2769 = vst [vmem:[%s2755 + $0x34] sm:$0xf] %v2736
        %2770 = vst [vmem:[%s2755 + $0x38] sm:$0xf] %v2737
        %2771 = vst [vmem:[%s2755 + $0x3c] sm:$0xf] %v2738
        %2788 = vrot.lane.b32.xlu0 %v1643, 96
        %v2789 = vpop.permute.xlu0 %2788
        %2790 = vrot.lane.b32.xlu0 %v1644, 96
        %v2791 = vpop.permute.xlu0 %2790
        %2792 = vrot.lane.b32.xlu0 %v1645, 96
        %v2793 = vpop.permute.xlu0 %2792
        %2794 = vrot.lane.b32.xlu0 %v1646, 96
        %v2795 = vpop.permute.xlu0 %2794
        %2796 = vrot.lane.b32.xlu0 %v1647, 96
        %v2797 = vpop.permute.xlu0 %2796
        %2798 = vrot.lane.b32.xlu0 %v1648, 96
        %v2799 = vpop.permute.xlu0 %2798
        %2800 = vrot.lane.b32.xlu0 %v1649, 96
        %v2801 = vpop.permute.xlu0 %2800
        %2802 = vrot.lane.b32.xlu0 %v1650, 96
        %v2803 = vpop.permute.xlu0 %2802
        %2804 = vrot.lane.b32.xlu0 %v1651, 96
        %v2805 = vpop.permute.xlu0 %2804
        %2806 = vrot.lane.b32.xlu0 %v1652, 96
        %v2807 = vpop.permute.xlu0 %2806
        %2808 = vrot.lane.b32.xlu0 %v1653, 96
        %v2809 = vpop.permute.xlu0 %2808
        %2810 = vrot.lane.b32.xlu0 %v1654, 96
        %v2811 = vpop.permute.xlu0 %2810
        %2812 = vrot.lane.b32.xlu0 %v1655, 96
        %v2813 = vpop.permute.xlu0 %2812
        %2814 = vrot.lane.b32.xlu0 %v1656, 96
        %v2815 = vpop.permute.xlu0 %2814
        %2816 = vrot.lane.b32.xlu0 %v1657, 96
        %v2817 = vpop.permute.xlu0 %2816
        %2818 = vrot.lane.b32.xlu0 %v1658, 96
        %v2819 = vpop.permute.xlu0 %2818
        %2836 = vmatprep.subr.mxu0 0.0
        %2837 = vmatpush1.msra.mxu0 %v2789
        %2838 = vmatprep.subr.mxu0 0.0
        %2839 = vmatpush1.msra.mxu0 %v2791
        %2840 = vmatprep.subr.mxu0 0.0
        %2841 = vmatpush1.msra.mxu0 %v2793
        %2842 = vmatprep.subr.mxu0 0.0
        %2843 = vmatpush1.msra.mxu0 %v2795
        %2844 = vmatprep.subr.mxu0 0.0
        %2845 = vmatpush1.msra.mxu0 %v2797
        %2846 = vmatprep.subr.mxu0 0.0
        %2847 = vmatpush1.msra.mxu0 %v2799
        %2848 = vmatprep.subr.mxu0 0.0
        %2849 = vmatpush1.msra.mxu0 %v2801
        %2850 = vmatprep.subr.mxu0 0.0
        %2851 = vmatpush1.msra.mxu0 %v2803
        %2852 = vmatprep.subr.mxu0 0.0
        %2853 = vmatpush1.msra.mxu0 %v2805
        %2854 = vmatprep.subr.mxu0 0.0
        %2855 = vmatpush1.msra.mxu0 %v2807
        %2856 = vmatprep.subr.mxu0 0.0
        %2857 = vmatpush1.msra.mxu0 %v2809
        %2858 = vmatprep.subr.mxu0 0.0
        %2859 = vmatpush1.msra.mxu0 %v2811
        %2860 = vmatprep.subr.mxu0 0.0
        %2861 = vmatpush1.msra.mxu0 %v2813
        %2862 = vmatprep.subr.mxu0 0.0
        %2863 = vmatpush1.msra.mxu0 %v2815
        %2864 = vmatprep.subr.mxu0 0.0
        %2865 = vmatpush1.msra.mxu0 %v2817
        %2866 = vmatprep.subr.mxu0 0.0
        %2867 = vmatpush1.msra.mxu0 %v2819
        %2868 = vmatprep.subr.mxu0 0.0
        %2869 = vmatpush1.msra.mxu0 0.0
        %2870 = vmatprep.subr.mxu0 0.0
        %2871 = vmatpush1.msra.mxu0 0.0
        %2872 = vmatprep.subr.mxu0 0.0
        %2873 = vmatpush1.msra.mxu0 0.0
        %2874 = vmatprep.subr.mxu0 0.0
        %2875 = vmatpush1.msra.mxu0 0.0
        %2876 = vmatprep.subr.mxu0 0.0
        %2877 = vmatpush1.msra.mxu0 0.0
        %2878 = vmatprep.subr.mxu0 0.0
        %2879 = vmatpush1.msra.mxu0 0.0
        %2880 = vmatprep.subr.mxu0 0.0
        %2881 = vmatpush1.msra.mxu0 0.0
        %2882 = vmatprep.subr.mxu0 0.0
        %2883 = vmatpush1.msra.mxu0 0.0
        %2884 = vmatprep.subr.mxu0 0.0
        %2885 = vmatpush1.msra.mxu0 0.0
        %2886 = vmatprep.subr.mxu0 0.0
        %2887 = vmatpush1.msra.mxu0 0.0
        %2888 = vmatprep.subr.mxu0 0.0
        %2889 = vmatpush1.msra.mxu0 0.0
        %2890 = vmatprep.subr.mxu0 0.0
        %2891 = vmatpush1.msra.mxu0 0.0
        %2892 = vmatprep.subr.mxu0 0.0
        %2893 = vmatpush1.msra.mxu0 0.0
        %2894 = vmatprep.subr.mxu0 0.0
        %2895 = vmatpush1.msra.mxu0 0.0
        %2896 = vmatprep.subr.mxu0 0.0
        %2897 = vmatpush1.msra.mxu0 0.0
        %2898 = vmatprep.subr.mxu0 0.0
        %2899 = vmatpush1.msra.mxu0 0.0
        %2900 = vmatprep.mubr.f32.mxu0 0.0
        %2901 = vmatmul.mubr.f32.gmra.mrb[0].mxu0 %v2675
        %v2902 = vpop.f32.mrb[0].mxu0
        %v2903 = vadd.f32 0.0, %v2902
        %v2904 = vpop.f32.mrb[0].mxu0
        %2905 = vmatprep.mubr.f32.mxu0 0.0
        %2906 = vmatmul.mubr.f32.gmra.mrb[0].mxu0 %v2676
        %v2907 = vpop.f32.mrb[0].mxu0
        %v2908 = vadd.f32 0.0, %v2907
        %v2909 = vpop.f32.mrb[0].mxu0
        %2910 = vmatprep.mubr.f32.mxu0 0.0
        %2911 = vmatmul.mubr.f32.gmra.mrb[0].mxu0 %v2677
        %v2912 = vpop.f32.mrb[0].mxu0
        %v2913 = vadd.f32 0.0, %v2912
        %v2914 = vpop.f32.mrb[0].mxu0
        %2915 = vmatprep.mubr.f32.mxu0 0.0
        %2916 = vmatmul.mubr.f32.gmra.mrb[0].mxu0 %v2678
        %v2917 = vpop.f32.mrb[0].mxu0
        %v2918 = vadd.f32 0.0, %v2917
        %v2919 = vpop.f32.mrb[0].mxu0
        %2920 = vmatprep.mubr.f32.mxu0 0.0
        %2921 = vmatmul.mubr.f32.gmra.mrb[0].mxu0 %v2679
        %v2922 = vpop.f32.mrb[0].mxu0
        %v2923 = vadd.f32 0.0, %v2922
        %v2924 = vpop.f32.mrb[0].mxu0
        %2925 = vmatprep.mubr.f32.mxu0 0.0
        %2926 = vmatmul.mubr.f32.gmra.mrb[0].mxu0 %v2680
        %v2927 = vpop.f32.mrb[0].mxu0
        %v2928 = vadd.f32 0.0, %v2927
        %v2929 = vpop.f32.mrb[0].mxu0
        %2930 = vmatprep.mubr.f32.mxu0 0.0
        %2931 = vmatmul.mubr.f32.gmra.mrb[0].mxu0 %v2681
        %v2932 = vpop.f32.mrb[0].mxu0
        %v2933 = vadd.f32 0.0, %v2932
        %v2934 = vpop.f32.mrb[0].mxu0
        %2935 = vmatprep.mubr.f32.mxu0 0.0
        %2936 = vmatmul.mubr.f32.gmra.mrb[0].mxu0 %v2682
        %v2937 = vpop.f32.mrb[0].mxu0
        %v2938 = vadd.f32 0.0, %v2937
        %v2939 = vpop.f32.mrb[0].mxu0
        %2940 = vmatprep.mubr.f32.mxu0 0.0
        %2941 = vmatmul.mubr.f32.gmra.mrb[0].mxu0 %v2683
        %v2942 = vpop.f32.mrb[0].mxu0
        %v2943 = vadd.f32 0.0, %v2942
        %v2944 = vpop.f32.mrb[0].mxu0
        %2945 = vmatprep.mubr.f32.mxu0 0.0
        %2946 = vmatmul.mubr.f32.gmra.mrb[0].mxu0 %v2684
        %v2947 = vpop.f32.mrb[0].mxu0
        %v2948 = vadd.f32 0.0, %v2947
        %v2949 = vpop.f32.mrb[0].mxu0
        %2950 = vmatprep.mubr.f32.mxu0 0.0
        %2951 = vmatmul.mubr.f32.gmra.mrb[0].mxu0 %v2685
        %v2952 = vpop.f32.mrb[0].mxu0
        %v2953 = vadd.f32 0.0, %v2952
        %v2954 = vpop.f32.mrb[0].mxu0
        %2955 = vmatprep.mubr.f32.mxu0 0.0
        %2956 = vmatmul.mubr.f32.gmra.mrb[0].mxu0 %v2686
        %v2957 = vpop.f32.mrb[0].mxu0
        %v2958 = vadd.f32 0.0, %v2957
        %v2959 = vpop.f32.mrb[0].mxu0
        %2960 = vmatprep.mubr.f32.mxu0 0.0
        %2961 = vmatmul.mubr.f32.gmra.mrb[0].mxu0 %v2687
        %v2962 = vpop.f32.mrb[0].mxu0
        %v2963 = vadd.f32 0.0, %v2962
        %v2964 = vpop.f32.mrb[0].mxu0
        %2965 = vmatprep.mubr.f32.mxu0 0.0
        %2966 = vmatmul.mubr.f32.gmra.mrb[0].mxu0 %v2688
        %v2967 = vpop.f32.mrb[0].mxu0
        %v2968 = vadd.f32 0.0, %v2967
        %v2969 = vpop.f32.mrb[0].mxu0
        %2970 = vmatprep.mubr.f32.mxu0 0.0
        %2971 = vmatmul.mubr.f32.gmra.mrb[0].mxu0 %v2689
        %v2972 = vpop.f32.mrb[0].mxu0
        %v2973 = vadd.f32 0.0, %v2972
        %v2974 = vpop.f32.mrb[0].mxu0
        %2975 = vmatprep.mubr.f32.mxu0 0.0
        %2976 = vmatmul.mubr.f32.gmra.mrb[0].mxu0 %v2690
        %v2977 = vpop.f32.mrb[0].mxu0
        %v2978 = vadd.f32 0.0, %v2977
        %v2979 = vpop.f32.mrb[0].mxu0
        %2980 = vdwg.mxu0
        %v2981 = vld [vmem:[#allocation12 + $0x20] sm:$0xff]
        %v2982 = vld [vmem:[#allocation12 + $0x28] sm:$0xff]
        %v2983 = vld [vmem:[#allocation12 + $0x30] sm:$0xff]
        %v2984 = vld [vmem:[#allocation12 + $0x38] sm:$0xff]
        %v2986 = vsel %vm1659, %v2903, 0
        %v2989 = vsel %vm1659, %v2908, 0
        %v2992 = vsel %vm1659, %v2913, 0
        %v2995 = vsel %vm1659, %v2918, 0
        %v2998 = vsel %vm1659, %v2923, 0
        %v3001 = vsel %vm1659, %v2928, 0
        %v3004 = vsel %vm1659, %v2933, 0
        %v3007 = vsel %vm1659, %v2938, 0
        %v3010 = vsel %vm1659, %v2943, 0
        %v3013 = vsel %vm1659, %v2948, 0
        %v3016 = vsel %vm1659, %v2953, 0
        %v3019 = vsel %vm1659, %v2958, 0
        %v3022 = vsel %vm1659, %v2963, 0
        %v3025 = vsel %vm1659, %v2968, 0
        %v3028 = vsel %vm1659, %v2973, 0
        %v3031 = vsel %vm1659, %v2978, 0
        %3033 = vmatprep.subr.mxu0 0.0
        %3034 = vmatpush1.msra.mxu0 %v2981
        %3035 = vmatprep.subr.mxu0 0.0
        %3036 = vmatpush1.msra.mxu0 %v2982
        %3037 = vmatprep.subr.mxu0 0.0
        %3038 = vmatpush1.msra.mxu0 %v2983
        %3039 = vmatprep.subr.mxu0 0.0
        %3040 = vmatpush1.msra.mxu0 %v2984
        %3041 = vmatprep.subr.mxu0 0.0
        %3042 = vmatpush1.msra.mxu0 0.0
        %3043 = vmatprep.subr.mxu0 0.0
        %3044 = vmatpush1.msra.mxu0 0.0
        %3045 = vmatprep.subr.mxu0 0.0
        %3046 = vmatpush1.msra.mxu0 0.0
        %3047 = vmatprep.subr.mxu0 0.0
        %3048 = vmatpush1.msra.mxu0 0.0
        %3049 = vmatprep.subr.mxu0 0.0
        %3050 = vmatpush1.msra.mxu0 0.0
        %3051 = vmatprep.subr.mxu0 0.0
        %3052 = vmatpush1.msra.mxu0 0.0
        %3053 = vmatprep.subr.mxu0 0.0
        %3054 = vmatpush1.msra.mxu0 0.0
        %3055 = vmatprep.subr.mxu0 0.0
        %3056 = vmatpush1.msra.mxu0 0.0
        %3057 = vmatprep.subr.mxu0 0.0
        %3058 = vmatpush1.msra.mxu0 0.0
        %3059 = vmatprep.subr.mxu0 0.0
        %3060 = vmatpush1.msra.mxu0 0.0
        %3061 = vmatprep.subr.mxu0 0.0
        %3062 = vmatpush1.msra.mxu0 0.0
        %3063 = vmatprep.subr.mxu0 0.0
        %3064 = vmatpush1.msra.mxu0 0.0
        %3065 = vmatprep.subr.mxu0 0.0
        %3066 = vmatpush1.msra.mxu0 0.0
        %3067 = vmatprep.subr.mxu0 0.0
        %3068 = vmatpush1.msra.mxu0 0.0
        %3069 = vmatprep.subr.mxu0 0.0
        %3070 = vmatpush1.msra.mxu0 0.0
        %3071 = vmatprep.subr.mxu0 0.0
        %3072 = vmatpush1.msra.mxu0 0.0
        %3073 = vmatprep.subr.mxu0 0.0
        %3074 = vmatpush1.msra.mxu0 0.0
        %3075 = vmatprep.subr.mxu0 0.0
        %3076 = vmatpush1.msra.mxu0 0.0
        %3077 = vmatprep.subr.mxu0 0.0
        %3078 = vmatpush1.msra.mxu0 0.0
        %3079 = vmatprep.subr.mxu0 0.0
        %3080 = vmatpush1.msra.mxu0 0.0
        %3081 = vmatprep.subr.mxu0 0.0
        %3082 = vmatpush1.msra.mxu0 0.0
        %3083 = vmatprep.subr.mxu0 0.0
        %3084 = vmatpush1.msra.mxu0 0.0
        %3085 = vmatprep.subr.mxu0 0.0
        %3086 = vmatpush1.msra.mxu0 0.0
        %3087 = vmatprep.subr.mxu0 0.0
        %3088 = vmatpush1.msra.mxu0 0.0
        %3089 = vmatprep.subr.mxu0 0.0
        %3090 = vmatpush1.msra.mxu0 0.0
        %3091 = vmatprep.subr.mxu0 0.0
        %3092 = vmatpush1.msra.mxu0 0.0
        %3093 = vmatprep.subr.mxu0 0.0
        %3094 = vmatpush1.msra.mxu0 0.0
        %3095 = vmatprep.subr.mxu0 0.0
        %3096 = vmatpush1.msra.mxu0 0.0
        %3097 = vmatprep.mubr.f32.mxu0 0.0
        %3098 = vmatmul.mubr.f32.gmra.mrb[0].mxu0 %v2986
        %v3099 = vpop.f32.mrb[0].mxu0
        %v3100 = vadd.f32 0.0, %v3099
        %v3101 = vpop.f32.mrb[0].mxu0
        %3102 = vmatprep.mubr.f32.mxu0 0.0
        %3103 = vmatmul.mubr.f32.gmra.mrb[0].mxu0 %v2989
        %v3104 = vpop.f32.mrb[0].mxu0
        %v3105 = vadd.f32 0.0, %v3104
        %v3106 = vpop.f32.mrb[0].mxu0
        %3107 = vmatprep.mubr.f32.mxu0 0.0
        %3108 = vmatmul.mubr.f32.gmra.mrb[0].mxu0 %v2992
        %v3109 = vpop.f32.mrb[0].mxu0
        %v3110 = vadd.f32 0.0, %v3109
        %v3111 = vpop.f32.mrb[0].mxu0
        %3112 = vmatprep.mubr.f32.mxu0 0.0
        %3113 = vmatmul.mubr.f32.gmra.mrb[0].mxu0 %v2995
        %v3114 = vpop.f32.mrb[0].mxu0
        %v3115 = vadd.f32 0.0, %v3114
        %v3116 = vpop.f32.mrb[0].mxu0
        %3117 = vmatprep.mubr.f32.mxu0 0.0
        %3118 = vmatmul.mubr.f32.gmra.mrb[0].mxu0 %v2998
        %v3119 = vpop.f32.mrb[0].mxu0
        %v3120 = vadd.f32 0.0, %v3119
        %v3121 = vpop.f32.mrb[0].mxu0
        %3122 = vmatprep.mubr.f32.mxu0 0.0
        %3123 = vmatmul.mubr.f32.gmra.mrb[0].mxu0 %v3001
        %v3124 = vpop.f32.mrb[0].mxu0
        %v3125 = vadd.f32 0.0, %v3124
        %v3126 = vpop.f32.mrb[0].mxu0
        %3127 = vmatprep.mubr.f32.mxu0 0.0
        %3128 = vmatmul.mubr.f32.gmra.mrb[0].mxu0 %v3004
        %v3129 = vpop.f32.mrb[0].mxu0
        %v3130 = vadd.f32 0.0, %v3129
        %v3131 = vpop.f32.mrb[0].mxu0
        %3132 = vmatprep.mubr.f32.mxu0 0.0
        %3133 = vmatmul.mubr.f32.gmra.mrb[0].mxu0 %v3007
        %v3134 = vpop.f32.mrb[0].mxu0
        %v3135 = vadd.f32 0.0, %v3134
        %v3136 = vpop.f32.mrb[0].mxu0
        %3137 = vmatprep.mubr.f32.mxu0 0.0
        %3138 = vmatmul.mubr.f32.gmra.mrb[0].mxu0 %v3010
        %v3139 = vpop.f32.mrb[0].mxu0
        %v3140 = vadd.f32 0.0, %v3139
        %v3141 = vpop.f32.mrb[0].mxu0
        %3142 = vmatprep.mubr.f32.mxu0 0.0
        %3143 = vmatmul.mubr.f32.gmra.mrb[0].mxu0 %v3013
        %v3144 = vpop.f32.mrb[0].mxu0
        %v3145 = vadd.f32 0.0, %v3144
        %v3146 = vpop.f32.mrb[0].mxu0
        %3147 = vmatprep.mubr.f32.mxu0 0.0
        %3148 = vmatmul.mubr.f32.gmra.mrb[0].mxu0 %v3016
        %v3149 = vpop.f32.mrb[0].mxu0
        %v3150 = vadd.f32 0.0, %v3149
        %v3151 = vpop.f32.mrb[0].mxu0
        %3152 = vmatprep.mubr.f32.mxu0 0.0
        %3153 = vmatmul.mubr.f32.gmra.mrb[0].mxu0 %v3019
        %v3154 = vpop.f32.mrb[0].mxu0
        %v3155 = vadd.f32 0.0, %v3154
        %v3156 = vpop.f32.mrb[0].mxu0
        %3157 = vmatprep.mubr.f32.mxu0 0.0
        %3158 = vmatmul.mubr.f32.gmra.mrb[0].mxu0 %v3022
        %v3159 = vpop.f32.mrb[0].mxu0
        %v3160 = vadd.f32 0.0, %v3159
        %v3161 = vpop.f32.mrb[0].mxu0
        %3162 = vmatprep.mubr.f32.mxu0 0.0
        %3163 = vmatmul.mubr.f32.gmra.mrb[0].mxu0 %v3025
        %v3164 = vpop.f32.mrb[0].mxu0
        %v3165 = vadd.f32 0.0, %v3164
        %v3166 = vpop.f32.mrb[0].mxu0
        %3167 = vmatprep.mubr.f32.mxu0 0.0
        %3168 = vmatmul.mubr.f32.gmra.mrb[0].mxu0 %v3028
        %v3169 = vpop.f32.mrb[0].mxu0
        %v3170 = vadd.f32 0.0, %v3169
        %v3171 = vpop.f32.mrb[0].mxu0
        %3172 = vmatprep.mubr.f32.mxu0 0.0
        %3173 = vmatmul.mubr.f32.gmra.mrb[0].mxu0 %v3031
        %v3174 = vpop.f32.mrb[0].mxu0
        %v3175 = vadd.f32 0.0, %v3174
        %v3176 = vpop.f32.mrb[0].mxu0
        %3177 = vdwg.mxu0
        %v3179 = vsel %vm1659, %v2192, 0
        %v3182 = vsel %vm1659, %v2197, 0
        %v3185 = vsel %vm1659, %v2202, 0
        %v3188 = vsel %vm1659, %v2207, 0
        %v3191 = vsel %vm1659, %v2212, 0
        %v3194 = vsel %vm1659, %v2217, 0
        %v3197 = vsel %vm1659, %v2222, 0
        %v3200 = vsel %vm1659, %v2227, 0
        %v3203 = vsel %vm1659, %v2232, 0
        %v3206 = vsel %vm1659, %v2237, 0
        %v3209 = vsel %vm1659, %v2242, 0
        %v3212 = vsel %vm1659, %v2247, 0
        %v3215 = vsel %vm1659, %v2252, 0
        %v3218 = vsel %vm1659, %v2257, 0
        %v3221 = vsel %vm1659, %v2262, 0
        %v3224 = vsel %vm1659, %v2267, 0
        %3226 = vmatprep.subr.mxu0 0.0
        %3227 = vmatpush1.msra.mxu0 %v2270
        %3228 = vmatprep.subr.mxu0 0.0
        %3229 = vmatpush1.msra.mxu0 %v2271
        %3230 = vmatprep.subr.mxu0 0.0
        %3231 = vmatpush1.msra.mxu0 %v2272
        %3232 = vmatprep.subr.mxu0 0.0
        %3233 = vmatpush1.msra.mxu0 %v2273
        %3234 = vmatprep.subr.mxu0 0.0
        %3235 = vmatpush1.msra.mxu0 0.0
        %3236 = vmatprep.subr.mxu0 0.0
        %3237 = vmatpush1.msra.mxu0 0.0
        %3238 = vmatprep.subr.mxu0 0.0
        %3239 = vmatpush1.msra.mxu0 0.0
        %3240 = vmatprep.subr.mxu0 0.0
        %3241 = vmatpush1.msra.mxu0 0.0
        %3242 = vmatprep.subr.mxu0 0.0
        %3243 = vmatpush1.msra.mxu0 0.0
        %3244 = vmatprep.subr.mxu0 0.0
        %3245 = vmatpush1.msra.mxu0 0.0
        %3246 = vmatprep.subr.mxu0 0.0
        %3247 = vmatpush1.msra.mxu0 0.0
        %3248 = vmatprep.subr.mxu0 0.0
        %3249 = vmatpush1.msra.mxu0 0.0
        %3250 = vmatprep.subr.mxu0 0.0
        %3251 = vmatpush1.msra.mxu0 0.0
        %3252 = vmatprep.subr.mxu0 0.0
        %3253 = vmatpush1.msra.mxu0 0.0
        %3254 = vmatprep.subr.mxu0 0.0
        %3255 = vmatpush1.msra.mxu0 0.0
        %3256 = vmatprep.subr.mxu0 0.0
        %3257 = vmatpush1.msra.mxu0 0.0
        %3258 = vmatprep.subr.mxu0 0.0
        %3259 = vmatpush1.msra.mxu0 0.0
        %3260 = vmatprep.subr.mxu0 0.0
        %3261 = vmatpush1.msra.mxu0 0.0
        %3262 = vmatprep.subr.mxu0 0.0
        %3263 = vmatpush1.msra.mxu0 0.0
        %3264 = vmatprep.subr.mxu0 0.0
        %3265 = vmatpush1.msra.mxu0 0.0
        %3266 = vmatprep.subr.mxu0 0.0
        %3267 = vmatpush1.msra.mxu0 0.0
        %3268 = vmatprep.subr.mxu0 0.0
        %3269 = vmatpush1.msra.mxu0 0.0
        %3270 = vmatprep.subr.mxu0 0.0
        %3271 = vmatpush1.msra.mxu0 0.0
        %3272 = vmatprep.subr.mxu0 0.0
        %3273 = vmatpush1.msra.mxu0 0.0
        %3274 = vmatprep.subr.mxu0 0.0
        %3275 = vmatpush1.msra.mxu0 0.0
        %3276 = vmatprep.subr.mxu0 0.0
        %3277 = vmatpush1.msra.mxu0 0.0
        %3278 = vmatprep.subr.mxu0 0.0
        %3279 = vmatpush1.msra.mxu0 0.0
        %3280 = vmatprep.subr.mxu0 0.0
        %3281 = vmatpush1.msra.mxu0 0.0
        %3282 = vmatprep.subr.mxu0 0.0
        %3283 = vmatpush1.msra.mxu0 0.0
        %3284 = vmatprep.subr.mxu0 0.0
        %3285 = vmatpush1.msra.mxu0 0.0
        %3286 = vmatprep.subr.mxu0 0.0
        %3287 = vmatpush1.msra.mxu0 0.0
        %3288 = vmatprep.subr.mxu0 0.0
        %3289 = vmatpush1.msra.mxu0 0.0
        %3290 = vmatprep.mubr.f32.mxu0 0.0
        %3291 = vmatmul.mubr.f32.gmra.mrb[0].mxu0 %v3179
        %v3292 = vpop.f32.mrb[0].mxu0
        %v3293 = vadd.f32 %v3100, %v3292
        %v3294 = vpop.f32.mrb[0].mxu0
        %3295 = vmatprep.mubr.f32.mxu0 0.0
        %3296 = vmatmul.mubr.f32.gmra.mrb[0].mxu0 %v3182
        %v3297 = vpop.f32.mrb[0].mxu0
        %v3298 = vadd.f32 %v3105, %v3297
        %v3299 = vpop.f32.mrb[0].mxu0
        %3300 = vmatprep.mubr.f32.mxu0 0.0
        %3301 = vmatmul.mubr.f32.gmra.mrb[0].mxu0 %v3185
        %v3302 = vpop.f32.mrb[0].mxu0
        %v3303 = vadd.f32 %v3110, %v3302
        %v3304 = vpop.f32.mrb[0].mxu0
        %3305 = vmatprep.mubr.f32.mxu0 0.0
        %3306 = vmatmul.mubr.f32.gmra.mrb[0].mxu0 %v3188
        %v3307 = vpop.f32.mrb[0].mxu0
        %v3308 = vadd.f32 %v3115, %v3307
        %v3309 = vpop.f32.mrb[0].mxu0
        %3310 = vmatprep.mubr.f32.mxu0 0.0
        %3311 = vmatmul.mubr.f32.gmra.mrb[0].mxu0 %v3191
        %v3312 = vpop.f32.mrb[0].mxu0
        %v3313 = vadd.f32 %v3120, %v3312
        %v3314 = vpop.f32.mrb[0].mxu0
        %3315 = vmatprep.mubr.f32.mxu0 0.0
        %3316 = vmatmul.mubr.f32.gmra.mrb[0].mxu0 %v3194
        %v3317 = vpop.f32.mrb[0].mxu0
        %v3318 = vadd.f32 %v3125, %v3317
        %v3319 = vpop.f32.mrb[0].mxu0
        %3320 = vmatprep.mubr.f32.mxu0 0.0
        %3321 = vmatmul.mubr.f32.gmra.mrb[0].mxu0 %v3197
        %v3322 = vpop.f32.mrb[0].mxu0
        %v3323 = vadd.f32 %v3130, %v3322
        %v3324 = vpop.f32.mrb[0].mxu0
        %3325 = vmatprep.mubr.f32.mxu0 0.0
        %3326 = vmatmul.mubr.f32.gmra.mrb[0].mxu0 %v3200
        %v3327 = vpop.f32.mrb[0].mxu0
        %v3328 = vadd.f32 %v3135, %v3327
        %v3329 = vpop.f32.mrb[0].mxu0
        %3330 = vmatprep.mubr.f32.mxu0 0.0
        %3331 = vmatmul.mubr.f32.gmra.mrb[0].mxu0 %v3203
        %v3332 = vpop.f32.mrb[0].mxu0
        %v3333 = vadd.f32 %v3140, %v3332
        %v3334 = vpop.f32.mrb[0].mxu0
        %3335 = vmatprep.mubr.f32.mxu0 0.0
        %3336 = vmatmul.mubr.f32.gmra.mrb[0].mxu0 %v3206
        %v3337 = vpop.f32.mrb[0].mxu0
        %v3338 = vadd.f32 %v3145, %v3337
        %v3339 = vpop.f32.mrb[0].mxu0
        %3340 = vmatprep.mubr.f32.mxu0 0.0
        %3341 = vmatmul.mubr.f32.gmra.mrb[0].mxu0 %v3209
        %v3342 = vpop.f32.mrb[0].mxu0
        %v3343 = vadd.f32 %v3150, %v3342
        %v3344 = vpop.f32.mrb[0].mxu0
        %3345 = vmatprep.mubr.f32.mxu0 0.0
        %3346 = vmatmul.mubr.f32.gmra.mrb[0].mxu0 %v3212
        %v3347 = vpop.f32.mrb[0].mxu0
        %v3348 = vadd.f32 %v3155, %v3347
        %v3349 = vpop.f32.mrb[0].mxu0
        %3350 = vmatprep.mubr.f32.mxu0 0.0
        %3351 = vmatmul.mubr.f32.gmra.mrb[0].mxu0 %v3215
        %v3352 = vpop.f32.mrb[0].mxu0
        %v3353 = vadd.f32 %v3160, %v3352
        %v3354 = vpop.f32.mrb[0].mxu0
        %3355 = vmatprep.mubr.f32.mxu0 0.0
        %3356 = vmatmul.mubr.f32.gmra.mrb[0].mxu0 %v3218
        %v3357 = vpop.f32.mrb[0].mxu0
        %v3358 = vadd.f32 %v3165, %v3357
        %v3359 = vpop.f32.mrb[0].mxu0
        %3360 = vmatprep.mubr.f32.mxu0 0.0
        %3361 = vmatmul.mubr.f32.gmra.mrb[0].mxu0 %v3221
        %v3362 = vpop.f32.mrb[0].mxu0
        %v3363 = vadd.f32 %v3170, %v3362
        %v3364 = vpop.f32.mrb[0].mxu0
        %3365 = vmatprep.mubr.f32.mxu0 0.0
        %3366 = vmatmul.mubr.f32.gmra.mrb[0].mxu0 %v3224
        %v3367 = vpop.f32.mrb[0].mxu0
        %v3368 = vadd.f32 %v3175, %v3367
        %v3369 = vpop.f32.mrb[0].mxu0
        %3370 = vdwg.mxu0
        %3371 = vrot.lane.b32.xlu0 %v1481, 64
        %v3372 = vpop.permute.xlu0 %3371
        %3373 = vrot.lane.b32.xlu0 %v1486, 64
        %v3374 = vpop.permute.xlu0 %3373
        %3375 = vrot.lane.b32.xlu0 %v1491, 64
        %v3376 = vpop.permute.xlu0 %3375
        %3377 = vrot.lane.b32.xlu0 %v1496, 64
        %v3378 = vpop.permute.xlu0 %3377
        %3379 = vrot.lane.b32.xlu0 %v1501, 64
        %v3380 = vpop.permute.xlu0 %3379
        %3381 = vrot.lane.b32.xlu0 %v1506, 64
        %v3382 = vpop.permute.xlu0 %3381
        %3383 = vrot.lane.b32.xlu0 %v1511, 64
        %v3384 = vpop.permute.xlu0 %3383
        %3385 = vrot.lane.b32.xlu0 %v1516, 64
        %v3386 = vpop.permute.xlu0 %3385
        %3387 = vrot.lane.b32.xlu0 %v1521, 64
        %v3388 = vpop.permute.xlu0 %3387
        %3389 = vrot.lane.b32.xlu0 %v1526, 64
        %v3390 = vpop.permute.xlu0 %3389
        %3391 = vrot.lane.b32.xlu0 %v1531, 64
        %v3392 = vpop.permute.xlu0 %3391
        %3393 = vrot.lane.b32.xlu0 %v1536, 64
        %v3394 = vpop.permute.xlu0 %3393
        %3395 = vrot.lane.b32.xlu0 %v1541, 64
        %v3396 = vpop.permute.xlu0 %3395
        %3397 = vrot.lane.b32.xlu0 %v1546, 64
        %v3398 = vpop.permute.xlu0 %3397
        %3399 = vrot.lane.b32.xlu0 %v1551, 64
        %v3400 = vpop.permute.xlu0 %3399
        %3401 = vrot.lane.b32.xlu0 %v1556, 64
        %v3402 = vpop.permute.xlu0 %3401
        %3403 = vrot.lane.b32.xlu0 %v1627, 64
        %v3404 = vpop.permute.xlu0 %3403
        %3405 = vrot.lane.b32.xlu0 %v1628, 64
        %v3406 = vpop.permute.xlu0 %3405
        %3407 = vrot.lane.b32.xlu0 %v1629, 64
        %v3408 = vpop.permute.xlu0 %3407
        %3409 = vrot.lane.b32.xlu0 %v1630, 64
        %v3410 = vpop.permute.xlu0 %3409
        %3411 = vrot.lane.b32.xlu0 %v1631, 64
        %v3412 = vpop.permute.xlu0 %3411
        %3413 = vrot.lane.b32.xlu0 %v1632, 64
        %v3414 = vpop.permute.xlu0 %3413
        %3415 = vrot.lane.b32.xlu0 %v1633, 64
        %v3416 = vpop.permute.xlu0 %3415
        %3417 = vrot.lane.b32.xlu0 %v1634, 64
        %v3418 = vpop.permute.xlu0 %3417
        %3419 = vrot.lane.b32.xlu0 %v1635, 64
        %v3420 = vpop.permute.xlu0 %3419
        %3421 = vrot.lane.b32.xlu0 %v1636, 64
        %v3422 = vpop.permute.xlu0 %3421
        %3423 = vrot.lane.b32.xlu0 %v1637, 64
        %v3424 = vpop.permute.xlu0 %3423
        %3425 = vrot.lane.b32.xlu0 %v1638, 64
        %v3426 = vpop.permute.xlu0 %3425
        %3427 = vrot.lane.b32.xlu0 %v1639, 64
        %v3428 = vpop.permute.xlu0 %3427
        %3429 = vrot.lane.b32.xlu0 %v1640, 64
        %v3430 = vpop.permute.xlu0 %3429
        %3431 = vrot.lane.b32.xlu0 %v1641, 64
        %v3432 = vpop.permute.xlu0 %3431
        %3433 = vrot.lane.b32.xlu0 %v1642, 64
        %v3434 = vpop.permute.xlu0 %3433
        %v3435 = vsel %vm1659, %v3372, 0
        %v3437 = vsel %vm1659, %v3374, 0
        %v3439 = vsel %vm1659, %v3376, 0
        %v3441 = vsel %vm1659, %v3378, 0
        %v3443 = vsel %vm1659, %v3380, 0
        %v3445 = vsel %vm1659, %v3382, 0
        %v3447 = vsel %vm1659, %v3384, 0
        %v3449 = vsel %vm1659, %v3386, 0
        %v3451 = vsel %vm1659, %v3388, 0
        %v3453 = vsel %vm1659, %v3390, 0
        %v3455 = vsel %vm1659, %v3392, 0
        %v3457 = vsel %vm1659, %v3394, 0
        %v3459 = vsel %vm1659, %v3396, 0
        %v3461 = vsel %vm1659, %v3398, 0
        %v3463 = vsel %vm1659, %v3400, 0
        %v3465 = vsel %vm1659, %v3402, 0
        %v3467 = vsel %vm1659, %v3404, 0
        %v3469 = vsel %vm1659, %v3406, 0
        %v3471 = vsel %vm1659, %v3408, 0
        %v3473 = vsel %vm1659, %v3410, 0
        %v3475 = vsel %vm1659, %v3412, 0
        %v3477 = vsel %vm1659, %v3414, 0
        %v3479 = vsel %vm1659, %v3416, 0
        %v3481 = vsel %vm1659, %v3418, 0
        %v3483 = vsel %vm1659, %v3420, 0
        %v3485 = vsel %vm1659, %v3422, 0
        %v3487 = vsel %vm1659, %v3424, 0
        %v3489 = vsel %vm1659, %v3426, 0
        %v3491 = vsel %vm1659, %v3428, 0
        %v3493 = vsel %vm1659, %v3430, 0
        %v3495 = vsel %vm1659, %v3432, 0
        %v3497 = vsel %vm1659, %v3434, 0
        %3499 = vmatprep.subr.mxu0 0.0
        %3500 = vmatpush1.xpose.msra.mxu0 %v3467
        %3501 = vmatprep.subr.mxu0 0.0
        %3502 = vmatpush1.xpose.msra.mxu0 %v3469
        %3503 = vmatprep.subr.mxu0 0.0
        %3504 = vmatpush1.xpose.msra.mxu0 %v3471
        %3505 = vmatprep.subr.mxu0 0.0
        %3506 = vmatpush1.xpose.msra.mxu0 %v3473
        %3507 = vmatprep.subr.mxu0 0.0
        %3508 = vmatpush1.xpose.msra.mxu0 %v3475
        %3509 = vmatprep.subr.mxu0 0.0
        %3510 = vmatpush1.xpose.msra.mxu0 %v3477
        %3511 = vmatprep.subr.mxu0 0.0
        %3512 = vmatpush1.xpose.msra.mxu0 %v3479
        %3513 = vmatprep.subr.mxu0 0.0
        %3514 = vmatpush1.xpose.msra.mxu0 %v3481
        %3515 = vmatprep.subr.mxu0 0.0
        %3516 = vmatpush1.xpose.msra.mxu0 %v3483
        %3517 = vmatprep.subr.mxu0 0.0
        %3518 = vmatpush1.xpose.msra.mxu0 %v3485
        %3519 = vmatprep.subr.mxu0 0.0
        %3520 = vmatpush1.xpose.msra.mxu0 %v3487
        %3521 = vmatprep.subr.mxu0 0.0
        %3522 = vmatpush1.xpose.msra.mxu0 %v3489
        %3523 = vmatprep.subr.mxu0 0.0
        %3524 = vmatpush1.xpose.msra.mxu0 %v3491
        %3525 = vmatprep.subr.mxu0 0.0
        %3526 = vmatpush1.xpose.msra.mxu0 %v3493
        %3527 = vmatprep.subr.mxu0 0.0
        %3528 = vmatpush1.xpose.msra.mxu0 %v3495
        %3529 = vmatprep.subr.mxu0 0.0
        %3530 = vmatpush1.xpose.msra.mxu0 %v3497
        %3531 = vmatprep.subr.mxu0 0.0
        %3532 = vmatpush1.xpose.msra.mxu0 0.0
        %3533 = vmatprep.subr.mxu0 0.0
        %3534 = vmatpush1.xpose.msra.mxu0 0.0
        %3535 = vmatprep.subr.mxu0 0.0
        %3536 = vmatpush1.xpose.msra.mxu0 0.0
        %3537 = vmatprep.subr.mxu0 0.0
        %3538 = vmatpush1.xpose.msra.mxu0 0.0
        %3539 = vmatprep.subr.mxu0 0.0
        %3540 = vmatpush1.xpose.msra.mxu0 0.0
        %3541 = vmatprep.subr.mxu0 0.0
        %3542 = vmatpush1.xpose.msra.mxu0 0.0
        %3543 = vmatprep.subr.mxu0 0.0
        %3544 = vmatpush1.xpose.msra.mxu0 0.0
        %3545 = vmatprep.subr.mxu0 0.0
        %3546 = vmatpush1.xpose.msra.mxu0 0.0
        %3547 = vmatprep.subr.mxu0 0.0
        %3548 = vmatpush1.xpose.msra.mxu0 0.0
        %3549 = vmatprep.subr.mxu0 0.0
        %3550 = vmatpush1.xpose.msra.mxu0 0.0
        %3551 = vmatprep.subr.mxu0 0.0
        %3552 = vmatpush1.xpose.msra.mxu0 0.0
        %3553 = vmatprep.subr.mxu0 0.0
        %3554 = vmatpush1.xpose.msra.mxu0 0.0
        %3555 = vmatprep.subr.mxu0 0.0
        %3556 = vmatpush1.xpose.msra.mxu0 0.0
        %3557 = vmatprep.subr.mxu0 0.0
        %3558 = vmatpush1.xpose.msra.mxu0 0.0
        %3559 = vmatprep.subr.mxu0 0.0
        %3560 = vmatpush1.xpose.msra.mxu0 0.0
        %3561 = vmatprep.subr.mxu0 0.0
        %3562 = vmatpush1.xpose.msra.mxu0 0.0
        %3563 = vmatprep.mubr.f32.mxu0 0.0
        %3564 = vmatmul.mubr.f32.gmra.mrb[0].mxu0 %v3435
        %v3565 = vpop.f32.mrb[0].mxu0
        %v3566 = vadd.f32 %v1611, %v3565
        %v3567 = vpop.f32.mrb[0].mxu0
        %3568 = vmatprep.mubr.f32.mxu0 0.0
        %3569 = vmatmul.mubr.f32.gmra.mrb[0].mxu0 %v3437
        %v3570 = vpop.f32.mrb[0].mxu0
        %v3571 = vadd.f32 %v1612, %v3570
        %v3572 = vpop.f32.mrb[0].mxu0
        %3573 = vmatprep.mubr.f32.mxu0 0.0
        %3574 = vmatmul.mubr.f32.gmra.mrb[0].mxu0 %v3439
        %v3575 = vpop.f32.mrb[0].mxu0
        %v3576 = vadd.f32 %v1613, %v3575
        %v3577 = vpop.f32.mrb[0].mxu0
        %3578 = vmatprep.mubr.f32.mxu0 0.0
        %3579 = vmatmul.mubr.f32.gmra.mrb[0].mxu0 %v3441
        %v3580 = vpop.f32.mrb[0].mxu0
        %v3581 = vadd.f32 %v1614, %v3580
        %v3582 = vpop.f32.mrb[0].mxu0
        %3583 = vmatprep.mubr.f32.mxu0 0.0
        %3584 = vmatmul.mubr.f32.gmra.mrb[0].mxu0 %v3443
        %v3585 = vpop.f32.mrb[0].mxu0
        %v3586 = vadd.f32 %v1615, %v3585
        %v3587 = vpop.f32.mrb[0].mxu0
        %3588 = vmatprep.mubr.f32.mxu0 0.0
        %3589 = vmatmul.mubr.f32.gmra.mrb[0].mxu0 %v3445
        %v3590 = vpop.f32.mrb[0].mxu0
        %v3591 = vadd.f32 %v1616, %v3590
        %v3592 = vpop.f32.mrb[0].mxu0
        %3593 = vmatprep.mubr.f32.mxu0 0.0
        %3594 = vmatmul.mubr.f32.gmra.mrb[0].mxu0 %v3447
        %v3595 = vpop.f32.mrb[0].mxu0
        %v3596 = vadd.f32 %v1617, %v3595
        %v3597 = vpop.f32.mrb[0].mxu0
        %3598 = vmatprep.mubr.f32.mxu0 0.0
        %3599 = vmatmul.mubr.f32.gmra.mrb[0].mxu0 %v3449
        %v3600 = vpop.f32.mrb[0].mxu0
        %v3601 = vadd.f32 %v1618, %v3600
        %v3602 = vpop.f32.mrb[0].mxu0
        %3603 = vmatprep.mubr.f32.mxu0 0.0
        %3604 = vmatmul.mubr.f32.gmra.mrb[0].mxu0 %v3451
        %v3605 = vpop.f32.mrb[0].mxu0
        %v3606 = vadd.f32 %v1619, %v3605
        %v3607 = vpop.f32.mrb[0].mxu0
        %3608 = vmatprep.mubr.f32.mxu0 0.0
        %3609 = vmatmul.mubr.f32.gmra.mrb[0].mxu0 %v3453
        %v3610 = vpop.f32.mrb[0].mxu0
        %v3611 = vadd.f32 %v1620, %v3610
        %v3612 = vpop.f32.mrb[0].mxu0
        %3613 = vmatprep.mubr.f32.mxu0 0.0
        %3614 = vmatmul.mubr.f32.gmra.mrb[0].mxu0 %v3455
        %v3615 = vpop.f32.mrb[0].mxu0
        %v3616 = vadd.f32 %v1621, %v3615
        %v3617 = vpop.f32.mrb[0].mxu0
        %3618 = vmatprep.mubr.f32.mxu0 0.0
        %3619 = vmatmul.mubr.f32.gmra.mrb[0].mxu0 %v3457
        %v3620 = vpop.f32.mrb[0].mxu0
        %v3621 = vadd.f32 %v1622, %v3620
        %v3622 = vpop.f32.mrb[0].mxu0
        %3623 = vmatprep.mubr.f32.mxu0 0.0
        %3624 = vmatmul.mubr.f32.gmra.mrb[0].mxu0 %v3459
        %v3625 = vpop.f32.mrb[0].mxu0
        %v3626 = vadd.f32 %v1623, %v3625
        %v3627 = vpop.f32.mrb[0].mxu0
        %3628 = vmatprep.mubr.f32.mxu0 0.0
        %3629 = vmatmul.mubr.f32.gmra.mrb[0].mxu0 %v3461
        %v3630 = vpop.f32.mrb[0].mxu0
        %v3631 = vadd.f32 %v1624, %v3630
        %v3632 = vpop.f32.mrb[0].mxu0
        %3633 = vmatprep.mubr.f32.mxu0 0.0
        %3634 = vmatmul.mubr.f32.gmra.mrb[0].mxu0 %v3463
        %v3635 = vpop.f32.mrb[0].mxu0
        %v3636 = vadd.f32 %v1625, %v3635
        %v3637 = vpop.f32.mrb[0].mxu0
        %3638 = vmatprep.mubr.f32.mxu0 0.0
        %3639 = vmatmul.mubr.f32.gmra.mrb[0].mxu0 %v3465
        %v3640 = vpop.f32.mrb[0].mxu0
        %v3641 = vadd.f32 %v1626, %v3640
        %v3642 = vpop.f32.mrb[0].mxu0
        %3643 = vdwg.mxu0
        %3644 = vmax.xlane.f32.xlu0 %v3566
        %v3645 = vpop.xlane.xlu0 %3644
        %3646 = vmax.xlane.f32.xlu0 %v3571
        %v3647 = vpop.xlane.xlu0 %3646
        %3648 = vmax.xlane.f32.xlu0 %v3576
        %v3649 = vpop.xlane.xlu0 %3648
        %3650 = vmax.xlane.f32.xlu0 %v3581
        %v3651 = vpop.xlane.xlu0 %3650
        %3652 = vmax.xlane.f32.xlu0 %v3586
        %v3653 = vpop.xlane.xlu0 %3652
        %3654 = vmax.xlane.f32.xlu0 %v3591
        %v3655 = vpop.xlane.xlu0 %3654
        %3656 = vmax.xlane.f32.xlu0 %v3596
        %v3657 = vpop.xlane.xlu0 %3656
        %3658 = vmax.xlane.f32.xlu0 %v3601
        %v3659 = vpop.xlane.xlu0 %3658
        %3660 = vmax.xlane.f32.xlu0 %v3606
        %v3661 = vpop.xlane.xlu0 %3660
        %3662 = vmax.xlane.f32.xlu0 %v3611
        %v3663 = vpop.xlane.xlu0 %3662
        %3664 = vmax.xlane.f32.xlu0 %v3616
        %v3665 = vpop.xlane.xlu0 %3664
        %3666 = vmax.xlane.f32.xlu0 %v3621
        %v3667 = vpop.xlane.xlu0 %3666
        %3668 = vmax.xlane.f32.xlu0 %v3626
        %v3669 = vpop.xlane.xlu0 %3668
        %3670 = vmax.xlane.f32.xlu0 %v3631
        %v3671 = vpop.xlane.xlu0 %3670
        %3672 = vmax.xlane.f32.xlu0 %v3636
        %v3673 = vpop.xlane.xlu0 %3672
        %3674 = vmax.xlane.f32.xlu0 %v3641
        %v3675 = vpop.xlane.xlu0 %3674
        %v3676 = vsub.f32 %v3566, %v3645
        %v3677 = vsub.f32 %v3571, %v3647
        %v3678 = vsub.f32 %v3576, %v3649
        %v3679 = vsub.f32 %v3581, %v3651
        %v3680 = vsub.f32 %v3586, %v3653
        %v3681 = vsub.f32 %v3591, %v3655
        %v3682 = vsub.f32 %v3596, %v3657
        %v3683 = vsub.f32 %v3601, %v3659
        %v3684 = vsub.f32 %v3606, %v3661
        %v3685 = vsub.f32 %v3611, %v3663
        %v3686 = vsub.f32 %v3616, %v3665
        %v3687 = vsub.f32 %v3621, %v3667
        %v3688 = vsub.f32 %v3626, %v3669
        %v3689 = vsub.f32 %v3631, %v3671
        %v3690 = vsub.f32 %v3636, %v3673
        %v3691 = vsub.f32 %v3641, %v3675
        %v3692 = vmul.f32 %v3676, 1.442695
        %v3693 = vpow.pop %v3692
        %v3694 = vmul.f32 %v3677, 1.442695
        %v3695 = vpow.pop %v3694
        %v3696 = vmul.f32 %v3678, 1.442695
        %v3697 = vpow.pop %v3696
        %v3698 = vmul.f32 %v3679, 1.442695
        %v3699 = vpow.pop %v3698
        %v3700 = vmul.f32 %v3680, 1.442695
        %v3701 = vpow.pop %v3700
        %v3702 = vmul.f32 %v3681, 1.442695
        %v3703 = vpow.pop %v3702
        %v3704 = vmul.f32 %v3682, 1.442695
        %v3705 = vpow.pop %v3704
        %v3706 = vmul.f32 %v3683, 1.442695
        %v3707 = vpow.pop %v3706
        %v3708 = vmul.f32 %v3684, 1.442695
        %v3709 = vpow.pop %v3708
        %v3710 = vmul.f32 %v3685, 1.442695
        %v3711 = vpow.pop %v3710
        %v3712 = vmul.f32 %v3686, 1.442695
        %v3713 = vpow.pop %v3712
        %v3714 = vmul.f32 %v3687, 1.442695
        %v3715 = vpow.pop %v3714
        %v3716 = vmul.f32 %v3688, 1.442695
        %v3717 = vpow.pop %v3716
        %v3718 = vmul.f32 %v3689, 1.442695
        %v3719 = vpow.pop %v3718
        %v3720 = vmul.f32 %v3690, 1.442695
        %v3721 = vpow.pop %v3720
        %v3722 = vmul.f32 %v3691, 1.442695
        %v3723 = vpow.pop %v3722
        %3724 = vadd.xlane.f32.xlu0 %v3693
        %v3725 = vpop.xlane.xlu0 %3724
        %3726 = vadd.xlane.f32.xlu0 %v3695
        %v3727 = vpop.xlane.xlu0 %3726
        %3728 = vadd.xlane.f32.xlu0 %v3697
        %v3729 = vpop.xlane.xlu0 %3728
        %3730 = vadd.xlane.f32.xlu0 %v3699
        %v3731 = vpop.xlane.xlu0 %3730
        %3732 = vadd.xlane.f32.xlu0 %v3701
        %v3733 = vpop.xlane.xlu0 %3732
        %3734 = vadd.xlane.f32.xlu0 %v3703
        %v3735 = vpop.xlane.xlu0 %3734
        %3736 = vadd.xlane.f32.xlu0 %v3705
        %v3737 = vpop.xlane.xlu0 %3736
        %3738 = vadd.xlane.f32.xlu0 %v3707
        %v3739 = vpop.xlane.xlu0 %3738
        %3740 = vadd.xlane.f32.xlu0 %v3709
        %v3741 = vpop.xlane.xlu0 %3740
        %3742 = vadd.xlane.f32.xlu0 %v3711
        %v3743 = vpop.xlane.xlu0 %3742
        %3744 = vadd.xlane.f32.xlu0 %v3713
        %v3745 = vpop.xlane.xlu0 %3744
        %3746 = vadd.xlane.f32.xlu0 %v3715
        %v3747 = vpop.xlane.xlu0 %3746
        %3748 = vadd.xlane.f32.xlu0 %v3717
        %v3749 = vpop.xlane.xlu0 %3748
        %3750 = vadd.xlane.f32.xlu0 %v3719
        %v3751 = vpop.xlane.xlu0 %3750
        %3752 = vadd.xlane.f32.xlu0 %v3721
        %v3753 = vpop.xlane.xlu0 %3752
        %3754 = vadd.xlane.f32.xlu0 %v3723
        %v3755 = vpop.xlane.xlu0 %3754
        %v3756 = vrcp.pop %v3725
        %v3757 = vrcp.pop %v3727
        %v3758 = vrcp.pop %v3729
        %v3759 = vrcp.pop %v3731
        %v3760 = vrcp.pop %v3733
        %v3761 = vrcp.pop %v3735
        %v3762 = vrcp.pop %v3737
        %v3763 = vrcp.pop %v3739
        %v3764 = vrcp.pop %v3741
        %v3765 = vrcp.pop %v3743
        %v3766 = vrcp.pop %v3745
        %v3767 = vrcp.pop %v3747
        %v3768 = vrcp.pop %v3749
        %v3769 = vrcp.pop %v3751
        %v3770 = vrcp.pop %v3753
        %v3771 = vrcp.pop %v3755
        %v3772 = vmul.f32 %v3693, %v3756
        %v3773 = vmul.f32 %v3695, %v3757
        %v3774 = vmul.f32 %v3697, %v3758
        %v3775 = vmul.f32 %v3699, %v3759
        %v3776 = vmul.f32 %v3701, %v3760
        %v3777 = vmul.f32 %v3703, %v3761
        %v3778 = vmul.f32 %v3705, %v3762
        %v3779 = vmul.f32 %v3707, %v3763
        %v3780 = vmul.f32 %v3709, %v3764
        %v3781 = vmul.f32 %v3711, %v3765
        %v3782 = vmul.f32 %v3713, %v3766
        %v3783 = vmul.f32 %v3715, %v3767
        %v3784 = vmul.f32 %v3717, %v3768
        %v3785 = vmul.f32 %v3719, %v3769
        %v3786 = vmul.f32 %v3721, %v3770
        %v3787 = vmul.f32 %v3723, %v3771
        %v3788 = vpack.c.bf16 %v3773, %v3772
        %v3789 = vpack.c.bf16 %v3775, %v3774
        %v3790 = vpack.c.bf16 %v3777, %v3776
        %v3791 = vpack.c.bf16 %v3779, %v3778
        %v3792 = vpack.c.bf16 %v3781, %v3780
        %v3793 = vpack.c.bf16 %v3783, %v3782
        %v3794 = vpack.c.bf16 %v3785, %v3784
        %v3795 = vpack.c.bf16 %v3787, %v3786
        %v3804 = vunpack.c.l.b16 %v3788
        %v3805 = vunpack.c.h.b16 %v3788
        %v3806 = vunpack.c.l.b16 %v3789
        %v3807 = vunpack.c.h.b16 %v3789
        %v3808 = vunpack.c.l.b16 %v3790
        %v3809 = vunpack.c.h.b16 %v3790
        %v3810 = vunpack.c.l.b16 %v3791
        %v3811 = vunpack.c.h.b16 %v3791
        %v3812 = vunpack.c.l.b16 %v3792
        %v3813 = vunpack.c.h.b16 %v3792
        %v3814 = vunpack.c.l.b16 %v3793
        %v3815 = vunpack.c.h.b16 %v3793
        %v3816 = vunpack.c.l.b16 %v3794
        %v3817 = vunpack.c.h.b16 %v3794
        %v3818 = vunpack.c.l.b16 %v3795
        %v3819 = vunpack.c.h.b16 %v3795
        %v3820 = vpack.c.b16 %v3804, %v3804
        %v3821 = vpack.c.b16 %v3805, %v3805
        %v3822 = vpack.c.b16 %v3806, %v3806
        %v3823 = vpack.c.b16 %v3807, %v3807
        %v3824 = vpack.c.b16 %v3808, %v3808
        %v3825 = vpack.c.b16 %v3809, %v3809
        %v3826 = vpack.c.b16 %v3810, %v3810
        %v3827 = vpack.c.b16 %v3811, %v3811
        %v3828 = vpack.c.b16 %v3812, %v3812
        %v3829 = vpack.c.b16 %v3813, %v3813
        %v3830 = vpack.c.b16 %v3814, %v3814
        %v3831 = vpack.c.b16 %v3815, %v3815
        %v3832 = vpack.c.b16 %v3816, %v3816
        %v3833 = vpack.c.b16 %v3817, %v3817
        %v3834 = vpack.c.b16 %v3818, %v3818
        %v3835 = vpack.c.b16 %v3819, %v3819
        %s3852 = scalar_lea.vmem %s547, 128 [#allocation17]
        %3853 = vst [vmem:[%s3852] sm:$0xf] %v3820
        %3854 = vst [vmem:[%s3852 + $0x4] sm:$0xf] %v3821
        %3855 = vst [vmem:[%s3852 + $0x8] sm:$0xf] %v3822
        %3856 = vst [vmem:[%s3852 + $0xc] sm:$0xf] %v3823
        %3857 = vst [vmem:[%s3852 + $0x10] sm:$0xf] %v3824
        %3858 = vst [vmem:[%s3852 + $0x14] sm:$0xf] %v3825
        %3859 = vst [vmem:[%s3852 + $0x18] sm:$0xf] %v3826
        %3860 = vst [vmem:[%s3852 + $0x1c] sm:$0xf] %v3827
        %3861 = vst [vmem:[%s3852 + $0x20] sm:$0xf] %v3828
        %3862 = vst [vmem:[%s3852 + $0x24] sm:$0xf] %v3829
        %3863 = vst [vmem:[%s3852 + $0x28] sm:$0xf] %v3830
        %3864 = vst [vmem:[%s3852 + $0x2c] sm:$0xf] %v3831
        %3865 = vst [vmem:[%s3852 + $0x30] sm:$0xf] %v3832
        %3866 = vst [vmem:[%s3852 + $0x34] sm:$0xf] %v3833
        %3867 = vst [vmem:[%s3852 + $0x38] sm:$0xf] %v3834
        %3868 = vst [vmem:[%s3852 + $0x3c] sm:$0xf] %v3835
        %3869 = vrot.lane.b32.xlu0 %v1643, 64
        %v3870 = vpop.permute.xlu0 %3869
        %3871 = vrot.lane.b32.xlu0 %v1644, 64
        %v3872 = vpop.permute.xlu0 %3871
        %3873 = vrot.lane.b32.xlu0 %v1645, 64
        %v3874 = vpop.permute.xlu0 %3873
        %3875 = vrot.lane.b32.xlu0 %v1646, 64
        %v3876 = vpop.permute.xlu0 %3875
        %3877 = vrot.lane.b32.xlu0 %v1647, 64
        %v3878 = vpop.permute.xlu0 %3877
        %3879 = vrot.lane.b32.xlu0 %v1648, 64
        %v3880 = vpop.permute.xlu0 %3879
        %3881 = vrot.lane.b32.xlu0 %v1649, 64
        %v3882 = vpop.permute.xlu0 %3881
        %3883 = vrot.lane.b32.xlu0 %v1650, 64
        %v3884 = vpop.permute.xlu0 %3883
        %3885 = vrot.lane.b32.xlu0 %v1651, 64
        %v3886 = vpop.permute.xlu0 %3885
        %3887 = vrot.lane.b32.xlu0 %v1652, 64
        %v3888 = vpop.permute.xlu0 %3887
        %3889 = vrot.lane.b32.xlu0 %v1653, 64
        %v3890 = vpop.permute.xlu0 %3889
        %3891 = vrot.lane.b32.xlu0 %v1654, 64
        %v3892 = vpop.permute.xlu0 %3891
        %3893 = vrot.lane.b32.xlu0 %v1655, 64
        %v3894 = vpop.permute.xlu0 %3893
        %3895 = vrot.lane.b32.xlu0 %v1656, 64
        %v3896 = vpop.permute.xlu0 %3895
        %3897 = vrot.lane.b32.xlu0 %v1657, 64
        %v3898 = vpop.permute.xlu0 %3897
        %3899 = vrot.lane.b32.xlu0 %v1658, 64
        %v3900 = vpop.permute.xlu0 %3899
        %3917 = vmatprep.subr.mxu0 0.0
        %3918 = vmatpush1.msra.mxu0 %v3870
        %3919 = vmatprep.subr.mxu0 0.0
        %3920 = vmatpush1.msra.mxu0 %v3872
        %3921 = vmatprep.subr.mxu0 0.0
        %3922 = vmatpush1.msra.mxu0 %v3874
        %3923 = vmatprep.subr.mxu0 0.0
        %3924 = vmatpush1.msra.mxu0 %v3876
        %3925 = vmatprep.subr.mxu0 0.0
        %3926 = vmatpush1.msra.mxu0 %v3878
        %3927 = vmatprep.subr.mxu0 0.0
        %3928 = vmatpush1.msra.mxu0 %v3880
        %3929 = vmatprep.subr.mxu0 0.0
        %3930 = vmatpush1.msra.mxu0 %v3882
        %3931 = vmatprep.subr.mxu0 0.0
        %3932 = vmatpush1.msra.mxu0 %v3884
        %3933 = vmatprep.subr.mxu0 0.0
        %3934 = vmatpush1.msra.mxu0 %v3886
        %3935 = vmatprep.subr.mxu0 0.0
        %3936 = vmatpush1.msra.mxu0 %v3888
        %3937 = vmatprep.subr.mxu0 0.0
        %3938 = vmatpush1.msra.mxu0 %v3890
        %3939 = vmatprep.subr.mxu0 0.0
        %3940 = vmatpush1.msra.mxu0 %v3892
        %3941 = vmatprep.subr.mxu0 0.0
        %3942 = vmatpush1.msra.mxu0 %v3894
        %3943 = vmatprep.subr.mxu0 0.0
        %3944 = vmatpush1.msra.mxu0 %v3896
        %3945 = vmatprep.subr.mxu0 0.0
        %3946 = vmatpush1.msra.mxu0 %v3898
        %3947 = vmatprep.subr.mxu0 0.0
        %3948 = vmatpush1.msra.mxu0 %v3900
        %3949 = vmatprep.subr.mxu0 0.0
        %3950 = vmatpush1.msra.mxu0 0.0
        %3951 = vmatprep.subr.mxu0 0.0
        %3952 = vmatpush1.msra.mxu0 0.0
        %3953 = vmatprep.subr.mxu0 0.0
        %3954 = vmatpush1.msra.mxu0 0.0
        %3955 = vmatprep.subr.mxu0 0.0
        %3956 = vmatpush1.msra.mxu0 0.0
        %3957 = vmatprep.subr.mxu0 0.0
        %3958 = vmatpush1.msra.mxu0 0.0
        %3959 = vmatprep.subr.mxu0 0.0
        %3960 = vmatpush1.msra.mxu0 0.0
        %3961 = vmatprep.subr.mxu0 0.0
        %3962 = vmatpush1.msra.mxu0 0.0
        %3963 = vmatprep.subr.mxu0 0.0
        %3964 = vmatpush1.msra.mxu0 0.0
        %3965 = vmatprep.subr.mxu0 0.0
        %3966 = vmatpush1.msra.mxu0 0.0
        %3967 = vmatprep.subr.mxu0 0.0
        %3968 = vmatpush1.msra.mxu0 0.0
        %3969 = vmatprep.subr.mxu0 0.0
        %3970 = vmatpush1.msra.mxu0 0.0
        %3971 = vmatprep.subr.mxu0 0.0
        %3972 = vmatpush1.msra.mxu0 0.0
        %3973 = vmatprep.subr.mxu0 0.0
        %3974 = vmatpush1.msra.mxu0 0.0
        %3975 = vmatprep.subr.mxu0 0.0
        %3976 = vmatpush1.msra.mxu0 0.0
        %3977 = vmatprep.subr.mxu0 0.0
        %3978 = vmatpush1.msra.mxu0 0.0
        %3979 = vmatprep.subr.mxu0 0.0
        %3980 = vmatpush1.msra.mxu0 0.0
        %3981 = vmatprep.mubr.f32.mxu0 0.0
        %3982 = vmatmul.mubr.f32.gmra.mrb[0].mxu0 %v3772
        %v3983 = vpop.f32.mrb[0].mxu0
        %v3984 = vadd.f32 0.0, %v3983
        %v3985 = vpop.f32.mrb[0].mxu0
        %3986 = vmatprep.mubr.f32.mxu0 0.0
        %3987 = vmatmul.mubr.f32.gmra.mrb[0].mxu0 %v3773
        %v3988 = vpop.f32.mrb[0].mxu0
        %v3989 = vadd.f32 0.0, %v3988
        %v3990 = vpop.f32.mrb[0].mxu0
        %3991 = vmatprep.mubr.f32.mxu0 0.0
        %3992 = vmatmul.mubr.f32.gmra.mrb[0].mxu0 %v3774
        %v3993 = vpop.f32.mrb[0].mxu0
        %v3994 = vadd.f32 0.0, %v3993
        %v3995 = vpop.f32.mrb[0].mxu0
        %3996 = vmatprep.mubr.f32.mxu0 0.0
        %3997 = vmatmul.mubr.f32.gmra.mrb[0].mxu0 %v3775
        %v3998 = vpop.f32.mrb[0].mxu0
        %v3999 = vadd.f32 0.0, %v3998
        %v4000 = vpop.f32.mrb[0].mxu0
        %4001 = vmatprep.mubr.f32.mxu0 0.0
        %4002 = vmatmul.mubr.f32.gmra.mrb[0].mxu0 %v3776
        %v4003 = vpop.f32.mrb[0].mxu0
        %v4004 = vadd.f32 0.0, %v4003
        %v4005 = vpop.f32.mrb[0].mxu0
        %4006 = vmatprep.mubr.f32.mxu0 0.0
        %4007 = vmatmul.mubr.f32.gmra.mrb[0].mxu0 %v3777
        %v4008 = vpop.f32.mrb[0].mxu0
        %v4009 = vadd.f32 0.0, %v4008
        %v4010 = vpop.f32.mrb[0].mxu0
        %4011 = vmatprep.mubr.f32.mxu0 0.0
        %4012 = vmatmul.mubr.f32.gmra.mrb[0].mxu0 %v3778
        %v4013 = vpop.f32.mrb[0].mxu0
        %v4014 = vadd.f32 0.0, %v4013
        %v4015 = vpop.f32.mrb[0].mxu0
        %4016 = vmatprep.mubr.f32.mxu0 0.0
        %4017 = vmatmul.mubr.f32.gmra.mrb[0].mxu0 %v3779
        %v4018 = vpop.f32.mrb[0].mxu0
        %v4019 = vadd.f32 0.0, %v4018
        %v4020 = vpop.f32.mrb[0].mxu0
        %4021 = vmatprep.mubr.f32.mxu0 0.0
        %4022 = vmatmul.mubr.f32.gmra.mrb[0].mxu0 %v3780
        %v4023 = vpop.f32.mrb[0].mxu0
        %v4024 = vadd.f32 0.0, %v4023
        %v4025 = vpop.f32.mrb[0].mxu0
        %4026 = vmatprep.mubr.f32.mxu0 0.0
        %4027 = vmatmul.mubr.f32.gmra.mrb[0].mxu0 %v3781
        %v4028 = vpop.f32.mrb[0].mxu0
        %v4029 = vadd.f32 0.0, %v4028
        %v4030 = vpop.f32.mrb[0].mxu0
        %4031 = vmatprep.mubr.f32.mxu0 0.0
        %4032 = vmatmul.mubr.f32.gmra.mrb[0].mxu0 %v3782
        %v4033 = vpop.f32.mrb[0].mxu0
        %v4034 = vadd.f32 0.0, %v4033
        %v4035 = vpop.f32.mrb[0].mxu0
        %4036 = vmatprep.mubr.f32.mxu0 0.0
        %4037 = vmatmul.mubr.f32.gmra.mrb[0].mxu0 %v3783
        %v4038 = vpop.f32.mrb[0].mxu0
        %v4039 = vadd.f32 0.0, %v4038
        %v4040 = vpop.f32.mrb[0].mxu0
        %4041 = vmatprep.mubr.f32.mxu0 0.0
        %4042 = vmatmul.mubr.f32.gmra.mrb[0].mxu0 %v3784
        %v4043 = vpop.f32.mrb[0].mxu0
        %v4044 = vadd.f32 0.0, %v4043
        %v4045 = vpop.f32.mrb[0].mxu0
        %4046 = vmatprep.mubr.f32.mxu0 0.0
        %4047 = vmatmul.mubr.f32.gmra.mrb[0].mxu0 %v3785
        %v4048 = vpop.f32.mrb[0].mxu0
        %v4049 = vadd.f32 0.0, %v4048
        %v4050 = vpop.f32.mrb[0].mxu0
        %4051 = vmatprep.mubr.f32.mxu0 0.0
        %4052 = vmatmul.mubr.f32.gmra.mrb[0].mxu0 %v3786
        %v4053 = vpop.f32.mrb[0].mxu0
        %v4054 = vadd.f32 0.0, %v4053
        %v4055 = vpop.f32.mrb[0].mxu0
        %4056 = vmatprep.mubr.f32.mxu0 0.0
        %4057 = vmatmul.mubr.f32.gmra.mrb[0].mxu0 %v3787
        %v4058 = vpop.f32.mrb[0].mxu0
        %v4059 = vadd.f32 0.0, %v4058
        %v4060 = vpop.f32.mrb[0].mxu0
        %4061 = vdwg.mxu0
        %v4062 = vld [vmem:[#allocation12 + $0x40] sm:$0xff]
        %v4063 = vld [vmem:[#allocation12 + $0x48] sm:$0xff]
        %v4064 = vld [vmem:[#allocation12 + $0x50] sm:$0xff]
        %v4065 = vld [vmem:[#allocation12 + $0x58] sm:$0xff]
        %v4067 = vsel %vm1659, %v3984, 0
        %v4070 = vsel %vm1659, %v3989, 0
        %v4073 = vsel %vm1659, %v3994, 0
        %v4076 = vsel %vm1659, %v3999, 0
        %v4079 = vsel %vm1659, %v4004, 0
        %v4082 = vsel %vm1659, %v4009, 0
        %v4085 = vsel %vm1659, %v4014, 0
        %v4088 = vsel %vm1659, %v4019, 0
        %v4091 = vsel %vm1659, %v4024, 0
        %v4094 = vsel %vm1659, %v4029, 0
        %v4097 = vsel %vm1659, %v4034, 0
        %v4100 = vsel %vm1659, %v4039, 0
        %v4103 = vsel %vm1659, %v4044, 0
        %v4106 = vsel %vm1659, %v4049, 0
        %v4109 = vsel %vm1659, %v4054, 0
        %v4112 = vsel %vm1659, %v4059, 0
        %4114 = vmatprep.subr.mxu0 0.0
        %4115 = vmatpush1.msra.mxu0 %v4062
        %4116 = vmatprep.subr.mxu0 0.0
        %4117 = vmatpush1.msra.mxu0 %v4063
        %4118 = vmatprep.subr.mxu0 0.0
        %4119 = vmatpush1.msra.mxu0 %v4064
        %4120 = vmatprep.subr.mxu0 0.0
        %4121 = vmatpush1.msra.mxu0 %v4065
        %4122 = vmatprep.subr.mxu0 0.0
        %4123 = vmatpush1.msra.mxu0 0.0
        %4124 = vmatprep.subr.mxu0 0.0
        %4125 = vmatpush1.msra.mxu0 0.0
        %4126 = vmatprep.subr.mxu0 0.0
        %4127 = vmatpush1.msra.mxu0 0.0
        %4128 = vmatprep.subr.mxu0 0.0
        %4129 = vmatpush1.msra.mxu0 0.0
        %4130 = vmatprep.subr.mxu0 0.0
        %4131 = vmatpush1.msra.mxu0 0.0
        %4132 = vmatprep.subr.mxu0 0.0
        %4133 = vmatpush1.msra.mxu0 0.0
        %4134 = vmatprep.subr.mxu0 0.0
        %4135 = vmatpush1.msra.mxu0 0.0
        %4136 = vmatprep.subr.mxu0 0.0
        %4137 = vmatpush1.msra.mxu0 0.0
        %4138 = vmatprep.subr.mxu0 0.0
        %4139 = vmatpush1.msra.mxu0 0.0
        %4140 = vmatprep.subr.mxu0 0.0
        %4141 = vmatpush1.msra.mxu0 0.0
        %4142 = vmatprep.subr.mxu0 0.0
        %4143 = vmatpush1.msra.mxu0 0.0
        %4144 = vmatprep.subr.mxu0 0.0
        %4145 = vmatpush1.msra.mxu0 0.0
        %4146 = vmatprep.subr.mxu0 0.0
        %4147 = vmatpush1.msra.mxu0 0.0
        %4148 = vmatprep.subr.mxu0 0.0
        %4149 = vmatpush1.msra.mxu0 0.0
        %4150 = vmatprep.subr.mxu0 0.0
        %4151 = vmatpush1.msra.mxu0 0.0
        %4152 = vmatprep.subr.mxu0 0.0
        %4153 = vmatpush1.msra.mxu0 0.0
        %4154 = vmatprep.subr.mxu0 0.0
        %4155 = vmatpush1.msra.mxu0 0.0
        %4156 = vmatprep.subr.mxu0 0.0
        %4157 = vmatpush1.msra.mxu0 0.0
        %4158 = vmatprep.subr.mxu0 0.0
        %4159 = vmatpush1.msra.mxu0 0.0
        %4160 = vmatprep.subr.mxu0 0.0
        %4161 = vmatpush1.msra.mxu0 0.0
        %4162 = vmatprep.subr.mxu0 0.0
        %4163 = vmatpush1.msra.mxu0 0.0
        %4164 = vmatprep.subr.mxu0 0.0
        %4165 = vmatpush1.msra.mxu0 0.0
        %4166 = vmatprep.subr.mxu0 0.0
        %4167 = vmatpush1.msra.mxu0 0.0
        %4168 = vmatprep.subr.mxu0 0.0
        %4169 = vmatpush1.msra.mxu0 0.0
        %4170 = vmatprep.subr.mxu0 0.0
        %4171 = vmatpush1.msra.mxu0 0.0
        %4172 = vmatprep.subr.mxu0 0.0
        %4173 = vmatpush1.msra.mxu0 0.0
        %4174 = vmatprep.subr.mxu0 0.0
        %4175 = vmatpush1.msra.mxu0 0.0
        %4176 = vmatprep.subr.mxu0 0.0
        %4177 = vmatpush1.msra.mxu0 0.0
        %4178 = vmatprep.mubr.f32.mxu0 0.0
        %4179 = vmatmul.mubr.f32.gmra.mrb[0].mxu0 %v4067
        %v4180 = vpop.f32.mrb[0].mxu0
        %v4181 = vadd.f32 0.0, %v4180
        %v4182 = vpop.f32.mrb[0].mxu0
        %4183 = vmatprep.mubr.f32.mxu0 0.0
        %4184 = vmatmul.mubr.f32.gmra.mrb[0].mxu0 %v4070
        %v4185 = vpop.f32.mrb[0].mxu0
        %v4186 = vadd.f32 0.0, %v4185
        %v4187 = vpop.f32.mrb[0].mxu0
        %4188 = vmatprep.mubr.f32.mxu0 0.0
        %4189 = vmatmul.mubr.f32.gmra.mrb[0].mxu0 %v4073
        %v4190 = vpop.f32.mrb[0].mxu0
        %v4191 = vadd.f32 0.0, %v4190
        %v4192 = vpop.f32.mrb[0].mxu0
        %4193 = vmatprep.mubr.f32.mxu0 0.0
        %4194 = vmatmul.mubr.f32.gmra.mrb[0].mxu0 %v4076
        %v4195 = vpop.f32.mrb[0].mxu0
        %v4196 = vadd.f32 0.0, %v4195
        %v4197 = vpop.f32.mrb[0].mxu0
        %4198 = vmatprep.mubr.f32.mxu0 0.0
        %4199 = vmatmul.mubr.f32.gmra.mrb[0].mxu0 %v4079
        %v4200 = vpop.f32.mrb[0].mxu0
        %v4201 = vadd.f32 0.0, %v4200
        %v4202 = vpop.f32.mrb[0].mxu0
        %4203 = vmatprep.mubr.f32.mxu0 0.0
        %4204 = vmatmul.mubr.f32.gmra.mrb[0].mxu0 %v4082
        %v4205 = vpop.f32.mrb[0].mxu0
        %v4206 = vadd.f32 0.0, %v4205
        %v4207 = vpop.f32.mrb[0].mxu0
        %4208 = vmatprep.mubr.f32.mxu0 0.0
        %4209 = vmatmul.mubr.f32.gmra.mrb[0].mxu0 %v4085
        %v4210 = vpop.f32.mrb[0].mxu0
        %v4211 = vadd.f32 0.0, %v4210
        %v4212 = vpop.f32.mrb[0].mxu0
        %4213 = vmatprep.mubr.f32.mxu0 0.0
        %4214 = vmatmul.mubr.f32.gmra.mrb[0].mxu0 %v4088
        %v4215 = vpop.f32.mrb[0].mxu0
        %v4216 = vadd.f32 0.0, %v4215
        %v4217 = vpop.f32.mrb[0].mxu0
        %4218 = vmatprep.mubr.f32.mxu0 0.0
        %4219 = vmatmul.mubr.f32.gmra.mrb[0].mxu0 %v4091
        %v4220 = vpop.f32.mrb[0].mxu0
        %v4221 = vadd.f32 0.0, %v4220
        %v4222 = vpop.f32.mrb[0].mxu0
        %4223 = vmatprep.mubr.f32.mxu0 0.0
        %4224 = vmatmul.mubr.f32.gmra.mrb[0].mxu0 %v4094
        %v4225 = vpop.f32.mrb[0].mxu0
        %v4226 = vadd.f32 0.0, %v4225
        %v4227 = vpop.f32.mrb[0].mxu0
        %4228 = vmatprep.mubr.f32.mxu0 0.0
        %4229 = vmatmul.mubr.f32.gmra.mrb[0].mxu0 %v4097
        %v4230 = vpop.f32.mrb[0].mxu0
        %v4231 = vadd.f32 0.0, %v4230
        %v4232 = vpop.f32.mrb[0].mxu0
        %4233 = vmatprep.mubr.f32.mxu0 0.0
        %4234 = vmatmul.mubr.f32.gmra.mrb[0].mxu0 %v4100
        %v4235 = vpop.f32.mrb[0].mxu0
        %v4236 = vadd.f32 0.0, %v4235
        %v4237 = vpop.f32.mrb[0].mxu0
        %4238 = vmatprep.mubr.f32.mxu0 0.0
        %4239 = vmatmul.mubr.f32.gmra.mrb[0].mxu0 %v4103
        %v4240 = vpop.f32.mrb[0].mxu0
        %v4241 = vadd.f32 0.0, %v4240
        %v4242 = vpop.f32.mrb[0].mxu0
        %4243 = vmatprep.mubr.f32.mxu0 0.0
        %4244 = vmatmul.mubr.f32.gmra.mrb[0].mxu0 %v4106
        %v4245 = vpop.f32.mrb[0].mxu0
        %v4246 = vadd.f32 0.0, %v4245
        %v4247 = vpop.f32.mrb[0].mxu0
        %4248 = vmatprep.mubr.f32.mxu0 0.0
        %4249 = vmatmul.mubr.f32.gmra.mrb[0].mxu0 %v4109
        %v4250 = vpop.f32.mrb[0].mxu0
        %v4251 = vadd.f32 0.0, %v4250
        %v4252 = vpop.f32.mrb[0].mxu0
        %4253 = vmatprep.mubr.f32.mxu0 0.0
        %4254 = vmatmul.mubr.f32.gmra.mrb[0].mxu0 %v4112
        %v4255 = vpop.f32.mrb[0].mxu0
        %v4256 = vadd.f32 0.0, %v4255
        %v4257 = vpop.f32.mrb[0].mxu0
        %4258 = vdwg.mxu0
        %v4259 = vadd.f32 %v3293, %v4181
        %v4260 = vadd.f32 %v3298, %v4186
        %v4261 = vadd.f32 %v3303, %v4191
        %v4262 = vadd.f32 %v3308, %v4196
        %v4263 = vadd.f32 %v3313, %v4201
        %v4264 = vadd.f32 %v3318, %v4206
        %v4265 = vadd.f32 %v3323, %v4211
        %v4266 = vadd.f32 %v3328, %v4216
        %v4267 = vadd.f32 %v3333, %v4221
        %v4268 = vadd.f32 %v3338, %v4226
        %v4269 = vadd.f32 %v3343, %v4231
        %v4270 = vadd.f32 %v3348, %v4236
        %v4271 = vadd.f32 %v3353, %v4241
        %v4272 = vadd.f32 %v3358, %v4246
        %v4273 = vadd.f32 %v3363, %v4251
        %v4274 = vadd.f32 %v3368, %v4256
        %4275 = vrot.lane.b32.xlu0 %v1481, 32
        %v4276 = vpop.permute.xlu0 %4275
        %4277 = vrot.lane.b32.xlu0 %v1486, 32
        %v4278 = vpop.permute.xlu0 %4277
        %4279 = vrot.lane.b32.xlu0 %v1491, 32
        %v4280 = vpop.permute.xlu0 %4279
        %4281 = vrot.lane.b32.xlu0 %v1496, 32
        %v4282 = vpop.permute.xlu0 %4281
        %4283 = vrot.lane.b32.xlu0 %v1501, 32
        %v4284 = vpop.permute.xlu0 %4283
        %4285 = vrot.lane.b32.xlu0 %v1506, 32
        %v4286 = vpop.permute.xlu0 %4285
        %4287 = vrot.lane.b32.xlu0 %v1511, 32
        %v4288 = vpop.permute.xlu0 %4287
        %4289 = vrot.lane.b32.xlu0 %v1516, 32
        %v4290 = vpop.permute.xlu0 %4289
        %4291 = vrot.lane.b32.xlu0 %v1521, 32
        %v4292 = vpop.permute.xlu0 %4291
        %4293 = vrot.lane.b32.xlu0 %v1526, 32
        %v4294 = vpop.permute.xlu0 %4293
        %4295 = vrot.lane.b32.xlu0 %v1531, 32
        %v4296 = vpop.permute.xlu0 %4295
        %4297 = vrot.lane.b32.xlu0 %v1536, 32
        %v4298 = vpop.permute.xlu0 %4297
        %4299 = vrot.lane.b32.xlu0 %v1541, 32
        %v4300 = vpop.permute.xlu0 %4299
        %4301 = vrot.lane.b32.xlu0 %v1546, 32
        %v4302 = vpop.permute.xlu0 %4301
        %4303 = vrot.lane.b32.xlu0 %v1551, 32
        %v4304 = vpop.permute.xlu0 %4303
        %4305 = vrot.lane.b32.xlu0 %v1556, 32
        %v4306 = vpop.permute.xlu0 %4305
        %4307 = vrot.lane.b32.xlu0 %v1627, 32
        %v4308 = vpop.permute.xlu0 %4307
        %4309 = vrot.lane.b32.xlu0 %v1628, 32
        %v4310 = vpop.permute.xlu0 %4309
        %4311 = vrot.lane.b32.xlu0 %v1629, 32
        %v4312 = vpop.permute.xlu0 %4311
        %4313 = vrot.lane.b32.xlu0 %v1630, 32
        %v4314 = vpop.permute.xlu0 %4313
        %4315 = vrot.lane.b32.xlu0 %v1631, 32
        %v4316 = vpop.permute.xlu0 %4315
        %4317 = vrot.lane.b32.xlu0 %v1632, 32
        %v4318 = vpop.permute.xlu0 %4317
        %4319 = vrot.lane.b32.xlu0 %v1633, 32
        %v4320 = vpop.permute.xlu0 %4319
        %4321 = vrot.lane.b32.xlu0 %v1634, 32
        %v4322 = vpop.permute.xlu0 %4321
        %4323 = vrot.lane.b32.xlu0 %v1635, 32
        %v4324 = vpop.permute.xlu0 %4323
        %4325 = vrot.lane.b32.xlu0 %v1636, 32
        %v4326 = vpop.permute.xlu0 %4325
        %4327 = vrot.lane.b32.xlu0 %v1637, 32
        %v4328 = vpop.permute.xlu0 %4327
        %4329 = vrot.lane.b32.xlu0 %v1638, 32
        %v4330 = vpop.permute.xlu0 %4329
        %4331 = vrot.lane.b32.xlu0 %v1639, 32
        %v4332 = vpop.permute.xlu0 %4331
        %4333 = vrot.lane.b32.xlu0 %v1640, 32
        %v4334 = vpop.permute.xlu0 %4333
        %4335 = vrot.lane.b32.xlu0 %v1641, 32
        %v4336 = vpop.permute.xlu0 %4335
        %4337 = vrot.lane.b32.xlu0 %v1642, 32
        %v4338 = vpop.permute.xlu0 %4337
        %v4339 = vsel %vm1659, %v4276, 0
        %v4341 = vsel %vm1659, %v4278, 0
        %v4343 = vsel %vm1659, %v4280, 0
        %v4345 = vsel %vm1659, %v4282, 0
        %v4347 = vsel %vm1659, %v4284, 0
        %v4349 = vsel %vm1659, %v4286, 0
        %v4351 = vsel %vm1659, %v4288, 0
        %v4353 = vsel %vm1659, %v4290, 0
        %v4355 = vsel %vm1659, %v4292, 0
        %v4357 = vsel %vm1659, %v4294, 0
        %v4359 = vsel %vm1659, %v4296, 0
        %v4361 = vsel %vm1659, %v4298, 0
        %v4363 = vsel %vm1659, %v4300, 0
        %v4365 = vsel %vm1659, %v4302, 0
        %v4367 = vsel %vm1659, %v4304, 0
        %v4369 = vsel %vm1659, %v4306, 0
        %v4371 = vsel %vm1659, %v4308, 0
        %v4373 = vsel %vm1659, %v4310, 0
        %v4375 = vsel %vm1659, %v4312, 0
        %v4377 = vsel %vm1659, %v4314, 0
        %v4379 = vsel %vm1659, %v4316, 0
        %v4381 = vsel %vm1659, %v4318, 0
        %v4383 = vsel %vm1659, %v4320, 0
        %v4385 = vsel %vm1659, %v4322, 0
        %v4387 = vsel %vm1659, %v4324, 0
        %v4389 = vsel %vm1659, %v4326, 0
        %v4391 = vsel %vm1659, %v4328, 0
        %v4393 = vsel %vm1659, %v4330, 0
        %v4395 = vsel %vm1659, %v4332, 0
        %v4397 = vsel %vm1659, %v4334, 0
        %v4399 = vsel %vm1659, %v4336, 0
        %v4401 = vsel %vm1659, %v4338, 0
        %4403 = vmatprep.subr.mxu0 0.0
        %4404 = vmatpush1.xpose.msra.mxu0 %v4371
        %4405 = vmatprep.subr.mxu0 0.0
        %4406 = vmatpush1.xpose.msra.mxu0 %v4373
        %4407 = vmatprep.subr.mxu0 0.0
        %4408 = vmatpush1.xpose.msra.mxu0 %v4375
        %4409 = vmatprep.subr.mxu0 0.0
        %4410 = vmatpush1.xpose.msra.mxu0 %v4377
        %4411 = vmatprep.subr.mxu0 0.0
        %4412 = vmatpush1.xpose.msra.mxu0 %v4379
        %4413 = vmatprep.subr.mxu0 0.0
        %4414 = vmatpush1.xpose.msra.mxu0 %v4381
        %4415 = vmatprep.subr.mxu0 0.0
        %4416 = vmatpush1.xpose.msra.mxu0 %v4383
        %4417 = vmatprep.subr.mxu0 0.0
        %4418 = vmatpush1.xpose.msra.mxu0 %v4385
        %4419 = vmatprep.subr.mxu0 0.0
        %4420 = vmatpush1.xpose.msra.mxu0 %v4387
        %4421 = vmatprep.subr.mxu0 0.0
        %4422 = vmatpush1.xpose.msra.mxu0 %v4389
        %4423 = vmatprep.subr.mxu0 0.0
        %4424 = vmatpush1.xpose.msra.mxu0 %v4391
        %4425 = vmatprep.subr.mxu0 0.0
        %4426 = vmatpush1.xpose.msra.mxu0 %v4393
        %4427 = vmatprep.subr.mxu0 0.0
        %4428 = vmatpush1.xpose.msra.mxu0 %v4395
        %4429 = vmatprep.subr.mxu0 0.0
        %4430 = vmatpush1.xpose.msra.mxu0 %v4397
        %4431 = vmatprep.subr.mxu0 0.0
        %4432 = vmatpush1.xpose.msra.mxu0 %v4399
        %4433 = vmatprep.subr.mxu0 0.0
        %4434 = vmatpush1.xpose.msra.mxu0 %v4401
        %4435 = vmatprep.subr.mxu0 0.0
        %4436 = vmatpush1.xpose.msra.mxu0 0.0
        %4437 = vmatprep.subr.mxu0 0.0
        %4438 = vmatpush1.xpose.msra.mxu0 0.0
        %4439 = vmatprep.subr.mxu0 0.0
        %4440 = vmatpush1.xpose.msra.mxu0 0.0
        %4441 = vmatprep.subr.mxu0 0.0
        %4442 = vmatpush1.xpose.msra.mxu0 0.0
        %4443 = vmatprep.subr.mxu0 0.0
        %4444 = vmatpush1.xpose.msra.mxu0 0.0
        %4445 = vmatprep.subr.mxu0 0.0
        %4446 = vmatpush1.xpose.msra.mxu0 0.0
        %4447 = vmatprep.subr.mxu0 0.0
        %4448 = vmatpush1.xpose.msra.mxu0 0.0
        %4449 = vmatprep.subr.mxu0 0.0
        %4450 = vmatpush1.xpose.msra.mxu0 0.0
        %4451 = vmatprep.subr.mxu0 0.0
        %4452 = vmatpush1.xpose.msra.mxu0 0.0
        %4453 = vmatprep.subr.mxu0 0.0
        %4454 = vmatpush1.xpose.msra.mxu0 0.0
        %4455 = vmatprep.subr.mxu0 0.0
        %4456 = vmatpush1.xpose.msra.mxu0 0.0
        %4457 = vmatprep.subr.mxu0 0.0
        %4458 = vmatpush1.xpose.msra.mxu0 0.0
        %4459 = vmatprep.subr.mxu0 0.0
        %4460 = vmatpush1.xpose.msra.mxu0 0.0
        %4461 = vmatprep.subr.mxu0 0.0
        %4462 = vmatpush1.xpose.msra.mxu0 0.0
        %4463 = vmatprep.subr.mxu0 0.0
        %4464 = vmatpush1.xpose.msra.mxu0 0.0
        %4465 = vmatprep.subr.mxu0 0.0
        %4466 = vmatpush1.xpose.msra.mxu0 0.0
        %4467 = vmatprep.mubr.f32.mxu0 0.0
        %4468 = vmatmul.mubr.f32.gmra.mrb[0].mxu0 %v4339
        %v4469 = vpop.f32.mrb[0].mxu0
        %v4470 = vadd.f32 %v1611, %v4469
        %v4471 = vpop.f32.mrb[0].mxu0
        %4472 = vmatprep.mubr.f32.mxu0 0.0
        %4473 = vmatmul.mubr.f32.gmra.mrb[0].mxu0 %v4341
        %v4474 = vpop.f32.mrb[0].mxu0
        %v4475 = vadd.f32 %v1612, %v4474
        %v4476 = vpop.f32.mrb[0].mxu0
        %4477 = vmatprep.mubr.f32.mxu0 0.0
        %4478 = vmatmul.mubr.f32.gmra.mrb[0].mxu0 %v4343
        %v4479 = vpop.f32.mrb[0].mxu0
        %v4480 = vadd.f32 %v1613, %v4479
        %v4481 = vpop.f32.mrb[0].mxu0
        %4482 = vmatprep.mubr.f32.mxu0 0.0
        %4483 = vmatmul.mubr.f32.gmra.mrb[0].mxu0 %v4345
        %v4484 = vpop.f32.mrb[0].mxu0
        %v4485 = vadd.f32 %v1614, %v4484
        %v4486 = vpop.f32.mrb[0].mxu0
        %4487 = vmatprep.mubr.f32.mxu0 0.0
        %4488 = vmatmul.mubr.f32.gmra.mrb[0].mxu0 %v4347
        %v4489 = vpop.f32.mrb[0].mxu0
        %v4490 = vadd.f32 %v1615, %v4489
        %v4491 = vpop.f32.mrb[0].mxu0
        %4492 = vmatprep.mubr.f32.mxu0 0.0
        %4493 = vmatmul.mubr.f32.gmra.mrb[0].mxu0 %v4349
        %v4494 = vpop.f32.mrb[0].mxu0
        %v4495 = vadd.f32 %v1616, %v4494
        %v4496 = vpop.f32.mrb[0].mxu0
        %4497 = vmatprep.mubr.f32.mxu0 0.0
        %4498 = vmatmul.mubr.f32.gmra.mrb[0].mxu0 %v4351
        %v4499 = vpop.f32.mrb[0].mxu0
        %v4500 = vadd.f32 %v1617, %v4499
        %v4501 = vpop.f32.mrb[0].mxu0
        %4502 = vmatprep.mubr.f32.mxu0 0.0
        %4503 = vmatmul.mubr.f32.gmra.mrb[0].mxu0 %v4353
        %v4504 = vpop.f32.mrb[0].mxu0
        %v4505 = vadd.f32 %v1618, %v4504
        %v4506 = vpop.f32.mrb[0].mxu0
        %4507 = vmatprep.mubr.f32.mxu0 0.0
        %4508 = vmatmul.mubr.f32.gmra.mrb[0].mxu0 %v4355
        %v4509 = vpop.f32.mrb[0].mxu0
        %v4510 = vadd.f32 %v1619, %v4509
        %v4511 = vpop.f32.mrb[0].mxu0
        %4512 = vmatprep.mubr.f32.mxu0 0.0
        %4513 = vmatmul.mubr.f32.gmra.mrb[0].mxu0 %v4357
        %v4514 = vpop.f32.mrb[0].mxu0
        %v4515 = vadd.f32 %v1620, %v4514
        %v4516 = vpop.f32.mrb[0].mxu0
        %4517 = vmatprep.mubr.f32.mxu0 0.0
        %4518 = vmatmul.mubr.f32.gmra.mrb[0].mxu0 %v4359
        %v4519 = vpop.f32.mrb[0].mxu0
        %v4520 = vadd.f32 %v1621, %v4519
        %v4521 = vpop.f32.mrb[0].mxu0
        %4522 = vmatprep.mubr.f32.mxu0 0.0
        %4523 = vmatmul.mubr.f32.gmra.mrb[0].mxu0 %v4361
        %v4524 = vpop.f32.mrb[0].mxu0
        %v4525 = vadd.f32 %v1622, %v4524
        %v4526 = vpop.f32.mrb[0].mxu0
        %4527 = vmatprep.mubr.f32.mxu0 0.0
        %4528 = vmatmul.mubr.f32.gmra.mrb[0].mxu0 %v4363
        %v4529 = vpop.f32.mrb[0].mxu0
        %v4530 = vadd.f32 %v1623, %v4529
        %v4531 = vpop.f32.mrb[0].mxu0
        %4532 = vmatprep.mubr.f32.mxu0 0.0
        %4533 = vmatmul.mubr.f32.gmra.mrb[0].mxu0 %v4365
        %v4534 = vpop.f32.mrb[0].mxu0
        %v4535 = vadd.f32 %v1624, %v4534
        %v4536 = vpop.f32.mrb[0].mxu0
        %4537 = vmatprep.mubr.f32.mxu0 0.0
        %4538 = vmatmul.mubr.f32.gmra.mrb[0].mxu0 %v4367
        %v4539 = vpop.f32.mrb[0].mxu0
        %v4540 = vadd.f32 %v1625, %v4539
        %v4541 = vpop.f32.mrb[0].mxu0
        %4542 = vmatprep.mubr.f32.mxu0 0.0
        %4543 = vmatmul.mubr.f32.gmra.mrb[0].mxu0 %v4369
        %v4544 = vpop.f32.mrb[0].mxu0
        %v4545 = vadd.f32 %v1626, %v4544
        %v4546 = vpop.f32.mrb[0].mxu0
        %4547 = vdwg.mxu0
        %4548 = vmax.xlane.f32.xlu0 %v4470
        %v4549 = vpop.xlane.xlu0 %4548
        %4550 = vmax.xlane.f32.xlu0 %v4475
        %v4551 = vpop.xlane.xlu0 %4550
        %4552 = vmax.xlane.f32.xlu0 %v4480
        %v4553 = vpop.xlane.xlu0 %4552
        %4554 = vmax.xlane.f32.xlu0 %v4485
        %v4555 = vpop.xlane.xlu0 %4554
        %4556 = vmax.xlane.f32.xlu0 %v4490
        %v4557 = vpop.xlane.xlu0 %4556
        %4558 = vmax.xlane.f32.xlu0 %v4495
        %v4559 = vpop.xlane.xlu0 %4558
        %4560 = vmax.xlane.f32.xlu0 %v4500
        %v4561 = vpop.xlane.xlu0 %4560
        %4562 = vmax.xlane.f32.xlu0 %v4505
        %v4563 = vpop.xlane.xlu0 %4562
        %4564 = vmax.xlane.f32.xlu0 %v4510
        %v4565 = vpop.xlane.xlu0 %4564
        %4566 = vmax.xlane.f32.xlu0 %v4515
        %v4567 = vpop.xlane.xlu0 %4566
        %4568 = vmax.xlane.f32.xlu0 %v4520
        %v4569 = vpop.xlane.xlu0 %4568
        %4570 = vmax.xlane.f32.xlu0 %v4525
        %v4571 = vpop.xlane.xlu0 %4570
        %4572 = vmax.xlane.f32.xlu0 %v4530
        %v4573 = vpop.xlane.xlu0 %4572
        %4574 = vmax.xlane.f32.xlu0 %v4535
        %v4575 = vpop.xlane.xlu0 %4574
        %4576 = vmax.xlane.f32.xlu0 %v4540
        %v4577 = vpop.xlane.xlu0 %4576
        %4578 = vmax.xlane.f32.xlu0 %v4545
        %v4579 = vpop.xlane.xlu0 %4578
        %v4580 = vsub.f32 %v4470, %v4549
        %v4581 = vsub.f32 %v4475, %v4551
        %v4582 = vsub.f32 %v4480, %v4553
        %v4583 = vsub.f32 %v4485, %v4555
        %v4584 = vsub.f32 %v4490, %v4557
        %v4585 = vsub.f32 %v4495, %v4559
        %v4586 = vsub.f32 %v4500, %v4561
        %v4587 = vsub.f32 %v4505, %v4563
        %v4588 = vsub.f32 %v4510, %v4565
        %v4589 = vsub.f32 %v4515, %v4567
        %v4590 = vsub.f32 %v4520, %v4569
        %v4591 = vsub.f32 %v4525, %v4571
        %v4592 = vsub.f32 %v4530, %v4573
        %v4593 = vsub.f32 %v4535, %v4575
        %v4594 = vsub.f32 %v4540, %v4577
        %v4595 = vsub.f32 %v4545, %v4579
        %v4596 = vmul.f32 %v4580, 1.442695
        %v4597 = vpow.pop %v4596
        %v4598 = vmul.f32 %v4581, 1.442695
        %v4599 = vpow.pop %v4598
        %v4600 = vmul.f32 %v4582, 1.442695
        %v4601 = vpow.pop %v4600
        %v4602 = vmul.f32 %v4583, 1.442695
        %v4603 = vpow.pop %v4602
        %v4604 = vmul.f32 %v4584, 1.442695
        %v4605 = vpow.pop %v4604
        %v4606 = vmul.f32 %v4585, 1.442695
        %v4607 = vpow.pop %v4606
        %v4608 = vmul.f32 %v4586, 1.442695
        %v4609 = vpow.pop %v4608
        %v4610 = vmul.f32 %v4587, 1.442695
        %v4611 = vpow.pop %v4610
        %v4612 = vmul.f32 %v4588, 1.442695
        %v4613 = vpow.pop %v4612
        %v4614 = vmul.f32 %v4589, 1.442695
        %v4615 = vpow.pop %v4614
        %v4616 = vmul.f32 %v4590, 1.442695
        %v4617 = vpow.pop %v4616
        %v4618 = vmul.f32 %v4591, 1.442695
        %v4619 = vpow.pop %v4618
        %v4620 = vmul.f32 %v4592, 1.442695
        %v4621 = vpow.pop %v4620
        %v4622 = vmul.f32 %v4593, 1.442695
        %v4623 = vpow.pop %v4622
        %v4624 = vmul.f32 %v4594, 1.442695
        %v4625 = vpow.pop %v4624
        %v4626 = vmul.f32 %v4595, 1.442695
        %v4627 = vpow.pop %v4626
        %4628 = vadd.xlane.f32.xlu0 %v4597
        %v4629 = vpop.xlane.xlu0 %4628
        %4630 = vadd.xlane.f32.xlu0 %v4599
        %v4631 = vpop.xlane.xlu0 %4630
        %4632 = vadd.xlane.f32.xlu0 %v4601
        %v4633 = vpop.xlane.xlu0 %4632
        %4634 = vadd.xlane.f32.xlu0 %v4603
        %v4635 = vpop.xlane.xlu0 %4634
        %4636 = vadd.xlane.f32.xlu0 %v4605
        %v4637 = vpop.xlane.xlu0 %4636
        %4638 = vadd.xlane.f32.xlu0 %v4607
        %v4639 = vpop.xlane.xlu0 %4638
        %4640 = vadd.xlane.f32.xlu0 %v4609
        %v4641 = vpop.xlane.xlu0 %4640
        %4642 = vadd.xlane.f32.xlu0 %v4611
        %v4643 = vpop.xlane.xlu0 %4642
        %4644 = vadd.xlane.f32.xlu0 %v4613
        %v4645 = vpop.xlane.xlu0 %4644
        %4646 = vadd.xlane.f32.xlu0 %v4615
        %v4647 = vpop.xlane.xlu0 %4646
        %4648 = vadd.xlane.f32.xlu0 %v4617
        %v4649 = vpop.xlane.xlu0 %4648
        %4650 = vadd.xlane.f32.xlu0 %v4619
        %v4651 = vpop.xlane.xlu0 %4650
        %4652 = vadd.xlane.f32.xlu0 %v4621
        %v4653 = vpop.xlane.xlu0 %4652
        %4654 = vadd.xlane.f32.xlu0 %v4623
        %v4655 = vpop.xlane.xlu0 %4654
        %4656 = vadd.xlane.f32.xlu0 %v4625
        %v4657 = vpop.xlane.xlu0 %4656
        %4658 = vadd.xlane.f32.xlu0 %v4627
        %v4659 = vpop.xlane.xlu0 %4658
        %v4660 = vrcp.pop %v4629
        %v4661 = vrcp.pop %v4631
        %v4662 = vrcp.pop %v4633
        %v4663 = vrcp.pop %v4635
        %v4664 = vrcp.pop %v4637
        %v4665 = vrcp.pop %v4639
        %v4666 = vrcp.pop %v4641
        %v4667 = vrcp.pop %v4643
        %v4668 = vrcp.pop %v4645
        %v4669 = vrcp.pop %v4647
        %v4670 = vrcp.pop %v4649
        %v4671 = vrcp.pop %v4651
        %v4672 = vrcp.pop %v4653
        %v4673 = vrcp.pop %v4655
        %v4674 = vrcp.pop %v4657
        %v4675 = vrcp.pop %v4659
        %v4676 = vmul.f32 %v4597, %v4660
        %v4677 = vmul.f32 %v4599, %v4661
        %v4678 = vmul.f32 %v4601, %v4662
        %v4679 = vmul.f32 %v4603, %v4663
        %v4680 = vmul.f32 %v4605, %v4664
        %v4681 = vmul.f32 %v4607, %v4665
        %v4682 = vmul.f32 %v4609, %v4666
        %v4683 = vmul.f32 %v4611, %v4667
        %v4684 = vmul.f32 %v4613, %v4668
        %v4685 = vmul.f32 %v4615, %v4669
        %v4686 = vmul.f32 %v4617, %v4670
        %v4687 = vmul.f32 %v4619, %v4671
        %v4688 = vmul.f32 %v4621, %v4672
        %v4689 = vmul.f32 %v4623, %v4673
        %v4690 = vmul.f32 %v4625, %v4674
        %v4691 = vmul.f32 %v4627, %v4675
        %v4692 = vpack.c.bf16 %v4677, %v4676
        %v4693 = vpack.c.bf16 %v4679, %v4678
        %v4694 = vpack.c.bf16 %v4681, %v4680
        %v4695 = vpack.c.bf16 %v4683, %v4682
        %v4696 = vpack.c.bf16 %v4685, %v4684
        %v4697 = vpack.c.bf16 %v4687, %v4686
        %v4698 = vpack.c.bf16 %v4689, %v4688
        %v4699 = vpack.c.bf16 %v4691, %v4690
        %v4708 = vunpack.c.l.b16 %v4692
        %v4709 = vunpack.c.h.b16 %v4692
        %v4710 = vunpack.c.l.b16 %v4693
        %v4711 = vunpack.c.h.b16 %v4693
        %v4712 = vunpack.c.l.b16 %v4694
        %v4713 = vunpack.c.h.b16 %v4694
        %v4714 = vunpack.c.l.b16 %v4695
        %v4715 = vunpack.c.h.b16 %v4695
        %v4716 = vunpack.c.l.b16 %v4696
        %v4717 = vunpack.c.h.b16 %v4696
        %v4718 = vunpack.c.l.b16 %v4697
        %v4719 = vunpack.c.h.b16 %v4697
        %v4720 = vunpack.c.l.b16 %v4698
        %v4721 = vunpack.c.h.b16 %v4698
        %v4722 = vunpack.c.l.b16 %v4699
        %v4723 = vunpack.c.h.b16 %v4699
        %v4724 = vpack.c.b16 %v4708, %v4708
        %v4725 = vpack.c.b16 %v4709, %v4709
        %v4726 = vpack.c.b16 %v4710, %v4710
        %v4727 = vpack.c.b16 %v4711, %v4711
        %v4728 = vpack.c.b16 %v4712, %v4712
        %v4729 = vpack.c.b16 %v4713, %v4713
        %v4730 = vpack.c.b16 %v4714, %v4714
        %v4731 = vpack.c.b16 %v4715, %v4715
        %v4732 = vpack.c.b16 %v4716, %v4716
        %v4733 = vpack.c.b16 %v4717, %v4717
        %v4734 = vpack.c.b16 %v4718, %v4718
        %v4735 = vpack.c.b16 %v4719, %v4719
        %v4736 = vpack.c.b16 %v4720, %v4720
        %v4737 = vpack.c.b16 %v4721, %v4721
        %v4738 = vpack.c.b16 %v4722, %v4722
        %v4739 = vpack.c.b16 %v4723, %v4723
        %s4756 = scalar_lea.vmem %s547, 192 [#allocation17]
        %4757 = vst [vmem:[%s4756] sm:$0xf] %v4724
        %4758 = vst [vmem:[%s4756 + $0x4] sm:$0xf] %v4725
        %4759 = vst [vmem:[%s4756 + $0x8] sm:$0xf] %v4726
        %4760 = vst [vmem:[%s4756 + $0xc] sm:$0xf] %v4727
        %4761 = vst [vmem:[%s4756 + $0x10] sm:$0xf] %v4728
        %4762 = vst [vmem:[%s4756 + $0x14] sm:$0xf] %v4729
        %4763 = vst [vmem:[%s4756 + $0x18] sm:$0xf] %v4730
        %4764 = vst [vmem:[%s4756 + $0x1c] sm:$0xf] %v4731
        %4765 = vst [vmem:[%s4756 + $0x20] sm:$0xf] %v4732
        %4766 = vst [vmem:[%s4756 + $0x24] sm:$0xf] %v4733
        %4767 = vst [vmem:[%s4756 + $0x28] sm:$0xf] %v4734
        %4768 = vst [vmem:[%s4756 + $0x2c] sm:$0xf] %v4735
        %4769 = vst [vmem:[%s4756 + $0x30] sm:$0xf] %v4736
        %4770 = vst [vmem:[%s4756 + $0x34] sm:$0xf] %v4737
        %4771 = vst [vmem:[%s4756 + $0x38] sm:$0xf] %v4738
        %4772 = vst [vmem:[%s4756 + $0x3c] sm:$0xf] %v4739
        %4773 = vrot.lane.b32.xlu0 %v1643, 32
        %v4774 = vpop.permute.xlu0 %4773
        %4775 = vrot.lane.b32.xlu0 %v1644, 32
        %v4776 = vpop.permute.xlu0 %4775
        %4777 = vrot.lane.b32.xlu0 %v1645, 32
        %v4778 = vpop.permute.xlu0 %4777
        %4779 = vrot.lane.b32.xlu0 %v1646, 32
        %v4780 = vpop.permute.xlu0 %4779
        %4781 = vrot.lane.b32.xlu0 %v1647, 32
        %v4782 = vpop.permute.xlu0 %4781
        %4783 = vrot.lane.b32.xlu0 %v1648, 32
        %v4784 = vpop.permute.xlu0 %4783
        %4785 = vrot.lane.b32.xlu0 %v1649, 32
        %v4786 = vpop.permute.xlu0 %4785
        %4787 = vrot.lane.b32.xlu0 %v1650, 32
        %v4788 = vpop.permute.xlu0 %4787
        %4789 = vrot.lane.b32.xlu0 %v1651, 32
        %v4790 = vpop.permute.xlu0 %4789
        %4791 = vrot.lane.b32.xlu0 %v1652, 32
        %v4792 = vpop.permute.xlu0 %4791
        %4793 = vrot.lane.b32.xlu0 %v1653, 32
        %v4794 = vpop.permute.xlu0 %4793
        %4795 = vrot.lane.b32.xlu0 %v1654, 32
        %v4796 = vpop.permute.xlu0 %4795
        %4797 = vrot.lane.b32.xlu0 %v1655, 32
        %v4798 = vpop.permute.xlu0 %4797
        %4799 = vrot.lane.b32.xlu0 %v1656, 32
        %v4800 = vpop.permute.xlu0 %4799
        %4801 = vrot.lane.b32.xlu0 %v1657, 32
        %v4802 = vpop.permute.xlu0 %4801
        %4803 = vrot.lane.b32.xlu0 %v1658, 32
        %v4804 = vpop.permute.xlu0 %4803
        %4821 = vmatprep.subr.mxu0 0.0
        %4822 = vmatpush1.msra.mxu0 %v4774
        %4823 = vmatprep.subr.mxu0 0.0
        %4824 = vmatpush1.msra.mxu0 %v4776
        %4825 = vmatprep.subr.mxu0 0.0
        %4826 = vmatpush1.msra.mxu0 %v4778
        %4827 = vmatprep.subr.mxu0 0.0
        %4828 = vmatpush1.msra.mxu0 %v4780
        %4829 = vmatprep.subr.mxu0 0.0
        %4830 = vmatpush1.msra.mxu0 %v4782
        %4831 = vmatprep.subr.mxu0 0.0
        %4832 = vmatpush1.msra.mxu0 %v4784
        %4833 = vmatprep.subr.mxu0 0.0
        %4834 = vmatpush1.msra.mxu0 %v4786
        %4835 = vmatprep.subr.mxu0 0.0
        %4836 = vmatpush1.msra.mxu0 %v4788
        %4837 = vmatprep.subr.mxu0 0.0
        %4838 = vmatpush1.msra.mxu0 %v4790
        %4839 = vmatprep.subr.mxu0 0.0
        %4840 = vmatpush1.msra.mxu0 %v4792
        %4841 = vmatprep.subr.mxu0 0.0
        %4842 = vmatpush1.msra.mxu0 %v4794
        %4843 = vmatprep.subr.mxu0 0.0
        %4844 = vmatpush1.msra.mxu0 %v4796
        %4845 = vmatprep.subr.mxu0 0.0
        %4846 = vmatpush1.msra.mxu0 %v4798
        %4847 = vmatprep.subr.mxu0 0.0
        %4848 = vmatpush1.msra.mxu0 %v4800
        %4849 = vmatprep.subr.mxu0 0.0
        %4850 = vmatpush1.msra.mxu0 %v4802
        %4851 = vmatprep.subr.mxu0 0.0
        %4852 = vmatpush1.msra.mxu0 %v4804
        %4853 = vmatprep.subr.mxu0 0.0
        %4854 = vmatpush1.msra.mxu0 0.0
        %4855 = vmatprep.subr.mxu0 0.0
        %4856 = vmatpush1.msra.mxu0 0.0
        %4857 = vmatprep.subr.mxu0 0.0
        %4858 = vmatpush1.msra.mxu0 0.0
        %4859 = vmatprep.subr.mxu0 0.0
        %4860 = vmatpush1.msra.mxu0 0.0
        %4861 = vmatprep.subr.mxu0 0.0
        %4862 = vmatpush1.msra.mxu0 0.0
        %4863 = vmatprep.subr.mxu0 0.0
        %4864 = vmatpush1.msra.mxu0 0.0
        %4865 = vmatprep.subr.mxu0 0.0
        %4866 = vmatpush1.msra.mxu0 0.0
        %4867 = vmatprep.subr.mxu0 0.0
        %4868 = vmatpush1.msra.mxu0 0.0
        %4869 = vmatprep.subr.mxu0 0.0
        %4870 = vmatpush1.msra.mxu0 0.0
        %4871 = vmatprep.subr.mxu0 0.0
        %4872 = vmatpush1.msra.mxu0 0.0
        %4873 = vmatprep.subr.mxu0 0.0
        %4874 = vmatpush1.msra.mxu0 0.0
        %4875 = vmatprep.subr.mxu0 0.0
        %4876 = vmatpush1.msra.mxu0 0.0
        %4877 = vmatprep.subr.mxu0 0.0
        %4878 = vmatpush1.msra.mxu0 0.0
        %4879 = vmatprep.subr.mxu0 0.0
        %4880 = vmatpush1.msra.mxu0 0.0
        %4881 = vmatprep.subr.mxu0 0.0
        %4882 = vmatpush1.msra.mxu0 0.0
        %4883 = vmatprep.subr.mxu0 0.0
        %4884 = vmatpush1.msra.mxu0 0.0
        %4885 = vmatprep.mubr.f32.mxu0 0.0
        %4886 = vmatmul.mubr.f32.gmra.mrb[0].mxu0 %v4676
        %v4887 = vpop.f32.mrb[0].mxu0
        %v4888 = vadd.f32 0.0, %v4887
        %v4889 = vpop.f32.mrb[0].mxu0
        %4890 = vmatprep.mubr.f32.mxu0 0.0
        %4891 = vmatmul.mubr.f32.gmra.mrb[0].mxu0 %v4677
        %v4892 = vpop.f32.mrb[0].mxu0
        %v4893 = vadd.f32 0.0, %v4892
        %v4894 = vpop.f32.mrb[0].mxu0
        %4895 = vmatprep.mubr.f32.mxu0 0.0
        %4896 = vmatmul.mubr.f32.gmra.mrb[0].mxu0 %v4678
        %v4897 = vpop.f32.mrb[0].mxu0
        %v4898 = vadd.f32 0.0, %v4897
        %v4899 = vpop.f32.mrb[0].mxu0
        %4900 = vmatprep.mubr.f32.mxu0 0.0
        %4901 = vmatmul.mubr.f32.gmra.mrb[0].mxu0 %v4679
        %v4902 = vpop.f32.mrb[0].mxu0
        %v4903 = vadd.f32 0.0, %v4902
        %v4904 = vpop.f32.mrb[0].mxu0
        %4905 = vmatprep.mubr.f32.mxu0 0.0
        %4906 = vmatmul.mubr.f32.gmra.mrb[0].mxu0 %v4680
        %v4907 = vpop.f32.mrb[0].mxu0
        %v4908 = vadd.f32 0.0, %v4907
        %v4909 = vpop.f32.mrb[0].mxu0
        %4910 = vmatprep.mubr.f32.mxu0 0.0
        %4911 = vmatmul.mubr.f32.gmra.mrb[0].mxu0 %v4681
        %v4912 = vpop.f32.mrb[0].mxu0
        %v4913 = vadd.f32 0.0, %v4912
        %v4914 = vpop.f32.mrb[0].mxu0
        %4915 = vmatprep.mubr.f32.mxu0 0.0
        %4916 = vmatmul.mubr.f32.gmra.mrb[0].mxu0 %v4682
        %v4917 = vpop.f32.mrb[0].mxu0
        %v4918 = vadd.f32 0.0, %v4917
        %v4919 = vpop.f32.mrb[0].mxu0
        %4920 = vmatprep.mubr.f32.mxu0 0.0
        %4921 = vmatmul.mubr.f32.gmra.mrb[0].mxu0 %v4683
        %v4922 = vpop.f32.mrb[0].mxu0
        %v4923 = vadd.f32 0.0, %v4922
        %v4924 = vpop.f32.mrb[0].mxu0
        %4925 = vmatprep.mubr.f32.mxu0 0.0
        %4926 = vmatmul.mubr.f32.gmra.mrb[0].mxu0 %v4684
        %v4927 = vpop.f32.mrb[0].mxu0
        %v4928 = vadd.f32 0.0, %v4927
        %v4929 = vpop.f32.mrb[0].mxu0
        %4930 = vmatprep.mubr.f32.mxu0 0.0
        %4931 = vmatmul.mubr.f32.gmra.mrb[0].mxu0 %v4685
        %v4932 = vpop.f32.mrb[0].mxu0
        %v4933 = vadd.f32 0.0, %v4932
        %v4934 = vpop.f32.mrb[0].mxu0
        %4935 = vmatprep.mubr.f32.mxu0 0.0
        %4936 = vmatmul.mubr.f32.gmra.mrb[0].mxu0 %v4686
        %v4937 = vpop.f32.mrb[0].mxu0
        %v4938 = vadd.f32 0.0, %v4937
        %v4939 = vpop.f32.mrb[0].mxu0
        %4940 = vmatprep.mubr.f32.mxu0 0.0
        %4941 = vmatmul.mubr.f32.gmra.mrb[0].mxu0 %v4687
        %v4942 = vpop.f32.mrb[0].mxu0
        %v4943 = vadd.f32 0.0, %v4942
        %v4944 = vpop.f32.mrb[0].mxu0
        %4945 = vmatprep.mubr.f32.mxu0 0.0
        %4946 = vmatmul.mubr.f32.gmra.mrb[0].mxu0 %v4688
        %v4947 = vpop.f32.mrb[0].mxu0
        %v4948 = vadd.f32 0.0, %v4947
        %v4949 = vpop.f32.mrb[0].mxu0
        %4950 = vmatprep.mubr.f32.mxu0 0.0
        %4951 = vmatmul.mubr.f32.gmra.mrb[0].mxu0 %v4689
        %v4952 = vpop.f32.mrb[0].mxu0
        %v4953 = vadd.f32 0.0, %v4952
        %v4954 = vpop.f32.mrb[0].mxu0
        %4955 = vmatprep.mubr.f32.mxu0 0.0
        %4956 = vmatmul.mubr.f32.gmra.mrb[0].mxu0 %v4690
        %v4957 = vpop.f32.mrb[0].mxu0
        %v4958 = vadd.f32 0.0, %v4957
        %v4959 = vpop.f32.mrb[0].mxu0
        %4960 = vmatprep.mubr.f32.mxu0 0.0
        %4961 = vmatmul.mubr.f32.gmra.mrb[0].mxu0 %v4691
        %v4962 = vpop.f32.mrb[0].mxu0
        %v4963 = vadd.f32 0.0, %v4962
        %v4964 = vpop.f32.mrb[0].mxu0
        %4965 = vdwg.mxu0
        %v4966 = vld [vmem:[#allocation12 + $0x60] sm:$0xff]
        %v4967 = vld [vmem:[#allocation12 + $0x68] sm:$0xff]
        %v4968 = vld [vmem:[#allocation12 + $0x70] sm:$0xff]
        %v4969 = vld [vmem:[#allocation12 + $0x78] sm:$0xff]
        %v4971 = vsel %vm1659, %v4888, 0
        %v4974 = vsel %vm1659, %v4893, 0
        %v4977 = vsel %vm1659, %v4898, 0
        %v4980 = vsel %vm1659, %v4903, 0
        %v4983 = vsel %vm1659, %v4908, 0
        %v4986 = vsel %vm1659, %v4913, 0
        %v4989 = vsel %vm1659, %v4918, 0
        %v4992 = vsel %vm1659, %v4923, 0
        %v4995 = vsel %vm1659, %v4928, 0
        %v4998 = vsel %vm1659, %v4933, 0
        %v5001 = vsel %vm1659, %v4938, 0
        %v5004 = vsel %vm1659, %v4943, 0
        %v5007 = vsel %vm1659, %v4948, 0
        %v5010 = vsel %vm1659, %v4953, 0
        %v5013 = vsel %vm1659, %v4958, 0
        %v5016 = vsel %vm1659, %v4963, 0
        %5018 = vmatprep.subr.mxu0 0.0
        %5019 = vmatpush1.msra.mxu0 %v4966
        %5020 = vmatprep.subr.mxu0 0.0
        %5021 = vmatpush1.msra.mxu0 %v4967
        %5022 = vmatprep.subr.mxu0 0.0
        %5023 = vmatpush1.msra.mxu0 %v4968
        %5024 = vmatprep.subr.mxu0 0.0
        %5025 = vmatpush1.msra.mxu0 %v4969
        %5026 = vmatprep.subr.mxu0 0.0
        %5027 = vmatpush1.msra.mxu0 0.0
        %5028 = vmatprep.subr.mxu0 0.0
        %5029 = vmatpush1.msra.mxu0 0.0
        %5030 = vmatprep.subr.mxu0 0.0
        %5031 = vmatpush1.msra.mxu0 0.0
        %5032 = vmatprep.subr.mxu0 0.0
        %5033 = vmatpush1.msra.mxu0 0.0
        %5034 = vmatprep.subr.mxu0 0.0
        %5035 = vmatpush1.msra.mxu0 0.0
        %5036 = vmatprep.subr.mxu0 0.0
        %5037 = vmatpush1.msra.mxu0 0.0
        %5038 = vmatprep.subr.mxu0 0.0
        %5039 = vmatpush1.msra.mxu0 0.0
        %5040 = vmatprep.subr.mxu0 0.0
        %5041 = vmatpush1.msra.mxu0 0.0
        %5042 = vmatprep.subr.mxu0 0.0
        %5043 = vmatpush1.msra.mxu0 0.0
        %5044 = vmatprep.subr.mxu0 0.0
        %5045 = vmatpush1.msra.mxu0 0.0
        %5046 = vmatprep.subr.mxu0 0.0
        %5047 = vmatpush1.msra.mxu0 0.0
        %5048 = vmatprep.subr.mxu0 0.0
        %5049 = vmatpush1.msra.mxu0 0.0
        %5050 = vmatprep.subr.mxu0 0.0
        %5051 = vmatpush1.msra.mxu0 0.0
        %5052 = vmatprep.subr.mxu0 0.0
        %5053 = vmatpush1.msra.mxu0 0.0
        %5054 = vmatprep.subr.mxu0 0.0
        %5055 = vmatpush1.msra.mxu0 0.0
        %5056 = vmatprep.subr.mxu0 0.0
        %5057 = vmatpush1.msra.mxu0 0.0
        %5058 = vmatprep.subr.mxu0 0.0
        %5059 = vmatpush1.msra.mxu0 0.0
        %5060 = vmatprep.subr.mxu0 0.0
        %5061 = vmatpush1.msra.mxu0 0.0
        %5062 = vmatprep.subr.mxu0 0.0
        %5063 = vmatpush1.msra.mxu0 0.0
        %5064 = vmatprep.subr.mxu0 0.0
        %5065 = vmatpush1.msra.mxu0 0.0
        %5066 = vmatprep.subr.mxu0 0.0
        %5067 = vmatpush1.msra.mxu0 0.0
        %5068 = vmatprep.subr.mxu0 0.0
        %5069 = vmatpush1.msra.mxu0 0.0
        %5070 = vmatprep.subr.mxu0 0.0
        %5071 = vmatpush1.msra.mxu0 0.0
        %5072 = vmatprep.subr.mxu0 0.0
        %5073 = vmatpush1.msra.mxu0 0.0
        %5074 = vmatprep.subr.mxu0 0.0
        %5075 = vmatpush1.msra.mxu0 0.0
        %5076 = vmatprep.subr.mxu0 0.0
        %5077 = vmatpush1.msra.mxu0 0.0
        %5078 = vmatprep.subr.mxu0 0.0
        %5079 = vmatpush1.msra.mxu0 0.0
        %5080 = vmatprep.subr.mxu0 0.0
        %5081 = vmatpush1.msra.mxu0 0.0
        %5082 = vmatprep.mubr.f32.mxu0 0.0
        %5083 = vmatmul.mubr.f32.gmra.mrb[0].mxu0 %v4971
        %v5084 = vpop.f32.mrb[0].mxu0
        %v5085 = vadd.f32 0.0, %v5084
        %v5086 = vpop.f32.mrb[0].mxu0
        %5087 = vmatprep.mubr.f32.mxu0 0.0
        %5088 = vmatmul.mubr.f32.gmra.mrb[0].mxu0 %v4974
        %v5089 = vpop.f32.mrb[0].mxu0
        %v5090 = vadd.f32 0.0, %v5089
        %v5091 = vpop.f32.mrb[0].mxu0
        %5092 = vmatprep.mubr.f32.mxu0 0.0
        %5093 = vmatmul.mubr.f32.gmra.mrb[0].mxu0 %v4977
        %v5094 = vpop.f32.mrb[0].mxu0
        %v5095 = vadd.f32 0.0, %v5094
        %v5096 = vpop.f32.mrb[0].mxu0
        %5097 = vmatprep.mubr.f32.mxu0 0.0
        %5098 = vmatmul.mubr.f32.gmra.mrb[0].mxu0 %v4980
        %v5099 = vpop.f32.mrb[0].mxu0
        %v5100 = vadd.f32 0.0, %v5099
        %v5101 = vpop.f32.mrb[0].mxu0
        %5102 = vmatprep.mubr.f32.mxu0 0.0
        %5103 = vmatmul.mubr.f32.gmra.mrb[0].mxu0 %v4983
        %v5104 = vpop.f32.mrb[0].mxu0
        %v5105 = vadd.f32 0.0, %v5104
        %v5106 = vpop.f32.mrb[0].mxu0
        %5107 = vmatprep.mubr.f32.mxu0 0.0
        %5108 = vmatmul.mubr.f32.gmra.mrb[0].mxu0 %v4986
        %v5109 = vpop.f32.mrb[0].mxu0
        %v5110 = vadd.f32 0.0, %v5109
        %v5111 = vpop.f32.mrb[0].mxu0
        %5112 = vmatprep.mubr.f32.mxu0 0.0
        %5113 = vmatmul.mubr.f32.gmra.mrb[0].mxu0 %v4989
        %v5114 = vpop.f32.mrb[0].mxu0
        %v5115 = vadd.f32 0.0, %v5114
        %v5116 = vpop.f32.mrb[0].mxu0
        %5117 = vmatprep.mubr.f32.mxu0 0.0
        %5118 = vmatmul.mubr.f32.gmra.mrb[0].mxu0 %v4992
        %v5119 = vpop.f32.mrb[0].mxu0
        %v5120 = vadd.f32 0.0, %v5119
        %v5121 = vpop.f32.mrb[0].mxu0
        %5122 = vmatprep.mubr.f32.mxu0 0.0
        %5123 = vmatmul.mubr.f32.gmra.mrb[0].mxu0 %v4995
        %v5124 = vpop.f32.mrb[0].mxu0
        %v5125 = vadd.f32 0.0, %v5124
        %v5126 = vpop.f32.mrb[0].mxu0
        %5127 = vmatprep.mubr.f32.mxu0 0.0
        %5128 = vmatmul.mubr.f32.gmra.mrb[0].mxu0 %v4998
        %v5129 = vpop.f32.mrb[0].mxu0
        %v5130 = vadd.f32 0.0, %v5129
        %v5131 = vpop.f32.mrb[0].mxu0
        %5132 = vmatprep.mubr.f32.mxu0 0.0
        %5133 = vmatmul.mubr.f32.gmra.mrb[0].mxu0 %v5001
        %v5134 = vpop.f32.mrb[0].mxu0
        %v5135 = vadd.f32 0.0, %v5134
        %v5136 = vpop.f32.mrb[0].mxu0
        %5137 = vmatprep.mubr.f32.mxu0 0.0
        %5138 = vmatmul.mubr.f32.gmra.mrb[0].mxu0 %v5004
        %v5139 = vpop.f32.mrb[0].mxu0
        %v5140 = vadd.f32 0.0, %v5139
        %v5141 = vpop.f32.mrb[0].mxu0
        %5142 = vmatprep.mubr.f32.mxu0 0.0
        %5143 = vmatmul.mubr.f32.gmra.mrb[0].mxu0 %v5007
        %v5144 = vpop.f32.mrb[0].mxu0
        %v5145 = vadd.f32 0.0, %v5144
        %v5146 = vpop.f32.mrb[0].mxu0
        %5147 = vmatprep.mubr.f32.mxu0 0.0
        %5148 = vmatmul.mubr.f32.gmra.mrb[0].mxu0 %v5010
        %v5149 = vpop.f32.mrb[0].mxu0
        %v5150 = vadd.f32 0.0, %v5149
        %v5151 = vpop.f32.mrb[0].mxu0
        %5152 = vmatprep.mubr.f32.mxu0 0.0
        %5153 = vmatmul.mubr.f32.gmra.mrb[0].mxu0 %v5013
        %v5154 = vpop.f32.mrb[0].mxu0
        %v5155 = vadd.f32 0.0, %v5154
        %v5156 = vpop.f32.mrb[0].mxu0
        %5157 = vmatprep.mubr.f32.mxu0 0.0
        %5158 = vmatmul.mubr.f32.gmra.mrb[0].mxu0 %v5016
        %v5159 = vpop.f32.mrb[0].mxu0
        %v5160 = vadd.f32 0.0, %v5159
        %v5161 = vpop.f32.mrb[0].mxu0
        %5162 = vdwg.mxu0
        %v5163 = vadd.f32 %v4259, %v5085
        %v5164 = vadd.f32 %v4260, %v5090
        %v5165 = vadd.f32 %v4261, %v5095
        %v5166 = vadd.f32 %v4262, %v5100
        %v5167 = vadd.f32 %v4263, %v5105
        %v5168 = vadd.f32 %v4264, %v5110
        %v5169 = vadd.f32 %v4265, %v5115
        %v5170 = vadd.f32 %v4266, %v5120
        %v5171 = vadd.f32 %v4267, %v5125
        %v5172 = vadd.f32 %v4268, %v5130
        %v5173 = vadd.f32 %v4269, %v5135
        %v5174 = vadd.f32 %v4270, %v5140
        %v5175 = vadd.f32 %v4271, %v5145
        %v5176 = vadd.f32 %v4272, %v5150
        %v5177 = vadd.f32 %v4273, %v5155
        %v5178 = vadd.f32 %v4274, %v5160
        %v5179 = vadd.f32 %v5163, %v1147
        %v5180 = vadd.f32 %v5164, %v1148
        %v5181 = vadd.f32 %v5165, %v1149
        %v5182 = vadd.f32 %v5166, %v1150
        %v5183 = vadd.f32 %v5167, %v1151
        %v5184 = vadd.f32 %v5168, %v1152
        %v5185 = vadd.f32 %v5169, %v1153
        %v5186 = vadd.f32 %v5170, %v1154
        %v5187 = vadd.f32 %v5171, %v1155
        %v5188 = vadd.f32 %v5172, %v1156
        %v5189 = vadd.f32 %v5173, %v1157
        %v5190 = vadd.f32 %v5174, %v1158
        %v5191 = vadd.f32 %v5175, %v1159
        %v5192 = vadd.f32 %v5176, %v1160
        %v5193 = vadd.f32 %v5177, %v1161
        %v5194 = vadd.f32 %v5178, %v1162
        %v5195 = vld [vmem:[%s3 + $0x4] sm:$0x1]
        %v5196 = vld [vmem:[%s3 + $0x5] sm:$0x1]
        %5197 = vadd.xlane.f32.xlu0 %v5179
        %v5198 = vpop.xlane.xlu0 %5197
        %5199 = vadd.xlane.f32.xlu0 %v5180
        %v5200 = vpop.xlane.xlu0 %5199
        %5201 = vadd.xlane.f32.xlu0 %v5181
        %v5202 = vpop.xlane.xlu0 %5201
        %5203 = vadd.xlane.f32.xlu0 %v5182
        %v5204 = vpop.xlane.xlu0 %5203
        %5205 = vadd.xlane.f32.xlu0 %v5183
        %v5206 = vpop.xlane.xlu0 %5205
        %5207 = vadd.xlane.f32.xlu0 %v5184
        %v5208 = vpop.xlane.xlu0 %5207
        %5209 = vadd.xlane.f32.xlu0 %v5185
        %v5210 = vpop.xlane.xlu0 %5209
        %5211 = vadd.xlane.f32.xlu0 %v5186
        %v5212 = vpop.xlane.xlu0 %5211
        %5213 = vadd.xlane.f32.xlu0 %v5187
        %v5214 = vpop.xlane.xlu0 %5213
        %5215 = vadd.xlane.f32.xlu0 %v5188
        %v5216 = vpop.xlane.xlu0 %5215
        %5217 = vadd.xlane.f32.xlu0 %v5189
        %v5218 = vpop.xlane.xlu0 %5217
        %5219 = vadd.xlane.f32.xlu0 %v5190
        %v5220 = vpop.xlane.xlu0 %5219
        %5221 = vadd.xlane.f32.xlu0 %v5191
        %v5222 = vpop.xlane.xlu0 %5221
        %5223 = vadd.xlane.f32.xlu0 %v5192
        %v5224 = vpop.xlane.xlu0 %5223
        %5225 = vadd.xlane.f32.xlu0 %v5193
        %v5226 = vpop.xlane.xlu0 %5225
        %5227 = vadd.xlane.f32.xlu0 %v5194
        %v5228 = vpop.xlane.xlu0 %5227
        %v5229 = vmul.f32 %v5198, %v1197
        %v5230 = vmul.f32 %v5200, %v1197
        %v5231 = vmul.f32 %v5202, %v1197
        %v5232 = vmul.f32 %v5204, %v1197
        %v5233 = vmul.f32 %v5206, %v1197
        %v5234 = vmul.f32 %v5208, %v1197
        %v5235 = vmul.f32 %v5210, %v1197
        %v5236 = vmul.f32 %v5212, %v1197
        %v5237 = vmul.f32 %v5214, %v1197
        %v5238 = vmul.f32 %v5216, %v1197
        %v5239 = vmul.f32 %v5218, %v1197
        %v5240 = vmul.f32 %v5220, %v1197
        %v5241 = vmul.f32 %v5222, %v1197
        %v5242 = vmul.f32 %v5224, %v1197
        %v5243 = vmul.f32 %v5226, %v1197
        %v5244 = vmul.f32 %v5228, %v1197
        %v5245 = vsub.f32 %v5179, %v5229
        %v5246 = vsub.f32 %v5180, %v5230
        %v5247 = vsub.f32 %v5181, %v5231
        %v5248 = vsub.f32 %v5182, %v5232
        %v5249 = vsub.f32 %v5183, %v5233
        %v5250 = vsub.f32 %v5184, %v5234
        %v5251 = vsub.f32 %v5185, %v5235
        %v5252 = vsub.f32 %v5186, %v5236
        %v5253 = vsub.f32 %v5187, %v5237
        %v5254 = vsub.f32 %v5188, %v5238
        %v5255 = vsub.f32 %v5189, %v5239
        %v5256 = vsub.f32 %v5190, %v5240
        %v5257 = vsub.f32 %v5191, %v5241
        %v5258 = vsub.f32 %v5192, %v5242
        %v5259 = vsub.f32 %v5193, %v5243
        %v5260 = vsub.f32 %v5194, %v5244
        %v5261 = vmul.f32 %v5245, %v5245
        %v5262 = vmul.f32 %v5246, %v5246
        %v5263 = vmul.f32 %v5247, %v5247
        %v5264 = vmul.f32 %v5248, %v5248
        %v5265 = vmul.f32 %v5249, %v5249
        %v5266 = vmul.f32 %v5250, %v5250
        %v5267 = vmul.f32 %v5251, %v5251
        %v5268 = vmul.f32 %v5252, %v5252
        %v5269 = vmul.f32 %v5253, %v5253
        %v5270 = vmul.f32 %v5254, %v5254
        %v5271 = vmul.f32 %v5255, %v5255
        %v5272 = vmul.f32 %v5256, %v5256
        %v5273 = vmul.f32 %v5257, %v5257
        %v5274 = vmul.f32 %v5258, %v5258
        %v5275 = vmul.f32 %v5259, %v5259
        %v5276 = vmul.f32 %v5260, %v5260
        %5277 = vadd.xlane.f32.xlu0 %v5261
        %v5278 = vpop.xlane.xlu0 %5277
        %5279 = vadd.xlane.f32.xlu0 %v5262
        %v5280 = vpop.xlane.xlu0 %5279
        %5281 = vadd.xlane.f32.xlu0 %v5263
        %v5282 = vpop.xlane.xlu0 %5281
        %5283 = vadd.xlane.f32.xlu0 %v5264
        %v5284 = vpop.xlane.xlu0 %5283
        %5285 = vadd.xlane.f32.xlu0 %v5265
        %v5286 = vpop.xlane.xlu0 %5285
        %5287 = vadd.xlane.f32.xlu0 %v5266
        %v5288 = vpop.xlane.xlu0 %5287
        %5289 = vadd.xlane.f32.xlu0 %v5267
        %v5290 = vpop.xlane.xlu0 %5289
        %5291 = vadd.xlane.f32.xlu0 %v5268
        %v5292 = vpop.xlane.xlu0 %5291
        %5293 = vadd.xlane.f32.xlu0 %v5269
        %v5294 = vpop.xlane.xlu0 %5293
        %5295 = vadd.xlane.f32.xlu0 %v5270
        %v5296 = vpop.xlane.xlu0 %5295
        %5297 = vadd.xlane.f32.xlu0 %v5271
        %v5298 = vpop.xlane.xlu0 %5297
        %5299 = vadd.xlane.f32.xlu0 %v5272
        %v5300 = vpop.xlane.xlu0 %5299
        %5301 = vadd.xlane.f32.xlu0 %v5273
        %v5302 = vpop.xlane.xlu0 %5301
        %5303 = vadd.xlane.f32.xlu0 %v5274
        %v5304 = vpop.xlane.xlu0 %5303
        %5305 = vadd.xlane.f32.xlu0 %v5275
        %v5306 = vpop.xlane.xlu0 %5305
        %5307 = vadd.xlane.f32.xlu0 %v5276
        %v5308 = vpop.xlane.xlu0 %5307
        %v5309 = vmul.f32 %v5278, %v1197
        %v5310 = vmul.f32 %v5280, %v1197
        %v5311 = vmul.f32 %v5282, %v1197
        %v5312 = vmul.f32 %v5284, %v1197
        %v5313 = vmul.f32 %v5286, %v1197
        %v5314 = vmul.f32 %v5288, %v1197
        %v5315 = vmul.f32 %v5290, %v1197
        %v5316 = vmul.f32 %v5292, %v1197
        %v5317 = vmul.f32 %v5294, %v1197
        %v5318 = vmul.f32 %v5296, %v1197
        %v5319 = vmul.f32 %v5298, %v1197
        %v5320 = vmul.f32 %v5300, %v1197
        %v5321 = vmul.f32 %v5302, %v1197
        %v5322 = vmul.f32 %v5304, %v1197
        %v5323 = vmul.f32 %v5306, %v1197
        %v5324 = vmul.f32 %v5308, %v1197
        %v5325 = vadd.f32 %v5309, 1e-05
        %v5326 = vadd.f32 %v5310, 1e-05
        %v5327 = vadd.f32 %v5311, 1e-05
        %v5328 = vadd.f32 %v5312, 1e-05
        %v5329 = vadd.f32 %v5313, 1e-05
        %v5330 = vadd.f32 %v5314, 1e-05
        %v5331 = vadd.f32 %v5315, 1e-05
        %v5332 = vadd.f32 %v5316, 1e-05
        %v5333 = vadd.f32 %v5317, 1e-05
        %v5334 = vadd.f32 %v5318, 1e-05
        %v5335 = vadd.f32 %v5319, 1e-05
        %v5336 = vadd.f32 %v5320, 1e-05
        %v5337 = vadd.f32 %v5321, 1e-05
        %v5338 = vadd.f32 %v5322, 1e-05
        %v5339 = vadd.f32 %v5323, 1e-05
        %v5340 = vadd.f32 %v5324, 1e-05
        %v5341 = vrsqrt.pop %v5325
        %v5342 = vrsqrt.pop %v5326
        %v5343 = vrsqrt.pop %v5327
        %v5344 = vrsqrt.pop %v5328
        %v5345 = vrsqrt.pop %v5329
        %v5346 = vrsqrt.pop %v5330
        %v5347 = vrsqrt.pop %v5331
        %v5348 = vrsqrt.pop %v5332
        %v5349 = vrsqrt.pop %v5333
        %v5350 = vrsqrt.pop %v5334
        %v5351 = vrsqrt.pop %v5335
        %v5352 = vrsqrt.pop %v5336
        %v5353 = vrsqrt.pop %v5337
        %v5354 = vrsqrt.pop %v5338
        %v5355 = vrsqrt.pop %v5339
        %v5356 = vrsqrt.pop %v5340
        %v5357 = vmul.f32 %v5245, %v5341
        %v5358 = vmul.f32 %v5246, %v5342
        %v5359 = vmul.f32 %v5247, %v5343
        %v5360 = vmul.f32 %v5248, %v5344
        %v5361 = vmul.f32 %v5249, %v5345
        %v5362 = vmul.f32 %v5250, %v5346
        %v5363 = vmul.f32 %v5251, %v5347
        %v5364 = vmul.f32 %v5252, %v5348
        %v5365 = vmul.f32 %v5253, %v5349
        %v5366 = vmul.f32 %v5254, %v5350
        %v5367 = vmul.f32 %v5255, %v5351
        %v5368 = vmul.f32 %v5256, %v5352
        %v5369 = vmul.f32 %v5257, %v5353
        %v5370 = vmul.f32 %v5258, %v5354
        %v5371 = vmul.f32 %v5259, %v5355
        %v5372 = vmul.f32 %v5260, %v5356
        %v5373 = vlaneseq
        %v5374 = vshrl.u32 %v5373, 7
        %v5375 = vsub.s32 0, %v5374
        %v5376 = vrot.slane %v5195, %v5375
        %v5377 = vmul.f32 %v5357, %v5376
        %v5378 = vmul.f32 %v5358, %v5376
        %v5379 = vmul.f32 %v5359, %v5376
        %v5380 = vmul.f32 %v5360, %v5376
        %v5381 = vmul.f32 %v5361, %v5376
        %v5382 = vmul.f32 %v5362, %v5376
        %v5383 = vmul.f32 %v5363, %v5376
        %v5384 = vmul.f32 %v5364, %v5376
        %v5385 = vmul.f32 %v5365, %v5376
        %v5386 = vmul.f32 %v5366, %v5376
        %v5387 = vmul.f32 %v5367, %v5376
        %v5388 = vmul.f32 %v5368, %v5376
        %v5389 = vmul.f32 %v5369, %v5376
        %v5390 = vmul.f32 %v5370, %v5376
        %v5391 = vmul.f32 %v5371, %v5376
        %v5392 = vmul.f32 %v5372, %v5376
        %v5393 = vlaneseq
        %v5394 = vshrl.u32 %v5393, 7
        %v5395 = vsub.s32 0, %v5394
        %v5396 = vrot.slane %v5196, %v5395
        %v5397 = vadd.f32 %v5377, %v5396
        %v5398 = vadd.f32 %v5378, %v5396
        %v5399 = vadd.f32 %v5379, %v5396
        %v5400 = vadd.f32 %v5380, %v5396
        %v5401 = vadd.f32 %v5381, %v5396
        %v5402 = vadd.f32 %v5382, %v5396
        %v5403 = vadd.f32 %v5383, %v5396
        %v5404 = vadd.f32 %v5384, %v5396
        %v5405 = vadd.f32 %v5385, %v5396
        %v5406 = vadd.f32 %v5386, %v5396
        %v5407 = vadd.f32 %v5387, %v5396
        %v5408 = vadd.f32 %v5388, %v5396
        %v5409 = vadd.f32 %v5389, %v5396
        %v5410 = vadd.f32 %v5390, %v5396
        %v5411 = vadd.f32 %v5391, %v5396
        %v5412 = vadd.f32 %v5392, %v5396
        %v5413 = vld [vmem:[#allocation13] sm:$0xff]
        %v5414 = vld [vmem:[#allocation13 + $0x8] sm:$0xff]
        %v5415 = vld [vmem:[#allocation13 + $0x10] sm:$0xff]
        %v5416 = vld [vmem:[#allocation13 + $0x18] sm:$0xff]
        %v5417 = vld [vmem:[#allocation13 + $0x20] sm:$0xff]
        %v5418 = vld [vmem:[#allocation13 + $0x28] sm:$0xff]
        %v5419 = vld [vmem:[#allocation13 + $0x30] sm:$0xff]
        %v5420 = vld [vmem:[#allocation13 + $0x38] sm:$0xff]
        %v5421 = vld [vmem:[#allocation13 + $0x40] sm:$0xff]
        %v5422 = vld [vmem:[#allocation13 + $0x48] sm:$0xff]
        %v5423 = vld [vmem:[#allocation13 + $0x50] sm:$0xff]
        %v5424 = vld [vmem:[#allocation13 + $0x58] sm:$0xff]
        %v5425 = vld [vmem:[#allocation13 + $0x60] sm:$0xff]
        %v5426 = vld [vmem:[#allocation13 + $0x68] sm:$0xff]
        %v5427 = vld [vmem:[#allocation13 + $0x70] sm:$0xff]
        %v5428 = vld [vmem:[#allocation13 + $0x78] sm:$0xff]
        %v5429 = vld [vmem:[#allocation13 + $0x80] sm:$0xff]
        %v5430 = vld [vmem:[#allocation13 + $0x88] sm:$0xff]
        %v5431 = vld [vmem:[#allocation13 + $0x90] sm:$0xff]
        %v5432 = vld [vmem:[#allocation13 + $0x98] sm:$0xff]
        %v5433 = vld [vmem:[#allocation13 + $0xa0] sm:$0xff]
        %v5434 = vld [vmem:[#allocation13 + $0xa8] sm:$0xff]
        %v5435 = vld [vmem:[#allocation13 + $0xb0] sm:$0xff]
        %v5436 = vld [vmem:[#allocation13 + $0xb8] sm:$0xff]
        %v5437 = vld [vmem:[#allocation13 + $0xc0] sm:$0xff]
        %v5438 = vld [vmem:[#allocation13 + $0xc8] sm:$0xff]
        %v5439 = vld [vmem:[#allocation13 + $0xd0] sm:$0xff]
        %v5440 = vld [vmem:[#allocation13 + $0xd8] sm:$0xff]
        %v5441 = vld [vmem:[#allocation13 + $0xe0] sm:$0xff]
        %v5442 = vld [vmem:[#allocation13 + $0xe8] sm:$0xff]
        %v5443 = vld [vmem:[#allocation13 + $0xf0] sm:$0xff]
        %v5444 = vld [vmem:[#allocation13 + $0xf8] sm:$0xff]
        %v5445 = vld [vmem:[#allocation13 + $0x100] sm:$0xff]
        %v5446 = vld [vmem:[#allocation13 + $0x108] sm:$0xff]
        %v5447 = vld [vmem:[#allocation13 + $0x110] sm:$0xff]
        %v5448 = vld [vmem:[#allocation13 + $0x118] sm:$0xff]
        %v5449 = vld [vmem:[#allocation13 + $0x120] sm:$0xff]
        %v5450 = vld [vmem:[#allocation13 + $0x128] sm:$0xff]
        %v5451 = vld [vmem:[#allocation13 + $0x130] sm:$0xff]
        %v5452 = vld [vmem:[#allocation13 + $0x138] sm:$0xff]
        %v5453 = vld [vmem:[#allocation13 + $0x140] sm:$0xff]
        %v5454 = vld [vmem:[#allocation13 + $0x148] sm:$0xff]
        %v5455 = vld [vmem:[#allocation13 + $0x150] sm:$0xff]
        %v5456 = vld [vmem:[#allocation13 + $0x158] sm:$0xff]
        %v5457 = vld [vmem:[#allocation13 + $0x160] sm:$0xff]
        %v5458 = vld [vmem:[#allocation13 + $0x168] sm:$0xff]
        %v5459 = vld [vmem:[#allocation13 + $0x170] sm:$0xff]
        %v5460 = vld [vmem:[#allocation13 + $0x178] sm:$0xff]
        %v5461 = vld [vmem:[#allocation13 + $0x180] sm:$0xff]
        %v5462 = vld [vmem:[#allocation13 + $0x188] sm:$0xff]
        %v5463 = vld [vmem:[#allocation13 + $0x190] sm:$0xff]
        %v5464 = vld [vmem:[#allocation13 + $0x198] sm:$0xff]
        %v5465 = vld [vmem:[#allocation13 + $0x1a0] sm:$0xff]
        %v5466 = vld [vmem:[#allocation13 + $0x1a8] sm:$0xff]
        %v5467 = vld [vmem:[#allocation13 + $0x1b0] sm:$0xff]
        %v5468 = vld [vmem:[#allocation13 + $0x1b8] sm:$0xff]
        %v5469 = vld [vmem:[#allocation13 + $0x1c0] sm:$0xff]
        %v5470 = vld [vmem:[#allocation13 + $0x1c8] sm:$0xff]
        %v5471 = vld [vmem:[#allocation13 + $0x1d0] sm:$0xff]
        %v5472 = vld [vmem:[#allocation13 + $0x1d8] sm:$0xff]
        %v5473 = vld [vmem:[#allocation13 + $0x1e0] sm:$0xff]
        %v5474 = vld [vmem:[#allocation13 + $0x1e8] sm:$0xff]
        %v5475 = vld [vmem:[#allocation13 + $0x1f0] sm:$0xff]
        %v5476 = vld [vmem:[#allocation13 + $0x1f8] sm:$0xff]
        %v5477 = vld [vmem:[%s4] sm:$0xf]
        %v5479 = vlaneseq
        %v5480 = vshrl.u32 %v5479, 7
        %v5481 = vsub.s32 0, %v5480
        %v5482 = vrot.slane %v5477, %v5481
        %v5483 = vlaneseq
        %v5484 = vshrl.u32 %v5483, 7
        %v5485 = vsub.s32 1, %v5484
        %v5486 = vrot.slane %v5477, %v5485
        %v5487 = vlaneseq
        %v5488 = vshrl.u32 %v5487, 7
        %v5489 = vsub.s32 2, %v5488
        %v5490 = vrot.slane %v5477, %v5489
        %v5491 = vlaneseq
        %v5492 = vshrl.u32 %v5491, 7
        %v5493 = vsub.s32 3, %v5492
        %v5494 = vrot.slane %v5477, %v5493
        %5499 = vmatprep.subr.mxu0 %v5414
        %5500 = vmatpush1.msra.mxu0 %v5413
        %5501 = vmatprep.subr.mxu0 %v5418
        %5502 = vmatpush1.msra.mxu0 %v5417
        %5503 = vmatprep.subr.mxu0 %v5422
        %5504 = vmatpush1.msra.mxu0 %v5421
        %5505 = vmatprep.subr.mxu0 %v5426
        %5506 = vmatpush1.msra.mxu0 %v5425
        %5507 = vmatprep.subr.mxu0 %v5430
        %5508 = vmatpush1.msra.mxu0 %v5429
        %5509 = vmatprep.subr.mxu0 %v5434
        %5510 = vmatpush1.msra.mxu0 %v5433
        %5511 = vmatprep.subr.mxu0 %v5438
        %5512 = vmatpush1.msra.mxu0 %v5437
        %5513 = vmatprep.subr.mxu0 %v5442
        %5514 = vmatpush1.msra.mxu0 %v5441
        %5515 = vmatprep.subr.mxu0 %v5446
        %5516 = vmatpush1.msra.mxu0 %v5445
        %5517 = vmatprep.subr.mxu0 %v5450
        %5518 = vmatpush1.msra.mxu0 %v5449
        %5519 = vmatprep.subr.mxu0 %v5454
        %5520 = vmatpush1.msra.mxu0 %v5453
        %5521 = vmatprep.subr.mxu0 %v5458
        %5522 = vmatpush1.msra.mxu0 %v5457
        %5523 = vmatprep.subr.mxu0 %v5462
        %5524 = vmatpush1.msra.mxu0 %v5461
        %5525 = vmatprep.subr.mxu0 %v5466
        %5526 = vmatpush1.msra.mxu0 %v5465
        %5527 = vmatprep.subr.mxu0 %v5470
        %5528 = vmatpush1.msra.mxu0 %v5469
        %5529 = vmatprep.subr.mxu0 %v5474
        %5530 = vmatpush1.msra.mxu0 %v5473
        %5531 = vmatprep.subr.mxu0 0.0
        %5532 = vmatpush1.msra.mxu0 0.0
        %5533 = vmatprep.subr.mxu0 0.0
        %5534 = vmatpush1.msra.mxu0 0.0
        %5535 = vmatprep.subr.mxu0 0.0
        %5536 = vmatpush1.msra.mxu0 0.0
        %5537 = vmatprep.subr.mxu0 0.0
        %5538 = vmatpush1.msra.mxu0 0.0
        %5539 = vmatprep.subr.mxu0 0.0
        %5540 = vmatpush1.msra.mxu0 0.0
        %5541 = vmatprep.subr.mxu0 0.0
        %5542 = vmatpush1.msra.mxu0 0.0
        %5543 = vmatprep.subr.mxu0 0.0
        %5544 = vmatpush1.msra.mxu0 0.0
        %5545 = vmatprep.subr.mxu0 0.0
        %5546 = vmatpush1.msra.mxu0 0.0
        %5547 = vmatprep.subr.mxu0 0.0
        %5548 = vmatpush1.msra.mxu0 0.0
        %5549 = vmatprep.subr.mxu0 0.0
        %5550 = vmatpush1.msra.mxu0 0.0
        %5551 = vmatprep.subr.mxu0 0.0
        %5552 = vmatpush1.msra.mxu0 0.0
        %5553 = vmatprep.subr.mxu0 0.0
        %5554 = vmatpush1.msra.mxu0 0.0
        %5555 = vmatprep.subr.mxu0 0.0
        %5556 = vmatpush1.msra.mxu0 0.0
        %5557 = vmatprep.subr.mxu0 0.0
        %5558 = vmatpush1.msra.mxu0 0.0
        %5559 = vmatprep.subr.mxu0 0.0
        %5560 = vmatpush1.msra.mxu0 0.0
        %5561 = vmatprep.subr.mxu0 0.0
        %5562 = vmatpush1.msra.mxu0 0.0
        %5563 = vmatprep.mubr.f32.mxu0 0.0
        %5564 = vmatmul.mubr.f32.gmra.mrb[0].mxu0 %v5397
        %v5565 = vpop.f32.mrb[0].mxu0
        %v5566 = vadd.f32 %v5482, %v5565
        %v5567 = vpop.f32.mrb[0].mxu0
        %v5568 = vadd.f32 %v5486, %v5567
        %5569 = vmatprep.mubr.f32.mxu0 0.0
        %5570 = vmatmul.mubr.f32.gmra.mrb[0].mxu0 %v5398
        %v5571 = vpop.f32.mrb[0].mxu0
        %v5572 = vadd.f32 %v5482, %v5571
        %v5573 = vpop.f32.mrb[0].mxu0
        %v5574 = vadd.f32 %v5486, %v5573
        %5575 = vmatprep.mubr.f32.mxu0 0.0
        %5576 = vmatmul.mubr.f32.gmra.mrb[0].mxu0 %v5399
        %v5577 = vpop.f32.mrb[0].mxu0
        %v5578 = vadd.f32 %v5482, %v5577
        %v5579 = vpop.f32.mrb[0].mxu0
        %v5580 = vadd.f32 %v5486, %v5579
        %5581 = vmatprep.mubr.f32.mxu0 0.0
        %5582 = vmatmul.mubr.f32.gmra.mrb[0].mxu0 %v5400
        %v5583 = vpop.f32.mrb[0].mxu0
        %v5584 = vadd.f32 %v5482, %v5583
        %v5585 = vpop.f32.mrb[0].mxu0
        %v5586 = vadd.f32 %v5486, %v5585
        %5587 = vmatprep.mubr.f32.mxu0 0.0
        %5588 = vmatmul.mubr.f32.gmra.mrb[0].mxu0 %v5401
        %v5589 = vpop.f32.mrb[0].mxu0
        %v5590 = vadd.f32 %v5482, %v5589
        %v5591 = vpop.f32.mrb[0].mxu0
        %v5592 = vadd.f32 %v5486, %v5591
        %5593 = vmatprep.mubr.f32.mxu0 0.0
        %5594 = vmatmul.mubr.f32.gmra.mrb[0].mxu0 %v5402
        %v5595 = vpop.f32.mrb[0].mxu0
        %v5596 = vadd.f32 %v5482, %v5595
        %v5597 = vpop.f32.mrb[0].mxu0
        %v5598 = vadd.f32 %v5486, %v5597
        %5599 = vmatprep.mubr.f32.mxu0 0.0
        %5600 = vmatmul.mubr.f32.gmra.mrb[0].mxu0 %v5403
        %v5601 = vpop.f32.mrb[0].mxu0
        %v5602 = vadd.f32 %v5482, %v5601
        %v5603 = vpop.f32.mrb[0].mxu0
        %v5604 = vadd.f32 %v5486, %v5603
        %5605 = vmatprep.mubr.f32.mxu0 0.0
        %5606 = vmatmul.mubr.f32.gmra.mrb[0].mxu0 %v5404
        %v5607 = vpop.f32.mrb[0].mxu0
        %v5608 = vadd.f32 %v5482, %v5607
        %v5609 = vpop.f32.mrb[0].mxu0
        %v5610 = vadd.f32 %v5486, %v5609
        %5611 = vmatprep.mubr.f32.mxu0 0.0
        %5612 = vmatmul.mubr.f32.gmra.mrb[0].mxu0 %v5405
        %v5613 = vpop.f32.mrb[0].mxu0
        %v5614 = vadd.f32 %v5482, %v5613
        %v5615 = vpop.f32.mrb[0].mxu0
        %v5616 = vadd.f32 %v5486, %v5615
        %5617 = vmatprep.mubr.f32.mxu0 0.0
        %5618 = vmatmul.mubr.f32.gmra.mrb[0].mxu0 %v5406
        %v5619 = vpop.f32.mrb[0].mxu0
        %v5620 = vadd.f32 %v5482, %v5619
        %v5621 = vpop.f32.mrb[0].mxu0
        %v5622 = vadd.f32 %v5486, %v5621
        %5623 = vmatprep.mubr.f32.mxu0 0.0
        %5624 = vmatmul.mubr.f32.gmra.mrb[0].mxu0 %v5407
        %v5625 = vpop.f32.mrb[0].mxu0
        %v5626 = vadd.f32 %v5482, %v5625
        %v5627 = vpop.f32.mrb[0].mxu0
        %v5628 = vadd.f32 %v5486, %v5627
        %5629 = vmatprep.mubr.f32.mxu0 0.0
        %5630 = vmatmul.mubr.f32.gmra.mrb[0].mxu0 %v5408
        %v5631 = vpop.f32.mrb[0].mxu0
        %v5632 = vadd.f32 %v5482, %v5631
        %v5633 = vpop.f32.mrb[0].mxu0
        %v5634 = vadd.f32 %v5486, %v5633
        %5635 = vmatprep.mubr.f32.mxu0 0.0
        %5636 = vmatmul.mubr.f32.gmra.mrb[0].mxu0 %v5409
        %v5637 = vpop.f32.mrb[0].mxu0
        %v5638 = vadd.f32 %v5482, %v5637
        %v5639 = vpop.f32.mrb[0].mxu0
        %v5640 = vadd.f32 %v5486, %v5639
        %5641 = vmatprep.mubr.f32.mxu0 0.0
        %5642 = vmatmul.mubr.f32.gmra.mrb[0].mxu0 %v5410
        %v5643 = vpop.f32.mrb[0].mxu0
        %v5644 = vadd.f32 %v5482, %v5643
        %v5645 = vpop.f32.mrb[0].mxu0
        %v5646 = vadd.f32 %v5486, %v5645
        %5647 = vmatprep.mubr.f32.mxu0 0.0
        %5648 = vmatmul.mubr.f32.gmra.mrb[0].mxu0 %v5411
        %v5649 = vpop.f32.mrb[0].mxu0
        %v5650 = vadd.f32 %v5482, %v5649
        %v5651 = vpop.f32.mrb[0].mxu0
        %v5652 = vadd.f32 %v5486, %v5651
        %5653 = vmatprep.mubr.f32.mxu0 0.0
        %5654 = vmatmul.mubr.f32.gmra.mrb[0].mxu0 %v5412
        %v5655 = vpop.f32.mrb[0].mxu0
        %v5656 = vadd.f32 %v5482, %v5655
        %v5657 = vpop.f32.mrb[0].mxu0
        %v5658 = vadd.f32 %v5486, %v5657
        %5659 = vdwg.mxu0
        %5660 = vmatprep.subr.mxu0 %v5416
        %5661 = vmatpush1.msra.mxu0 %v5415
        %5662 = vmatprep.subr.mxu0 %v5420
        %5663 = vmatpush1.msra.mxu0 %v5419
        %5664 = vmatprep.subr.mxu0 %v5424
        %5665 = vmatpush1.msra.mxu0 %v5423
        %5666 = vmatprep.subr.mxu0 %v5428
        %5667 = vmatpush1.msra.mxu0 %v5427
        %5668 = vmatprep.subr.mxu0 %v5432
        %5669 = vmatpush1.msra.mxu0 %v5431
        %5670 = vmatprep.subr.mxu0 %v5436
        %5671 = vmatpush1.msra.mxu0 %v5435
        %5672 = vmatprep.subr.mxu0 %v5440
        %5673 = vmatpush1.msra.mxu0 %v5439
        %5674 = vmatprep.subr.mxu0 %v5444
        %5675 = vmatpush1.msra.mxu0 %v5443
        %5676 = vmatprep.subr.mxu0 %v5448
        %5677 = vmatpush1.msra.mxu0 %v5447
        %5678 = vmatprep.subr.mxu0 %v5452
        %5679 = vmatpush1.msra.mxu0 %v5451
        %5680 = vmatprep.subr.mxu0 %v5456
        %5681 = vmatpush1.msra.mxu0 %v5455
        %5682 = vmatprep.subr.mxu0 %v5460
        %5683 = vmatpush1.msra.mxu0 %v5459
        %5684 = vmatprep.subr.mxu0 %v5464
        %5685 = vmatpush1.msra.mxu0 %v5463
        %5686 = vmatprep.subr.mxu0 %v5468
        %5687 = vmatpush1.msra.mxu0 %v5467
        %5688 = vmatprep.subr.mxu0 %v5472
        %5689 = vmatpush1.msra.mxu0 %v5471
        %5690 = vmatprep.subr.mxu0 %v5476
        %5691 = vmatpush1.msra.mxu0 %v5475
        %5692 = vmatprep.subr.mxu0 0.0
        %5693 = vmatpush1.msra.mxu0 0.0
        %5694 = vmatprep.subr.mxu0 0.0
        %5695 = vmatpush1.msra.mxu0 0.0
        %5696 = vmatprep.subr.mxu0 0.0
        %5697 = vmatpush1.msra.mxu0 0.0
        %5698 = vmatprep.subr.mxu0 0.0
        %5699 = vmatpush1.msra.mxu0 0.0
        %5700 = vmatprep.subr.mxu0 0.0
        %5701 = vmatpush1.msra.mxu0 0.0
        %5702 = vmatprep.subr.mxu0 0.0
        %5703 = vmatpush1.msra.mxu0 0.0
        %5704 = vmatprep.subr.mxu0 0.0
        %5705 = vmatpush1.msra.mxu0 0.0
        %5706 = vmatprep.subr.mxu0 0.0
        %5707 = vmatpush1.msra.mxu0 0.0
        %5708 = vmatprep.subr.mxu0 0.0
        %5709 = vmatpush1.msra.mxu0 0.0
        %5710 = vmatprep.subr.mxu0 0.0
        %5711 = vmatpush1.msra.mxu0 0.0
        %5712 = vmatprep.subr.mxu0 0.0
        %5713 = vmatpush1.msra.mxu0 0.0
        %5714 = vmatprep.subr.mxu0 0.0
        %5715 = vmatpush1.msra.mxu0 0.0
        %5716 = vmatprep.subr.mxu0 0.0
        %5717 = vmatpush1.msra.mxu0 0.0
        %5718 = vmatprep.subr.mxu0 0.0
        %5719 = vmatpush1.msra.mxu0 0.0
        %5720 = vmatprep.subr.mxu0 0.0
        %5721 = vmatpush1.msra.mxu0 0.0
        %5722 = vmatprep.subr.mxu0 0.0
        %5723 = vmatpush1.msra.mxu0 0.0
        %5724 = vmatprep.mubr.f32.mxu0 0.0
        %5725 = vmatmul.mubr.f32.gmra.mrb[0].mxu0 %v5397
        %v5726 = vpop.f32.mrb[0].mxu0
        %v5727 = vadd.f32 %v5490, %v5726
        %v5728 = vpop.f32.mrb[0].mxu0
        %v5729 = vadd.f32 %v5494, %v5728
        %5730 = vmatprep.mubr.f32.mxu0 0.0
        %5731 = vmatmul.mubr.f32.gmra.mrb[0].mxu0 %v5398
        %v5732 = vpop.f32.mrb[0].mxu0
        %v5733 = vadd.f32 %v5490, %v5732
        %v5734 = vpop.f32.mrb[0].mxu0
        %v5735 = vadd.f32 %v5494, %v5734
        %5736 = vmatprep.mubr.f32.mxu0 0.0
        %5737 = vmatmul.mubr.f32.gmra.mrb[0].mxu0 %v5399
        %v5738 = vpop.f32.mrb[0].mxu0
        %v5739 = vadd.f32 %v5490, %v5738
        %v5740 = vpop.f32.mrb[0].mxu0
        %v5741 = vadd.f32 %v5494, %v5740
        %5742 = vmatprep.mubr.f32.mxu0 0.0
        %5743 = vmatmul.mubr.f32.gmra.mrb[0].mxu0 %v5400
        %v5744 = vpop.f32.mrb[0].mxu0
        %v5745 = vadd.f32 %v5490, %v5744
        %v5746 = vpop.f32.mrb[0].mxu0
        %v5747 = vadd.f32 %v5494, %v5746
        %5748 = vmatprep.mubr.f32.mxu0 0.0
        %5749 = vmatmul.mubr.f32.gmra.mrb[0].mxu0 %v5401
        %v5750 = vpop.f32.mrb[0].mxu0
        %v5751 = vadd.f32 %v5490, %v5750
        %v5752 = vpop.f32.mrb[0].mxu0
        %v5753 = vadd.f32 %v5494, %v5752
        %5754 = vmatprep.mubr.f32.mxu0 0.0
        %5755 = vmatmul.mubr.f32.gmra.mrb[0].mxu0 %v5402
        %v5756 = vpop.f32.mrb[0].mxu0
        %v5757 = vadd.f32 %v5490, %v5756
        %v5758 = vpop.f32.mrb[0].mxu0
        %v5759 = vadd.f32 %v5494, %v5758
        %5760 = vmatprep.mubr.f32.mxu0 0.0
        %5761 = vmatmul.mubr.f32.gmra.mrb[0].mxu0 %v5403
        %v5762 = vpop.f32.mrb[0].mxu0
        %v5763 = vadd.f32 %v5490, %v5762
        %v5764 = vpop.f32.mrb[0].mxu0
        %v5765 = vadd.f32 %v5494, %v5764
        %5766 = vmatprep.mubr.f32.mxu0 0.0
        %5767 = vmatmul.mubr.f32.gmra.mrb[0].mxu0 %v5404
        %v5768 = vpop.f32.mrb[0].mxu0
        %v5769 = vadd.f32 %v5490, %v5768
        %v5770 = vpop.f32.mrb[0].mxu0
        %v5771 = vadd.f32 %v5494, %v5770
        %5772 = vmatprep.mubr.f32.mxu0 0.0
        %5773 = vmatmul.mubr.f32.gmra.mrb[0].mxu0 %v5405
        %v5774 = vpop.f32.mrb[0].mxu0
        %v5775 = vadd.f32 %v5490, %v5774
        %v5776 = vpop.f32.mrb[0].mxu0
        %v5777 = vadd.f32 %v5494, %v5776
        %5778 = vmatprep.mubr.f32.mxu0 0.0
        %5779 = vmatmul.mubr.f32.gmra.mrb[0].mxu0 %v5406
        %v5780 = vpop.f32.mrb[0].mxu0
        %v5781 = vadd.f32 %v5490, %v5780
        %v5782 = vpop.f32.mrb[0].mxu0
        %v5783 = vadd.f32 %v5494, %v5782
        %5784 = vmatprep.mubr.f32.mxu0 0.0
        %5785 = vmatmul.mubr.f32.gmra.mrb[0].mxu0 %v5407
        %v5786 = vpop.f32.mrb[0].mxu0
        %v5787 = vadd.f32 %v5490, %v5786
        %v5788 = vpop.f32.mrb[0].mxu0
        %v5789 = vadd.f32 %v5494, %v5788
        %5790 = vmatprep.mubr.f32.mxu0 0.0
        %5791 = vmatmul.mubr.f32.gmra.mrb[0].mxu0 %v5408
        %v5792 = vpop.f32.mrb[0].mxu0
        %v5793 = vadd.f32 %v5490, %v5792
        %v5794 = vpop.f32.mrb[0].mxu0
        %v5795 = vadd.f32 %v5494, %v5794
        %5796 = vmatprep.mubr.f32.mxu0 0.0
        %5797 = vmatmul.mubr.f32.gmra.mrb[0].mxu0 %v5409
        %v5798 = vpop.f32.mrb[0].mxu0
        %v5799 = vadd.f32 %v5490, %v5798
        %v5800 = vpop.f32.mrb[0].mxu0
        %v5801 = vadd.f32 %v5494, %v5800
        %5802 = vmatprep.mubr.f32.mxu0 0.0
        %5803 = vmatmul.mubr.f32.gmra.mrb[0].mxu0 %v5410
        %v5804 = vpop.f32.mrb[0].mxu0
        %v5805 = vadd.f32 %v5490, %v5804
        %v5806 = vpop.f32.mrb[0].mxu0
        %v5807 = vadd.f32 %v5494, %v5806
        %5808 = vmatprep.mubr.f32.mxu0 0.0
        %5809 = vmatmul.mubr.f32.gmra.mrb[0].mxu0 %v5411
        %v5810 = vpop.f32.mrb[0].mxu0
        %v5811 = vadd.f32 %v5490, %v5810
        %v5812 = vpop.f32.mrb[0].mxu0
        %v5813 = vadd.f32 %v5494, %v5812
        %5814 = vmatprep.mubr.f32.mxu0 0.0
        %5815 = vmatmul.mubr.f32.gmra.mrb[0].mxu0 %v5412
        %v5816 = vpop.f32.mrb[0].mxu0
        %v5817 = vadd.f32 %v5490, %v5816
        %v5818 = vpop.f32.mrb[0].mxu0
        %v5819 = vadd.f32 %v5494, %v5818
        %5820 = vdwg.mxu0
        %vm5821 = vcmp.ge.f32.partialorder %v5566, 0.0
        %vm5822 = vcmp.ge.f32.partialorder %v5568, 0.0
        %vm5823 = vcmp.ge.f32.partialorder %v5727, 0.0
        %vm5824 = vcmp.ge.f32.partialorder %v5729, 0.0
        %vm5825 = vcmp.ge.f32.partialorder %v5572, 0.0
        %vm5826 = vcmp.ge.f32.partialorder %v5574, 0.0
        %vm5827 = vcmp.ge.f32.partialorder %v5733, 0.0
        %vm5828 = vcmp.ge.f32.partialorder %v5735, 0.0
        %vm5829 = vcmp.ge.f32.partialorder %v5578, 0.0
        %vm5830 = vcmp.ge.f32.partialorder %v5580, 0.0
        %vm5831 = vcmp.ge.f32.partialorder %v5739, 0.0
        %vm5832 = vcmp.ge.f32.partialorder %v5741, 0.0
        %vm5833 = vcmp.ge.f32.partialorder %v5584, 0.0
        %vm5834 = vcmp.ge.f32.partialorder %v5586, 0.0
        %vm5835 = vcmp.ge.f32.partialorder %v5745, 0.0
        %vm5836 = vcmp.ge.f32.partialorder %v5747, 0.0
        %vm5837 = vcmp.ge.f32.partialorder %v5590, 0.0
        %vm5838 = vcmp.ge.f32.partialorder %v5592, 0.0
        %vm5839 = vcmp.ge.f32.partialorder %v5751, 0.0
        %vm5840 = vcmp.ge.f32.partialorder %v5753, 0.0
        %vm5841 = vcmp.ge.f32.partialorder %v5596, 0.0
        %vm5842 = vcmp.ge.f32.partialorder %v5598, 0.0
        %vm5843 = vcmp.ge.f32.partialorder %v5757, 0.0
        %vm5844 = vcmp.ge.f32.partialorder %v5759, 0.0
        %vm5845 = vcmp.ge.f32.partialorder %v5602, 0.0
        %vm5846 = vcmp.ge.f32.partialorder %v5604, 0.0
        %vm5847 = vcmp.ge.f32.partialorder %v5763, 0.0
        %vm5848 = vcmp.ge.f32.partialorder %v5765, 0.0
        %vm5849 = vcmp.ge.f32.partialorder %v5608, 0.0
        %vm5850 = vcmp.ge.f32.partialorder %v5610, 0.0
        %vm5851 = vcmp.ge.f32.partialorder %v5769, 0.0
        %vm5852 = vcmp.ge.f32.partialorder %v5771, 0.0
        %vm5853 = vcmp.ge.f32.partialorder %v5614, 0.0
        %vm5854 = vcmp.ge.f32.partialorder %v5616, 0.0
        %vm5855 = vcmp.ge.f32.partialorder %v5775, 0.0
        %vm5856 = vcmp.ge.f32.partialorder %v5777, 0.0
        %vm5857 = vcmp.ge.f32.partialorder %v5620, 0.0
        %vm5858 = vcmp.ge.f32.partialorder %v5622, 0.0
        %vm5859 = vcmp.ge.f32.partialorder %v5781, 0.0
        %vm5860 = vcmp.ge.f32.partialorder %v5783, 0.0
        %vm5861 = vcmp.ge.f32.partialorder %v5626, 0.0
        %vm5862 = vcmp.ge.f32.partialorder %v5628, 0.0
        %vm5863 = vcmp.ge.f32.partialorder %v5787, 0.0
        %vm5864 = vcmp.ge.f32.partialorder %v5789, 0.0
        %vm5865 = vcmp.ge.f32.partialorder %v5632, 0.0
        %vm5866 = vcmp.ge.f32.partialorder %v5634, 0.0
        %vm5867 = vcmp.ge.f32.partialorder %v5793, 0.0
        %vm5868 = vcmp.ge.f32.partialorder %v5795, 0.0
        %vm5869 = vcmp.ge.f32.partialorder %v5638, 0.0
        %vm5870 = vcmp.ge.f32.partialorder %v5640, 0.0
        %vm5871 = vcmp.ge.f32.partialorder %v5799, 0.0
        %vm5872 = vcmp.ge.f32.partialorder %v5801, 0.0
        %vm5873 = vcmp.ge.f32.partialorder %v5644, 0.0
        %vm5874 = vcmp.ge.f32.partialorder %v5646, 0.0
        %vm5875 = vcmp.ge.f32.partialorder %v5805, 0.0
        %vm5876 = vcmp.ge.f32.partialorder %v5807, 0.0
        %vm5877 = vcmp.ge.f32.partialorder %v5650, 0.0
        %vm5878 = vcmp.ge.f32.partialorder %v5652, 0.0
        %vm5879 = vcmp.ge.f32.partialorder %v5811, 0.0
        %vm5880 = vcmp.ge.f32.partialorder %v5813, 0.0
        %vm5881 = vcmp.ge.f32.partialorder %v5656, 0.0
        %vm5882 = vcmp.ge.f32.partialorder %v5658, 0.0
        %vm5883 = vcmp.ge.f32.partialorder %v5817, 0.0
        %vm5884 = vcmp.ge.f32.partialorder %v5819, 0.0
        %v5885 = vmul.f32 %v5566, 0.01
        %v5886 = vmul.f32 %v5568, 0.01
        %v5887 = vmul.f32 %v5727, 0.01
        %v5888 = vmul.f32 %v5729, 0.01
        %v5889 = vmul.f32 %v5572, 0.01
        %v5890 = vmul.f32 %v5574, 0.01
        %v5891 = vmul.f32 %v5733, 0.01
        %v5892 = vmul.f32 %v5735, 0.01
        %v5893 = vmul.f32 %v5578, 0.01
        %v5894 = vmul.f32 %v5580, 0.01
        %v5895 = vmul.f32 %v5739, 0.01
        %v5896 = vmul.f32 %v5741, 0.01
        %v5897 = vmul.f32 %v5584, 0.01
        %v5898 = vmul.f32 %v5586, 0.01
        %v5899 = vmul.f32 %v5745, 0.01
        %v5900 = vmul.f32 %v5747, 0.01
        %v5901 = vmul.f32 %v5590, 0.01
        %v5902 = vmul.f32 %v5592, 0.01
        %v5903 = vmul.f32 %v5751, 0.01
        %v5904 = vmul.f32 %v5753, 0.01
        %v5905 = vmul.f32 %v5596, 0.01
        %v5906 = vmul.f32 %v5598, 0.01
        %v5907 = vmul.f32 %v5757, 0.01
        %v5908 = vmul.f32 %v5759, 0.01
        %v5909 = vmul.f32 %v5602, 0.01
        %v5910 = vmul.f32 %v5604, 0.01
        %v5911 = vmul.f32 %v5763, 0.01
        %v5912 = vmul.f32 %v5765, 0.01
        %v5913 = vmul.f32 %v5608, 0.01
        %v5914 = vmul.f32 %v5610, 0.01
        %v5915 = vmul.f32 %v5769, 0.01
        %v5916 = vmul.f32 %v5771, 0.01
        %v5917 = vmul.f32 %v5614, 0.01
        %v5918 = vmul.f32 %v5616, 0.01
        %v5919 = vmul.f32 %v5775, 0.01
        %v5920 = vmul.f32 %v5777, 0.01
        %v5921 = vmul.f32 %v5620, 0.01
        %v5922 = vmul.f32 %v5622, 0.01
        %v5923 = vmul.f32 %v5781, 0.01
        %v5924 = vmul.f32 %v5783, 0.01
        %v5925 = vmul.f32 %v5626, 0.01
        %v5926 = vmul.f32 %v5628, 0.01
        %v5927 = vmul.f32 %v5787, 0.01
        %v5928 = vmul.f32 %v5789, 0.01
        %v5929 = vmul.f32 %v5632, 0.01
        %v5930 = vmul.f32 %v5634, 0.01
        %v5931 = vmul.f32 %v5793, 0.01
        %v5932 = vmul.f32 %v5795, 0.01
        %v5933 = vmul.f32 %v5638, 0.01
        %v5934 = vmul.f32 %v5640, 0.01
        %v5935 = vmul.f32 %v5799, 0.01
        %v5936 = vmul.f32 %v5801, 0.01
        %v5937 = vmul.f32 %v5644, 0.01
        %v5938 = vmul.f32 %v5646, 0.01
        %v5939 = vmul.f32 %v5805, 0.01
        %v5940 = vmul.f32 %v5807, 0.01
        %v5941 = vmul.f32 %v5650, 0.01
        %v5942 = vmul.f32 %v5652, 0.01
        %v5943 = vmul.f32 %v5811, 0.01
        %v5944 = vmul.f32 %v5813, 0.01
        %v5945 = vmul.f32 %v5656, 0.01
        %v5946 = vmul.f32 %v5658, 0.01
        %v5947 = vmul.f32 %v5817, 0.01
        %v5948 = vmul.f32 %v5819, 0.01
        %v5949 = vsel %vm5821, %v5566, %v5885
        %v5950 = vsel %vm5822, %v5568, %v5886
        %v5951 = vsel %vm5823, %v5727, %v5887
        %v5952 = vsel %vm5824, %v5729, %v5888
        %v5953 = vsel %vm5825, %v5572, %v5889
        %v5954 = vsel %vm5826, %v5574, %v5890
        %v5955 = vsel %vm5827, %v5733, %v5891
        %v5956 = vsel %vm5828, %v5735, %v5892
        %v5957 = vsel %vm5829, %v5578, %v5893
        %v5958 = vsel %vm5830, %v5580, %v5894
        %v5959 = vsel %vm5831, %v5739, %v5895
        %v5960 = vsel %vm5832, %v5741, %v5896
        %v5961 = vsel %vm5833, %v5584, %v5897
        %v5962 = vsel %vm5834, %v5586, %v5898
        %v5963 = vsel %vm5835, %v5745, %v5899
        %v5964 = vsel %vm5836, %v5747, %v5900
        %v5965 = vsel %vm5837, %v5590, %v5901
        %v5966 = vsel %vm5838, %v5592, %v5902
        %v5967 = vsel %vm5839, %v5751, %v5903
        %v5968 = vsel %vm5840, %v5753, %v5904
        %v5969 = vsel %vm5841, %v5596, %v5905
        %v5970 = vsel %vm5842, %v5598, %v5906
        %v5971 = vsel %vm5843, %v5757, %v5907
        %v5972 = vsel %vm5844, %v5759, %v5908
        %v5973 = vsel %vm5845, %v5602, %v5909
        %v5974 = vsel %vm5846, %v5604, %v5910
        %v5975 = vsel %vm5847, %v5763, %v5911
        %v5976 = vsel %vm5848, %v5765, %v5912
        %v5977 = vsel %vm5849, %v5608, %v5913
        %v5978 = vsel %vm5850, %v5610, %v5914
        %v5979 = vsel %vm5851, %v5769, %v5915
        %v5980 = vsel %vm5852, %v5771, %v5916
        %v5981 = vsel %vm5853, %v5614, %v5917
        %v5982 = vsel %vm5854, %v5616, %v5918
        %v5983 = vsel %vm5855, %v5775, %v5919
        %v5984 = vsel %vm5856, %v5777, %v5920
        %v5985 = vsel %vm5857, %v5620, %v5921
        %v5986 = vsel %vm5858, %v5622, %v5922
        %v5987 = vsel %vm5859, %v5781, %v5923
        %v5988 = vsel %vm5860, %v5783, %v5924
        %v5989 = vsel %vm5861, %v5626, %v5925
        %v5990 = vsel %vm5862, %v5628, %v5926
        %v5991 = vsel %vm5863, %v5787, %v5927
        %v5992 = vsel %vm5864, %v5789, %v5928
        %v5993 = vsel %vm5865, %v5632, %v5929
        %v5994 = vsel %vm5866, %v5634, %v5930
        %v5995 = vsel %vm5867, %v5793, %v5931
        %v5996 = vsel %vm5868, %v5795, %v5932
        %v5997 = vsel %vm5869, %v5638, %v5933
        %v5998 = vsel %vm5870, %v5640, %v5934
        %v5999 = vsel %vm5871, %v5799, %v5935
        %v6000 = vsel %vm5872, %v5801, %v5936
        %v6001 = vsel %vm5873, %v5644, %v5937
        %v6002 = vsel %vm5874, %v5646, %v5938
        %v6003 = vsel %vm5875, %v5805, %v5939
        %v6004 = vsel %vm5876, %v5807, %v5940
        %v6005 = vsel %vm5877, %v5650, %v5941
        %v6006 = vsel %vm5878, %v5652, %v5942
        %v6007 = vsel %vm5879, %v5811, %v5943
        %v6008 = vsel %vm5880, %v5813, %v5944
        %v6009 = vsel %vm5881, %v5656, %v5945
        %v6010 = vsel %vm5882, %v5658, %v5946
        %v6011 = vsel %vm5883, %v5817, %v5947
        %v6012 = vsel %vm5884, %v5819, %v5948
        %v6013 = vld [vmem:[#allocation15] sm:$0xff]
        %v6014 = vld [vmem:[#allocation15 + $0x8] sm:$0xff]
        %v6015 = vld [vmem:[#allocation15 + $0x10] sm:$0xff]
        %v6016 = vld [vmem:[#allocation15 + $0x18] sm:$0xff]
        %v6017 = vld [vmem:[#allocation15 + $0x20] sm:$0xff]
        %v6018 = vld [vmem:[#allocation15 + $0x28] sm:$0xff]
        %v6019 = vld [vmem:[#allocation15 + $0x30] sm:$0xff]
        %v6020 = vld [vmem:[#allocation15 + $0x38] sm:$0xff]
        %v6021 = vld [vmem:[#allocation15 + $0x40] sm:$0xff]
        %v6022 = vld [vmem:[#allocation15 + $0x48] sm:$0xff]
        %v6023 = vld [vmem:[#allocation15 + $0x50] sm:$0xff]
        %v6024 = vld [vmem:[#allocation15 + $0x58] sm:$0xff]
        %v6025 = vld [vmem:[#allocation15 + $0x60] sm:$0xff]
        %v6026 = vld [vmem:[#allocation15 + $0x68] sm:$0xff]
        %v6027 = vld [vmem:[#allocation15 + $0x70] sm:$0xff]
        %v6028 = vld [vmem:[#allocation15 + $0x78] sm:$0xff]
        %v6029 = vld [vmem:[#allocation15 + $0x80] sm:$0xff]
        %v6030 = vld [vmem:[#allocation15 + $0x88] sm:$0xff]
        %v6031 = vld [vmem:[#allocation15 + $0x90] sm:$0xff]
        %v6032 = vld [vmem:[#allocation15 + $0x98] sm:$0xff]
        %v6033 = vld [vmem:[#allocation15 + $0xa0] sm:$0xff]
        %v6034 = vld [vmem:[#allocation15 + $0xa8] sm:$0xff]
        %v6035 = vld [vmem:[#allocation15 + $0xb0] sm:$0xff]
        %v6036 = vld [vmem:[#allocation15 + $0xb8] sm:$0xff]
        %v6037 = vld [vmem:[#allocation15 + $0xc0] sm:$0xff]
        %v6038 = vld [vmem:[#allocation15 + $0xc8] sm:$0xff]
        %v6039 = vld [vmem:[#allocation15 + $0xd0] sm:$0xff]
        %v6040 = vld [vmem:[#allocation15 + $0xd8] sm:$0xff]
        %v6041 = vld [vmem:[#allocation15 + $0xe0] sm:$0xff]
        %v6042 = vld [vmem:[#allocation15 + $0xe8] sm:$0xff]
        %v6043 = vld [vmem:[#allocation15 + $0xf0] sm:$0xff]
        %v6044 = vld [vmem:[#allocation15 + $0xf8] sm:$0xff]
        %v6045 = vld [vmem:[#allocation15 + $0x100] sm:$0xff]
        %v6046 = vld [vmem:[#allocation15 + $0x108] sm:$0xff]
        %v6047 = vld [vmem:[#allocation15 + $0x110] sm:$0xff]
        %v6048 = vld [vmem:[#allocation15 + $0x118] sm:$0xff]
        %v6049 = vld [vmem:[#allocation15 + $0x120] sm:$0xff]
        %v6050 = vld [vmem:[#allocation15 + $0x128] sm:$0xff]
        %v6051 = vld [vmem:[#allocation15 + $0x130] sm:$0xff]
        %v6052 = vld [vmem:[#allocation15 + $0x138] sm:$0xff]
        %v6053 = vld [vmem:[#allocation15 + $0x140] sm:$0xff]
        %v6054 = vld [vmem:[#allocation15 + $0x148] sm:$0xff]
        %v6055 = vld [vmem:[#allocation15 + $0x150] sm:$0xff]
        %v6056 = vld [vmem:[#allocation15 + $0x158] sm:$0xff]
        %v6057 = vld [vmem:[#allocation15 + $0x160] sm:$0xff]
        %v6058 = vld [vmem:[#allocation15 + $0x168] sm:$0xff]
        %v6059 = vld [vmem:[#allocation15 + $0x170] sm:$0xff]
        %v6060 = vld [vmem:[#allocation15 + $0x178] sm:$0xff]
        %v6061 = vld [vmem:[#allocation15 + $0x180] sm:$0xff]
        %v6062 = vld [vmem:[#allocation15 + $0x188] sm:$0xff]
        %v6063 = vld [vmem:[#allocation15 + $0x190] sm:$0xff]
        %v6064 = vld [vmem:[#allocation15 + $0x198] sm:$0xff]
        %v6065 = vld [vmem:[#allocation15 + $0x1a0] sm:$0xff]
        %v6066 = vld [vmem:[#allocation15 + $0x1a8] sm:$0xff]
        %v6067 = vld [vmem:[#allocation15 + $0x1b0] sm:$0xff]
        %v6068 = vld [vmem:[#allocation15 + $0x1b8] sm:$0xff]
        %v6069 = vld [vmem:[#allocation15 + $0x1c0] sm:$0xff]
        %v6070 = vld [vmem:[#allocation15 + $0x1c8] sm:$0xff]
        %v6071 = vld [vmem:[#allocation15 + $0x1d0] sm:$0xff]
        %v6072 = vld [vmem:[#allocation15 + $0x1d8] sm:$0xff]
        %v6073 = vld [vmem:[#allocation15 + $0x1e0] sm:$0xff]
        %v6074 = vld [vmem:[#allocation15 + $0x1e8] sm:$0xff]
        %v6075 = vld [vmem:[#allocation15 + $0x1f0] sm:$0xff]
        %v6076 = vld [vmem:[#allocation15 + $0x1f8] sm:$0xff]
        %v6077 = vld [vmem:[%s3 + $0x6] sm:$0x1]
        %v6078 = vlaneseq
        %v6079 = vshrl.u32 %v6078, 7
        %v6080 = vsub.s32 0, %v6079
        %v6081 = vrot.slane %v6077, %v6080
        %6082 = vmatprep.subr.mxu0 0.0
        %6083 = vmatpush1.msra.mxu0 %v6013
        %6084 = vmatprep.subr.mxu0 0.0
        %6085 = vmatpush1.msra.mxu0 %v6014
        %6086 = vmatprep.subr.mxu0 0.0
        %6087 = vmatpush1.msra.mxu0 %v6015
        %6088 = vmatprep.subr.mxu0 0.0
        %6089 = vmatpush1.msra.mxu0 %v6016
        %6090 = vmatprep.subr.mxu0 0.0
        %6091 = vmatpush1.msra.mxu0 %v6017
        %6092 = vmatprep.subr.mxu0 0.0
        %6093 = vmatpush1.msra.mxu0 %v6018
        %6094 = vmatprep.subr.mxu0 0.0
        %6095 = vmatpush1.msra.mxu0 %v6019
        %6096 = vmatprep.subr.mxu0 0.0
        %6097 = vmatpush1.msra.mxu0 %v6020
        %6098 = vmatprep.subr.mxu0 0.0
        %6099 = vmatpush1.msra.mxu0 %v6021
        %6100 = vmatprep.subr.mxu0 0.0
        %6101 = vmatpush1.msra.mxu0 %v6022
        %6102 = vmatprep.subr.mxu0 0.0
        %6103 = vmatpush1.msra.mxu0 %v6023
        %6104 = vmatprep.subr.mxu0 0.0
        %6105 = vmatpush1.msra.mxu0 %v6024
        %6106 = vmatprep.subr.mxu0 0.0
        %6107 = vmatpush1.msra.mxu0 %v6025
        %6108 = vmatprep.subr.mxu0 0.0
        %6109 = vmatpush1.msra.mxu0 %v6026
        %6110 = vmatprep.subr.mxu0 0.0
        %6111 = vmatpush1.msra.mxu0 %v6027
        %6112 = vmatprep.subr.mxu0 0.0
        %6113 = vmatpush1.msra.mxu0 %v6028
        %6114 = vmatprep.subr.mxu0 0.0
        %6115 = vmatpush1.msra.mxu0 %v6029
        %6116 = vmatprep.subr.mxu0 0.0
        %6117 = vmatpush1.msra.mxu0 %v6030
        %6118 = vmatprep.subr.mxu0 0.0
        %6119 = vmatpush1.msra.mxu0 %v6031
        %6120 = vmatprep.subr.mxu0 0.0
        %6121 = vmatpush1.msra.mxu0 %v6032
        %6122 = vmatprep.subr.mxu0 0.0
        %6123 = vmatpush1.msra.mxu0 %v6033
        %6124 = vmatprep.subr.mxu0 0.0
        %6125 = vmatpush1.msra.mxu0 %v6034
        %6126 = vmatprep.subr.mxu0 0.0
        %6127 = vmatpush1.msra.mxu0 %v6035
        %6128 = vmatprep.subr.mxu0 0.0
        %6129 = vmatpush1.msra.mxu0 %v6036
        %6130 = vmatprep.subr.mxu0 0.0
        %6131 = vmatpush1.msra.mxu0 %v6037
        %6132 = vmatprep.subr.mxu0 0.0
        %6133 = vmatpush1.msra.mxu0 %v6038
        %6134 = vmatprep.subr.mxu0 0.0
        %6135 = vmatpush1.msra.mxu0 %v6039
        %6136 = vmatprep.subr.mxu0 0.0
        %6137 = vmatpush1.msra.mxu0 %v6040
        %6138 = vmatprep.subr.mxu0 0.0
        %6139 = vmatpush1.msra.mxu0 %v6041
        %6140 = vmatprep.subr.mxu0 0.0
        %6141 = vmatpush1.msra.mxu0 %v6042
        %6142 = vmatprep.subr.mxu0 0.0
        %6143 = vmatpush1.msra.mxu0 %v6043
        %6144 = vmatprep.subr.mxu0 0.0
        %6145 = vmatpush1.msra.mxu0 %v6044
        %6146 = vmatprep.mubr.f32.mxu0 %v5950
        %6147 = vmatmul.mubr.f32.gmra.mrb[0].mxu0 %v5949
        %v6148 = vpop.f32.mrb[0].mxu0
        %v6149 = vadd.f32 %v6081, %v6148
        %v6150 = vpop.f32.mrb[0].mxu0
        %6151 = vmatprep.mubr.f32.mxu0 %v5954
        %6152 = vmatmul.mubr.f32.gmra.mrb[0].mxu0 %v5953
        %v6153 = vpop.f32.mrb[0].mxu0
        %v6154 = vadd.f32 %v6081, %v6153
        %v6155 = vpop.f32.mrb[0].mxu0
        %6156 = vmatprep.mubr.f32.mxu0 %v5958
        %6157 = vmatmul.mubr.f32.gmra.mrb[0].mxu0 %v5957
        %v6158 = vpop.f32.mrb[0].mxu0
        %v6159 = vadd.f32 %v6081, %v6158
        %v6160 = vpop.f32.mrb[0].mxu0
        %6161 = vmatprep.mubr.f32.mxu0 %v5962
        %6162 = vmatmul.mubr.f32.gmra.mrb[0].mxu0 %v5961
        %v6163 = vpop.f32.mrb[0].mxu0
        %v6164 = vadd.f32 %v6081, %v6163
        %v6165 = vpop.f32.mrb[0].mxu0
        %6166 = vmatprep.mubr.f32.mxu0 %v5966
        %6167 = vmatmul.mubr.f32.gmra.mrb[0].mxu0 %v5965
        %v6168 = vpop.f32.mrb[0].mxu0
        %v6169 = vadd.f32 %v6081, %v6168
        %v6170 = vpop.f32.mrb[0].mxu0
        %6171 = vmatprep.mubr.f32.mxu0 %v5970
        %6172 = vmatmul.mubr.f32.gmra.mrb[0].mxu0 %v5969
        %v6173 = vpop.f32.mrb[0].mxu0
        %v6174 = vadd.f32 %v6081, %v6173
        %v6175 = vpop.f32.mrb[0].mxu0
        %6176 = vmatprep.mubr.f32.mxu0 %v5974
        %6177 = vmatmul.mubr.f32.gmra.mrb[0].mxu0 %v5973
        %v6178 = vpop.f32.mrb[0].mxu0
        %v6179 = vadd.f32 %v6081, %v6178
        %v6180 = vpop.f32.mrb[0].mxu0
        %6181 = vmatprep.mubr.f32.mxu0 %v5978
        %6182 = vmatmul.mubr.f32.gmra.mrb[0].mxu0 %v5977
        %v6183 = vpop.f32.mrb[0].mxu0
        %v6184 = vadd.f32 %v6081, %v6183
        %v6185 = vpop.f32.mrb[0].mxu0
        %6186 = vmatprep.mubr.f32.mxu0 %v5982
        %6187 = vmatmul.mubr.f32.gmra.mrb[0].mxu0 %v5981
        %v6188 = vpop.f32.mrb[0].mxu0
        %v6189 = vadd.f32 %v6081, %v6188
        %v6190 = vpop.f32.mrb[0].mxu0
        %6191 = vmatprep.mubr.f32.mxu0 %v5986
        %6192 = vmatmul.mubr.f32.gmra.mrb[0].mxu0 %v5985
        %v6193 = vpop.f32.mrb[0].mxu0
        %v6194 = vadd.f32 %v6081, %v6193
        %v6195 = vpop.f32.mrb[0].mxu0
        %6196 = vmatprep.mubr.f32.mxu0 %v5990
        %6197 = vmatmul.mubr.f32.gmra.mrb[0].mxu0 %v5989
        %v6198 = vpop.f32.mrb[0].mxu0
        %v6199 = vadd.f32 %v6081, %v6198
        %v6200 = vpop.f32.mrb[0].mxu0
        %6201 = vmatprep.mubr.f32.mxu0 %v5994
        %6202 = vmatmul.mubr.f32.gmra.mrb[0].mxu0 %v5993
        %v6203 = vpop.f32.mrb[0].mxu0
        %v6204 = vadd.f32 %v6081, %v6203
        %v6205 = vpop.f32.mrb[0].mxu0
        %6206 = vmatprep.mubr.f32.mxu0 %v5998
        %6207 = vmatmul.mubr.f32.gmra.mrb[0].mxu0 %v5997
        %v6208 = vpop.f32.mrb[0].mxu0
        %v6209 = vadd.f32 %v6081, %v6208
        %v6210 = vpop.f32.mrb[0].mxu0
        %6211 = vmatprep.mubr.f32.mxu0 %v6002
        %6212 = vmatmul.mubr.f32.gmra.mrb[0].mxu0 %v6001
        %v6213 = vpop.f32.mrb[0].mxu0
        %v6214 = vadd.f32 %v6081, %v6213
        %v6215 = vpop.f32.mrb[0].mxu0
        %6216 = vmatprep.mubr.f32.mxu0 %v6006
        %6217 = vmatmul.mubr.f32.gmra.mrb[0].mxu0 %v6005
        %v6218 = vpop.f32.mrb[0].mxu0
        %v6219 = vadd.f32 %v6081, %v6218
        %v6220 = vpop.f32.mrb[0].mxu0
        %6221 = vmatprep.mubr.f32.mxu0 %v6010
        %6222 = vmatmul.mubr.f32.gmra.mrb[0].mxu0 %v6009
        %v6223 = vpop.f32.mrb[0].mxu0
        %v6224 = vadd.f32 %v6081, %v6223
        %v6225 = vpop.f32.mrb[0].mxu0
        %6226 = vdwg.mxu0
        %6227 = vmatprep.subr.mxu0 0.0
        %6228 = vmatpush1.msra.mxu0 %v6045
        %6229 = vmatprep.subr.mxu0 0.0
        %6230 = vmatpush1.msra.mxu0 %v6046
        %6231 = vmatprep.subr.mxu0 0.0
        %6232 = vmatpush1.msra.mxu0 %v6047
        %6233 = vmatprep.subr.mxu0 0.0
        %6234 = vmatpush1.msra.mxu0 %v6048
        %6235 = vmatprep.subr.mxu0 0.0
        %6236 = vmatpush1.msra.mxu0 %v6049
        %6237 = vmatprep.subr.mxu0 0.0
        %6238 = vmatpush1.msra.mxu0 %v6050
        %6239 = vmatprep.subr.mxu0 0.0
        %6240 = vmatpush1.msra.mxu0 %v6051
        %6241 = vmatprep.subr.mxu0 0.0
        %6242 = vmatpush1.msra.mxu0 %v6052
        %6243 = vmatprep.subr.mxu0 0.0
        %6244 = vmatpush1.msra.mxu0 %v6053
        %6245 = vmatprep.subr.mxu0 0.0
        %6246 = vmatpush1.msra.mxu0 %v6054
        %6247 = vmatprep.subr.mxu0 0.0
        %6248 = vmatpush1.msra.mxu0 %v6055
        %6249 = vmatprep.subr.mxu0 0.0
        %6250 = vmatpush1.msra.mxu0 %v6056
        %6251 = vmatprep.subr.mxu0 0.0
        %6252 = vmatpush1.msra.mxu0 %v6057
        %6253 = vmatprep.subr.mxu0 0.0
        %6254 = vmatpush1.msra.mxu0 %v6058
        %6255 = vmatprep.subr.mxu0 0.0
        %6256 = vmatpush1.msra.mxu0 %v6059
        %6257 = vmatprep.subr.mxu0 0.0
        %6258 = vmatpush1.msra.mxu0 %v6060
        %6259 = vmatprep.subr.mxu0 0.0
        %6260 = vmatpush1.msra.mxu0 %v6061
        %6261 = vmatprep.subr.mxu0 0.0
        %6262 = vmatpush1.msra.mxu0 %v6062
        %6263 = vmatprep.subr.mxu0 0.0
        %6264 = vmatpush1.msra.mxu0 %v6063
        %6265 = vmatprep.subr.mxu0 0.0
        %6266 = vmatpush1.msra.mxu0 %v6064
        %6267 = vmatprep.subr.mxu0 0.0
        %6268 = vmatpush1.msra.mxu0 %v6065
        %6269 = vmatprep.subr.mxu0 0.0
        %6270 = vmatpush1.msra.mxu0 %v6066
        %6271 = vmatprep.subr.mxu0 0.0
        %6272 = vmatpush1.msra.mxu0 %v6067
        %6273 = vmatprep.subr.mxu0 0.0
        %6274 = vmatpush1.msra.mxu0 %v6068
        %6275 = vmatprep.subr.mxu0 0.0
        %6276 = vmatpush1.msra.mxu0 %v6069
        %6277 = vmatprep.subr.mxu0 0.0
        %6278 = vmatpush1.msra.mxu0 %v6070
        %6279 = vmatprep.subr.mxu0 0.0
        %6280 = vmatpush1.msra.mxu0 %v6071
        %6281 = vmatprep.subr.mxu0 0.0
        %6282 = vmatpush1.msra.mxu0 %v6072
        %6283 = vmatprep.subr.mxu0 0.0
        %6284 = vmatpush1.msra.mxu0 %v6073
        %6285 = vmatprep.subr.mxu0 0.0
        %6286 = vmatpush1.msra.mxu0 %v6074
        %6287 = vmatprep.subr.mxu0 0.0
        %6288 = vmatpush1.msra.mxu0 %v6075
        %6289 = vmatprep.subr.mxu0 0.0
        %6290 = vmatpush1.msra.mxu0 %v6076
        %6291 = vmatprep.mubr.f32.mxu0 %v5952
        %6292 = vmatmul.mubr.f32.gmra.mrb[0].mxu0 %v5951
        %v6293 = vpop.f32.mrb[0].mxu0
        %v6294 = vadd.f32 %v6149, %v6293
        %v6295 = vpop.f32.mrb[0].mxu0
        %6296 = vmatprep.mubr.f32.mxu0 %v5956
        %6297 = vmatmul.mubr.f32.gmra.mrb[0].mxu0 %v5955
        %v6298 = vpop.f32.mrb[0].mxu0
        %v6299 = vadd.f32 %v6154, %v6298
        %v6300 = vpop.f32.mrb[0].mxu0
        %6301 = vmatprep.mubr.f32.mxu0 %v5960
        %6302 = vmatmul.mubr.f32.gmra.mrb[0].mxu0 %v5959
        %v6303 = vpop.f32.mrb[0].mxu0
        %v6304 = vadd.f32 %v6159, %v6303
        %v6305 = vpop.f32.mrb[0].mxu0
        %6306 = vmatprep.mubr.f32.mxu0 %v5964
        %6307 = vmatmul.mubr.f32.gmra.mrb[0].mxu0 %v5963
        %v6308 = vpop.f32.mrb[0].mxu0
        %v6309 = vadd.f32 %v6164, %v6308
        %v6310 = vpop.f32.mrb[0].mxu0
        %6311 = vmatprep.mubr.f32.mxu0 %v5968
        %6312 = vmatmul.mubr.f32.gmra.mrb[0].mxu0 %v5967
        %v6313 = vpop.f32.mrb[0].mxu0
        %v6314 = vadd.f32 %v6169, %v6313
        %v6315 = vpop.f32.mrb[0].mxu0
        %6316 = vmatprep.mubr.f32.mxu0 %v5972
        %6317 = vmatmul.mubr.f32.gmra.mrb[0].mxu0 %v5971
        %v6318 = vpop.f32.mrb[0].mxu0
        %v6319 = vadd.f32 %v6174, %v6318
        %v6320 = vpop.f32.mrb[0].mxu0
        %6321 = vmatprep.mubr.f32.mxu0 %v5976
        %6322 = vmatmul.mubr.f32.gmra.mrb[0].mxu0 %v5975
        %v6323 = vpop.f32.mrb[0].mxu0
        %v6324 = vadd.f32 %v6179, %v6323
        %v6325 = vpop.f32.mrb[0].mxu0
        %6326 = vmatprep.mubr.f32.mxu0 %v5980
        %6327 = vmatmul.mubr.f32.gmra.mrb[0].mxu0 %v5979
        %v6328 = vpop.f32.mrb[0].mxu0
        %v6329 = vadd.f32 %v6184, %v6328
        %v6330 = vpop.f32.mrb[0].mxu0
        %6331 = vmatprep.mubr.f32.mxu0 %v5984
        %6332 = vmatmul.mubr.f32.gmra.mrb[0].mxu0 %v5983
        %v6333 = vpop.f32.mrb[0].mxu0
        %v6334 = vadd.f32 %v6189, %v6333
        %v6335 = vpop.f32.mrb[0].mxu0
        %6336 = vmatprep.mubr.f32.mxu0 %v5988
        %6337 = vmatmul.mubr.f32.gmra.mrb[0].mxu0 %v5987
        %v6338 = vpop.f32.mrb[0].mxu0
        %v6339 = vadd.f32 %v6194, %v6338
        %v6340 = vpop.f32.mrb[0].mxu0
        %6341 = vmatprep.mubr.f32.mxu0 %v5992
        %6342 = vmatmul.mubr.f32.gmra.mrb[0].mxu0 %v5991
        %v6343 = vpop.f32.mrb[0].mxu0
        %v6344 = vadd.f32 %v6199, %v6343
        %v6345 = vpop.f32.mrb[0].mxu0
        %6346 = vmatprep.mubr.f32.mxu0 %v5996
        %6347 = vmatmul.mubr.f32.gmra.mrb[0].mxu0 %v5995
        %v6348 = vpop.f32.mrb[0].mxu0
        %v6349 = vadd.f32 %v6204, %v6348
        %v6350 = vpop.f32.mrb[0].mxu0
        %6351 = vmatprep.mubr.f32.mxu0 %v6000
        %6352 = vmatmul.mubr.f32.gmra.mrb[0].mxu0 %v5999
        %v6353 = vpop.f32.mrb[0].mxu0
        %v6354 = vadd.f32 %v6209, %v6353
        %v6355 = vpop.f32.mrb[0].mxu0
        %6356 = vmatprep.mubr.f32.mxu0 %v6004
        %6357 = vmatmul.mubr.f32.gmra.mrb[0].mxu0 %v6003
        %v6358 = vpop.f32.mrb[0].mxu0
        %v6359 = vadd.f32 %v6214, %v6358
        %v6360 = vpop.f32.mrb[0].mxu0
        %6361 = vmatprep.mubr.f32.mxu0 %v6008
        %6362 = vmatmul.mubr.f32.gmra.mrb[0].mxu0 %v6007
        %v6363 = vpop.f32.mrb[0].mxu0
        %v6364 = vadd.f32 %v6219, %v6363
        %v6365 = vpop.f32.mrb[0].mxu0
        %6366 = vmatprep.mubr.f32.mxu0 %v6012
        %6367 = vmatmul.mubr.f32.gmra.mrb[0].mxu0 %v6011
        %v6368 = vpop.f32.mrb[0].mxu0
        %v6369 = vadd.f32 %v6224, %v6368
        %v6370 = vpop.f32.mrb[0].mxu0
        %6371 = vdwg.mxu0
        %v6372 = vadd.f32 %v6294, %v5179
        %v6373 = vadd.f32 %v6299, %v5180
        %v6374 = vadd.f32 %v6304, %v5181
        %v6375 = vadd.f32 %v6309, %v5182
        %v6376 = vadd.f32 %v6314, %v5183
        %v6377 = vadd.f32 %v6319, %v5184
        %v6378 = vadd.f32 %v6324, %v5185
        %v6379 = vadd.f32 %v6329, %v5186
        %v6380 = vadd.f32 %v6334, %v5187
        %v6381 = vadd.f32 %v6339, %v5188
        %v6382 = vadd.f32 %v6344, %v5189
        %v6383 = vadd.f32 %v6349, %v5190
        %v6384 = vadd.f32 %v6354, %v5191
        %v6385 = vadd.f32 %v6359, %v5192
        %v6386 = vadd.f32 %v6364, %v5193
        %v6387 = vadd.f32 %v6369, %v5194
        %6388 = vst [vmem:[%s540] sm:$0xff] %v6372
        %6389 = vst [vmem:[%s540 + $0x8] sm:$0xff] %v6373
        %6390 = vst [vmem:[%s540 + $0x10] sm:$0xff] %v6374
        %6391 = vst [vmem:[%s540 + $0x18] sm:$0xff] %v6375
        %6392 = vst [vmem:[%s540 + $0x20] sm:$0xff] %v6376
        %6393 = vst [vmem:[%s540 + $0x28] sm:$0xff] %v6377
        %6394 = vst [vmem:[%s540 + $0x30] sm:$0xff] %v6378
        %6395 = vst [vmem:[%s540 + $0x38] sm:$0xff] %v6379
        %6396 = vst [vmem:[%s540 + $0x40] sm:$0xff] %v6380
        %6397 = vst [vmem:[%s540 + $0x48] sm:$0xff] %v6381
        %6398 = vst [vmem:[%s540 + $0x50] sm:$0xff] %v6382
        %6399 = vst [vmem:[%s540 + $0x58] sm:$0xff] %v6383
        %6400 = vst [vmem:[%s540 + $0x60] sm:$0xff] %v6384
        %6401 = vst [vmem:[%s540 + $0x68] sm:$0xff] %v6385
        %6402 = vst [vmem:[%s540 + $0x70] sm:$0xff] %v6386
        %6403 = vst [vmem:[%s540 + $0x78] sm:$0xff] %v6387
        %s6404 = sand.u32 %s266, 1
        %s6405 = scalar_lea.sflag [#allocation6], %s6404
        %s6406 = sand.u32 %s266, 1
        %s6407 = smul.addr %s6406, 128
        %s6408 = scalar_lea.vmem [#allocation16], %s6407
        %s6409 = sand.u32 %s294, 1
        %s6410 = scalar_lea.sflag [#allocation18], %s6409
        %s6411 = sand.u32 %s294, 1
        %s6412 = smul.addr %s6411, 256
        %s6413 = scalar_lea.vmem [#allocation17], %s6412
        // Predicated region
        $region89: #{tpu_custom_call.1} parent=55 // pred_check
          %p6414 = pneg %p276
        $region90: #{tpu_custom_call.1} parent=55 // pred_check_branch
          %6416 = sbr.rel (%p6414) target = $region92
        $region91: #{tpu_custom_call.1} parent=55 // pred_region
          %s6417 = smul.u32 16, %s41
          %s6419 = ssub.s32 2048, 2048
          %6420 = vsyncadd %s6405, %s6419
          %s6421 = smul.addr %s40, 16
          %s6422 = sadd.s32 %s6417, %s6421
          %s6423 = smul.addr %s6422, 128
          %s6424 = scalar_lea.hbm %s9, %s6423
          %s6425 = sshll.u32 %s6408, 4
          %s6426 = int_to_ptr.vmem [resolvable:$true] %s6425
          %6431 = dma.vmem_to_hbm [thread:$0]  %s6426, 2048, %s6424, %s6405, 128, 128, 8
        $region92: #{tpu_custom_call.1} parent=55 // pred_fallthru
          _
        // Predicated region
        $region93: #{tpu_custom_call.1} parent=55 // pred_check
          %p6432 = pneg %p304
        $region94: #{tpu_custom_call.1} parent=55 // pred_check_branch
          %6434 = sbr.rel (%p6432) target = $region96
        $region95: #{tpu_custom_call.1} parent=55 // pred_region
          #allocation20 [shape = 'u32[6]{0}', space=smem, size = 0x18, scoped, tag = 'DMA stride descriptor']
          %s6435 = smul.u32 16, %s41
          %s6437 = ssub.s32 4096, 4096
          %6438 = vsyncadd %s6410, %s6437
          %s6439 = smul.addr %s40, 16
          %s6440 = sadd.s32 %s6435, %s6439
          %s6441 = smul.addr %s6440, 64
          %s6442 = scalar_lea.hbm %s10, %s6441
          %s6444 = sshll.u32 1, 14
          %s6445 = sxor.u32 4294967295, %s6444
          %s6448 = sshll.u32 7, 18
          %s6449 = sxor.u32 4294967295, %s6448
          %s6450 = sand.u32 0, %s6449
          %s6452 = sor.u32 %s6450, 0
          %s6454 = sshll.u32 3, 24
          %s6455 = sxor.u32 4294967295, %s6454
          %s6456 = sand.u32 %s6452, %s6455
          %s6458 = sor.u32 %s6456, 0
          %s6459 = sshll.u32 %s6413, 4
          %s6460 = int_to_ptr.vmem [resolvable:$true] %s6459
          %6466 = sst [smem:[#allocation20]] 1024
          %s6467 = scalar_lea.smem [#allocation20], 1
          %6468 = sst [smem:[%s6467]] 2048
          %s6469 = scalar_lea.smem [#allocation20], 2
          %6470 = sst [smem:[%s6469]] 16
          %s6471 = scalar_lea.smem [#allocation20], 3
          %6472 = sst [smem:[%s6471]] 64
          %s6473 = scalar_lea.smem [#allocation20], 4
          %6474 = sst [smem:[%s6473]] 64
          %s6475 = scalar_lea.smem [#allocation20], 5
          %6476 = sst [smem:[%s6475]] 4
          %6478 = dma.general %s6460, 4096, %s6442, %s6410, [#allocation19], [#allocation20], %s6458, 0
        $region96: #{tpu_custom_call.1} parent=55 // pred_fallthru
          _
      $region56: #{tpu_custom_call.1} parent=5 // pred_fallthru
        _
      %p6479 = scmp.le.s32.totalorder 2, %s31
      // Predicated region
      $region97: #{tpu_custom_call.1} parent=5 // pred_check
        %p6480 = pneg %p6479
      $region98: #{tpu_custom_call.1} parent=5 // pred_check_branch
        %6482 = sbr.rel (%p6480) target = $region100
      $region99: #{tpu_custom_call.1} parent=5 // pred_region
        %s6483 = ssub.s32 %s31, 2
        // Predicated region
        $region101: #{tpu_custom_call.1} parent=99 // pred_check
          %p6484 = pneg %p282
        $region102: #{tpu_custom_call.1} parent=99 // pred_check_branch
          %6486 = sbr.rel (%p6484) target = $region104
        $region103: #{tpu_custom_call.1} parent=99 // pred_region
          %s6487 = sand.u32 %s267, 1
          %s6488 = scalar_lea.sflag [#allocation6], %s6487
          %s6489 = sand.u32 %s267, 1
          %s6490 = smul.addr %s6489, 128
          %s6491 = scalar_lea.vmem [#allocation16], %s6490
          %6492 = dma.done %s6488, 2048
        $region104: #{tpu_custom_call.1} parent=99 // pred_fallthru
          _
        // Predicated region
        $region105: #{tpu_custom_call.1} parent=99 // pred_check
          %p6493 = pneg %p310
        $region106: #{tpu_custom_call.1} parent=99 // pred_check_branch
          %6495 = sbr.rel (%p6493) target = $region108
        $region107: #{tpu_custom_call.1} parent=99 // pred_region
          %s6496 = sand.u32 %s295, 1
          %s6497 = scalar_lea.sflag [#allocation18], %s6496
          %s6498 = sand.u32 %s295, 1
          %s6499 = smul.addr %s6498, 256
          %s6500 = scalar_lea.vmem [#allocation17], %s6499
          %6501 = dma.done %s6497, 4096
        $region108: #{tpu_custom_call.1} parent=99 // pred_fallthru
          _
      $region100: #{tpu_custom_call.1} parent=5 // pred_fallthru
        _
    $region6: #{tpu_custom_call.1} parent=1 // loop_footer
      %s35 = sadd.s32 1, %s31
    $region7: #{tpu_custom_call.1} parent=1 // loop_footer_branch
      %30 = sbr.rel target = $region3
    $region8: #{tpu_custom_call.1} parent=1 // loop_exit
      _
    %6502 = vsyncpa [#allocation5], 1
    %s6503 = scalar_lea.sflag [#allocation5], 1
    %6504 = vsyncpa %s6503, 1
    %6505 = vsyncpa [#allocation8], 1
    %s6506 = scalar_lea.sflag [#allocation8], 1
    %6507 = vsyncpa %s6506, 1
    %6508 = vsyncpa [#allocation11], 1
    %6509 = vsyncpa [#allocation14], 1
    %6510 = vsyncpa [#allocation6], 1
    %s6511 = scalar_lea.sflag [#allocation6], 1
    %6512 = vsyncpa %s6511, 1
    %6513 = vsyncpa [#allocation18], 1
    %s6514 = scalar_lea.sflag [#allocation18], 1
    %6515 = vsyncpa %s6514, 1

</llo_original>
